<compile_context>
chip_gen: v7x
topology: tpu7x:2x2x1
jax: 0.10.0
libtpu: 0.0.40
codegen_flags: <defaults>
</compile_context>

<pallas_src>
import functools

import jax
import jax.numpy as jnp
from jax.experimental import pallas as pl
from jax.experimental.pallas import tpu as pltpu

_BN_EPS = 1e-5            # torch.nn.BatchNorm2d default
_MXU_DTYPE = jnp.float32  # flip to jnp.bfloat16 on v6e/v7x for higher MXU throughput
_LANES = 128


def _round_up(x, m):
    return (x + m - 1) // m * m


# ------------------------------------------------------------------------- kernels
def _conv3x3_stats_kernel(xpad_ref, w_ref, y_ref, stats_ref):
    """3x3 conv (input already zero-padded) + fused per-block BN partial sums.

    xpad_ref : (1, H+2, W+2, Cin)  zero-padded NHWC input block          (VMEM)
    w_ref    : (3, 3, Cin, Cp)     conv weight, HWIO, lane-padded Cout   (VMEM)
    y_ref    : (1, H*W, Cp)        raw conv output block (lane-dense)    (VMEM)
    stats_ref: (1, 2, Cp)          [sum, sum-of-squares] over this block (VMEM)
    """
    H = xpad_ref.shape[1] - 2
    W = xpad_ref.shape[2] - 2
    Cin = xpad_ref.shape[3]
    Cp = y_ref.shape[-1]

    # 9 large matmuls (one per tap): (H*W, Cin) @ (Cin, Cp) -> single f32 accumulator.
    acc = jnp.zeros((H * W, Cp), jnp.float32)
    for dy in range(3):
        for dx in range(3):
            patch = xpad_ref[0, dy:dy + H, dx:dx + W, :].reshape(H * W, Cin)
            acc = acc + jnp.dot(patch.astype(_MXU_DTYPE),
                                w_ref[dy, dx].astype(_MXU_DTYPE),
                                preferred_element_type=jnp.float32)

    y_ref[0] = acc
    s = jnp.sum(acc, axis=0, keepdims=True)           # (1, Cp)
    sq = jnp.sum(acc * acc, axis=0, keepdims=True)    # (1, Cp)
    stats_ref[0] = jnp.concatenate([s, sq], axis=0)   # (2, Cp)


def _bn_relu_kernel(y_ref, partials_ref, g_ref, b_ref, out_ref, *, count):
    """BatchNorm2d (training batch stats, biased var) + affine + ReLU.

    y_ref        : (1, H*W, Cp)  raw conv output block
    partials_ref : (N, 2, Cp)    per-batch-element [sum, sumsq] partials
    g_ref, b_ref : (1, Cp)       BN gamma / beta (lane-padded with zeros)
    out_ref      : (1, H*W, Cp)
    """
    stats = jnp.sum(partials_ref[...], axis=0)        # (2, Cp) global sums over batch
    inv_n = 1.0 / count
    mean = stats[0:1, :] * inv_n                      # (1, Cp)
    var = stats[1:2, :] * inv_n - mean * mean         # biased var (torch forward)
    inv_std = jax.lax.rsqrt(var + _BN_EPS)
    scale = g_ref[...] * inv_std                      # (1, Cp)
    shift = b_ref[...] - mean * scale                 # (1, Cp)
    out_ref[0] = jnp.maximum(y_ref[0] * scale + shift, 0.0).astype(out_ref.dtype)


# --------------------------------------------------------- one conv -> BN -> ReLU
def conv_bn_relu_block(x_nhwc, w_hwio, gamma, beta):
    """x (N,H,W,Cin) f32, w (3,3,Cin,Cp), gamma/beta (Cp,) -> (N,H,W,Cp) f32."""
    N, H, W, Cin = x_nhwc.shape
    Cp = w_hwio.shape[-1]
    Hp, Wp = H + 2, W + 2
    HW = H * W
    xpad = jnp.pad(x_nhwc, ((0, 0), (1, 1), (1, 1), (0, 0)))   # padding=1 (glue)
    # TODO(synk): for large H*W additionally tile rows (halo blocks via pl.Element or
    # manual DMA) so one block stays a few MiB of VMEM; batch-gridding suffices here.

    parallel = pltpu.CompilerParams(dimension_semantics=("parallel",))

    y, partials = pl.pallas_call(
        _conv3x3_stats_kernel,
        grid=(N,),
        in_specs=[
            pl.BlockSpec((1, Hp, Wp, Cin), lambda n: (n, 0, 0, 0)),
            pl.BlockSpec((3, 3, Cin, Cp), lambda n: (0, 0, 0, 0)),
        ],
        out_specs=[
            pl.BlockSpec((1, HW, Cp), lambda n: (n, 0, 0)),
            pl.BlockSpec((1, 2, Cp), lambda n: (n, 0, 0)),
        ],
        out_shape=[
            jax.ShapeDtypeStruct((N, HW, Cp), jnp.float32),
            jax.ShapeDtypeStruct((N, 2, Cp), jnp.float32),
        ],
        compiler_params=parallel,
    )(xpad, w_hwio)

    out = pl.pallas_call(
        functools.partial(_bn_relu_kernel, count=float(N * HW)),
        grid=(N,),
        in_specs=[
            pl.BlockSpec((1, HW, Cp), lambda n: (n, 0, 0)),
            pl.BlockSpec((N, 2, Cp), lambda n: (0, 0, 0)),
            pl.BlockSpec((1, Cp), lambda n: (0, 0)),
            pl.BlockSpec((1, Cp), lambda n: (0, 0)),
        ],
        out_specs=pl.BlockSpec((1, HW, Cp), lambda n: (n, 0, 0)),
        out_shape=jax.ShapeDtypeStruct((N, HW, Cp), jnp.float32),
        compiler_params=parallel,
    )(y, partials, gamma.reshape(1, Cp), beta.reshape(1, Cp))

    return out.reshape(N, H, W, Cp)   # contiguous, metadata-only reshape


@jax.jit
def double_conv(x_nchw, w1, g1, b1, w2, g2, b2):
    """DoubleConv.forward: (conv => BN => ReLU) * 2.  NCHW in/out like PyTorch."""
    N, Cin, H, W = x_nchw.shape
    Cmid, Cout = w1.shape[0], w2.shape[0]
    Cp1, Cp2 = _round_up(Cmid, _LANES), _round_up(Cout, _LANES)

    x = jnp.transpose(x_nchw, (0, 2, 3, 1)).astype(jnp.float32)   # NCHW -> NHWC

    # OIHW -> HWIO, zero-pad output channels (and block-2 input channels) to 128-lane
    # multiples so all Pallas stores / intermediates are lane-dense.
    w1h = jnp.pad(jnp.transpose(w1, (2, 3, 1, 0)).astype(jnp.float32),
                  ((0, 0), (0, 0), (0, 0), (0, Cp1 - Cmid)))
    g1p = jnp.pad(g1.astype(jnp.float32), (0, Cp1 - Cmid))
    b1p = jnp.pad(b1.astype(jnp.float32), (0, Cp1 - Cmid))
    w2h = jnp.pad(jnp.transpose(w2, (2, 3, 1, 0)).astype(jnp.float32),
                  ((0, 0), (0, 0), (0, Cp1 - Cmid), (0, Cp2 - Cout)))
    g2p = jnp.pad(g2.astype(jnp.float32), (0, Cp2 - Cout))
    b2p = jnp.pad(b2.astype(jnp.float32), (0, Cp2 - Cout))

    h = conv_bn_relu_block(x, w1h, g1p, b1p)    # (N, H, W, Cp1), pad channels == 0
    h = conv_bn_relu_block(h, w2h, g2p, b2p)    # (N, H, W, Cp2), pad channels == 0
    return jnp.transpose(h[..., :Cout], (0, 3, 1, 2))   # drop lane pad, NHWC -> NCHW
    # TODO(synk): BatchNorm2d running_mean/running_var buffer updates are training
    # state only and do not affect this forward output, so they are not modeled.


def _ref_double_conv(x, w1, g1, b1, w2, g2, b2):
    """Pure-JAX reference (NCHW) reproducing the PyTorch forward semantics."""
    def block(x, w, g, b):
        y = jax.lax.conv_general_dilated(
            x, w, window_strides=(1, 1), padding="SAME",
            dimension_numbers=("NCHW", "OIHW", "NCHW"))
        mean = jnp.mean(y, axis=(0, 2, 3), keepdims=True)
        var = jnp.mean((y - mean) ** 2, axis=(0, 2, 3), keepdims=True)
        y = (y - mean) / jnp.sqrt(var + _BN_EPS)
        y = y * g.reshape(1, -1, 1, 1) + b.reshape(1, -1, 1, 1)
        return jnp.maximum(y, 0.0)
    return block(block(x, w1, g1, b1), w2, g2, b2)


if __name__ == "__main__":
    # DoubleConv(in_channels=4, out_channels=8, mid_channels=None) -> mid_channels = 8
    N, Cin, H, W = 2, 4, 16, 16
    Cmid, Cout = 8, 8

    keys = jax.random.split(jax.random.PRNGKey(0), 7)
    x = jax.random.normal(keys[0], (N, Cin, H, W), jnp.float32)
    w1 = 0.2 * jax.random.normal(keys[1], (Cmid, Cin, 3, 3), jnp.float32)   # Conv2d.weight (OIHW)
    g1 = 1.0 + 0.1 * jax.random.normal(keys[2], (Cmid,), jnp.float32)       # BatchNorm2d.weight
    b1 = 0.1 * jax.random.normal(keys[3], (Cmid,), jnp.float32)             # BatchNorm2d.bias
    w2 = 0.2 * jax.random.normal(keys[4], (Cout, Cmid, 3, 3), jnp.float32)
    g2 = 1.0 + 0.1 * jax.random.normal(keys[5], (Cout,), jnp.float32)
    b2 = 0.1 * jax.random.normal(keys[6], (Cout,), jnp.float32)

    out = jax.block_until_ready(double_conv(x, w1, g1, b1, w2, g2, b2))
    assert out.shape == (N, Cout, H, W) and out.dtype == jnp.float32

    ref = _ref_double_conv(x, w1, g1, b1, w2, g2, b2)
    if not jnp.allclose(out, ref, atol=5e-4, rtol=5e-4):
        raise AssertionError(
            "Pallas DoubleConv mismatch vs JAX reference: "
            f"max abs err = {float(jnp.max(jnp.abs(out - ref)))}")

    print("KERNEL_OK")
</pallas_src>

<mosaic_0001>
module attributes {stable_mosaic.version = 11 : i64} {
  func.func @_conv3x3_stats_kernel(%arg0: i32, %arg1: memref<1x18x18x4xf32, #tpu.memory_space<vmem>>, %arg2: memref<3x3x4x128xf32, #tpu.memory_space<vmem>>, %arg3: memref<1x256x128xf32, #tpu.memory_space<vmem>>, %arg4: memref<1x2x128xf32, #tpu.memory_space<vmem>>) attributes {dimension_semantics = [#tpu.dimension_semantics<parallel>], iteration_bounds = array<i64: 2>, scalar_prefetch = 0 : i64, scratch_operands = 0 : i64, tpu.core_type = #tpu.core_type<tc>, window_params = [{transform_indices = @transform_0, window_bounds = array<i64: 1, 18, 18, 4>}, {pipeline_mode = #tpu.pipeline_mode<synchronous>, transform_indices = @transform_1, window_bounds = array<i64: 3, 3, 4, 128>}, {transform_indices = @transform_2, window_bounds = array<i64: 1, 256, 128>}, {transform_indices = @transform_3, window_bounds = array<i64: 1, 2, 128>}]} {
    %cst = arith.constant 0.000000e+00 : f32
    %0 = vector.broadcast %cst : f32 to vector<256x128xf32>
    %c0 = arith.constant 0 : index
    %c0_0 = arith.constant 0 : index
    %c0_1 = arith.constant 0 : index
    %c0_2 = arith.constant 0 : index
    %1 = vector.load %arg1[%c0, %c0_0, %c0_1, %c0_2] : memref<1x18x18x4xf32, #tpu.memory_space<vmem>>, vector<1x16x16x4xf32>
    %2 = vector.shape_cast %1 : vector<1x16x16x4xf32> to vector<16x16x4xf32>
    %3 = vector.shape_cast %2 : vector<16x16x4xf32> to vector<256x4xf32>
    %c0_3 = arith.constant 0 : index
    %c0_4 = arith.constant 0 : index
    %c0_5 = arith.constant 0 : index
    %c0_6 = arith.constant 0 : index
    %4 = vector.load %arg2[%c0_3, %c0_4, %c0_5, %c0_6] : memref<3x3x4x128xf32, #tpu.memory_space<vmem>>, vector<1x1x4x128xf32>
    %5 = vector.shape_cast %4 : vector<1x1x4x128xf32> to vector<4x128xf32>
    %cst_7 = arith.constant dense<0.000000e+00> : vector<256x128xf32>
    %6 = tpu.matmul %3, %5, %cst_7 {dimension_numbers = #tpu.dot_dimension_numbers<[1], [0], [0], [1], [0, 0, 1, 1], [], []>} : vector<256x4xf32>, vector<4x128xf32>, vector<256x128xf32> -> vector<256x128xf32>
    %7 = arith.addf %0, %6 : vector<256x128xf32>
    %c0_8 = arith.constant 0 : index
    %c0_9 = arith.constant 0 : index
    %c1 = arith.constant 1 : index
    %c0_10 = arith.constant 0 : index
    %8 = vector.load %arg1[%c0_8, %c0_9, %c1, %c0_10] : memref<1x18x18x4xf32, #tpu.memory_space<vmem>>, vector<1x16x16x4xf32>
    %9 = vector.shape_cast %8 : vector<1x16x16x4xf32> to vector<16x16x4xf32>
    %10 = vector.shape_cast %9 : vector<16x16x4xf32> to vector<256x4xf32>
    %c0_11 = arith.constant 0 : index
    %c1_12 = arith.constant 1 : index
    %c0_13 = arith.constant 0 : index
    %c0_14 = arith.constant 0 : index
    %11 = vector.load %arg2[%c0_11, %c1_12, %c0_13, %c0_14] : memref<3x3x4x128xf32, #tpu.memory_space<vmem>>, vector<1x1x4x128xf32>
    %12 = vector.shape_cast %11 : vector<1x1x4x128xf32> to vector<4x128xf32>
    %cst_15 = arith.constant dense<0.000000e+00> : vector<256x128xf32>
    %13 = tpu.matmul %10, %12, %cst_15 {dimension_numbers = #tpu.dot_dimension_numbers<[1], [0], [0], [1], [0, 0, 1, 1], [], []>} : vector<256x4xf32>, vector<4x128xf32>, vector<256x128xf32> -> vector<256x128xf32>
    %14 = arith.addf %7, %13 : vector<256x128xf32>
    %c0_16 = arith.constant 0 : index
    %c0_17 = arith.constant 0 : index
    %c2 = arith.constant 2 : index
    %c0_18 = arith.constant 0 : index
    %15 = vector.load %arg1[%c0_16, %c0_17, %c2, %c0_18] : memref<1x18x18x4xf32, #tpu.memory_space<vmem>>, vector<1x16x16x4xf32>
    %16 = vector.shape_cast %15 : vector<1x16x16x4xf32> to vector<16x16x4xf32>
    %17 = vector.shape_cast %16 : vector<16x16x4xf32> to vector<256x4xf32>
    %c0_19 = arith.constant 0 : index
    %c2_20 = arith.constant 2 : index
    %c0_21 = arith.constant 0 : index
    %c0_22 = arith.constant 0 : index
    %18 = vector.load %arg2[%c0_19, %c2_20, %c0_21, %c0_22] : memref<3x3x4x128xf32, #tpu.memory_space<vmem>>, vector<1x1x4x128xf32>
    %19 = vector.shape_cast %18 : vector<1x1x4x128xf32> to vector<4x128xf32>
    %cst_23 = arith.constant dense<0.000000e+00> : vector<256x128xf32>
    %20 = tpu.matmul %17, %19, %cst_23 {dimension_numbers = #tpu.dot_dimension_numbers<[1], [0], [0], [1], [0, 0, 1, 1], [], []>} : vector<256x4xf32>, vector<4x128xf32>, vector<256x128xf32> -> vector<256x128xf32>
    %21 = arith.addf %14, %20 : vector<256x128xf32>
    %c0_24 = arith.constant 0 : index
    %c1_25 = arith.constant 1 : index
    %c0_26 = arith.constant 0 : index
    %c0_27 = arith.constant 0 : index
    %22 = vector.load %arg1[%c0_24, %c1_25, %c0_26, %c0_27] : memref<1x18x18x4xf32, #tpu.memory_space<vmem>>, vector<1x16x16x4xf32>
    %23 = vector.shape_cast %22 : vector<1x16x16x4xf32> to vector<16x16x4xf32>
    %24 = vector.shape_cast %23 : vector<16x16x4xf32> to vector<256x4xf32>
    %c1_28 = arith.constant 1 : index
    %c0_29 = arith.constant 0 : index
    %c0_30 = arith.constant 0 : index
    %c0_31 = arith.constant 0 : index
    %25 = vector.load %arg2[%c1_28, %c0_29, %c0_30, %c0_31] : memref<3x3x4x128xf32, #tpu.memory_space<vmem>>, vector<1x1x4x128xf32>
    %26 = vector.shape_cast %25 : vector<1x1x4x128xf32> to vector<4x128xf32>
    %cst_32 = arith.constant dense<0.000000e+00> : vector<256x128xf32>
    %27 = tpu.matmul %24, %26, %cst_32 {dimension_numbers = #tpu.dot_dimension_numbers<[1], [0], [0], [1], [0, 0, 1, 1], [], []>} : vector<256x4xf32>, vector<4x128xf32>, vector<256x128xf32> -> vector<256x128xf32>
    %28 = arith.addf %21, %27 : vector<256x128xf32>
    %c0_33 = arith.constant 0 : index
    %c1_34 = arith.constant 1 : index
    %c1_35 = arith.constant 1 : index
    %c0_36 = arith.constant 0 : index
    %29 = vector.load %arg1[%c0_33, %c1_34, %c1_35, %c0_36] : memref<1x18x18x4xf32, #tpu.memory_space<vmem>>, vector<1x16x16x4xf32>
    %30 = vector.shape_cast %29 : vector<1x16x16x4xf32> to vector<16x16x4xf32>
    %31 = vector.shape_cast %30 : vector<16x16x4xf32> to vector<256x4xf32>
    %c1_37 = arith.constant 1 : index
    %c1_38 = arith.constant 1 : index
    %c0_39 = arith.constant 0 : index
    %c0_40 = arith.constant 0 : index
    %32 = vector.load %arg2[%c1_37, %c1_38, %c0_39, %c0_40] : memref<3x3x4x128xf32, #tpu.memory_space<vmem>>, vector<1x1x4x128xf32>
    %33 = vector.shape_cast %32 : vector<1x1x4x128xf32> to vector<4x128xf32>
    %cst_41 = arith.constant dense<0.000000e+00> : vector<256x128xf32>
    %34 = tpu.matmul %31, %33, %cst_41 {dimension_numbers = #tpu.dot_dimension_numbers<[1], [0], [0], [1], [0, 0, 1, 1], [], []>} : vector<256x4xf32>, vector<4x128xf32>, vector<256x128xf32> -> vector<256x128xf32>
    %35 = arith.addf %28, %34 : vector<256x128xf32>
    %c0_42 = arith.constant 0 : index
    %c1_43 = arith.constant 1 : index
    %c2_44 = arith.constant 2 : index
    %c0_45 = arith.constant 0 : index
    %36 = vector.load %arg1[%c0_42, %c1_43, %c2_44, %c0_45] : memref<1x18x18x4xf32, #tpu.memory_space<vmem>>, vector<1x16x16x4xf32>
    %37 = vector.shape_cast %36 : vector<1x16x16x4xf32> to vector<16x16x4xf32>
    %38 = vector.shape_cast %37 : vector<16x16x4xf32> to vector<256x4xf32>
    %c1_46 = arith.constant 1 : index
    %c2_47 = arith.constant 2 : index
    %c0_48 = arith.constant 0 : index
    %c0_49 = arith.constant 0 : index
    %39 = vector.load %arg2[%c1_46, %c2_47, %c0_48, %c0_49] : memref<3x3x4x128xf32, #tpu.memory_space<vmem>>, vector<1x1x4x128xf32>
    %40 = vector.shape_cast %39 : vector<1x1x4x128xf32> to vector<4x128xf32>
    %cst_50 = arith.constant dense<0.000000e+00> : vector<256x128xf32>
    %41 = tpu.matmul %38, %40, %cst_50 {dimension_numbers = #tpu.dot_dimension_numbers<[1], [0], [0], [1], [0, 0, 1, 1], [], []>} : vector<256x4xf32>, vector<4x128xf32>, vector<256x128xf32> -> vector<256x128xf32>
    %42 = arith.addf %35, %41 : vector<256x128xf32>
    %c0_51 = arith.constant 0 : index
    %c2_52 = arith.constant 2 : index
    %c0_53 = arith.constant 0 : index
    %c0_54 = arith.constant 0 : index
    %43 = vector.load %arg1[%c0_51, %c2_52, %c0_53, %c0_54] : memref<1x18x18x4xf32, #tpu.memory_space<vmem>>, vector<1x16x16x4xf32>
    %44 = vector.shape_cast %43 : vector<1x16x16x4xf32> to vector<16x16x4xf32>
    %45 = vector.shape_cast %44 : vector<16x16x4xf32> to vector<256x4xf32>
    %c2_55 = arith.constant 2 : index
    %c0_56 = arith.constant 0 : index
    %c0_57 = arith.constant 0 : index
    %c0_58 = arith.constant 0 : index
    %46 = vector.load %arg2[%c2_55, %c0_56, %c0_57, %c0_58] : memref<3x3x4x128xf32, #tpu.memory_space<vmem>>, vector<1x1x4x128xf32>
    %47 = vector.shape_cast %46 : vector<1x1x4x128xf32> to vector<4x128xf32>
    %cst_59 = arith.constant dense<0.000000e+00> : vector<256x128xf32>
    %48 = tpu.matmul %45, %47, %cst_59 {dimension_numbers = #tpu.dot_dimension_numbers<[1], [0], [0], [1], [0, 0, 1, 1], [], []>} : vector<256x4xf32>, vector<4x128xf32>, vector<256x128xf32> -> vector<256x128xf32>
    %49 = arith.addf %42, %48 : vector<256x128xf32>
    %c0_60 = arith.constant 0 : index
    %c2_61 = arith.constant 2 : index
    %c1_62 = arith.constant 1 : index
    %c0_63 = arith.constant 0 : index
    %50 = vector.load %arg1[%c0_60, %c2_61, %c1_62, %c0_63] : memref<1x18x18x4xf32, #tpu.memory_space<vmem>>, vector<1x16x16x4xf32>
    %51 = vector.shape_cast %50 : vector<1x16x16x4xf32> to vector<16x16x4xf32>
    %52 = vector.shape_cast %51 : vector<16x16x4xf32> to vector<256x4xf32>
    %c2_64 = arith.constant 2 : index
    %c1_65 = arith.constant 1 : index
    %c0_66 = arith.constant 0 : index
    %c0_67 = arith.constant 0 : index
    %53 = vector.load %arg2[%c2_64, %c1_65, %c0_66, %c0_67] : memref<3x3x4x128xf32, #tpu.memory_space<vmem>>, vector<1x1x4x128xf32>
    %54 = vector.shape_cast %53 : vector<1x1x4x128xf32> to vector<4x128xf32>
    %cst_68 = arith.constant dense<0.000000e+00> : vector<256x128xf32>
    %55 = tpu.matmul %52, %54, %cst_68 {dimension_numbers = #tpu.dot_dimension_numbers<[1], [0], [0], [1], [0, 0, 1, 1], [], []>} : vector<256x4xf32>, vector<4x128xf32>, vector<256x128xf32> -> vector<256x128xf32>
    %56 = arith.addf %49, %55 : vector<256x128xf32>
    %c0_69 = arith.constant 0 : index
    %c2_70 = arith.constant 2 : index
    %c2_71 = arith.constant 2 : index
    %c0_72 = arith.constant 0 : index
    %57 = vector.load %arg1[%c0_69, %c2_70, %c2_71, %c0_72] : memref<1x18x18x4xf32, #tpu.memory_space<vmem>>, vector<1x16x16x4xf32>
    %58 = vector.shape_cast %57 : vector<1x16x16x4xf32> to vector<16x16x4xf32>
    %59 = vector.shape_cast %58 : vector<16x16x4xf32> to vector<256x4xf32>
    %c2_73 = arith.constant 2 : index
    %c2_74 = arith.constant 2 : index
    %c0_75 = arith.constant 0 : index
    %c0_76 = arith.constant 0 : index
    %60 = vector.load %arg2[%c2_73, %c2_74, %c0_75, %c0_76] : memref<3x3x4x128xf32, #tpu.memory_space<vmem>>, vector<1x1x4x128xf32>
    %61 = vector.shape_cast %60 : vector<1x1x4x128xf32> to vector<4x128xf32>
    %cst_77 = arith.constant dense<0.000000e+00> : vector<256x128xf32>
    %62 = tpu.matmul %59, %61, %cst_77 {dimension_numbers = #tpu.dot_dimension_numbers<[1], [0], [0], [1], [0, 0, 1, 1], [], []>} : vector<256x4xf32>, vector<4x128xf32>, vector<256x128xf32> -> vector<256x128xf32>
    %63 = arith.addf %56, %62 : vector<256x128xf32>
    %c0_78 = arith.constant 0 : index
    %c0_79 = arith.constant 0 : index
    %c0_80 = arith.constant 0 : index
    %64 = vector.load %arg3[%c0_78, %c0_79, %c0_80] : memref<1x256x128xf32, #tpu.memory_space<vmem>>, vector<1x256x128xf32>
    %65 = vector.shape_cast %64 : vector<1x256x128xf32> to vector<256x128xf32>
    %66 = vector.shape_cast %63 : vector<256x128xf32> to vector<1x256x128xf32>
    tpu.vector_store %arg3[%c0_78, %c0_79, %c0_80], %66 {strides = array<i32>} : memref<1x256x128xf32, #tpu.memory_space<vmem>>, vector<1x256x128xf32>,
    %cst_81 = arith.constant dense<0.000000e+00> : vector<128xf32>
    %67 = vector.multi_reduction <add>, %63, %cst_81 [0] : vector<256x128xf32> to vector<128xf32>
    %68 = vector.shape_cast %67 : vector<128xf32> to vector<1x128xf32>
    %69 = arith.mulf %63, %63 : vector<256x128xf32>
    %cst_82 = arith.constant dense<0.000000e+00> : vector<128xf32>
    %70 = vector.multi_reduction <add>, %69, %cst_82 [0] : vector<256x128xf32> to vector<128xf32>
    %71 = vector.shape_cast %70 : vector<128xf32> to vector<1x128xf32>
    %72 = tpu.concatenate %68, %71 in 0 : vector<1x128xf32>, vector<1x128xf32> -> vector<2x128xf32>
    %c0_83 = arith.constant 0 : index
    %c0_84 = arith.constant 0 : index
    %c0_85 = arith.constant 0 : index
    %73 = vector.load %arg4[%c0_83, %c0_84, %c0_85] : memref<1x2x128xf32, #tpu.memory_space<vmem>>, vector<1x2x128xf32>
    %74 = vector.shape_cast %73 : vector<1x2x128xf32> to vector<2x128xf32>
    %75 = vector.shape_cast %72 : vector<2x128xf32> to vector<1x2x128xf32>
    tpu.vector_store %arg4[%c0_83, %c0_84, %c0_85], %75 {strides = array<i32>} : memref<1x2x128xf32, #tpu.memory_space<vmem>>, vector<1x2x128xf32>,
    return
  }
  func.func @transform_0(%arg0: i32) -> (i32, i32, i32, i32) {
    %c0_i32 = arith.constant 0 : i32
    %c0_i32_0 = arith.constant 0 : i32
    %c0_i32_1 = arith.constant 0 : i32
    %c0_i32_2 = arith.constant 0 : i32
    return %arg0, %c0_i32, %c0_i32_0, %c0_i32_1 : i32, i32, i32, i32
  }
  func.func @transform_1(%arg0: i32) -> (i32, i32, i32, i32) {
    %c0_i32 = arith.constant 0 : i32
    %c0_i32_0 = arith.constant 0 : i32
    %c0_i32_1 = arith.constant 0 : i32
    %c0_i32_2 = arith.constant 0 : i32
    %c0_i32_3 = arith.constant 0 : i32
    return %c0_i32, %c0_i32_0, %c0_i32_1, %c0_i32_2 : i32, i32, i32, i32
  }
  func.func @transform_2(%arg0: i32) -> (i32, i32, i32) {
    %c0_i32 = arith.constant 0 : i32
    %c0_i32_0 = arith.constant 0 : i32
    %c0_i32_1 = arith.constant 0 : i32
    return %arg0, %c0_i32, %c0_i32_0 : i32, i32, i32
  }
  func.func @transform_3(%arg0: i32) -> (i32, i32, i32) {
    %c0_i32 = arith.constant 0 : i32
    %c0_i32_0 = arith.constant 0 : i32
    %c0_i32_1 = arith.constant 0 : i32
    return %arg0, %c0_i32, %c0_i32_0 : i32, i32, i32
  }
}

module attributes {stable_mosaic.version = 11 : i64} {
  func.func @_bn_relu_kernel(%arg0: i32, %arg1: memref<1x256x128xf32, #tpu.memory_space<vmem>>, %arg2: memref<2x2x128xf32, #tpu.memory_space<vmem>>, %arg3: memref<1x128xf32, #tpu.memory_space<vmem>>, %arg4: memref<1x128xf32, #tpu.memory_space<vmem>>, %arg5: memref<1x256x128xf32, #tpu.memory_space<vmem>>) attributes {dimension_semantics = [#tpu.dimension_semantics<parallel>], iteration_bounds = array<i64: 2>, scalar_prefetch = 0 : i64, scratch_operands = 0 : i64, tpu.core_type = #tpu.core_type<tc>, window_params = [{transform_indices = @transform_0, window_bounds = array<i64: 1, 256, 128>}, {pipeline_mode = #tpu.pipeline_mode<synchronous>, transform_indices = @transform_1, window_bounds = array<i64: 2, 2, 128>}, {pipeline_mode = #tpu.pipeline_mode<synchronous>, transform_indices = @transform_2, window_bounds = array<i64: 1, 128>}, {pipeline_mode = #tpu.pipeline_mode<synchronous>, transform_indices = @transform_3, window_bounds = array<i64: 1, 128>}, {transform_indices = @transform_4, window_bounds = array<i64: 1, 256, 128>}]} {
    %c0 = arith.constant 0 : index
    %c0_0 = arith.constant 0 : index
    %c0_1 = arith.constant 0 : index
    %0 = vector.load %arg2[%c0, %c0_0, %c0_1] : memref<2x2x128xf32, #tpu.memory_space<vmem>>, vector<2x2x128xf32>
    %cst = arith.constant dense<0.000000e+00> : vector<2x128xf32>
    %1 = vector.multi_reduction <add>, %0, %cst [0] : vector<2x2x128xf32> to vector<2x128xf32>
    %2 = vector.extract_strided_slice %1 {offsets = [0, 0], sizes = [1, 128], strides = [1, 1]} : vector<2x128xf32> to vector<1x128xf32>
    %cst_2 = arith.constant 0.001953125 : f32
    %3 = vector.broadcast %cst_2 : f32 to vector<1x128xf32>
    %4 = arith.mulf %2, %3 : vector<1x128xf32>
    %5 = vector.extract_strided_slice %1 {offsets = [1, 0], sizes = [1, 128], strides = [1, 1]} : vector<2x128xf32> to vector<1x128xf32>
    %cst_3 = arith.constant 0.001953125 : f32
    %6 = vector.broadcast %cst_3 : f32 to vector<1x128xf32>
    %7 = arith.mulf %5, %6 : vector<1x128xf32>
    %8 = arith.mulf %4, %4 : vector<1x128xf32>
    %9 = arith.subf %7, %8 : vector<1x128xf32>
    %cst_4 = arith.constant 9.99999974E-6 : f32
    %10 = vector.broadcast %cst_4 : f32 to vector<1x128xf32>
    %11 = arith.addf %9, %10 : vector<1x128xf32>
    %12 = math.rsqrt %11 : vector<1x128xf32>
    %c0_5 = arith.constant 0 : index
    %c0_6 = arith.constant 0 : index
    %13 = vector.load %arg3[%c0_5, %c0_6] : memref<1x128xf32, #tpu.memory_space<vmem>>, vector<1x128xf32>
    %14 = arith.mulf %13, %12 : vector<1x128xf32>
    %c0_7 = arith.constant 0 : index
    %c0_8 = arith.constant 0 : index
    %15 = vector.load %arg4[%c0_7, %c0_8] : memref<1x128xf32, #tpu.memory_space<vmem>>, vector<1x128xf32>
    %16 = arith.mulf %4, %14 : vector<1x128xf32>
    %17 = arith.subf %15, %16 : vector<1x128xf32>
    %c0_9 = arith.constant 0 : index
    %c0_10 = arith.constant 0 : index
    %c0_11 = arith.constant 0 : index
    %18 = vector.load %arg1[%c0_9, %c0_10, %c0_11] : memref<1x256x128xf32, #tpu.memory_space<vmem>>, vector<1x256x128xf32>
    %19 = vector.shape_cast %18 : vector<1x256x128xf32> to vector<256x128xf32>
    %20 = vector.broadcast %14 : vector<1x128xf32> to vector<256x128xf32>
    %21 = arith.mulf %19, %20 : vector<256x128xf32>
    %22 = vector.broadcast %17 : vector<1x128xf32> to vector<256x128xf32>
    %23 = arith.addf %21, %22 : vector<256x128xf32>
    %cst_12 = arith.constant 0.000000e+00 : f32
    %24 = vector.broadcast %cst_12 : f32 to vector<256x128xf32>
    %25 = arith.maximumf %23, %24 : vector<256x128xf32>
    %c0_13 = arith.constant 0 : index
    %c0_14 = arith.constant 0 : index
    %c0_15 = arith.constant 0 : index
    %26 = vector.load %arg5[%c0_13, %c0_14, %c0_15] : memref<1x256x128xf32, #tpu.memory_space<vmem>>, vector<1x256x128xf32>
    %27 = vector.shape_cast %26 : vector<1x256x128xf32> to vector<256x128xf32>
    %28 = vector.shape_cast %25 : vector<256x128xf32> to vector<1x256x128xf32>
    tpu.vector_store %arg5[%c0_13, %c0_14, %c0_15], %28 {strides = array<i32>} : memref<1x256x128xf32, #tpu.memory_space<vmem>>, vector<1x256x128xf32>,
    return
  }
  func.func @transform_0(%arg0: i32) -> (i32, i32, i32) {
    %c0_i32 = arith.constant 0 : i32
    %c0_i32_0 = arith.constant 0 : i32
    %c0_i32_1 = arith.constant 0 : i32
    return %arg0, %c0_i32, %c0_i32_0 : i32, i32, i32
  }
  func.func @transform_1(%arg0: i32) -> (i32, i32, i32) {
    %c0_i32 = arith.constant 0 : i32
    %c0_i32_0 = arith.constant 0 : i32
    %c0_i32_1 = arith.constant 0 : i32
    %c0_i32_2 = arith.constant 0 : i32
    return %c0_i32, %c0_i32_0, %c0_i32_1 : i32, i32, i32
  }
  func.func @transform_2(%arg0: i32) -> (i32, i32) {
    %c0_i32 = arith.constant 0 : i32
    %c0_i32_0 = arith.constant 0 : i32
    %c0_i32_1 = arith.constant 0 : i32
    return %c0_i32, %c0_i32_0 : i32, i32
  }
  func.func @transform_3(%arg0: i32) -> (i32, i32) {
    %c0_i32 = arith.constant 0 : i32
    %c0_i32_0 = arith.constant 0 : i32
    %c0_i32_1 = arith.constant 0 : i32
    return %c0_i32, %c0_i32_0 : i32, i32
  }
  func.func @transform_4(%arg0: i32) -> (i32, i32, i32) {
    %c0_i32 = arith.constant 0 : i32
    %c0_i32_0 = arith.constant 0 : i32
    %c0_i32_1 = arith.constant 0 : i32
    return %arg0, %c0_i32, %c0_i32_0 : i32, i32, i32
  }
}

module attributes {stable_mosaic.version = 11 : i64} {
  func.func @_conv3x3_stats_kernel(%arg0: i32, %arg1: memref<1x18x18x128xf32, #tpu.memory_space<vmem>>, %arg2: memref<3x3x128x128xf32, #tpu.memory_space<vmem>>, %arg3: memref<1x256x128xf32, #tpu.memory_space<vmem>>, %arg4: memref<1x2x128xf32, #tpu.memory_space<vmem>>) attributes {dimension_semantics = [#tpu.dimension_semantics<parallel>], iteration_bounds = array<i64: 2>, scalar_prefetch = 0 : i64, scratch_operands = 0 : i64, tpu.core_type = #tpu.core_type<tc>, window_params = [{transform_indices = @transform_0, window_bounds = array<i64: 1, 18, 18, 128>}, {pipeline_mode = #tpu.pipeline_mode<synchronous>, transform_indices = @transform_1, window_bounds = array<i64: 3, 3, 128, 128>}, {transform_indices = @transform_2, window_bounds = array<i64: 1, 256, 128>}, {transform_indices = @transform_3, window_bounds = array<i64: 1, 2, 128>}]} {
    %cst = arith.constant 0.000000e+00 : f32
    %0 = vector.broadcast %cst : f32 to vector<256x128xf32>
    %c0 = arith.constant 0 : index
    %c0_0 = arith.constant 0 : index
    %c0_1 = arith.constant 0 : index
    %c0_2 = arith.constant 0 : index
    %1 = vector.load %arg1[%c0, %c0_0, %c0_1, %c0_2] : memref<1x18x18x128xf32, #tpu.memory_space<vmem>>, vector<1x16x16x128xf32>
    %2 = vector.shape_cast %1 : vector<1x16x16x128xf32> to vector<16x16x128xf32>
    %3 = vector.shape_cast %2 : vector<16x16x128xf32> to vector<256x128xf32>
    %c0_3 = arith.constant 0 : index
    %c0_4 = arith.constant 0 : index
    %c0_5 = arith.constant 0 : index
    %c0_6 = arith.constant 0 : index
    %4 = vector.load %arg2[%c0_3, %c0_4, %c0_5, %c0_6] : memref<3x3x128x128xf32, #tpu.memory_space<vmem>>, vector<1x1x128x128xf32>
    %5 = vector.shape_cast %4 : vector<1x1x128x128xf32> to vector<128x128xf32>
    %cst_7 = arith.constant dense<0.000000e+00> : vector<256x128xf32>
    %6 = tpu.matmul %3, %5, %cst_7 {dimension_numbers = #tpu.dot_dimension_numbers<[1], [0], [0], [1], [0, 0, 1, 1], [], []>} : vector<256x128xf32>, vector<128x128xf32>, vector<256x128xf32> -> vector<256x128xf32>
    %7 = arith.addf %0, %6 : vector<256x128xf32>
    %c0_8 = arith.constant 0 : index
    %c0_9 = arith.constant 0 : index
    %c1 = arith.constant 1 : index
    %c0_10 = arith.constant 0 : index
    %8 = vector.load %arg1[%c0_8, %c0_9, %c1, %c0_10] : memref<1x18x18x128xf32, #tpu.memory_space<vmem>>, vector<1x16x16x128xf32>
    %9 = vector.shape_cast %8 : vector<1x16x16x128xf32> to vector<16x16x128xf32>
    %10 = vector.shape_cast %9 : vector<16x16x128xf32> to vector<256x128xf32>
    %c0_11 = arith.constant 0 : index
    %c1_12 = arith.constant 1 : index
    %c0_13 = arith.constant 0 : index
    %c0_14 = arith.constant 0 : index
    %11 = vector.load %arg2[%c0_11, %c1_12, %c0_13, %c0_14] : memref<3x3x128x128xf32, #tpu.memory_space<vmem>>, vector<1x1x128x128xf32>
    %12 = vector.shape_cast %11 : vector<1x1x128x128xf32> to vector<128x128xf32>
    %cst_15 = arith.constant dense<0.000000e+00> : vector<256x128xf32>
    %13 = tpu.matmul %10, %12, %cst_15 {dimension_numbers = #tpu.dot_dimension_numbers<[1], [0], [0], [1], [0, 0, 1, 1], [], []>} : vector<256x128xf32>, vector<128x128xf32>, vector<256x128xf32> -> vector<256x128xf32>
    %14 = arith.addf %7, %13 : vector<256x128xf32>
    %c0_16 = arith.constant 0 : index
    %c0_17 = arith.constant 0 : index
    %c2 = arith.constant 2 : index
    %c0_18 = arith.constant 0 : index
    %15 = vector.load %arg1[%c0_16, %c0_17, %c2, %c0_18] : memref<1x18x18x128xf32, #tpu.memory_space<vmem>>, vector<1x16x16x128xf32>
    %16 = vector.shape_cast %15 : vector<1x16x16x128xf32> to vector<16x16x128xf32>
    %17 = vector.shape_cast %16 : vector<16x16x128xf32> to vector<256x128xf32>
    %c0_19 = arith.constant 0 : index
    %c2_20 = arith.constant 2 : index
    %c0_21 = arith.constant 0 : index
    %c0_22 = arith.constant 0 : index
    %18 = vector.load %arg2[%c0_19, %c2_20, %c0_21, %c0_22] : memref<3x3x128x128xf32, #tpu.memory_space<vmem>>, vector<1x1x128x128xf32>
    %19 = vector.shape_cast %18 : vector<1x1x128x128xf32> to vector<128x128xf32>
    %cst_23 = arith.constant dense<0.000000e+00> : vector<256x128xf32>
    %20 = tpu.matmul %17, %19, %cst_23 {dimension_numbers = #tpu.dot_dimension_numbers<[1], [0], [0], [1], [0, 0, 1, 1], [], []>} : vector<256x128xf32>, vector<128x128xf32>, vector<256x128xf32> -> vector<256x128xf32>
    %21 = arith.addf %14, %20 : vector<256x128xf32>
    %c0_24 = arith.constant 0 : index
    %c1_25 = arith.constant 1 : index
    %c0_26 = arith.constant 0 : index
    %c0_27 = arith.constant 0 : index
    %22 = vector.load %arg1[%c0_24, %c1_25, %c0_26, %c0_27] : memref<1x18x18x128xf32, #tpu.memory_space<vmem>>, vector<1x16x16x128xf32>
    %23 = vector.shape_cast %22 : vector<1x16x16x128xf32> to vector<16x16x128xf32>
    %24 = vector.shape_cast %23 : vector<16x16x128xf32> to vector<256x128xf32>
    %c1_28 = arith.constant 1 : index
    %c0_29 = arith.constant 0 : index
    %c0_30 = arith.constant 0 : index
    %c0_31 = arith.constant 0 : index
    %25 = vector.load %arg2[%c1_28, %c0_29, %c0_30, %c0_31] : memref<3x3x128x128xf32, #tpu.memory_space<vmem>>, vector<1x1x128x128xf32>
    %26 = vector.shape_cast %25 : vector<1x1x128x128xf32> to vector<128x128xf32>
    %cst_32 = arith.constant dense<0.000000e+00> : vector<256x128xf32>
    %27 = tpu.matmul %24, %26, %cst_32 {dimension_numbers = #tpu.dot_dimension_numbers<[1], [0], [0], [1], [0, 0, 1, 1], [], []>} : vector<256x128xf32>, vector<128x128xf32>, vector<256x128xf32> -> vector<256x128xf32>
    %28 = arith.addf %21, %27 : vector<256x128xf32>
    %c0_33 = arith.constant 0 : index
    %c1_34 = arith.constant 1 : index
    %c1_35 = arith.constant 1 : index
    %c0_36 = arith.constant 0 : index
    %29 = vector.load %arg1[%c0_33, %c1_34, %c1_35, %c0_36] : memref<1x18x18x128xf32, #tpu.memory_space<vmem>>, vector<1x16x16x128xf32>
    %30 = vector.shape_cast %29 : vector<1x16x16x128xf32> to vector<16x16x128xf32>
    %31 = vector.shape_cast %30 : vector<16x16x128xf32> to vector<256x128xf32>
    %c1_37 = arith.constant 1 : index
    %c1_38 = arith.constant 1 : index
    %c0_39 = arith.constant 0 : index
    %c0_40 = arith.constant 0 : index
    %32 = vector.load %arg2[%c1_37, %c1_38, %c0_39, %c0_40] : memref<3x3x128x128xf32, #tpu.memory_space<vmem>>, vector<1x1x128x128xf32>
    %33 = vector.shape_cast %32 : vector<1x1x128x128xf32> to vector<128x128xf32>
    %cst_41 = arith.constant dense<0.000000e+00> : vector<256x128xf32>
    %34 = tpu.matmul %31, %33, %cst_41 {dimension_numbers = #tpu.dot_dimension_numbers<[1], [0], [0], [1], [0, 0, 1, 1], [], []>} : vector<256x128xf32>, vector<128x128xf32>, vector<256x128xf32> -> vector<256x128xf32>
    %35 = arith.addf %28, %34 : vector<256x128xf32>
    %c0_42 = arith.constant 0 : index
    %c1_43 = arith.constant 1 : index
    %c2_44 = arith.constant 2 : index
    %c0_45 = arith.constant 0 : index
    %36 = vector.load %arg1[%c0_42, %c1_43, %c2_44, %c0_45] : memref<1x18x18x128xf32, #tpu.memory_space<vmem>>, vector<1x16x16x128xf32>
    %37 = vector.shape_cast %36 : vector<1x16x16x128xf32> to vector<16x16x128xf32>
    %38 = vector.shape_cast %37 : vector<16x16x128xf32> to vector<256x128xf32>
    %c1_46 = arith.constant 1 : index
    %c2_47 = arith.constant 2 : index
    %c0_48 = arith.constant 0 : index
    %c0_49 = arith.constant 0 : index
    %39 = vector.load %arg2[%c1_46, %c2_47, %c0_48, %c0_49] : memref<3x3x128x128xf32, #tpu.memory_space<vmem>>, vector<1x1x128x128xf32>
    %40 = vector.shape_cast %39 : vector<1x1x128x128xf32> to vector<128x128xf32>
    %cst_50 = arith.constant dense<0.000000e+00> : vector<256x128xf32>
    %41 = tpu.matmul %38, %40, %cst_50 {dimension_numbers = #tpu.dot_dimension_numbers<[1], [0], [0], [1], [0, 0, 1, 1], [], []>} : vector<256x128xf32>, vector<128x128xf32>, vector<256x128xf32> -> vector<256x128xf32>
    %42 = arith.addf %35, %41 : vector<256x128xf32>
    %c0_51 = arith.constant 0 : index
    %c2_52 = arith.constant 2 : index
    %c0_53 = arith.constant 0 : index
    %c0_54 = arith.constant 0 : index
    %43 = vector.load %arg1[%c0_51, %c2_52, %c0_53, %c0_54] : memref<1x18x18x128xf32, #tpu.memory_space<vmem>>, vector<1x16x16x128xf32>
    %44 = vector.shape_cast %43 : vector<1x16x16x128xf32> to vector<16x16x128xf32>
    %45 = vector.shape_cast %44 : vector<16x16x128xf32> to vector<256x128xf32>
    %c2_55 = arith.constant 2 : index
    %c0_56 = arith.constant 0 : index
    %c0_57 = arith.constant 0 : index
    %c0_58 = arith.constant 0 : index
    %46 = vector.load %arg2[%c2_55, %c0_56, %c0_57, %c0_58] : memref<3x3x128x128xf32, #tpu.memory_space<vmem>>, vector<1x1x128x128xf32>
    %47 = vector.shape_cast %46 : vector<1x1x128x128xf32> to vector<128x128xf32>
    %cst_59 = arith.constant dense<0.000000e+00> : vector<256x128xf32>
    %48 = tpu.matmul %45, %47, %cst_59 {dimension_numbers = #tpu.dot_dimension_numbers<[1], [0], [0], [1], [0, 0, 1, 1], [], []>} : vector<256x128xf32>, vector<128x128xf32>, vector<256x128xf32> -> vector<256x128xf32>
    %49 = arith.addf %42, %48 : vector<256x128xf32>
    %c0_60 = arith.constant 0 : index
    %c2_61 = arith.constant 2 : index
    %c1_62 = arith.constant 1 : index
    %c0_63 = arith.constant 0 : index
    %50 = vector.load %arg1[%c0_60, %c2_61, %c1_62, %c0_63] : memref<1x18x18x128xf32, #tpu.memory_space<vmem>>, vector<1x16x16x128xf32>
    %51 = vector.shape_cast %50 : vector<1x16x16x128xf32> to vector<16x16x128xf32>
    %52 = vector.shape_cast %51 : vector<16x16x128xf32> to vector<256x128xf32>
    %c2_64 = arith.constant 2 : index
    %c1_65 = arith.constant 1 : index
    %c0_66 = arith.constant 0 : index
    %c0_67 = arith.constant 0 : index
    %53 = vector.load %arg2[%c2_64, %c1_65, %c0_66, %c0_67] : memref<3x3x128x128xf32, #tpu.memory_space<vmem>>, vector<1x1x128x128xf32>
    %54 = vector.shape_cast %53 : vector<1x1x128x128xf32> to vector<128x128xf32>
    %cst_68 = arith.constant dense<0.000000e+00> : vector<256x128xf32>
    %55 = tpu.matmul %52, %54, %cst_68 {dimension_numbers = #tpu.dot_dimension_numbers<[1], [0], [0], [1], [0, 0, 1, 1], [], []>} : vector<256x128xf32>, vector<128x128xf32>, vector<256x128xf32> -> vector<256x128xf32>
    %56 = arith.addf %49, %55 : vector<256x128xf32>
    %c0_69 = arith.constant 0 : index
    %c2_70 = arith.constant 2 : index
    %c2_71 = arith.constant 2 : index
    %c0_72 = arith.constant 0 : index
    %57 = vector.load %arg1[%c0_69, %c2_70, %c2_71, %c0_72] : memref<1x18x18x128xf32, #tpu.memory_space<vmem>>, vector<1x16x16x128xf32>
    %58 = vector.shape_cast %57 : vector<1x16x16x128xf32> to vector<16x16x128xf32>
    %59 = vector.shape_cast %58 : vector<16x16x128xf32> to vector<256x128xf32>
    %c2_73 = arith.constant 2 : index
    %c2_74 = arith.constant 2 : index
    %c0_75 = arith.constant 0 : index
    %c0_76 = arith.constant 0 : index
    %60 = vector.load %arg2[%c2_73, %c2_74, %c0_75, %c0_76] : memref<3x3x128x128xf32, #tpu.memory_space<vmem>>, vector<1x1x128x128xf32>
    %61 = vector.shape_cast %60 : vector<1x1x128x128xf32> to vector<128x128xf32>
    %cst_77 = arith.constant dense<0.000000e+00> : vector<256x128xf32>
    %62 = tpu.matmul %59, %61, %cst_77 {dimension_numbers = #tpu.dot_dimension_numbers<[1], [0], [0], [1], [0, 0, 1, 1], [], []>} : vector<256x128xf32>, vector<128x128xf32>, vector<256x128xf32> -> vector<256x128xf32>
    %63 = arith.addf %56, %62 : vector<256x128xf32>
    %c0_78 = arith.constant 0 : index
    %c0_79 = arith.constant 0 : index
    %c0_80 = arith.constant 0 : index
    %64 = vector.load %arg3[%c0_78, %c0_79, %c0_80] : memref<1x256x128xf32, #tpu.memory_space<vmem>>, vector<1x256x128xf32>
    %65 = vector.shape_cast %64 : vector<1x256x128xf32> to vector<256x128xf32>
    %66 = vector.shape_cast %63 : vector<256x128xf32> to vector<1x256x128xf32>
    tpu.vector_store %arg3[%c0_78, %c0_79, %c0_80], %66 {strides = array<i32>} : memref<1x256x128xf32, #tpu.memory_space<vmem>>, vector<1x256x128xf32>,
    %cst_81 = arith.constant dense<0.000000e+00> : vector<128xf32>
    %67 = vector.multi_reduction <add>, %63, %cst_81 [0] : vector<256x128xf32> to vector<128xf32>
    %68 = vector.shape_cast %67 : vector<128xf32> to vector<1x128xf32>
    %69 = arith.mulf %63, %63 : vector<256x128xf32>
    %cst_82 = arith.constant dense<0.000000e+00> : vector<128xf32>
    %70 = vector.multi_reduction <add>, %69, %cst_82 [0] : vector<256x128xf32> to vector<128xf32>
    %71 = vector.shape_cast %70 : vector<128xf32> to vector<1x128xf32>
    %72 = tpu.concatenate %68, %71 in 0 : vector<1x128xf32>, vector<1x128xf32> -> vector<2x128xf32>
    %c0_83 = arith.constant 0 : index
    %c0_84 = arith.constant 0 : index
    %c0_85 = arith.constant 0 : index
    %73 = vector.load %arg4[%c0_83, %c0_84, %c0_85] : memref<1x2x128xf32, #tpu.memory_space<vmem>>, vector<1x2x128xf32>
    %74 = vector.shape_cast %73 : vector<1x2x128xf32> to vector<2x128xf32>
    %75 = vector.shape_cast %72 : vector<2x128xf32> to vector<1x2x128xf32>
    tpu.vector_store %arg4[%c0_83, %c0_84, %c0_85], %75 {strides = array<i32>} : memref<1x2x128xf32, #tpu.memory_space<vmem>>, vector<1x2x128xf32>,
    return
  }
  func.func @transform_0(%arg0: i32) -> (i32, i32, i32, i32) {
    %c0_i32 = arith.constant 0 : i32
    %c0_i32_0 = arith.constant 0 : i32
    %c0_i32_1 = arith.constant 0 : i32
    %c0_i32_2 = arith.constant 0 : i32
    return %arg0, %c0_i32, %c0_i32_0, %c0_i32_1 : i32, i32, i32, i32
  }
  func.func @transform_1(%arg0: i32) -> (i32, i32, i32, i32) {
    %c0_i32 = arith.constant 0 : i32
    %c0_i32_0 = arith.constant 0 : i32
    %c0_i32_1 = arith.constant 0 : i32
    %c0_i32_2 = arith.constant 0 : i32
    %c0_i32_3 = arith.constant 0 : i32
    return %c0_i32, %c0_i32_0, %c0_i32_1, %c0_i32_2 : i32, i32, i32, i32
  }
  func.func @transform_2(%arg0: i32) -> (i32, i32, i32) {
    %c0_i32 = arith.constant 0 : i32
    %c0_i32_0 = arith.constant 0 : i32
    %c0_i32_1 = arith.constant 0 : i32
    return %arg0, %c0_i32, %c0_i32_0 : i32, i32, i32
  }
  func.func @transform_3(%arg0: i32) -> (i32, i32, i32) {
    %c0_i32 = arith.constant 0 : i32
    %c0_i32_0 = arith.constant 0 : i32
    %c0_i32_1 = arith.constant 0 : i32
    return %arg0, %c0_i32, %c0_i32_0 : i32, i32, i32
  }
}

</mosaic_0001>

<llo_original>
// kernel: double_conv.5
$region0: #{double_conv.5}
  #allocation0 [shape = 'u32[]', space=smem, size = 0x4, offset = 0x4, fixed_abs, tag = 'smem constant byte address 0x4 - core index']
  #allocation1 [shape = 'u32[144,128]{1,0:T(1,128)}', space=vmem, size = 0x12000, scoped, tag = 'internal scratch']
  %s0 = inlined_call_operand.vmem [shape: f32[2,256,128], index: 0, kind: input, shape index: {}]
  %s1 = inlined_call_operand.vmem [shape: f32[2,2,128], index: 1, kind: input, shape index: {}]
  %s2 = inlined_call_operand.vmem [shape: f32[1,128], index: 2, kind: input, shape index: {}]
  %s3 = inlined_call_operand.vmem [shape: f32[1,128], index: 3, kind: input, shape index: {}]
  %s4 = inlined_call_operand.vmem [shape: f32[2,256,128], index: 4, kind: output, shape index: {}]
  %s5 = sld [smem:[#allocation0]]
  $region49: #{double_conv.5} parent=0
    _
  %s7 = ssub.s32 1, %s5
  %s8 = scalar_select 0, %s7, %s5
  loop: start=0, step=1, limit=4
  $region2: #{double_conv.5} parent=0 // loop_pre_header
    _
  $region3: #{double_conv.5} parent=0 // loop_header
    %s10 = sphi 0, %s14
    %p11 = scmp.ge.s32.totalorder %s10, 4
    %s20 = sphi 0, %s22
    %s23 = sphi 0, %s20
    %s24 = sphi 0, %s23
    %s40 = sphi 0, %s24
    %s44 = sphi 0, %s44
    %s46 = sphi 0, %s44
    %s47 = sphi 0, %s46
    %s61 = sphi 0, %s47
    %s65 = sphi 0, %s65
    %s67 = sphi 0, %s65
    %s68 = sphi 0, %s67
    %s82 = sphi 0, %s68
    %s86 = sphi 0, %s86
    %s88 = sphi 0, %s86
    %s89 = sphi 0, %s88
    %s103 = sphi 0, %s89
    %s109 = sphi 0, %s111
    %s112 = sphi 0, %s109
    %s113 = sphi 0, %s112
    %s129 = sphi 0, %s113
  $region4: #{double_conv.5} parent=0 // loop_header_branch
    %13 = sbr.rel (%p11) target = $region8
  $region5: #{double_conv.5} parent=0 // loop_body
    %s15 = ssub.s32 %s10, 1
    %s16 = ssub.s32 %s10, 2
    %s17 = sadd.s32 %s10, 1
    %s18 = ssub.s32 %s10, %s17
    %p19 = scmp.eq.s32.totalorder %s18, 0
    %s21 = sadd.s32 %s20, 1
    %s22 = scalar_select %p19, %s20, %s21
    %p25 = pneg %p19
    %p26 = scmp.eq.s32.totalorder %s10, 1
    %p27 = por %p25, %p26
    %p28 = scmp.ne.s32.totalorder %s20, %s23
    %p29 = scmp.eq.s32.totalorder %s10, 0
    %p30 = por %p28, %p29
    %p31 = scmp.ne.s32.totalorder %s20, %s23
    %p32 = scmp.eq.s32.totalorder %s15, 1
    %p33 = por %p31, %p32
    %p34 = scmp.ne.s32.totalorder %s23, %s24
    %p35 = scmp.eq.s32.totalorder %s15, 0
    %p36 = por %p34, %p35
    %p37 = scmp.ne.s32.totalorder %s23, %s24
    %p38 = scmp.eq.s32.totalorder %s16, 1
    %p39 = por %p37, %p38
    %p41 = scmp.ne.s32.totalorder %s24, %s40
    %p42 = scmp.eq.s32.totalorder %s16, 0
    %p43 = por %p41, %p42
    %s45 = sadd.s32 %s44, 1
    %p48 = scmp.eq.s32.totalorder %s10, 1
    %p49 = scmp.ne.s32.totalorder %s44, %s46
    %p50 = scmp.eq.s32.totalorder %s10, 0
    %p51 = por %p49, %p50
    %p52 = scmp.ne.s32.totalorder %s44, %s46
    %p53 = scmp.eq.s32.totalorder %s15, 1
    %p54 = por %p52, %p53
    %p55 = scmp.ne.s32.totalorder %s46, %s47
    %p56 = scmp.eq.s32.totalorder %s15, 0
    %p57 = por %p55, %p56
    %p58 = scmp.ne.s32.totalorder %s46, %s47
    %p59 = scmp.eq.s32.totalorder %s16, 1
    %p60 = por %p58, %p59
    %p62 = scmp.ne.s32.totalorder %s47, %s61
    %p63 = scmp.eq.s32.totalorder %s16, 0
    %p64 = por %p62, %p63
    %s66 = sadd.s32 %s65, 1
    %p69 = scmp.eq.s32.totalorder %s10, 1
    %p70 = scmp.ne.s32.totalorder %s65, %s67
    %p71 = scmp.eq.s32.totalorder %s10, 0
    %p72 = por %p70, %p71
    %p73 = scmp.ne.s32.totalorder %s65, %s67
    %p74 = scmp.eq.s32.totalorder %s15, 1
    %p75 = por %p73, %p74
    %p76 = scmp.ne.s32.totalorder %s67, %s68
    %p77 = scmp.eq.s32.totalorder %s15, 0
    %p78 = por %p76, %p77
    %p79 = scmp.ne.s32.totalorder %s67, %s68
    %p80 = scmp.eq.s32.totalorder %s16, 1
    %p81 = por %p79, %p80
    %p83 = scmp.ne.s32.totalorder %s68, %s82
    %p84 = scmp.eq.s32.totalorder %s16, 0
    %p85 = por %p83, %p84
    %s87 = sadd.s32 %s86, 1
    %p90 = scmp.eq.s32.totalorder %s10, 1
    %p91 = scmp.ne.s32.totalorder %s86, %s88
    %p92 = scmp.eq.s32.totalorder %s10, 0
    %p93 = por %p91, %p92
    %p94 = scmp.ne.s32.totalorder %s86, %s88
    %p95 = scmp.eq.s32.totalorder %s15, 1
    %p96 = por %p94, %p95
    %p97 = scmp.ne.s32.totalorder %s88, %s89
    %p98 = scmp.eq.s32.totalorder %s15, 0
    %p99 = por %p97, %p98
    %p100 = scmp.ne.s32.totalorder %s88, %s89
    %p101 = scmp.eq.s32.totalorder %s16, 1
    %p102 = por %p100, %p101
    %p104 = scmp.ne.s32.totalorder %s89, %s103
    %p105 = scmp.eq.s32.totalorder %s16, 0
    %p106 = por %p104, %p105
    %s107 = ssub.s32 %s10, %s17
    %p108 = scmp.eq.s32.totalorder %s107, 0
    %s110 = sadd.s32 %s109, 1
    %s111 = scalar_select %p108, %s109, %s110
    %p114 = pneg %p108
    %p115 = scmp.eq.s32.totalorder %s10, 1
    %p116 = por %p114, %p115
    %p117 = scmp.ne.s32.totalorder %s109, %s112
    %p118 = scmp.eq.s32.totalorder %s10, 0
    %p119 = por %p117, %p118
    %p120 = scmp.ne.s32.totalorder %s109, %s112
    %p121 = scmp.eq.s32.totalorder %s15, 1
    %p122 = por %p120, %p121
    %p123 = scmp.ne.s32.totalorder %s112, %s113
    %p124 = scmp.eq.s32.totalorder %s15, 0
    %p125 = por %p123, %p124
    %p126 = scmp.ne.s32.totalorder %s112, %s113
    %p127 = scmp.eq.s32.totalorder %s16, 1
    %p128 = por %p126, %p127
    %p130 = scmp.ne.s32.totalorder %s113, %s129
    %p131 = scmp.eq.s32.totalorder %s16, 0
    %p132 = por %p130, %p131
    %p133 = scmp.le.s32.totalorder 1, %s10
    %p134 = scmp.lt.s32.totalorder %s10, 3
    %p135 = pnand %p133, %p134
    %p136 = pneg %p135
    // Predicated region
    $region9: #{double_conv.5} parent=5 // pred_check
      _
    $region10: #{double_conv.5} parent=5 // pred_check_branch
      %138 = sbr.rel (%p135) target = $region12
    $region11: #{double_conv.5} parent=5 // pred_region
      %s139 = ssub.s32 %s10, 1
      // Predicated region
      $region13: #{double_conv.5} parent=11 // pred_check
        %p140 = pneg %p57
      $region14: #{double_conv.5} parent=11 // pred_check_branch
        %142 = sbr.rel (%p140) target = $region16
      $region15: #{double_conv.5} parent=11 // pred_region
        _
      $region16: #{double_conv.5} parent=11 // pred_fallthru
        _
      // Predicated region
      $region17: #{double_conv.5} parent=11 // pred_check
        %p143 = pneg %p78
      $region18: #{double_conv.5} parent=11 // pred_check_branch
        %145 = sbr.rel (%p143) target = $region20
      $region19: #{double_conv.5} parent=11 // pred_region
        _
      $region20: #{double_conv.5} parent=11 // pred_fallthru
        _
      // Predicated region
      $region21: #{double_conv.5} parent=11 // pred_check
        %p146 = pneg %p99
      $region22: #{double_conv.5} parent=11 // pred_check_branch
        %148 = sbr.rel (%p146) target = $region24
      $region23: #{double_conv.5} parent=11 // pred_region
        _
      $region24: #{double_conv.5} parent=11 // pred_fallthru
        _
    $region12: #{double_conv.5} parent=5 // pred_fallthru
      _
    %p149 = scmp.lt.s32.totalorder %s10, 2
    // Predicated region
    $region25: #{double_conv.5} parent=5 // pred_check
      %p150 = pneg %p149
    $region26: #{double_conv.5} parent=5 // pred_check_branch
      %152 = sbr.rel (%p150) target = $region28
    $region27: #{double_conv.5} parent=5 // pred_region
      // Predicated region
      $region29: #{double_conv.5} parent=27 // pred_check
        %p153 = pneg %p30
      $region30: #{double_conv.5} parent=27 // pred_check_branch
        %155 = sbr.rel (%p153) target = $region32
      $region31: #{double_conv.5} parent=27 // pred_region
        %p156 = scmp.lt.s32.totalorder %s10, 1
        %s157 = scalar_select %p156, %s10, 1
        %s158 = smul.addr %s157, 32
        %s159 = smul.addr %s158, 8
        %s160 = scalar_lea.vmem %s0, %s159
      $region32: #{double_conv.5} parent=27 // pred_fallthru
        _
    $region28: #{double_conv.5} parent=5 // pred_fallthru
      _
    %p161 = scmp.le.s32.totalorder 1, %s10
    %p162 = scmp.lt.s32.totalorder %s10, 3
    %p163 = pnand %p161, %p162
    %p164 = pneg %p163
    // Predicated region
    $region33: #{double_conv.5} parent=5 // pred_check
      _
    $region34: #{double_conv.5} parent=5 // pred_check_branch
      %166 = sbr.rel (%p163) target = $region36
    $region35: #{double_conv.5} parent=5 // pred_region
      %s167 = ssub.s32 %s10, 1
      %p168 = scmp.lt.s32.totalorder %s15, 1
      %s169 = scalar_select %p168, %s15, 1
      %s170 = smul.addr %s169, 32
      %s171 = smul.addr %s170, 8
      %s172 = scalar_lea.vmem %s0, %s171
      %p173 = pneg %p36
      %p174 = pneg %p33
      %p175 = pneg %p57
      %p176 = pneg %p54
      %p177 = pneg %p78
      %p178 = pneg %p75
      %p179 = pneg %p99
      %p180 = pneg %p96
      %p181 = pneg %p125
      %p182 = pneg %p122
      %p183 = scmp.lt.s32.totalorder %s15, 1
      %s184 = scalar_select %p183, %s15, 1
      %s185 = smul.addr %s184, 32
      %s186 = smul.addr %s185, 8
      %s187 = scalar_lea.vmem %s4, %s186
      %p188 = scmp.lt.s32.totalorder %s15, 1
      %s189 = scalar_select %p188, %s15, 1
      %s190 = smul.addr %s189, 32
      %s191 = smul.addr %s190, 8
      %s192 = scalar_lea.vmem %s0, %s191
      %p193 = scmp.lt.s32.totalorder %s15, 1
      %s194 = scalar_select %p193, %s15, 1
      %s195 = smul.addr %s194, 32
      %s196 = smul.addr %s195, 8
      %s197 = scalar_lea.vmem %s4, %s196
      %v198 = vld [vmem:[%s1] sm:$0x3]
      %v199 = vld [vmem:[%s1 + $0x2] sm:$0x3]
      %vm200 = vcmask 1041408
      %v201 = vsel %vm200, %v198, 0.0
      %v202 = vsel %vm200, %v199, 0.0
      %v203 = vadd.f32 %v201, %v202
      %v204 = vmul.f32 %v203, 0.001953125
      %v205 = vmul.f32 %v204, %v204
      %v207 = vrot.slane %v205, 7
      %v209 = vsub.f32 %v204, %v207
      %v210 = vadd.f32 %v209, 1e-05
      %v211 = vrsqrt.pop %v210
      %v212 = vld [vmem:[%s2] sm:$0x1]
      %v215 = vunpack.c.l.s4 1966171168
      %v216 = vunpack.c.0.s8 %v215
      %v217 = vlaneseq
      %v218 = vshrl.u32 %v217, 7
      %v219 = vsub.s32 %v216, %v218
      %v220 = vrot.slane %v211, %v219
      %v221 = vcombine.high %v220, %v220
      %v223 = vunpack.c.l.s4 1966171168
      %v224 = vunpack.c.0.s8 %v223
      %v225 = vlaneseq
      %v226 = vshrl.u32 %v225, 7
      %v227 = vsub.s32 %v224, %v226
      %v228 = vrot.slane %v221, %v227
      %v230 = vmul.f32 %v212, %v228
      %v231 = vld [vmem:[%s3] sm:$0x1]
      %v232 = vmul.f32 %v204, %v230
      %v233 = vsub.f32 %v231, %v232
      %v234 = vld [vmem:[%s192] sm:$0xff]
      %v235 = vld [vmem:[%s192 + $0x8] sm:$0xff]
      %v236 = vld [vmem:[%s192 + $0x10] sm:$0xff]
      %v237 = vld [vmem:[%s192 + $0x18] sm:$0xff]
      %v238 = vld [vmem:[%s192 + $0x20] sm:$0xff]
      %v239 = vld [vmem:[%s192 + $0x28] sm:$0xff]
      %v240 = vld [vmem:[%s192 + $0x30] sm:$0xff]
      %v241 = vld [vmem:[%s192 + $0x38] sm:$0xff]
      %v242 = vld [vmem:[%s192 + $0x40] sm:$0xff]
      %v243 = vld [vmem:[%s192 + $0x48] sm:$0xff]
      %v244 = vld [vmem:[%s192 + $0x50] sm:$0xff]
      %v245 = vld [vmem:[%s192 + $0x58] sm:$0xff]
      %v246 = vld [vmem:[%s192 + $0x60] sm:$0xff]
      %v247 = vld [vmem:[%s192 + $0x68] sm:$0xff]
      %v248 = vld [vmem:[%s192 + $0x70] sm:$0xff]
      %v249 = vld [vmem:[%s192 + $0x78] sm:$0xff]
      %v250 = vld [vmem:[%s192 + $0x80] sm:$0xff]
      %v251 = vld [vmem:[%s192 + $0x88] sm:$0xff]
      %v252 = vld [vmem:[%s192 + $0x90] sm:$0xff]
      %v253 = vld [vmem:[%s192 + $0x98] sm:$0xff]
      %v254 = vld [vmem:[%s192 + $0xa0] sm:$0xff]
      %v255 = vld [vmem:[%s192 + $0xa8] sm:$0xff]
      %v256 = vld [vmem:[%s192 + $0xb0] sm:$0xff]
      %v257 = vld [vmem:[%s192 + $0xb8] sm:$0xff]
      %v258 = vld [vmem:[%s192 + $0xc0] sm:$0xff]
      %v259 = vld [vmem:[%s192 + $0xc8] sm:$0xff]
      %v260 = vld [vmem:[%s192 + $0xd0] sm:$0xff]
      %v261 = vld [vmem:[%s192 + $0xd8] sm:$0xff]
      %v262 = vld [vmem:[%s192 + $0xe0] sm:$0xff]
      %v263 = vld [vmem:[%s192 + $0xe8] sm:$0xff]
      %v264 = vld [vmem:[%s192 + $0xf0] sm:$0xff]
      %v265 = vld [vmem:[%s192 + $0xf8] sm:$0xff]
      %v267 = vlaneseq
      %v268 = vshrl.u32 %v267, 7
      %v269 = vsub.s32 0, %v268
      %v270 = vrot.slane %v230, %v269
      %v272 = vmul.f32 %v234, %v270
      %v273 = vmul.f32 %v235, %v270
      %v274 = vmul.f32 %v236, %v270
      %v275 = vmul.f32 %v237, %v270
      %v276 = vmul.f32 %v238, %v270
      %v277 = vmul.f32 %v239, %v270
      %v278 = vmul.f32 %v240, %v270
      %v279 = vmul.f32 %v241, %v270
      %v280 = vmul.f32 %v242, %v270
      %v281 = vmul.f32 %v243, %v270
      %v282 = vmul.f32 %v244, %v270
      %v283 = vmul.f32 %v245, %v270
      %v284 = vmul.f32 %v246, %v270
      %v285 = vmul.f32 %v247, %v270
      %v286 = vmul.f32 %v248, %v270
      %v287 = vmul.f32 %v249, %v270
      %v288 = vmul.f32 %v250, %v270
      %v289 = vmul.f32 %v251, %v270
      %v290 = vmul.f32 %v252, %v270
      %v291 = vmul.f32 %v253, %v270
      %v292 = vmul.f32 %v254, %v270
      %v293 = vmul.f32 %v255, %v270
      %v294 = vmul.f32 %v256, %v270
      %v295 = vmul.f32 %v257, %v270
      %v296 = vmul.f32 %v258, %v270
      %v297 = vmul.f32 %v259, %v270
      %v298 = vmul.f32 %v260, %v270
      %v299 = vmul.f32 %v261, %v270
      %v300 = vmul.f32 %v262, %v270
      %v301 = vmul.f32 %v263, %v270
      %v302 = vmul.f32 %v264, %v270
      %v303 = vmul.f32 %v265, %v270
      %v305 = vlaneseq
      %v306 = vshrl.u32 %v305, 7
      %v307 = vsub.s32 0, %v306
      %v308 = vrot.slane %v233, %v307
      %v310 = vadd.f32 %v272, %v308
      %v311 = vadd.f32 %v273, %v308
      %v312 = vadd.f32 %v274, %v308
      %v313 = vadd.f32 %v275, %v308
      %v314 = vadd.f32 %v276, %v308
      %v315 = vadd.f32 %v277, %v308
      %v316 = vadd.f32 %v278, %v308
      %v317 = vadd.f32 %v279, %v308
      %v318 = vadd.f32 %v280, %v308
      %v319 = vadd.f32 %v281, %v308
      %v320 = vadd.f32 %v282, %v308
      %v321 = vadd.f32 %v283, %v308
      %v322 = vadd.f32 %v284, %v308
      %v323 = vadd.f32 %v285, %v308
      %v324 = vadd.f32 %v286, %v308
      %v325 = vadd.f32 %v287, %v308
      %v326 = vadd.f32 %v288, %v308
      %v327 = vadd.f32 %v289, %v308
      %v328 = vadd.f32 %v290, %v308
      %v329 = vadd.f32 %v291, %v308
      %v330 = vadd.f32 %v292, %v308
      %v331 = vadd.f32 %v293, %v308
      %v332 = vadd.f32 %v294, %v308
      %v333 = vadd.f32 %v295, %v308
      %v334 = vadd.f32 %v296, %v308
      %v335 = vadd.f32 %v297, %v308
      %v336 = vadd.f32 %v298, %v308
      %v337 = vadd.f32 %v299, %v308
      %v338 = vadd.f32 %v300, %v308
      %v339 = vadd.f32 %v301, %v308
      %v340 = vadd.f32 %v302, %v308
      %v341 = vadd.f32 %v303, %v308
      %v342 = vmax.f32 %v310, 0.0
      %v343 = vmax.f32 %v311, 0.0
      %v344 = vmax.f32 %v312, 0.0
      %v345 = vmax.f32 %v313, 0.0
      %v346 = vmax.f32 %v314, 0.0
      %v347 = vmax.f32 %v315, 0.0
      %v348 = vmax.f32 %v316, 0.0
      %v349 = vmax.f32 %v317, 0.0
      %v350 = vmax.f32 %v318, 0.0
      %v351 = vmax.f32 %v319, 0.0
      %v352 = vmax.f32 %v320, 0.0
      %v353 = vmax.f32 %v321, 0.0
      %v354 = vmax.f32 %v322, 0.0
      %v355 = vmax.f32 %v323, 0.0
      %v356 = vmax.f32 %v324, 0.0
      %v357 = vmax.f32 %v325, 0.0
      %v358 = vmax.f32 %v326, 0.0
      %v359 = vmax.f32 %v327, 0.0
      %v360 = vmax.f32 %v328, 0.0
      %v361 = vmax.f32 %v329, 0.0
      %v362 = vmax.f32 %v330, 0.0
      %v363 = vmax.f32 %v331, 0.0
      %v364 = vmax.f32 %v332, 0.0
      %v365 = vmax.f32 %v333, 0.0
      %v366 = vmax.f32 %v334, 0.0
      %v367 = vmax.f32 %v335, 0.0
      %v368 = vmax.f32 %v336, 0.0
      %v369 = vmax.f32 %v337, 0.0
      %v370 = vmax.f32 %v338, 0.0
      %v371 = vmax.f32 %v339, 0.0
      %v372 = vmax.f32 %v340, 0.0
      %v373 = vmax.f32 %v341, 0.0
      %374 = vst [vmem:[%s197] sm:$0xff] %v342
      %375 = vst [vmem:[%s197 + $0x8] sm:$0xff] %v343
      %376 = vst [vmem:[%s197 + $0x10] sm:$0xff] %v344
      %377 = vst [vmem:[%s197 + $0x18] sm:$0xff] %v345
      %378 = vst [vmem:[%s197 + $0x20] sm:$0xff] %v346
      %379 = vst [vmem:[%s197 + $0x28] sm:$0xff] %v347
      %380 = vst [vmem:[%s197 + $0x30] sm:$0xff] %v348
      %381 = vst [vmem:[%s197 + $0x38] sm:$0xff] %v349
      %382 = vst [vmem:[%s197 + $0x40] sm:$0xff] %v350
      %383 = vst [vmem:[%s197 + $0x48] sm:$0xff] %v351
      %384 = vst [vmem:[%s197 + $0x50] sm:$0xff] %v352
      %385 = vst [vmem:[%s197 + $0x58] sm:$0xff] %v353
      %386 = vst [vmem:[%s197 + $0x60] sm:$0xff] %v354
      %387 = vst [vmem:[%s197 + $0x68] sm:$0xff] %v355
      %388 = vst [vmem:[%s197 + $0x70] sm:$0xff] %v356
      %389 = vst [vmem:[%s197 + $0x78] sm:$0xff] %v357
      %390 = vst [vmem:[%s197 + $0x80] sm:$0xff] %v358
      %391 = vst [vmem:[%s197 + $0x88] sm:$0xff] %v359
      %392 = vst [vmem:[%s197 + $0x90] sm:$0xff] %v360
      %393 = vst [vmem:[%s197 + $0x98] sm:$0xff] %v361
      %394 = vst [vmem:[%s197 + $0xa0] sm:$0xff] %v362
      %395 = vst [vmem:[%s197 + $0xa8] sm:$0xff] %v363
      %396 = vst [vmem:[%s197 + $0xb0] sm:$0xff] %v364
      %397 = vst [vmem:[%s197 + $0xb8] sm:$0xff] %v365
      %398 = vst [vmem:[%s197 + $0xc0] sm:$0xff] %v366
      %399 = vst [vmem:[%s197 + $0xc8] sm:$0xff] %v367
      %400 = vst [vmem:[%s197 + $0xd0] sm:$0xff] %v368
      %401 = vst [vmem:[%s197 + $0xd8] sm:$0xff] %v369
      %402 = vst [vmem:[%s197 + $0xe0] sm:$0xff] %v370
      %403 = vst [vmem:[%s197 + $0xe8] sm:$0xff] %v371
      %404 = vst [vmem:[%s197 + $0xf0] sm:$0xff] %v372
      %405 = vst [vmem:[%s197 + $0xf8] sm:$0xff] %v373
      %p406 = scmp.lt.s32.totalorder %s15, 1
      %s407 = scalar_select %p406, %s15, 1
      %s408 = smul.addr %s407, 32
      %s409 = smul.addr %s408, 8
      %s410 = scalar_lea.vmem %s4, %s409
      // Predicated region
      $region37: #{double_conv.5} parent=35 // pred_check
        %p411 = pneg %p122
      $region38: #{double_conv.5} parent=35 // pred_check_branch
        %413 = sbr.rel (%p411) target = $region40
      $region39: #{double_conv.5} parent=35 // pred_region
        _
      $region40: #{double_conv.5} parent=35 // pred_fallthru
        _
    $region36: #{double_conv.5} parent=5 // pred_fallthru
      _
    %p414 = scmp.le.s32.totalorder 2, %s10
    // Predicated region
    $region41: #{double_conv.5} parent=5 // pred_check
      %p415 = pneg %p414
    $region42: #{double_conv.5} parent=5 // pred_check_branch
      %417 = sbr.rel (%p415) target = $region44
    $region43: #{double_conv.5} parent=5 // pred_region
      %s418 = ssub.s32 %s10, 2
      // Predicated region
      $region45: #{double_conv.5} parent=43 // pred_check
        %p419 = pneg %p128
      $region46: #{double_conv.5} parent=43 // pred_check_branch
        %421 = sbr.rel (%p419) target = $region48
      $region47: #{double_conv.5} parent=43 // pred_region
        %p422 = scmp.lt.s32.totalorder %s16, 1
        %s423 = scalar_select %p422, %s16, 1
        %s424 = smul.addr %s423, 32
        %s425 = smul.addr %s424, 8
        %s426 = scalar_lea.vmem %s4, %s425
      $region48: #{double_conv.5} parent=43 // pred_fallthru
        _
    $region44: #{double_conv.5} parent=5 // pred_fallthru
      _
  $region6: #{double_conv.5} parent=0 // loop_footer
    %s14 = sadd.s32 1, %s10
  $region7: #{double_conv.5} parent=0 // loop_footer_branch
    %9 = sbr.rel target = $region3
  $region8: #{double_conv.5} parent=0 // loop_exit
    _

// kernel: double_conv.4
$region0: #{double_conv.4}
  #allocation0 [shape = 'u32[]', space=smem, size = 0x4, offset = 0x4, fixed_abs, tag = 'smem constant byte address 0x4 - core index']
  #allocation1 [shape = 'u32[144,128]{1,0:T(1,128)}', space=vmem, size = 0x12000, scoped, tag = 'internal scratch']
  %s0 = inlined_call_operand.vmem [shape: f32[2,18,18,4], index: 0, kind: input, shape index: {}]
  %s1 = inlined_call_operand.vmem [shape: f32[3,3,4,128], index: 1, kind: input, shape index: {}]
  %s2 = inlined_call_operand.vmem [shape: f32[2,256,128], index: 2, kind: output, shape index: {0}]
  %s3 = inlined_call_operand.vmem [shape: f32[2,2,128], index: 3, kind: output, shape index: {1}]
  %4 = xla_tuple %s2, %s3
  %s5 = sld [smem:[#allocation0]]
  $region49: #{double_conv.4} parent=0
    _
  %s7 = ssub.s32 1, %s5
  %s8 = scalar_select 0, %s7, %s5
  loop: start=0, step=1, limit=4
  $region2: #{double_conv.4} parent=0 // loop_pre_header
    _
  $region3: #{double_conv.4} parent=0 // loop_header
    %s10 = sphi 0, %s14
    %p11 = scmp.ge.s32.totalorder %s10, 4
    %s20 = sphi 0, %s22
    %s23 = sphi 0, %s20
    %s24 = sphi 0, %s23
    %s40 = sphi 0, %s24
    %s44 = sphi 0, %s44
    %s46 = sphi 0, %s44
    %s47 = sphi 0, %s46
    %s61 = sphi 0, %s47
    %s67 = sphi 0, %s69
    %s70 = sphi 0, %s67
    %s71 = sphi 0, %s70
    %s87 = sphi 0, %s71
    %s93 = sphi 0, %s95
    %s96 = sphi 0, %s93
    %s97 = sphi 0, %s96
    %s113 = sphi 0, %s97
  $region4: #{double_conv.4} parent=0 // loop_header_branch
    %13 = sbr.rel (%p11) target = $region8
  $region5: #{double_conv.4} parent=0 // loop_body
    %s15 = ssub.s32 %s10, 1
    %s16 = ssub.s32 %s10, 2
    %s17 = sadd.s32 %s10, 1
    %s18 = ssub.s32 %s10, %s17
    %p19 = scmp.eq.s32.totalorder %s18, 0
    %s21 = sadd.s32 %s20, 1
    %s22 = scalar_select %p19, %s20, %s21
    %p25 = pneg %p19
    %p26 = scmp.eq.s32.totalorder %s10, 1
    %p27 = por %p25, %p26
    %p28 = scmp.ne.s32.totalorder %s20, %s23
    %p29 = scmp.eq.s32.totalorder %s10, 0
    %p30 = por %p28, %p29
    %p31 = scmp.ne.s32.totalorder %s20, %s23
    %p32 = scmp.eq.s32.totalorder %s15, 1
    %p33 = por %p31, %p32
    %p34 = scmp.ne.s32.totalorder %s23, %s24
    %p35 = scmp.eq.s32.totalorder %s15, 0
    %p36 = por %p34, %p35
    %p37 = scmp.ne.s32.totalorder %s23, %s24
    %p38 = scmp.eq.s32.totalorder %s16, 1
    %p39 = por %p37, %p38
    %p41 = scmp.ne.s32.totalorder %s24, %s40
    %p42 = scmp.eq.s32.totalorder %s16, 0
    %p43 = por %p41, %p42
    %s45 = sadd.s32 %s44, 1
    %p48 = scmp.eq.s32.totalorder %s10, 1
    %p49 = scmp.ne.s32.totalorder %s44, %s46
    %p50 = scmp.eq.s32.totalorder %s10, 0
    %p51 = por %p49, %p50
    %p52 = scmp.ne.s32.totalorder %s44, %s46
    %p53 = scmp.eq.s32.totalorder %s15, 1
    %p54 = por %p52, %p53
    %p55 = scmp.ne.s32.totalorder %s46, %s47
    %p56 = scmp.eq.s32.totalorder %s15, 0
    %p57 = por %p55, %p56
    %p58 = scmp.ne.s32.totalorder %s46, %s47
    %p59 = scmp.eq.s32.totalorder %s16, 1
    %p60 = por %p58, %p59
    %p62 = scmp.ne.s32.totalorder %s47, %s61
    %p63 = scmp.eq.s32.totalorder %s16, 0
    %p64 = por %p62, %p63
    %s65 = ssub.s32 %s10, %s17
    %p66 = scmp.eq.s32.totalorder %s65, 0
    %s68 = sadd.s32 %s67, 1
    %s69 = scalar_select %p66, %s67, %s68
    %p72 = pneg %p66
    %p73 = scmp.eq.s32.totalorder %s10, 1
    %p74 = por %p72, %p73
    %p75 = scmp.ne.s32.totalorder %s67, %s70
    %p76 = scmp.eq.s32.totalorder %s10, 0
    %p77 = por %p75, %p76
    %p78 = scmp.ne.s32.totalorder %s67, %s70
    %p79 = scmp.eq.s32.totalorder %s15, 1
    %p80 = por %p78, %p79
    %p81 = scmp.ne.s32.totalorder %s70, %s71
    %p82 = scmp.eq.s32.totalorder %s15, 0
    %p83 = por %p81, %p82
    %p84 = scmp.ne.s32.totalorder %s70, %s71
    %p85 = scmp.eq.s32.totalorder %s16, 1
    %p86 = por %p84, %p85
    %p88 = scmp.ne.s32.totalorder %s71, %s87
    %p89 = scmp.eq.s32.totalorder %s16, 0
    %p90 = por %p88, %p89
    %s91 = ssub.s32 %s10, %s17
    %p92 = scmp.eq.s32.totalorder %s91, 0
    %s94 = sadd.s32 %s93, 1
    %s95 = scalar_select %p92, %s93, %s94
    %p98 = pneg %p92
    %p99 = scmp.eq.s32.totalorder %s10, 1
    %p100 = por %p98, %p99
    %p101 = scmp.ne.s32.totalorder %s93, %s96
    %p102 = scmp.eq.s32.totalorder %s10, 0
    %p103 = por %p101, %p102
    %p104 = scmp.ne.s32.totalorder %s93, %s96
    %p105 = scmp.eq.s32.totalorder %s15, 1
    %p106 = por %p104, %p105
    %p107 = scmp.ne.s32.totalorder %s96, %s97
    %p108 = scmp.eq.s32.totalorder %s15, 0
    %p109 = por %p107, %p108
    %p110 = scmp.ne.s32.totalorder %s96, %s97
    %p111 = scmp.eq.s32.totalorder %s16, 1
    %p112 = por %p110, %p111
    %p114 = scmp.ne.s32.totalorder %s97, %s113
    %p115 = scmp.eq.s32.totalorder %s16, 0
    %p116 = por %p114, %p115
    %p117 = scmp.le.s32.totalorder 1, %s10
    %p118 = scmp.lt.s32.totalorder %s10, 3
    %p119 = pnand %p117, %p118
    %p120 = pneg %p119
    // Predicated region
    $region9: #{double_conv.4} parent=5 // pred_check
      _
    $region10: #{double_conv.4} parent=5 // pred_check_branch
      %122 = sbr.rel (%p119) target = $region12
    $region11: #{double_conv.4} parent=5 // pred_region
      %s123 = ssub.s32 %s10, 1
      // Predicated region
      $region13: #{double_conv.4} parent=11 // pred_check
        %p124 = pneg %p57
      $region14: #{double_conv.4} parent=11 // pred_check_branch
        %126 = sbr.rel (%p124) target = $region16
      $region15: #{double_conv.4} parent=11 // pred_region
        _
      $region16: #{double_conv.4} parent=11 // pred_fallthru
        _
    $region12: #{double_conv.4} parent=5 // pred_fallthru
      _
    %p127 = scmp.lt.s32.totalorder %s10, 2
    // Predicated region
    $region17: #{double_conv.4} parent=5 // pred_check
      %p128 = pneg %p127
    $region18: #{double_conv.4} parent=5 // pred_check_branch
      %130 = sbr.rel (%p128) target = $region20
    $region19: #{double_conv.4} parent=5 // pred_region
      // Predicated region
      $region21: #{double_conv.4} parent=19 // pred_check
        %p131 = pneg %p30
      $region22: #{double_conv.4} parent=19 // pred_check_branch
        %133 = sbr.rel (%p131) target = $region24
      $region23: #{double_conv.4} parent=19 // pred_region
        %p134 = scmp.lt.s32.totalorder %s10, 1
        %s135 = scalar_select %p134, %s10, 1
        %s136 = smul.addr %s135, 54
        %s137 = smul.addr %s136, 8
        %s138 = scalar_lea.vmem %s0, %s137
      $region24: #{double_conv.4} parent=19 // pred_fallthru
        _
    $region20: #{double_conv.4} parent=5 // pred_fallthru
      _
    %p139 = scmp.le.s32.totalorder 1, %s10
    %p140 = scmp.lt.s32.totalorder %s10, 3
    %p141 = pnand %p139, %p140
    %p142 = pneg %p141
    // Predicated region
    $region25: #{double_conv.4} parent=5 // pred_check
      _
    $region26: #{double_conv.4} parent=5 // pred_check_branch
      %144 = sbr.rel (%p141) target = $region28
    $region27: #{double_conv.4} parent=5 // pred_region
      %s145 = ssub.s32 %s10, 1
      %p146 = scmp.lt.s32.totalorder %s15, 1
      %s147 = scalar_select %p146, %s15, 1
      %s148 = smul.addr %s147, 54
      %s149 = smul.addr %s148, 8
      %s150 = scalar_lea.vmem %s0, %s149
      %p151 = pneg %p36
      %p152 = pneg %p33
      %p153 = pneg %p57
      %p154 = pneg %p54
      %p155 = pneg %p83
      %p156 = pneg %p80
      %p157 = scmp.lt.s32.totalorder %s15, 1
      %s158 = scalar_select %p157, %s15, 1
      %s159 = smul.addr %s158, 32
      %s160 = smul.addr %s159, 8
      %s161 = scalar_lea.vmem %s2, %s160
      %p162 = pneg %p109
      %p163 = pneg %p106
      %p164 = scmp.lt.s32.totalorder %s15, 1
      %s165 = scalar_select %p164, %s15, 1
      %s166 = smul.addr %s165, 2
      %s167 = scalar_lea.vmem %s3, %s166
      %p168 = scmp.lt.s32.totalorder %s15, 1
      %s169 = scalar_select %p168, %s15, 1
      %s170 = smul.addr %s169, 54
      %s171 = smul.addr %s170, 8
      %s172 = scalar_lea.vmem %s0, %s171
      %p173 = scmp.lt.s32.totalorder %s15, 1
      %s174 = scalar_select %p173, %s15, 1
      %s175 = smul.addr %s174, 32
      %s176 = smul.addr %s175, 8
      %s177 = scalar_lea.vmem %s2, %s176
      %p178 = scmp.lt.s32.totalorder %s15, 1
      %s179 = scalar_select %p178, %s15, 1
      %s180 = smul.addr %s179, 2
      %s181 = scalar_lea.vmem %s3, %s180
      %v182 = vld [vmem:[%s172] sm:$0xff]
      %v183 = vld [vmem:[%s172 + $0x8] sm:$0xff]
      %v184 = vld [vmem:[%s172 + $0x18] sm:$0xff]
      %v185 = vld [vmem:[%s172 + $0x20] sm:$0xff]
      %v186 = vld [vmem:[%s172 + $0x30] sm:$0xff]
      %v187 = vld [vmem:[%s172 + $0x38] sm:$0xff]
      %v188 = vld [vmem:[%s172 + $0x48] sm:$0xff]
      %v189 = vld [vmem:[%s172 + $0x50] sm:$0xff]
      %v190 = vld [vmem:[%s172 + $0x60] sm:$0xff]
      %v191 = vld [vmem:[%s172 + $0x68] sm:$0xff]
      %v192 = vld [vmem:[%s172 + $0x78] sm:$0xff]
      %v193 = vld [vmem:[%s172 + $0x80] sm:$0xff]
      %v194 = vld [vmem:[%s172 + $0x90] sm:$0xff]
      %v195 = vld [vmem:[%s172 + $0x98] sm:$0xff]
      %v196 = vld [vmem:[%s172 + $0xa8] sm:$0xff]
      %v197 = vld [vmem:[%s172 + $0xb0] sm:$0xff]
      %v198 = vld [vmem:[%s172 + $0xc0] sm:$0xff]
      %v199 = vld [vmem:[%s172 + $0xc8] sm:$0xff]
      %v200 = vld [vmem:[%s172 + $0xd8] sm:$0xff]
      %v201 = vld [vmem:[%s172 + $0xe0] sm:$0xff]
      %v202 = vld [vmem:[%s172 + $0xf0] sm:$0xff]
      %v203 = vld [vmem:[%s172 + $0xf8] sm:$0xff]
      %v204 = vld [vmem:[%s172 + $0x108] sm:$0xff]
      %v205 = vld [vmem:[%s172 + $0x110] sm:$0xff]
      %v206 = vld [vmem:[%s172 + $0x120] sm:$0xff]
      %v207 = vld [vmem:[%s172 + $0x128] sm:$0xff]
      %v208 = vld [vmem:[%s172 + $0x138] sm:$0xff]
      %v209 = vld [vmem:[%s172 + $0x140] sm:$0xff]
      %v210 = vld [vmem:[%s172 + $0x150] sm:$0xff]
      %v211 = vld [vmem:[%s172 + $0x158] sm:$0xff]
      %v212 = vld [vmem:[%s172 + $0x168] sm:$0xff]
      %v213 = vld [vmem:[%s172 + $0x170] sm:$0xff]
      %v214 = vld [vmem:[%s1] sm:$0xf]
      %v215 = vld [vmem:[%s172 + $0x1] sm:$0xff]
      %v216 = vld [vmem:[%s172 + $0x9] sm:$0xff]
      %v217 = vld [vmem:[%s172 + $0x19] sm:$0xff]
      %v218 = vld [vmem:[%s172 + $0x21] sm:$0xff]
      %v219 = vld [vmem:[%s172 + $0x31] sm:$0xff]
      %v220 = vld [vmem:[%s172 + $0x39] sm:$0xff]
      %v221 = vld [vmem:[%s172 + $0x49] sm:$0xff]
      %v222 = vld [vmem:[%s172 + $0x51] sm:$0xff]
      %v223 = vld [vmem:[%s172 + $0x61] sm:$0xff]
      %v224 = vld [vmem:[%s172 + $0x69] sm:$0xff]
      %v225 = vld [vmem:[%s172 + $0x79] sm:$0xff]
      %v226 = vld [vmem:[%s172 + $0x81] sm:$0xff]
      %v227 = vld [vmem:[%s172 + $0x91] sm:$0xff]
      %v228 = vld [vmem:[%s172 + $0x99] sm:$0xff]
      %v229 = vld [vmem:[%s172 + $0xa9] sm:$0xff]
      %v230 = vld [vmem:[%s172 + $0xb1] sm:$0xff]
      %v231 = vld [vmem:[%s172 + $0xc1] sm:$0xff]
      %v232 = vld [vmem:[%s172 + $0xc9] sm:$0xff]
      %v233 = vld [vmem:[%s172 + $0xd9] sm:$0xff]
      %v234 = vld [vmem:[%s172 + $0xe1] sm:$0xff]
      %v235 = vld [vmem:[%s172 + $0xf1] sm:$0xff]
      %v236 = vld [vmem:[%s172 + $0xf9] sm:$0xff]
      %v237 = vld [vmem:[%s172 + $0x109] sm:$0xff]
      %v238 = vld [vmem:[%s172 + $0x111] sm:$0xff]
      %v239 = vld [vmem:[%s172 + $0x121] sm:$0xff]
      %v240 = vld [vmem:[%s172 + $0x129] sm:$0xff]
      %v241 = vld [vmem:[%s172 + $0x139] sm:$0xff]
      %v242 = vld [vmem:[%s172 + $0x141] sm:$0xff]
      %v243 = vld [vmem:[%s172 + $0x151] sm:$0xff]
      %v244 = vld [vmem:[%s172 + $0x159] sm:$0xff]
      %v245 = vld [vmem:[%s172 + $0x169] sm:$0xff]
      %v246 = vld [vmem:[%s172 + $0x171] sm:$0xff]
      %s247 = scalar_lea.vmem %s1, 4
      %v248 = vld [vmem:[%s247] sm:$0xf]
      %vm249 = vcmask 31744
      %v251 = vsel %vm249, %v215, 0
      %v254 = vsel %vm249, %v216, 0
      %v257 = vsel %vm249, %v217, 0
      %v260 = vsel %vm249, %v218, 0
      %v263 = vsel %vm249, %v219, 0
      %v266 = vsel %vm249, %v220, 0
      %v269 = vsel %vm249, %v221, 0
      %v272 = vsel %vm249, %v222, 0
      %v275 = vsel %vm249, %v223, 0
      %v278 = vsel %vm249, %v224, 0
      %v281 = vsel %vm249, %v225, 0
      %v284 = vsel %vm249, %v226, 0
      %v287 = vsel %vm249, %v227, 0
      %v290 = vsel %vm249, %v228, 0
      %v293 = vsel %vm249, %v229, 0
      %v296 = vsel %vm249, %v230, 0
      %v299 = vsel %vm249, %v231, 0
      %v302 = vsel %vm249, %v232, 0
      %v305 = vsel %vm249, %v233, 0
      %v308 = vsel %vm249, %v234, 0
      %v311 = vsel %vm249, %v235, 0
      %v314 = vsel %vm249, %v236, 0
      %v317 = vsel %vm249, %v237, 0
      %v320 = vsel %vm249, %v238, 0
      %v323 = vsel %vm249, %v239, 0
      %v326 = vsel %vm249, %v240, 0
      %v329 = vsel %vm249, %v241, 0
      %v332 = vsel %vm249, %v242, 0
      %v335 = vsel %vm249, %v243, 0
      %v338 = vsel %vm249, %v244, 0
      %v341 = vsel %vm249, %v245, 0
      %v344 = vsel %vm249, %v246, 0
      %vm346 = vcmask 1043456
      %v348 = vsel %vm346, %v248, 0
      %350 = vmatprep.subr.mxu0 0.0
      %351 = vmatpush1.msra.mxu0 %v348
      %352 = vmatprep.subr.mxu0 0.0
      %353 = vmatpush1.msra.mxu0 0.0
      %354 = vmatprep.subr.mxu0 0.0
      %355 = vmatpush1.msra.mxu0 0.0
      %356 = vmatprep.subr.mxu0 0.0
      %357 = vmatpush1.msra.mxu0 0.0
      %358 = vmatprep.subr.mxu0 0.0
      %359 = vmatpush1.msra.mxu0 0.0
      %360 = vmatprep.subr.mxu0 0.0
      %361 = vmatpush1.msra.mxu0 0.0
      %362 = vmatprep.subr.mxu0 0.0
      %363 = vmatpush1.msra.mxu0 0.0
      %364 = vmatprep.subr.mxu0 0.0
      %365 = vmatpush1.msra.mxu0 0.0
      %366 = vmatprep.subr.mxu0 0.0
      %367 = vmatpush1.msra.mxu0 0.0
      %368 = vmatprep.subr.mxu0 0.0
      %369 = vmatpush1.msra.mxu0 0.0
      %370 = vmatprep.subr.mxu0 0.0
      %371 = vmatpush1.msra.mxu0 0.0
      %372 = vmatprep.subr.mxu0 0.0
      %373 = vmatpush1.msra.mxu0 0.0
      %374 = vmatprep.subr.mxu0 0.0
      %375 = vmatpush1.msra.mxu0 0.0
      %376 = vmatprep.subr.mxu0 0.0
      %377 = vmatpush1.msra.mxu0 0.0
      %378 = vmatprep.subr.mxu0 0.0
      %379 = vmatpush1.msra.mxu0 0.0
      %380 = vmatprep.subr.mxu0 0.0
      %381 = vmatpush1.msra.mxu0 0.0
      %382 = vmatprep.subr.mxu0 0.0
      %383 = vmatpush1.msra.mxu0 0.0
      %384 = vmatprep.subr.mxu0 0.0
      %385 = vmatpush1.msra.mxu0 0.0
      %386 = vmatprep.subr.mxu0 0.0
      %387 = vmatpush1.msra.mxu0 0.0
      %388 = vmatprep.subr.mxu0 0.0
      %389 = vmatpush1.msra.mxu0 0.0
      %390 = vmatprep.subr.mxu0 0.0
      %391 = vmatpush1.msra.mxu0 0.0
      %392 = vmatprep.subr.mxu0 0.0
      %393 = vmatpush1.msra.mxu0 0.0
      %394 = vmatprep.subr.mxu0 0.0
      %395 = vmatpush1.msra.mxu0 0.0
      %396 = vmatprep.subr.mxu0 0.0
      %397 = vmatpush1.msra.mxu0 0.0
      %398 = vmatprep.subr.mxu0 0.0
      %399 = vmatpush1.msra.mxu0 0.0
      %400 = vmatprep.subr.mxu0 0.0
      %401 = vmatpush1.msra.mxu0 0.0
      %402 = vmatprep.subr.mxu0 0.0
      %403 = vmatpush1.msra.mxu0 0.0
      %404 = vmatprep.subr.mxu0 0.0
      %405 = vmatpush1.msra.mxu0 0.0
      %406 = vmatprep.subr.mxu0 0.0
      %407 = vmatpush1.msra.mxu0 0.0
      %408 = vmatprep.subr.mxu0 0.0
      %409 = vmatpush1.msra.mxu0 0.0
      %410 = vmatprep.subr.mxu0 0.0
      %411 = vmatpush1.msra.mxu0 0.0
      %412 = vmatprep.subr.mxu0 0.0
      %413 = vmatpush1.msra.mxu0 0.0
      %414 = vmatprep.mubr.f32.mxu0 0.0
      %415 = vmatmul.mubr.f32.gmra.mrb[0].mxu0 %v251
      %v416 = vpop.f32.mrb[0].mxu0
      %v417 = vadd.f32 0.0, %v416
      %v418 = vpop.f32.mrb[0].mxu0
      %419 = vmatprep.mubr.f32.mxu0 0.0
      %420 = vmatmul.mubr.f32.gmra.mrb[0].mxu0 %v254
      %v421 = vpop.f32.mrb[0].mxu0
      %v422 = vadd.f32 0.0, %v421
      %v423 = vpop.f32.mrb[0].mxu0
      %424 = vmatprep.mubr.f32.mxu0 0.0
      %425 = vmatmul.mubr.f32.gmra.mrb[0].mxu0 %v257
      %v426 = vpop.f32.mrb[0].mxu0
      %v427 = vadd.f32 0.0, %v426
      %v428 = vpop.f32.mrb[0].mxu0
      %429 = vmatprep.mubr.f32.mxu0 0.0
      %430 = vmatmul.mubr.f32.gmra.mrb[0].mxu0 %v260
      %v431 = vpop.f32.mrb[0].mxu0
      %v432 = vadd.f32 0.0, %v431
      %v433 = vpop.f32.mrb[0].mxu0
      %434 = vmatprep.mubr.f32.mxu0 0.0
      %435 = vmatmul.mubr.f32.gmra.mrb[0].mxu0 %v263
      %v436 = vpop.f32.mrb[0].mxu0
      %v437 = vadd.f32 0.0, %v436
      %v438 = vpop.f32.mrb[0].mxu0
      %439 = vmatprep.mubr.f32.mxu0 0.0
      %440 = vmatmul.mubr.f32.gmra.mrb[0].mxu0 %v266
      %v441 = vpop.f32.mrb[0].mxu0
      %v442 = vadd.f32 0.0, %v441
      %v443 = vpop.f32.mrb[0].mxu0
      %444 = vmatprep.mubr.f32.mxu0 0.0
      %445 = vmatmul.mubr.f32.gmra.mrb[0].mxu0 %v269
      %v446 = vpop.f32.mrb[0].mxu0
      %v447 = vadd.f32 0.0, %v446
      %v448 = vpop.f32.mrb[0].mxu0
      %449 = vmatprep.mubr.f32.mxu0 0.0
      %450 = vmatmul.mubr.f32.gmra.mrb[0].mxu0 %v272
      %v451 = vpop.f32.mrb[0].mxu0
      %v452 = vadd.f32 0.0, %v451
      %v453 = vpop.f32.mrb[0].mxu0
      %454 = vmatprep.mubr.f32.mxu0 0.0
      %455 = vmatmul.mubr.f32.gmra.mrb[0].mxu0 %v275
      %v456 = vpop.f32.mrb[0].mxu0
      %v457 = vadd.f32 0.0, %v456
      %v458 = vpop.f32.mrb[0].mxu0
      %459 = vmatprep.mubr.f32.mxu0 0.0
      %460 = vmatmul.mubr.f32.gmra.mrb[0].mxu0 %v278
      %v461 = vpop.f32.mrb[0].mxu0
      %v462 = vadd.f32 0.0, %v461
      %v463 = vpop.f32.mrb[0].mxu0
      %464 = vmatprep.mubr.f32.mxu0 0.0
      %465 = vmatmul.mubr.f32.gmra.mrb[0].mxu0 %v281
      %v466 = vpop.f32.mrb[0].mxu0
      %v467 = vadd.f32 0.0, %v466
      %v468 = vpop.f32.mrb[0].mxu0
      %469 = vmatprep.mubr.f32.mxu0 0.0
      %470 = vmatmul.mubr.f32.gmra.mrb[0].mxu0 %v284
      %v471 = vpop.f32.mrb[0].mxu0
      %v472 = vadd.f32 0.0, %v471
      %v473 = vpop.f32.mrb[0].mxu0
      %474 = vmatprep.mubr.f32.mxu0 0.0
      %475 = vmatmul.mubr.f32.gmra.mrb[0].mxu0 %v287
      %v476 = vpop.f32.mrb[0].mxu0
      %v477 = vadd.f32 0.0, %v476
      %v478 = vpop.f32.mrb[0].mxu0
      %479 = vmatprep.mubr.f32.mxu0 0.0
      %480 = vmatmul.mubr.f32.gmra.mrb[0].mxu0 %v290
      %v481 = vpop.f32.mrb[0].mxu0
      %v482 = vadd.f32 0.0, %v481
      %v483 = vpop.f32.mrb[0].mxu0
      %484 = vmatprep.mubr.f32.mxu0 0.0
      %485 = vmatmul.mubr.f32.gmra.mrb[0].mxu0 %v293
      %v486 = vpop.f32.mrb[0].mxu0
      %v487 = vadd.f32 0.0, %v486
      %v488 = vpop.f32.mrb[0].mxu0
      %489 = vmatprep.mubr.f32.mxu0 0.0
      %490 = vmatmul.mubr.f32.gmra.mrb[0].mxu0 %v296
      %v491 = vpop.f32.mrb[0].mxu0
      %v492 = vadd.f32 0.0, %v491
      %v493 = vpop.f32.mrb[0].mxu0
      %494 = vmatprep.mubr.f32.mxu0 0.0
      %495 = vmatmul.mubr.f32.gmra.mrb[0].mxu0 %v299
      %v496 = vpop.f32.mrb[0].mxu0
      %v497 = vadd.f32 0.0, %v496
      %v498 = vpop.f32.mrb[0].mxu0
      %499 = vmatprep.mubr.f32.mxu0 0.0
      %500 = vmatmul.mubr.f32.gmra.mrb[0].mxu0 %v302
      %v501 = vpop.f32.mrb[0].mxu0
      %v502 = vadd.f32 0.0, %v501
      %v503 = vpop.f32.mrb[0].mxu0
      %504 = vmatprep.mubr.f32.mxu0 0.0
      %505 = vmatmul.mubr.f32.gmra.mrb[0].mxu0 %v305
      %v506 = vpop.f32.mrb[0].mxu0
      %v507 = vadd.f32 0.0, %v506
      %v508 = vpop.f32.mrb[0].mxu0
      %509 = vmatprep.mubr.f32.mxu0 0.0
      %510 = vmatmul.mubr.f32.gmra.mrb[0].mxu0 %v308
      %v511 = vpop.f32.mrb[0].mxu0
      %v512 = vadd.f32 0.0, %v511
      %v513 = vpop.f32.mrb[0].mxu0
      %514 = vmatprep.mubr.f32.mxu0 0.0
      %515 = vmatmul.mubr.f32.gmra.mrb[0].mxu0 %v311
      %v516 = vpop.f32.mrb[0].mxu0
      %v517 = vadd.f32 0.0, %v516
      %v518 = vpop.f32.mrb[0].mxu0
      %519 = vmatprep.mubr.f32.mxu0 0.0
      %520 = vmatmul.mubr.f32.gmra.mrb[0].mxu0 %v314
      %v521 = vpop.f32.mrb[0].mxu0
      %v522 = vadd.f32 0.0, %v521
      %v523 = vpop.f32.mrb[0].mxu0
      %524 = vmatprep.mubr.f32.mxu0 0.0
      %525 = vmatmul.mubr.f32.gmra.mrb[0].mxu0 %v317
      %v526 = vpop.f32.mrb[0].mxu0
      %v527 = vadd.f32 0.0, %v526
      %v528 = vpop.f32.mrb[0].mxu0
      %529 = vmatprep.mubr.f32.mxu0 0.0
      %530 = vmatmul.mubr.f32.gmra.mrb[0].mxu0 %v320
      %v531 = vpop.f32.mrb[0].mxu0
      %v532 = vadd.f32 0.0, %v531
      %v533 = vpop.f32.mrb[0].mxu0
      %534 = vmatprep.mubr.f32.mxu0 0.0
      %535 = vmatmul.mubr.f32.gmra.mrb[0].mxu0 %v323
      %v536 = vpop.f32.mrb[0].mxu0
      %v537 = vadd.f32 0.0, %v536
      %v538 = vpop.f32.mrb[0].mxu0
      %539 = vmatprep.mubr.f32.mxu0 0.0
      %540 = vmatmul.mubr.f32.gmra.mrb[0].mxu0 %v326
      %v541 = vpop.f32.mrb[0].mxu0
      %v542 = vadd.f32 0.0, %v541
      %v543 = vpop.f32.mrb[0].mxu0
      %544 = vmatprep.mubr.f32.mxu0 0.0
      %545 = vmatmul.mubr.f32.gmra.mrb[0].mxu0 %v329
      %v546 = vpop.f32.mrb[0].mxu0
      %v547 = vadd.f32 0.0, %v546
      %v548 = vpop.f32.mrb[0].mxu0
      %549 = vmatprep.mubr.f32.mxu0 0.0
      %550 = vmatmul.mubr.f32.gmra.mrb[0].mxu0 %v332
      %v551 = vpop.f32.mrb[0].mxu0
      %v552 = vadd.f32 0.0, %v551
      %v553 = vpop.f32.mrb[0].mxu0
      %554 = vmatprep.mubr.f32.mxu0 0.0
      %555 = vmatmul.mubr.f32.gmra.mrb[0].mxu0 %v335
      %v556 = vpop.f32.mrb[0].mxu0
      %v557 = vadd.f32 0.0, %v556
      %v558 = vpop.f32.mrb[0].mxu0
      %559 = vmatprep.mubr.f32.mxu0 0.0
      %560 = vmatmul.mubr.f32.gmra.mrb[0].mxu0 %v338
      %v561 = vpop.f32.mrb[0].mxu0
      %v562 = vadd.f32 0.0, %v561
      %v563 = vpop.f32.mrb[0].mxu0
      %564 = vmatprep.mubr.f32.mxu0 0.0
      %565 = vmatmul.mubr.f32.gmra.mrb[0].mxu0 %v341
      %v566 = vpop.f32.mrb[0].mxu0
      %v567 = vadd.f32 0.0, %v566
      %v568 = vpop.f32.mrb[0].mxu0
      %569 = vmatprep.mubr.f32.mxu0 0.0
      %570 = vmatmul.mubr.f32.gmra.mrb[0].mxu0 %v344
      %v571 = vpop.f32.mrb[0].mxu0
      %v572 = vadd.f32 0.0, %v571
      %v573 = vpop.f32.mrb[0].mxu0
      %574 = vdwg.mxu0
      %v576 = vsel %vm249, %v182, 0
      %v579 = vsel %vm249, %v183, 0
      %v582 = vsel %vm249, %v184, 0
      %v585 = vsel %vm249, %v185, 0
      %v588 = vsel %vm249, %v186, 0
      %v591 = vsel %vm249, %v187, 0
      %v594 = vsel %vm249, %v188, 0
      %v597 = vsel %vm249, %v189, 0
      %v600 = vsel %vm249, %v190, 0
      %v603 = vsel %vm249, %v191, 0
      %v606 = vsel %vm249, %v192, 0
      %v609 = vsel %vm249, %v193, 0
      %v612 = vsel %vm249, %v194, 0
      %v615 = vsel %vm249, %v195, 0
      %v618 = vsel %vm249, %v196, 0
      %v621 = vsel %vm249, %v197, 0
      %v624 = vsel %vm249, %v198, 0
      %v627 = vsel %vm249, %v199, 0
      %v630 = vsel %vm249, %v200, 0
      %v633 = vsel %vm249, %v201, 0
      %v636 = vsel %vm249, %v202, 0
      %v639 = vsel %vm249, %v203, 0
      %v642 = vsel %vm249, %v204, 0
      %v645 = vsel %vm249, %v205, 0
      %v648 = vsel %vm249, %v206, 0
      %v651 = vsel %vm249, %v207, 0
      %v654 = vsel %vm249, %v208, 0
      %v657 = vsel %vm249, %v209, 0
      %v660 = vsel %vm249, %v210, 0
      %v663 = vsel %vm249, %v211, 0
      %v666 = vsel %vm249, %v212, 0
      %v669 = vsel %vm249, %v213, 0
      %v672 = vsel %vm346, %v214, 0
      %674 = vmatprep.subr.mxu0 0.0
      %675 = vmatpush1.msra.mxu0 %v672
      %676 = vmatprep.subr.mxu0 0.0
      %677 = vmatpush1.msra.mxu0 0.0
      %678 = vmatprep.subr.mxu0 0.0
      %679 = vmatpush1.msra.mxu0 0.0
      %680 = vmatprep.subr.mxu0 0.0
      %681 = vmatpush1.msra.mxu0 0.0
      %682 = vmatprep.subr.mxu0 0.0
      %683 = vmatpush1.msra.mxu0 0.0
      %684 = vmatprep.subr.mxu0 0.0
      %685 = vmatpush1.msra.mxu0 0.0
      %686 = vmatprep.subr.mxu0 0.0
      %687 = vmatpush1.msra.mxu0 0.0
      %688 = vmatprep.subr.mxu0 0.0
      %689 = vmatpush1.msra.mxu0 0.0
      %690 = vmatprep.subr.mxu0 0.0
      %691 = vmatpush1.msra.mxu0 0.0
      %692 = vmatprep.subr.mxu0 0.0
      %693 = vmatpush1.msra.mxu0 0.0
      %694 = vmatprep.subr.mxu0 0.0
      %695 = vmatpush1.msra.mxu0 0.0
      %696 = vmatprep.subr.mxu0 0.0
      %697 = vmatpush1.msra.mxu0 0.0
      %698 = vmatprep.subr.mxu0 0.0
      %699 = vmatpush1.msra.mxu0 0.0
      %700 = vmatprep.subr.mxu0 0.0
      %701 = vmatpush1.msra.mxu0 0.0
      %702 = vmatprep.subr.mxu0 0.0
      %703 = vmatpush1.msra.mxu0 0.0
      %704 = vmatprep.subr.mxu0 0.0
      %705 = vmatpush1.msra.mxu0 0.0
      %706 = vmatprep.subr.mxu0 0.0
      %707 = vmatpush1.msra.mxu0 0.0
      %708 = vmatprep.subr.mxu0 0.0
      %709 = vmatpush1.msra.mxu0 0.0
      %710 = vmatprep.subr.mxu0 0.0
      %711 = vmatpush1.msra.mxu0 0.0
      %712 = vmatprep.subr.mxu0 0.0
      %713 = vmatpush1.msra.mxu0 0.0
      %714 = vmatprep.subr.mxu0 0.0
      %715 = vmatpush1.msra.mxu0 0.0
      %716 = vmatprep.subr.mxu0 0.0
      %717 = vmatpush1.msra.mxu0 0.0
      %718 = vmatprep.subr.mxu0 0.0
      %719 = vmatpush1.msra.mxu0 0.0
      %720 = vmatprep.subr.mxu0 0.0
      %721 = vmatpush1.msra.mxu0 0.0
      %722 = vmatprep.subr.mxu0 0.0
      %723 = vmatpush1.msra.mxu0 0.0
      %724 = vmatprep.subr.mxu0 0.0
      %725 = vmatpush1.msra.mxu0 0.0
      %726 = vmatprep.subr.mxu0 0.0
      %727 = vmatpush1.msra.mxu0 0.0
      %728 = vmatprep.subr.mxu0 0.0
      %729 = vmatpush1.msra.mxu0 0.0
      %730 = vmatprep.subr.mxu0 0.0
      %731 = vmatpush1.msra.mxu0 0.0
      %732 = vmatprep.subr.mxu0 0.0
      %733 = vmatpush1.msra.mxu0 0.0
      %734 = vmatprep.subr.mxu0 0.0
      %735 = vmatpush1.msra.mxu0 0.0
      %736 = vmatprep.subr.mxu0 0.0
      %737 = vmatpush1.msra.mxu0 0.0
      %738 = vmatprep.mubr.f32.mxu0 0.0
      %739 = vmatmul.mubr.f32.gmra.mrb[0].mxu0 %v576
      %v740 = vpop.f32.mrb[0].mxu0
      %v741 = vadd.f32 %v417, %v740
      %v742 = vpop.f32.mrb[0].mxu0
      %743 = vmatprep.mubr.f32.mxu0 0.0
      %744 = vmatmul.mubr.f32.gmra.mrb[0].mxu0 %v579
      %v745 = vpop.f32.mrb[0].mxu0
      %v746 = vadd.f32 %v422, %v745
      %v747 = vpop.f32.mrb[0].mxu0
      %748 = vmatprep.mubr.f32.mxu0 0.0
      %749 = vmatmul.mubr.f32.gmra.mrb[0].mxu0 %v582
      %v750 = vpop.f32.mrb[0].mxu0
      %v751 = vadd.f32 %v427, %v750
      %v752 = vpop.f32.mrb[0].mxu0
      %753 = vmatprep.mubr.f32.mxu0 0.0
      %754 = vmatmul.mubr.f32.gmra.mrb[0].mxu0 %v585
      %v755 = vpop.f32.mrb[0].mxu0
      %v756 = vadd.f32 %v432, %v755
      %v757 = vpop.f32.mrb[0].mxu0
      %758 = vmatprep.mubr.f32.mxu0 0.0
      %759 = vmatmul.mubr.f32.gmra.mrb[0].mxu0 %v588
      %v760 = vpop.f32.mrb[0].mxu0
      %v761 = vadd.f32 %v437, %v760
      %v762 = vpop.f32.mrb[0].mxu0
      %763 = vmatprep.mubr.f32.mxu0 0.0
      %764 = vmatmul.mubr.f32.gmra.mrb[0].mxu0 %v591
      %v765 = vpop.f32.mrb[0].mxu0
      %v766 = vadd.f32 %v442, %v765
      %v767 = vpop.f32.mrb[0].mxu0
      %768 = vmatprep.mubr.f32.mxu0 0.0
      %769 = vmatmul.mubr.f32.gmra.mrb[0].mxu0 %v594
      %v770 = vpop.f32.mrb[0].mxu0
      %v771 = vadd.f32 %v447, %v770
      %v772 = vpop.f32.mrb[0].mxu0
      %773 = vmatprep.mubr.f32.mxu0 0.0
      %774 = vmatmul.mubr.f32.gmra.mrb[0].mxu0 %v597
      %v775 = vpop.f32.mrb[0].mxu0
      %v776 = vadd.f32 %v452, %v775
      %v777 = vpop.f32.mrb[0].mxu0
      %778 = vmatprep.mubr.f32.mxu0 0.0
      %779 = vmatmul.mubr.f32.gmra.mrb[0].mxu0 %v600
      %v780 = vpop.f32.mrb[0].mxu0
      %v781 = vadd.f32 %v457, %v780
      %v782 = vpop.f32.mrb[0].mxu0
      %783 = vmatprep.mubr.f32.mxu0 0.0
      %784 = vmatmul.mubr.f32.gmra.mrb[0].mxu0 %v603
      %v785 = vpop.f32.mrb[0].mxu0
      %v786 = vadd.f32 %v462, %v785
      %v787 = vpop.f32.mrb[0].mxu0
      %788 = vmatprep.mubr.f32.mxu0 0.0
      %789 = vmatmul.mubr.f32.gmra.mrb[0].mxu0 %v606
      %v790 = vpop.f32.mrb[0].mxu0
      %v791 = vadd.f32 %v467, %v790
      %v792 = vpop.f32.mrb[0].mxu0
      %793 = vmatprep.mubr.f32.mxu0 0.0
      %794 = vmatmul.mubr.f32.gmra.mrb[0].mxu0 %v609
      %v795 = vpop.f32.mrb[0].mxu0
      %v796 = vadd.f32 %v472, %v795
      %v797 = vpop.f32.mrb[0].mxu0
      %798 = vmatprep.mubr.f32.mxu0 0.0
      %799 = vmatmul.mubr.f32.gmra.mrb[0].mxu0 %v612
      %v800 = vpop.f32.mrb[0].mxu0
      %v801 = vadd.f32 %v477, %v800
      %v802 = vpop.f32.mrb[0].mxu0
      %803 = vmatprep.mubr.f32.mxu0 0.0
      %804 = vmatmul.mubr.f32.gmra.mrb[0].mxu0 %v615
      %v805 = vpop.f32.mrb[0].mxu0
      %v806 = vadd.f32 %v482, %v805
      %v807 = vpop.f32.mrb[0].mxu0
      %808 = vmatprep.mubr.f32.mxu0 0.0
      %809 = vmatmul.mubr.f32.gmra.mrb[0].mxu0 %v618
      %v810 = vpop.f32.mrb[0].mxu0
      %v811 = vadd.f32 %v487, %v810
      %v812 = vpop.f32.mrb[0].mxu0
      %813 = vmatprep.mubr.f32.mxu0 0.0
      %814 = vmatmul.mubr.f32.gmra.mrb[0].mxu0 %v621
      %v815 = vpop.f32.mrb[0].mxu0
      %v816 = vadd.f32 %v492, %v815
      %v817 = vpop.f32.mrb[0].mxu0
      %818 = vmatprep.mubr.f32.mxu0 0.0
      %819 = vmatmul.mubr.f32.gmra.mrb[0].mxu0 %v624
      %v820 = vpop.f32.mrb[0].mxu0
      %v821 = vadd.f32 %v497, %v820
      %v822 = vpop.f32.mrb[0].mxu0
      %823 = vmatprep.mubr.f32.mxu0 0.0
      %824 = vmatmul.mubr.f32.gmra.mrb[0].mxu0 %v627
      %v825 = vpop.f32.mrb[0].mxu0
      %v826 = vadd.f32 %v502, %v825
      %v827 = vpop.f32.mrb[0].mxu0
      %828 = vmatprep.mubr.f32.mxu0 0.0
      %829 = vmatmul.mubr.f32.gmra.mrb[0].mxu0 %v630
      %v830 = vpop.f32.mrb[0].mxu0
      %v831 = vadd.f32 %v507, %v830
      %v832 = vpop.f32.mrb[0].mxu0
      %833 = vmatprep.mubr.f32.mxu0 0.0
      %834 = vmatmul.mubr.f32.gmra.mrb[0].mxu0 %v633
      %v835 = vpop.f32.mrb[0].mxu0
      %v836 = vadd.f32 %v512, %v835
      %v837 = vpop.f32.mrb[0].mxu0
      %838 = vmatprep.mubr.f32.mxu0 0.0
      %839 = vmatmul.mubr.f32.gmra.mrb[0].mxu0 %v636
      %v840 = vpop.f32.mrb[0].mxu0
      %v841 = vadd.f32 %v517, %v840
      %v842 = vpop.f32.mrb[0].mxu0
      %843 = vmatprep.mubr.f32.mxu0 0.0
      %844 = vmatmul.mubr.f32.gmra.mrb[0].mxu0 %v639
      %v845 = vpop.f32.mrb[0].mxu0
      %v846 = vadd.f32 %v522, %v845
      %v847 = vpop.f32.mrb[0].mxu0
      %848 = vmatprep.mubr.f32.mxu0 0.0
      %849 = vmatmul.mubr.f32.gmra.mrb[0].mxu0 %v642
      %v850 = vpop.f32.mrb[0].mxu0
      %v851 = vadd.f32 %v527, %v850
      %v852 = vpop.f32.mrb[0].mxu0
      %853 = vmatprep.mubr.f32.mxu0 0.0
      %854 = vmatmul.mubr.f32.gmra.mrb[0].mxu0 %v645
      %v855 = vpop.f32.mrb[0].mxu0
      %v856 = vadd.f32 %v532, %v855
      %v857 = vpop.f32.mrb[0].mxu0
      %858 = vmatprep.mubr.f32.mxu0 0.0
      %859 = vmatmul.mubr.f32.gmra.mrb[0].mxu0 %v648
      %v860 = vpop.f32.mrb[0].mxu0
      %v861 = vadd.f32 %v537, %v860
      %v862 = vpop.f32.mrb[0].mxu0
      %863 = vmatprep.mubr.f32.mxu0 0.0
      %864 = vmatmul.mubr.f32.gmra.mrb[0].mxu0 %v651
      %v865 = vpop.f32.mrb[0].mxu0
      %v866 = vadd.f32 %v542, %v865
      %v867 = vpop.f32.mrb[0].mxu0
      %868 = vmatprep.mubr.f32.mxu0 0.0
      %869 = vmatmul.mubr.f32.gmra.mrb[0].mxu0 %v654
      %v870 = vpop.f32.mrb[0].mxu0
      %v871 = vadd.f32 %v547, %v870
      %v872 = vpop.f32.mrb[0].mxu0
      %873 = vmatprep.mubr.f32.mxu0 0.0
      %874 = vmatmul.mubr.f32.gmra.mrb[0].mxu0 %v657
      %v875 = vpop.f32.mrb[0].mxu0
      %v876 = vadd.f32 %v552, %v875
      %v877 = vpop.f32.mrb[0].mxu0
      %878 = vmatprep.mubr.f32.mxu0 0.0
      %879 = vmatmul.mubr.f32.gmra.mrb[0].mxu0 %v660
      %v880 = vpop.f32.mrb[0].mxu0
      %v881 = vadd.f32 %v557, %v880
      %v882 = vpop.f32.mrb[0].mxu0
      %883 = vmatprep.mubr.f32.mxu0 0.0
      %884 = vmatmul.mubr.f32.gmra.mrb[0].mxu0 %v663
      %v885 = vpop.f32.mrb[0].mxu0
      %v886 = vadd.f32 %v562, %v885
      %v887 = vpop.f32.mrb[0].mxu0
      %888 = vmatprep.mubr.f32.mxu0 0.0
      %889 = vmatmul.mubr.f32.gmra.mrb[0].mxu0 %v666
      %v890 = vpop.f32.mrb[0].mxu0
      %v891 = vadd.f32 %v567, %v890
      %v892 = vpop.f32.mrb[0].mxu0
      %893 = vmatprep.mubr.f32.mxu0 0.0
      %894 = vmatmul.mubr.f32.gmra.mrb[0].mxu0 %v669
      %v895 = vpop.f32.mrb[0].mxu0
      %v896 = vadd.f32 %v572, %v895
      %v897 = vpop.f32.mrb[0].mxu0
      %898 = vdwg.mxu0
      %v899 = vld [vmem:[%s172 + $0x2] sm:$0xff]
      %v900 = vld [vmem:[%s172 + $0xa] sm:$0xff]
      %v901 = vld [vmem:[%s172 + $0x1a] sm:$0xff]
      %v902 = vld [vmem:[%s172 + $0x22] sm:$0xff]
      %v903 = vld [vmem:[%s172 + $0x32] sm:$0xff]
      %v904 = vld [vmem:[%s172 + $0x3a] sm:$0xff]
      %v905 = vld [vmem:[%s172 + $0x4a] sm:$0xff]
      %v906 = vld [vmem:[%s172 + $0x52] sm:$0xff]
      %v907 = vld [vmem:[%s172 + $0x62] sm:$0xff]
      %v908 = vld [vmem:[%s172 + $0x6a] sm:$0xff]
      %v909 = vld [vmem:[%s172 + $0x7a] sm:$0xff]
      %v910 = vld [vmem:[%s172 + $0x82] sm:$0xff]
      %v911 = vld [vmem:[%s172 + $0x92] sm:$0xff]
      %v912 = vld [vmem:[%s172 + $0x9a] sm:$0xff]
      %v913 = vld [vmem:[%s172 + $0xaa] sm:$0xff]
      %v914 = vld [vmem:[%s172 + $0xb2] sm:$0xff]
      %v915 = vld [vmem:[%s172 + $0xc2] sm:$0xff]
      %v916 = vld [vmem:[%s172 + $0xca] sm:$0xff]
      %v917 = vld [vmem:[%s172 + $0xda] sm:$0xff]
      %v918 = vld [vmem:[%s172 + $0xe2] sm:$0xff]
      %v919 = vld [vmem:[%s172 + $0xf2] sm:$0xff]
      %v920 = vld [vmem:[%s172 + $0xfa] sm:$0xff]
      %v921 = vld [vmem:[%s172 + $0x10a] sm:$0xff]
      %v922 = vld [vmem:[%s172 + $0x112] sm:$0xff]
      %v923 = vld [vmem:[%s172 + $0x122] sm:$0xff]
      %v924 = vld [vmem:[%s172 + $0x12a] sm:$0xff]
      %v925 = vld [vmem:[%s172 + $0x13a] sm:$0xff]
      %v926 = vld [vmem:[%s172 + $0x142] sm:$0xff]
      %v927 = vld [vmem:[%s172 + $0x152] sm:$0xff]
      %v928 = vld [vmem:[%s172 + $0x15a] sm:$0xff]
      %v929 = vld [vmem:[%s172 + $0x16a] sm:$0xff]
      %v930 = vld [vmem:[%s172 + $0x172] sm:$0xff]
      %s931 = scalar_lea.vmem %s1, 8
      %v932 = vld [vmem:[%s931] sm:$0xf]
      %v934 = vsel %vm249, %v899, 0
      %v937 = vsel %vm249, %v900, 0
      %v940 = vsel %vm249, %v901, 0
      %v943 = vsel %vm249, %v902, 0
      %v946 = vsel %vm249, %v903, 0
      %v949 = vsel %vm249, %v904, 0
      %v952 = vsel %vm249, %v905, 0
      %v955 = vsel %vm249, %v906, 0
      %v958 = vsel %vm249, %v907, 0
      %v961 = vsel %vm249, %v908, 0
      %v964 = vsel %vm249, %v909, 0
      %v967 = vsel %vm249, %v910, 0
      %v970 = vsel %vm249, %v911, 0
      %v973 = vsel %vm249, %v912, 0
      %v976 = vsel %vm249, %v913, 0
      %v979 = vsel %vm249, %v914, 0
      %v982 = vsel %vm249, %v915, 0
      %v985 = vsel %vm249, %v916, 0
      %v988 = vsel %vm249, %v917, 0
      %v991 = vsel %vm249, %v918, 0
      %v994 = vsel %vm249, %v919, 0
      %v997 = vsel %vm249, %v920, 0
      %v1000 = vsel %vm249, %v921, 0
      %v1003 = vsel %vm249, %v922, 0
      %v1006 = vsel %vm249, %v923, 0
      %v1009 = vsel %vm249, %v924, 0
      %v1012 = vsel %vm249, %v925, 0
      %v1015 = vsel %vm249, %v926, 0
      %v1018 = vsel %vm249, %v927, 0
      %v1021 = vsel %vm249, %v928, 0
      %v1024 = vsel %vm249, %v929, 0
      %v1027 = vsel %vm249, %v930, 0
      %v1030 = vsel %vm346, %v932, 0
      %1032 = vmatprep.subr.mxu0 0.0
      %1033 = vmatpush1.msra.mxu0 %v1030
      %1034 = vmatprep.subr.mxu0 0.0
      %1035 = vmatpush1.msra.mxu0 0.0
      %1036 = vmatprep.subr.mxu0 0.0
      %1037 = vmatpush1.msra.mxu0 0.0
      %1038 = vmatprep.subr.mxu0 0.0
      %1039 = vmatpush1.msra.mxu0 0.0
      %1040 = vmatprep.subr.mxu0 0.0
      %1041 = vmatpush1.msra.mxu0 0.0
      %1042 = vmatprep.subr.mxu0 0.0
      %1043 = vmatpush1.msra.mxu0 0.0
      %1044 = vmatprep.subr.mxu0 0.0
      %1045 = vmatpush1.msra.mxu0 0.0
      %1046 = vmatprep.subr.mxu0 0.0
      %1047 = vmatpush1.msra.mxu0 0.0
      %1048 = vmatprep.subr.mxu0 0.0
      %1049 = vmatpush1.msra.mxu0 0.0
      %1050 = vmatprep.subr.mxu0 0.0
      %1051 = vmatpush1.msra.mxu0 0.0
      %1052 = vmatprep.subr.mxu0 0.0
      %1053 = vmatpush1.msra.mxu0 0.0
      %1054 = vmatprep.subr.mxu0 0.0
      %1055 = vmatpush1.msra.mxu0 0.0
      %1056 = vmatprep.subr.mxu0 0.0
      %1057 = vmatpush1.msra.mxu0 0.0
      %1058 = vmatprep.subr.mxu0 0.0
      %1059 = vmatpush1.msra.mxu0 0.0
      %1060 = vmatprep.subr.mxu0 0.0
      %1061 = vmatpush1.msra.mxu0 0.0
      %1062 = vmatprep.subr.mxu0 0.0
      %1063 = vmatpush1.msra.mxu0 0.0
      %1064 = vmatprep.subr.mxu0 0.0
      %1065 = vmatpush1.msra.mxu0 0.0
      %1066 = vmatprep.subr.mxu0 0.0
      %1067 = vmatpush1.msra.mxu0 0.0
      %1068 = vmatprep.subr.mxu0 0.0
      %1069 = vmatpush1.msra.mxu0 0.0
      %1070 = vmatprep.subr.mxu0 0.0
      %1071 = vmatpush1.msra.mxu0 0.0
      %1072 = vmatprep.subr.mxu0 0.0
      %1073 = vmatpush1.msra.mxu0 0.0
      %1074 = vmatprep.subr.mxu0 0.0
      %1075 = vmatpush1.msra.mxu0 0.0
      %1076 = vmatprep.subr.mxu0 0.0
      %1077 = vmatpush1.msra.mxu0 0.0
      %1078 = vmatprep.subr.mxu0 0.0
      %1079 = vmatpush1.msra.mxu0 0.0
      %1080 = vmatprep.subr.mxu0 0.0
      %1081 = vmatpush1.msra.mxu0 0.0
      %1082 = vmatprep.subr.mxu0 0.0
      %1083 = vmatpush1.msra.mxu0 0.0
      %1084 = vmatprep.subr.mxu0 0.0
      %1085 = vmatpush1.msra.mxu0 0.0
      %1086 = vmatprep.subr.mxu0 0.0
      %1087 = vmatpush1.msra.mxu0 0.0
      %1088 = vmatprep.subr.mxu0 0.0
      %1089 = vmatpush1.msra.mxu0 0.0
      %1090 = vmatprep.subr.mxu0 0.0
      %1091 = vmatpush1.msra.mxu0 0.0
      %1092 = vmatprep.subr.mxu0 0.0
      %1093 = vmatpush1.msra.mxu0 0.0
      %1094 = vmatprep.subr.mxu0 0.0
      %1095 = vmatpush1.msra.mxu0 0.0
      %1096 = vmatprep.mubr.f32.mxu0 0.0
      %1097 = vmatmul.mubr.f32.gmra.mrb[0].mxu0 %v934
      %v1098 = vpop.f32.mrb[0].mxu0
      %v1099 = vadd.f32 0.0, %v1098
      %v1100 = vpop.f32.mrb[0].mxu0
      %1101 = vmatprep.mubr.f32.mxu0 0.0
      %1102 = vmatmul.mubr.f32.gmra.mrb[0].mxu0 %v937
      %v1103 = vpop.f32.mrb[0].mxu0
      %v1104 = vadd.f32 0.0, %v1103
      %v1105 = vpop.f32.mrb[0].mxu0
      %1106 = vmatprep.mubr.f32.mxu0 0.0
      %1107 = vmatmul.mubr.f32.gmra.mrb[0].mxu0 %v940
      %v1108 = vpop.f32.mrb[0].mxu0
      %v1109 = vadd.f32 0.0, %v1108
      %v1110 = vpop.f32.mrb[0].mxu0
      %1111 = vmatprep.mubr.f32.mxu0 0.0
      %1112 = vmatmul.mubr.f32.gmra.mrb[0].mxu0 %v943
      %v1113 = vpop.f32.mrb[0].mxu0
      %v1114 = vadd.f32 0.0, %v1113
      %v1115 = vpop.f32.mrb[0].mxu0
      %1116 = vmatprep.mubr.f32.mxu0 0.0
      %1117 = vmatmul.mubr.f32.gmra.mrb[0].mxu0 %v946
      %v1118 = vpop.f32.mrb[0].mxu0
      %v1119 = vadd.f32 0.0, %v1118
      %v1120 = vpop.f32.mrb[0].mxu0
      %1121 = vmatprep.mubr.f32.mxu0 0.0
      %1122 = vmatmul.mubr.f32.gmra.mrb[0].mxu0 %v949
      %v1123 = vpop.f32.mrb[0].mxu0
      %v1124 = vadd.f32 0.0, %v1123
      %v1125 = vpop.f32.mrb[0].mxu0
      %1126 = vmatprep.mubr.f32.mxu0 0.0
      %1127 = vmatmul.mubr.f32.gmra.mrb[0].mxu0 %v952
      %v1128 = vpop.f32.mrb[0].mxu0
      %v1129 = vadd.f32 0.0, %v1128
      %v1130 = vpop.f32.mrb[0].mxu0
      %1131 = vmatprep.mubr.f32.mxu0 0.0
      %1132 = vmatmul.mubr.f32.gmra.mrb[0].mxu0 %v955
      %v1133 = vpop.f32.mrb[0].mxu0
      %v1134 = vadd.f32 0.0, %v1133
      %v1135 = vpop.f32.mrb[0].mxu0
      %1136 = vmatprep.mubr.f32.mxu0 0.0
      %1137 = vmatmul.mubr.f32.gmra.mrb[0].mxu0 %v958
      %v1138 = vpop.f32.mrb[0].mxu0
      %v1139 = vadd.f32 0.0, %v1138
      %v1140 = vpop.f32.mrb[0].mxu0
      %1141 = vmatprep.mubr.f32.mxu0 0.0
      %1142 = vmatmul.mubr.f32.gmra.mrb[0].mxu0 %v961
      %v1143 = vpop.f32.mrb[0].mxu0
      %v1144 = vadd.f32 0.0, %v1143
      %v1145 = vpop.f32.mrb[0].mxu0
      %1146 = vmatprep.mubr.f32.mxu0 0.0
      %1147 = vmatmul.mubr.f32.gmra.mrb[0].mxu0 %v964
      %v1148 = vpop.f32.mrb[0].mxu0
      %v1149 = vadd.f32 0.0, %v1148
      %v1150 = vpop.f32.mrb[0].mxu0
      %1151 = vmatprep.mubr.f32.mxu0 0.0
      %1152 = vmatmul.mubr.f32.gmra.mrb[0].mxu0 %v967
      %v1153 = vpop.f32.mrb[0].mxu0
      %v1154 = vadd.f32 0.0, %v1153
      %v1155 = vpop.f32.mrb[0].mxu0
      %1156 = vmatprep.mubr.f32.mxu0 0.0
      %1157 = vmatmul.mubr.f32.gmra.mrb[0].mxu0 %v970
      %v1158 = vpop.f32.mrb[0].mxu0
      %v1159 = vadd.f32 0.0, %v1158
      %v1160 = vpop.f32.mrb[0].mxu0
      %1161 = vmatprep.mubr.f32.mxu0 0.0
      %1162 = vmatmul.mubr.f32.gmra.mrb[0].mxu0 %v973
      %v1163 = vpop.f32.mrb[0].mxu0
      %v1164 = vadd.f32 0.0, %v1163
      %v1165 = vpop.f32.mrb[0].mxu0
      %1166 = vmatprep.mubr.f32.mxu0 0.0
      %1167 = vmatmul.mubr.f32.gmra.mrb[0].mxu0 %v976
      %v1168 = vpop.f32.mrb[0].mxu0
      %v1169 = vadd.f32 0.0, %v1168
      %v1170 = vpop.f32.mrb[0].mxu0
      %1171 = vmatprep.mubr.f32.mxu0 0.0
      %1172 = vmatmul.mubr.f32.gmra.mrb[0].mxu0 %v979
      %v1173 = vpop.f32.mrb[0].mxu0
      %v1174 = vadd.f32 0.0, %v1173
      %v1175 = vpop.f32.mrb[0].mxu0
      %1176 = vmatprep.mubr.f32.mxu0 0.0
      %1177 = vmatmul.mubr.f32.gmra.mrb[0].mxu0 %v982
      %v1178 = vpop.f32.mrb[0].mxu0
      %v1179 = vadd.f32 0.0, %v1178
      %v1180 = vpop.f32.mrb[0].mxu0
      %1181 = vmatprep.mubr.f32.mxu0 0.0
      %1182 = vmatmul.mubr.f32.gmra.mrb[0].mxu0 %v985
      %v1183 = vpop.f32.mrb[0].mxu0
      %v1184 = vadd.f32 0.0, %v1183
      %v1185 = vpop.f32.mrb[0].mxu0
      %1186 = vmatprep.mubr.f32.mxu0 0.0
      %1187 = vmatmul.mubr.f32.gmra.mrb[0].mxu0 %v988
      %v1188 = vpop.f32.mrb[0].mxu0
      %v1189 = vadd.f32 0.0, %v1188
      %v1190 = vpop.f32.mrb[0].mxu0
      %1191 = vmatprep.mubr.f32.mxu0 0.0
      %1192 = vmatmul.mubr.f32.gmra.mrb[0].mxu0 %v991
      %v1193 = vpop.f32.mrb[0].mxu0
      %v1194 = vadd.f32 0.0, %v1193
      %v1195 = vpop.f32.mrb[0].mxu0
      %1196 = vmatprep.mubr.f32.mxu0 0.0
      %1197 = vmatmul.mubr.f32.gmra.mrb[0].mxu0 %v994
      %v1198 = vpop.f32.mrb[0].mxu0
      %v1199 = vadd.f32 0.0, %v1198
      %v1200 = vpop.f32.mrb[0].mxu0
      %1201 = vmatprep.mubr.f32.mxu0 0.0
      %1202 = vmatmul.mubr.f32.gmra.mrb[0].mxu0 %v997
      %v1203 = vpop.f32.mrb[0].mxu0
      %v1204 = vadd.f32 0.0, %v1203
      %v1205 = vpop.f32.mrb[0].mxu0
      %1206 = vmatprep.mubr.f32.mxu0 0.0
      %1207 = vmatmul.mubr.f32.gmra.mrb[0].mxu0 %v1000
      %v1208 = vpop.f32.mrb[0].mxu0
      %v1209 = vadd.f32 0.0, %v1208
      %v1210 = vpop.f32.mrb[0].mxu0
      %1211 = vmatprep.mubr.f32.mxu0 0.0
      %1212 = vmatmul.mubr.f32.gmra.mrb[0].mxu0 %v1003
      %v1213 = vpop.f32.mrb[0].mxu0
      %v1214 = vadd.f32 0.0, %v1213
      %v1215 = vpop.f32.mrb[0].mxu0
      %1216 = vmatprep.mubr.f32.mxu0 0.0
      %1217 = vmatmul.mubr.f32.gmra.mrb[0].mxu0 %v1006
      %v1218 = vpop.f32.mrb[0].mxu0
      %v1219 = vadd.f32 0.0, %v1218
      %v1220 = vpop.f32.mrb[0].mxu0
      %1221 = vmatprep.mubr.f32.mxu0 0.0
      %1222 = vmatmul.mubr.f32.gmra.mrb[0].mxu0 %v1009
      %v1223 = vpop.f32.mrb[0].mxu0
      %v1224 = vadd.f32 0.0, %v1223
      %v1225 = vpop.f32.mrb[0].mxu0
      %1226 = vmatprep.mubr.f32.mxu0 0.0
      %1227 = vmatmul.mubr.f32.gmra.mrb[0].mxu0 %v1012
      %v1228 = vpop.f32.mrb[0].mxu0
      %v1229 = vadd.f32 0.0, %v1228
      %v1230 = vpop.f32.mrb[0].mxu0
      %1231 = vmatprep.mubr.f32.mxu0 0.0
      %1232 = vmatmul.mubr.f32.gmra.mrb[0].mxu0 %v1015
      %v1233 = vpop.f32.mrb[0].mxu0
      %v1234 = vadd.f32 0.0, %v1233
      %v1235 = vpop.f32.mrb[0].mxu0
      %1236 = vmatprep.mubr.f32.mxu0 0.0
      %1237 = vmatmul.mubr.f32.gmra.mrb[0].mxu0 %v1018
      %v1238 = vpop.f32.mrb[0].mxu0
      %v1239 = vadd.f32 0.0, %v1238
      %v1240 = vpop.f32.mrb[0].mxu0
      %1241 = vmatprep.mubr.f32.mxu0 0.0
      %1242 = vmatmul.mubr.f32.gmra.mrb[0].mxu0 %v1021
      %v1243 = vpop.f32.mrb[0].mxu0
      %v1244 = vadd.f32 0.0, %v1243
      %v1245 = vpop.f32.mrb[0].mxu0
      %1246 = vmatprep.mubr.f32.mxu0 0.0
      %1247 = vmatmul.mubr.f32.gmra.mrb[0].mxu0 %v1024
      %v1248 = vpop.f32.mrb[0].mxu0
      %v1249 = vadd.f32 0.0, %v1248
      %v1250 = vpop.f32.mrb[0].mxu0
      %1251 = vmatprep.mubr.f32.mxu0 0.0
      %1252 = vmatmul.mubr.f32.gmra.mrb[0].mxu0 %v1027
      %v1253 = vpop.f32.mrb[0].mxu0
      %v1254 = vadd.f32 0.0, %v1253
      %v1255 = vpop.f32.mrb[0].mxu0
      %1256 = vdwg.mxu0
      %v1257 = vadd.f32 %v741, %v1099
      %v1258 = vadd.f32 %v746, %v1104
      %v1259 = vadd.f32 %v751, %v1109
      %v1260 = vadd.f32 %v756, %v1114
      %v1261 = vadd.f32 %v761, %v1119
      %v1262 = vadd.f32 %v766, %v1124
      %v1263 = vadd.f32 %v771, %v1129
      %v1264 = vadd.f32 %v776, %v1134
      %v1265 = vadd.f32 %v781, %v1139
      %v1266 = vadd.f32 %v786, %v1144
      %v1267 = vadd.f32 %v791, %v1149
      %v1268 = vadd.f32 %v796, %v1154
      %v1269 = vadd.f32 %v801, %v1159
      %v1270 = vadd.f32 %v806, %v1164
      %v1271 = vadd.f32 %v811, %v1169
      %v1272 = vadd.f32 %v816, %v1174
      %v1273 = vadd.f32 %v821, %v1179
      %v1274 = vadd.f32 %v826, %v1184
      %v1275 = vadd.f32 %v831, %v1189
      %v1276 = vadd.f32 %v836, %v1194
      %v1277 = vadd.f32 %v841, %v1199
      %v1278 = vadd.f32 %v846, %v1204
      %v1279 = vadd.f32 %v851, %v1209
      %v1280 = vadd.f32 %v856, %v1214
      %v1281 = vadd.f32 %v861, %v1219
      %v1282 = vadd.f32 %v866, %v1224
      %v1283 = vadd.f32 %v871, %v1229
      %v1284 = vadd.f32 %v876, %v1234
      %v1285 = vadd.f32 %v881, %v1239
      %v1286 = vadd.f32 %v886, %v1244
      %v1287 = vadd.f32 %v891, %v1249
      %v1288 = vadd.f32 %v896, %v1254
      %s1289 = scalar_lea.vmem %s172, 24
      %v1290 = vld [vmem:[%s1289] sm:$0xff]
      %v1291 = vld [vmem:[%s1289 + $0x8] sm:$0xff]
      %v1292 = vld [vmem:[%s1289 + $0x18] sm:$0xff]
      %v1293 = vld [vmem:[%s1289 + $0x20] sm:$0xff]
      %v1294 = vld [vmem:[%s1289 + $0x30] sm:$0xff]
      %v1295 = vld [vmem:[%s1289 + $0x38] sm:$0xff]
      %v1296 = vld [vmem:[%s1289 + $0x48] sm:$0xff]
      %v1297 = vld [vmem:[%s1289 + $0x50] sm:$0xff]
      %v1298 = vld [vmem:[%s1289 + $0x60] sm:$0xff]
      %v1299 = vld [vmem:[%s1289 + $0x68] sm:$0xff]
      %v1300 = vld [vmem:[%s1289 + $0x78] sm:$0xff]
      %v1301 = vld [vmem:[%s1289 + $0x80] sm:$0xff]
      %v1302 = vld [vmem:[%s1289 + $0x90] sm:$0xff]
      %v1303 = vld [vmem:[%s1289 + $0x98] sm:$0xff]
      %v1304 = vld [vmem:[%s1289 + $0xa8] sm:$0xff]
      %v1305 = vld [vmem:[%s1289 + $0xb0] sm:$0xff]
      %v1306 = vld [vmem:[%s1289 + $0xc0] sm:$0xff]
      %v1307 = vld [vmem:[%s1289 + $0xc8] sm:$0xff]
      %v1308 = vld [vmem:[%s1289 + $0xd8] sm:$0xff]
      %v1309 = vld [vmem:[%s1289 + $0xe0] sm:$0xff]
      %v1310 = vld [vmem:[%s1289 + $0xf0] sm:$0xff]
      %v1311 = vld [vmem:[%s1289 + $0xf8] sm:$0xff]
      %v1312 = vld [vmem:[%s1289 + $0x108] sm:$0xff]
      %v1313 = vld [vmem:[%s1289 + $0x110] sm:$0xff]
      %v1314 = vld [vmem:[%s1289 + $0x120] sm:$0xff]
      %v1315 = vld [vmem:[%s1289 + $0x128] sm:$0xff]
      %v1316 = vld [vmem:[%s1289 + $0x138] sm:$0xff]
      %v1317 = vld [vmem:[%s1289 + $0x140] sm:$0xff]
      %v1318 = vld [vmem:[%s1289 + $0x150] sm:$0xff]
      %v1319 = vld [vmem:[%s1289 + $0x158] sm:$0xff]
      %v1320 = vld [vmem:[%s1289 + $0x168] sm:$0xff]
      %v1321 = vld [vmem:[%s1289 + $0x170] sm:$0xff]
      %s1322 = scalar_lea.vmem %s1, 12
      %v1323 = vld [vmem:[%s1322] sm:$0xf]
      %v1325 = vsel %vm249, %v1290, 0
      %v1328 = vsel %vm249, %v1291, 0
      %v1331 = vsel %vm249, %v1292, 0
      %v1334 = vsel %vm249, %v1293, 0
      %v1337 = vsel %vm249, %v1294, 0
      %v1340 = vsel %vm249, %v1295, 0
      %v1343 = vsel %vm249, %v1296, 0
      %v1346 = vsel %vm249, %v1297, 0
      %v1349 = vsel %vm249, %v1298, 0
      %v1352 = vsel %vm249, %v1299, 0
      %v1355 = vsel %vm249, %v1300, 0
      %v1358 = vsel %vm249, %v1301, 0
      %v1361 = vsel %vm249, %v1302, 0
      %v1364 = vsel %vm249, %v1303, 0
      %v1367 = vsel %vm249, %v1304, 0
      %v1370 = vsel %vm249, %v1305, 0
      %v1373 = vsel %vm249, %v1306, 0
      %v1376 = vsel %vm249, %v1307, 0
      %v1379 = vsel %vm249, %v1308, 0
      %v1382 = vsel %vm249, %v1309, 0
      %v1385 = vsel %vm249, %v1310, 0
      %v1388 = vsel %vm249, %v1311, 0
      %v1391 = vsel %vm249, %v1312, 0
      %v1394 = vsel %vm249, %v1313, 0
      %v1397 = vsel %vm249, %v1314, 0
      %v1400 = vsel %vm249, %v1315, 0
      %v1403 = vsel %vm249, %v1316, 0
      %v1406 = vsel %vm249, %v1317, 0
      %v1409 = vsel %vm249, %v1318, 0
      %v1412 = vsel %vm249, %v1319, 0
      %v1415 = vsel %vm249, %v1320, 0
      %v1418 = vsel %vm249, %v1321, 0
      %v1421 = vsel %vm346, %v1323, 0
      %1423 = vmatprep.subr.mxu0 0.0
      %1424 = vmatpush1.msra.mxu0 %v1421
      %1425 = vmatprep.subr.mxu0 0.0
      %1426 = vmatpush1.msra.mxu0 0.0
      %1427 = vmatprep.subr.mxu0 0.0
      %1428 = vmatpush1.msra.mxu0 0.0
      %1429 = vmatprep.subr.mxu0 0.0
      %1430 = vmatpush1.msra.mxu0 0.0
      %1431 = vmatprep.subr.mxu0 0.0
      %1432 = vmatpush1.msra.mxu0 0.0
      %1433 = vmatprep.subr.mxu0 0.0
      %1434 = vmatpush1.msra.mxu0 0.0
      %1435 = vmatprep.subr.mxu0 0.0
      %1436 = vmatpush1.msra.mxu0 0.0
      %1437 = vmatprep.subr.mxu0 0.0
      %1438 = vmatpush1.msra.mxu0 0.0
      %1439 = vmatprep.subr.mxu0 0.0
      %1440 = vmatpush1.msra.mxu0 0.0
      %1441 = vmatprep.subr.mxu0 0.0
      %1442 = vmatpush1.msra.mxu0 0.0
      %1443 = vmatprep.subr.mxu0 0.0
      %1444 = vmatpush1.msra.mxu0 0.0
      %1445 = vmatprep.subr.mxu0 0.0
      %1446 = vmatpush1.msra.mxu0 0.0
      %1447 = vmatprep.subr.mxu0 0.0
      %1448 = vmatpush1.msra.mxu0 0.0
      %1449 = vmatprep.subr.mxu0 0.0
      %1450 = vmatpush1.msra.mxu0 0.0
      %1451 = vmatprep.subr.mxu0 0.0
      %1452 = vmatpush1.msra.mxu0 0.0
      %1453 = vmatprep.subr.mxu0 0.0
      %1454 = vmatpush1.msra.mxu0 0.0
      %1455 = vmatprep.subr.mxu0 0.0
      %1456 = vmatpush1.msra.mxu0 0.0
      %1457 = vmatprep.subr.mxu0 0.0
      %1458 = vmatpush1.msra.mxu0 0.0
      %1459 = vmatprep.subr.mxu0 0.0
      %1460 = vmatpush1.msra.mxu0 0.0
      %1461 = vmatprep.subr.mxu0 0.0
      %1462 = vmatpush1.msra.mxu0 0.0
      %1463 = vmatprep.subr.mxu0 0.0
      %1464 = vmatpush1.msra.mxu0 0.0
      %1465 = vmatprep.subr.mxu0 0.0
      %1466 = vmatpush1.msra.mxu0 0.0
      %1467 = vmatprep.subr.mxu0 0.0
      %1468 = vmatpush1.msra.mxu0 0.0
      %1469 = vmatprep.subr.mxu0 0.0
      %1470 = vmatpush1.msra.mxu0 0.0
      %1471 = vmatprep.subr.mxu0 0.0
      %1472 = vmatpush1.msra.mxu0 0.0
      %1473 = vmatprep.subr.mxu0 0.0
      %1474 = vmatpush1.msra.mxu0 0.0
      %1475 = vmatprep.subr.mxu0 0.0
      %1476 = vmatpush1.msra.mxu0 0.0
      %1477 = vmatprep.subr.mxu0 0.0
      %1478 = vmatpush1.msra.mxu0 0.0
      %1479 = vmatprep.subr.mxu0 0.0
      %1480 = vmatpush1.msra.mxu0 0.0
      %1481 = vmatprep.subr.mxu0 0.0
      %1482 = vmatpush1.msra.mxu0 0.0
      %1483 = vmatprep.subr.mxu0 0.0
      %1484 = vmatpush1.msra.mxu0 0.0
      %1485 = vmatprep.subr.mxu0 0.0
      %1486 = vmatpush1.msra.mxu0 0.0
      %1487 = vmatprep.mubr.f32.mxu0 0.0
      %1488 = vmatmul.mubr.f32.gmra.mrb[0].mxu0 %v1325
      %v1489 = vpop.f32.mrb[0].mxu0
      %v1490 = vadd.f32 0.0, %v1489
      %v1491 = vpop.f32.mrb[0].mxu0
      %1492 = vmatprep.mubr.f32.mxu0 0.0
      %1493 = vmatmul.mubr.f32.gmra.mrb[0].mxu0 %v1328
      %v1494 = vpop.f32.mrb[0].mxu0
      %v1495 = vadd.f32 0.0, %v1494
      %v1496 = vpop.f32.mrb[0].mxu0
      %1497 = vmatprep.mubr.f32.mxu0 0.0
      %1498 = vmatmul.mubr.f32.gmra.mrb[0].mxu0 %v1331
      %v1499 = vpop.f32.mrb[0].mxu0
      %v1500 = vadd.f32 0.0, %v1499
      %v1501 = vpop.f32.mrb[0].mxu0
      %1502 = vmatprep.mubr.f32.mxu0 0.0
      %1503 = vmatmul.mubr.f32.gmra.mrb[0].mxu0 %v1334
      %v1504 = vpop.f32.mrb[0].mxu0
      %v1505 = vadd.f32 0.0, %v1504
      %v1506 = vpop.f32.mrb[0].mxu0
      %1507 = vmatprep.mubr.f32.mxu0 0.0
      %1508 = vmatmul.mubr.f32.gmra.mrb[0].mxu0 %v1337
      %v1509 = vpop.f32.mrb[0].mxu0
      %v1510 = vadd.f32 0.0, %v1509
      %v1511 = vpop.f32.mrb[0].mxu0
      %1512 = vmatprep.mubr.f32.mxu0 0.0
      %1513 = vmatmul.mubr.f32.gmra.mrb[0].mxu0 %v1340
      %v1514 = vpop.f32.mrb[0].mxu0
      %v1515 = vadd.f32 0.0, %v1514
      %v1516 = vpop.f32.mrb[0].mxu0
      %1517 = vmatprep.mubr.f32.mxu0 0.0
      %1518 = vmatmul.mubr.f32.gmra.mrb[0].mxu0 %v1343
      %v1519 = vpop.f32.mrb[0].mxu0
      %v1520 = vadd.f32 0.0, %v1519
      %v1521 = vpop.f32.mrb[0].mxu0
      %1522 = vmatprep.mubr.f32.mxu0 0.0
      %1523 = vmatmul.mubr.f32.gmra.mrb[0].mxu0 %v1346
      %v1524 = vpop.f32.mrb[0].mxu0
      %v1525 = vadd.f32 0.0, %v1524
      %v1526 = vpop.f32.mrb[0].mxu0
      %1527 = vmatprep.mubr.f32.mxu0 0.0
      %1528 = vmatmul.mubr.f32.gmra.mrb[0].mxu0 %v1349
      %v1529 = vpop.f32.mrb[0].mxu0
      %v1530 = vadd.f32 0.0, %v1529
      %v1531 = vpop.f32.mrb[0].mxu0
      %1532 = vmatprep.mubr.f32.mxu0 0.0
      %1533 = vmatmul.mubr.f32.gmra.mrb[0].mxu0 %v1352
      %v1534 = vpop.f32.mrb[0].mxu0
      %v1535 = vadd.f32 0.0, %v1534
      %v1536 = vpop.f32.mrb[0].mxu0
      %1537 = vmatprep.mubr.f32.mxu0 0.0
      %1538 = vmatmul.mubr.f32.gmra.mrb[0].mxu0 %v1355
      %v1539 = vpop.f32.mrb[0].mxu0
      %v1540 = vadd.f32 0.0, %v1539
      %v1541 = vpop.f32.mrb[0].mxu0
      %1542 = vmatprep.mubr.f32.mxu0 0.0
      %1543 = vmatmul.mubr.f32.gmra.mrb[0].mxu0 %v1358
      %v1544 = vpop.f32.mrb[0].mxu0
      %v1545 = vadd.f32 0.0, %v1544
      %v1546 = vpop.f32.mrb[0].mxu0
      %1547 = vmatprep.mubr.f32.mxu0 0.0
      %1548 = vmatmul.mubr.f32.gmra.mrb[0].mxu0 %v1361
      %v1549 = vpop.f32.mrb[0].mxu0
      %v1550 = vadd.f32 0.0, %v1549
      %v1551 = vpop.f32.mrb[0].mxu0
      %1552 = vmatprep.mubr.f32.mxu0 0.0
      %1553 = vmatmul.mubr.f32.gmra.mrb[0].mxu0 %v1364
      %v1554 = vpop.f32.mrb[0].mxu0
      %v1555 = vadd.f32 0.0, %v1554
      %v1556 = vpop.f32.mrb[0].mxu0
      %1557 = vmatprep.mubr.f32.mxu0 0.0
      %1558 = vmatmul.mubr.f32.gmra.mrb[0].mxu0 %v1367
      %v1559 = vpop.f32.mrb[0].mxu0
      %v1560 = vadd.f32 0.0, %v1559
      %v1561 = vpop.f32.mrb[0].mxu0
      %1562 = vmatprep.mubr.f32.mxu0 0.0
      %1563 = vmatmul.mubr.f32.gmra.mrb[0].mxu0 %v1370
      %v1564 = vpop.f32.mrb[0].mxu0
      %v1565 = vadd.f32 0.0, %v1564
      %v1566 = vpop.f32.mrb[0].mxu0
      %1567 = vmatprep.mubr.f32.mxu0 0.0
      %1568 = vmatmul.mubr.f32.gmra.mrb[0].mxu0 %v1373
      %v1569 = vpop.f32.mrb[0].mxu0
      %v1570 = vadd.f32 0.0, %v1569
      %v1571 = vpop.f32.mrb[0].mxu0
      %1572 = vmatprep.mubr.f32.mxu0 0.0
      %1573 = vmatmul.mubr.f32.gmra.mrb[0].mxu0 %v1376
      %v1574 = vpop.f32.mrb[0].mxu0
      %v1575 = vadd.f32 0.0, %v1574
      %v1576 = vpop.f32.mrb[0].mxu0
      %1577 = vmatprep.mubr.f32.mxu0 0.0
      %1578 = vmatmul.mubr.f32.gmra.mrb[0].mxu0 %v1379
      %v1579 = vpop.f32.mrb[0].mxu0
      %v1580 = vadd.f32 0.0, %v1579
      %v1581 = vpop.f32.mrb[0].mxu0
      %1582 = vmatprep.mubr.f32.mxu0 0.0
      %1583 = vmatmul.mubr.f32.gmra.mrb[0].mxu0 %v1382
      %v1584 = vpop.f32.mrb[0].mxu0
      %v1585 = vadd.f32 0.0, %v1584
      %v1586 = vpop.f32.mrb[0].mxu0
      %1587 = vmatprep.mubr.f32.mxu0 0.0
      %1588 = vmatmul.mubr.f32.gmra.mrb[0].mxu0 %v1385
      %v1589 = vpop.f32.mrb[0].mxu0
      %v1590 = vadd.f32 0.0, %v1589
      %v1591 = vpop.f32.mrb[0].mxu0
      %1592 = vmatprep.mubr.f32.mxu0 0.0
      %1593 = vmatmul.mubr.f32.gmra.mrb[0].mxu0 %v1388
      %v1594 = vpop.f32.mrb[0].mxu0
      %v1595 = vadd.f32 0.0, %v1594
      %v1596 = vpop.f32.mrb[0].mxu0
      %1597 = vmatprep.mubr.f32.mxu0 0.0
      %1598 = vmatmul.mubr.f32.gmra.mrb[0].mxu0 %v1391
      %v1599 = vpop.f32.mrb[0].mxu0
      %v1600 = vadd.f32 0.0, %v1599
      %v1601 = vpop.f32.mrb[0].mxu0
      %1602 = vmatprep.mubr.f32.mxu0 0.0
      %1603 = vmatmul.mubr.f32.gmra.mrb[0].mxu0 %v1394
      %v1604 = vpop.f32.mrb[0].mxu0
      %v1605 = vadd.f32 0.0, %v1604
      %v1606 = vpop.f32.mrb[0].mxu0
      %1607 = vmatprep.mubr.f32.mxu0 0.0
      %1608 = vmatmul.mubr.f32.gmra.mrb[0].mxu0 %v1397
      %v1609 = vpop.f32.mrb[0].mxu0
      %v1610 = vadd.f32 0.0, %v1609
      %v1611 = vpop.f32.mrb[0].mxu0
      %1612 = vmatprep.mubr.f32.mxu0 0.0
      %1613 = vmatmul.mubr.f32.gmra.mrb[0].mxu0 %v1400
      %v1614 = vpop.f32.mrb[0].mxu0
      %v1615 = vadd.f32 0.0, %v1614
      %v1616 = vpop.f32.mrb[0].mxu0
      %1617 = vmatprep.mubr.f32.mxu0 0.0
      %1618 = vmatmul.mubr.f32.gmra.mrb[0].mxu0 %v1403
      %v1619 = vpop.f32.mrb[0].mxu0
      %v1620 = vadd.f32 0.0, %v1619
      %v1621 = vpop.f32.mrb[0].mxu0
      %1622 = vmatprep.mubr.f32.mxu0 0.0
      %1623 = vmatmul.mubr.f32.gmra.mrb[0].mxu0 %v1406
      %v1624 = vpop.f32.mrb[0].mxu0
      %v1625 = vadd.f32 0.0, %v1624
      %v1626 = vpop.f32.mrb[0].mxu0
      %1627 = vmatprep.mubr.f32.mxu0 0.0
      %1628 = vmatmul.mubr.f32.gmra.mrb[0].mxu0 %v1409
      %v1629 = vpop.f32.mrb[0].mxu0
      %v1630 = vadd.f32 0.0, %v1629
      %v1631 = vpop.f32.mrb[0].mxu0
      %1632 = vmatprep.mubr.f32.mxu0 0.0
      %1633 = vmatmul.mubr.f32.gmra.mrb[0].mxu0 %v1412
      %v1634 = vpop.f32.mrb[0].mxu0
      %v1635 = vadd.f32 0.0, %v1634
      %v1636 = vpop.f32.mrb[0].mxu0
      %1637 = vmatprep.mubr.f32.mxu0 0.0
      %1638 = vmatmul.mubr.f32.gmra.mrb[0].mxu0 %v1415
      %v1639 = vpop.f32.mrb[0].mxu0
      %v1640 = vadd.f32 0.0, %v1639
      %v1641 = vpop.f32.mrb[0].mxu0
      %1642 = vmatprep.mubr.f32.mxu0 0.0
      %1643 = vmatmul.mubr.f32.gmra.mrb[0].mxu0 %v1418
      %v1644 = vpop.f32.mrb[0].mxu0
      %v1645 = vadd.f32 0.0, %v1644
      %v1646 = vpop.f32.mrb[0].mxu0
      %1647 = vdwg.mxu0
      %v1648 = vadd.f32 %v1257, %v1490
      %v1649 = vadd.f32 %v1258, %v1495
      %v1650 = vadd.f32 %v1259, %v1500
      %v1651 = vadd.f32 %v1260, %v1505
      %v1652 = vadd.f32 %v1261, %v1510
      %v1653 = vadd.f32 %v1262, %v1515
      %v1654 = vadd.f32 %v1263, %v1520
      %v1655 = vadd.f32 %v1264, %v1525
      %v1656 = vadd.f32 %v1265, %v1530
      %v1657 = vadd.f32 %v1266, %v1535
      %v1658 = vadd.f32 %v1267, %v1540
      %v1659 = vadd.f32 %v1268, %v1545
      %v1660 = vadd.f32 %v1269, %v1550
      %v1661 = vadd.f32 %v1270, %v1555
      %v1662 = vadd.f32 %v1271, %v1560
      %v1663 = vadd.f32 %v1272, %v1565
      %v1664 = vadd.f32 %v1273, %v1570
      %v1665 = vadd.f32 %v1274, %v1575
      %v1666 = vadd.f32 %v1275, %v1580
      %v1667 = vadd.f32 %v1276, %v1585
      %v1668 = vadd.f32 %v1277, %v1590
      %v1669 = vadd.f32 %v1278, %v1595
      %v1670 = vadd.f32 %v1279, %v1600
      %v1671 = vadd.f32 %v1280, %v1605
      %v1672 = vadd.f32 %v1281, %v1610
      %v1673 = vadd.f32 %v1282, %v1615
      %v1674 = vadd.f32 %v1283, %v1620
      %v1675 = vadd.f32 %v1284, %v1625
      %v1676 = vadd.f32 %v1285, %v1630
      %v1677 = vadd.f32 %v1286, %v1635
      %v1678 = vadd.f32 %v1287, %v1640
      %v1679 = vadd.f32 %v1288, %v1645
      %v1680 = vld [vmem:[%s1289 + $0x1] sm:$0xff]
      %v1681 = vld [vmem:[%s1289 + $0x9] sm:$0xff]
      %v1682 = vld [vmem:[%s1289 + $0x19] sm:$0xff]
      %v1683 = vld [vmem:[%s1289 + $0x21] sm:$0xff]
      %v1684 = vld [vmem:[%s1289 + $0x31] sm:$0xff]
      %v1685 = vld [vmem:[%s1289 + $0x39] sm:$0xff]
      %v1686 = vld [vmem:[%s1289 + $0x49] sm:$0xff]
      %v1687 = vld [vmem:[%s1289 + $0x51] sm:$0xff]
      %v1688 = vld [vmem:[%s1289 + $0x61] sm:$0xff]
      %v1689 = vld [vmem:[%s1289 + $0x69] sm:$0xff]
      %v1690 = vld [vmem:[%s1289 + $0x79] sm:$0xff]
      %v1691 = vld [vmem:[%s1289 + $0x81] sm:$0xff]
      %v1692 = vld [vmem:[%s1289 + $0x91] sm:$0xff]
      %v1693 = vld [vmem:[%s1289 + $0x99] sm:$0xff]
      %v1694 = vld [vmem:[%s1289 + $0xa9] sm:$0xff]
      %v1695 = vld [vmem:[%s1289 + $0xb1] sm:$0xff]
      %v1696 = vld [vmem:[%s1289 + $0xc1] sm:$0xff]
      %v1697 = vld [vmem:[%s1289 + $0xc9] sm:$0xff]
      %v1698 = vld [vmem:[%s1289 + $0xd9] sm:$0xff]
      %v1699 = vld [vmem:[%s1289 + $0xe1] sm:$0xff]
      %v1700 = vld [vmem:[%s1289 + $0xf1] sm:$0xff]
      %v1701 = vld [vmem:[%s1289 + $0xf9] sm:$0xff]
      %v1702 = vld [vmem:[%s1289 + $0x109] sm:$0xff]
      %v1703 = vld [vmem:[%s1289 + $0x111] sm:$0xff]
      %v1704 = vld [vmem:[%s1289 + $0x121] sm:$0xff]
      %v1705 = vld [vmem:[%s1289 + $0x129] sm:$0xff]
      %v1706 = vld [vmem:[%s1289 + $0x139] sm:$0xff]
      %v1707 = vld [vmem:[%s1289 + $0x141] sm:$0xff]
      %v1708 = vld [vmem:[%s1289 + $0x151] sm:$0xff]
      %v1709 = vld [vmem:[%s1289 + $0x159] sm:$0xff]
      %v1710 = vld [vmem:[%s1289 + $0x169] sm:$0xff]
      %v1711 = vld [vmem:[%s1289 + $0x171] sm:$0xff]
      %s1712 = scalar_lea.vmem %s1, 16
      %v1713 = vld [vmem:[%s1712] sm:$0xf]
      %v1715 = vsel %vm249, %v1680, 0
      %v1718 = vsel %vm249, %v1681, 0
      %v1721 = vsel %vm249, %v1682, 0
      %v1724 = vsel %vm249, %v1683, 0
      %v1727 = vsel %vm249, %v1684, 0
      %v1730 = vsel %vm249, %v1685, 0
      %v1733 = vsel %vm249, %v1686, 0
      %v1736 = vsel %vm249, %v1687, 0
      %v1739 = vsel %vm249, %v1688, 0
      %v1742 = vsel %vm249, %v1689, 0
      %v1745 = vsel %vm249, %v1690, 0
      %v1748 = vsel %vm249, %v1691, 0
      %v1751 = vsel %vm249, %v1692, 0
      %v1754 = vsel %vm249, %v1693, 0
      %v1757 = vsel %vm249, %v1694, 0
      %v1760 = vsel %vm249, %v1695, 0
      %v1763 = vsel %vm249, %v1696, 0
      %v1766 = vsel %vm249, %v1697, 0
      %v1769 = vsel %vm249, %v1698, 0
      %v1772 = vsel %vm249, %v1699, 0
      %v1775 = vsel %vm249, %v1700, 0
      %v1778 = vsel %vm249, %v1701, 0
      %v1781 = vsel %vm249, %v1702, 0
      %v1784 = vsel %vm249, %v1703, 0
      %v1787 = vsel %vm249, %v1704, 0
      %v1790 = vsel %vm249, %v1705, 0
      %v1793 = vsel %vm249, %v1706, 0
      %v1796 = vsel %vm249, %v1707, 0
      %v1799 = vsel %vm249, %v1708, 0
      %v1802 = vsel %vm249, %v1709, 0
      %v1805 = vsel %vm249, %v1710, 0
      %v1808 = vsel %vm249, %v1711, 0
      %v1811 = vsel %vm346, %v1713, 0
      %1813 = vmatprep.subr.mxu0 0.0
      %1814 = vmatpush1.msra.mxu0 %v1811
      %1815 = vmatprep.subr.mxu0 0.0
      %1816 = vmatpush1.msra.mxu0 0.0
      %1817 = vmatprep.subr.mxu0 0.0
      %1818 = vmatpush1.msra.mxu0 0.0
      %1819 = vmatprep.subr.mxu0 0.0
      %1820 = vmatpush1.msra.mxu0 0.0
      %1821 = vmatprep.subr.mxu0 0.0
      %1822 = vmatpush1.msra.mxu0 0.0
      %1823 = vmatprep.subr.mxu0 0.0
      %1824 = vmatpush1.msra.mxu0 0.0
      %1825 = vmatprep.subr.mxu0 0.0
      %1826 = vmatpush1.msra.mxu0 0.0
      %1827 = vmatprep.subr.mxu0 0.0
      %1828 = vmatpush1.msra.mxu0 0.0
      %1829 = vmatprep.subr.mxu0 0.0
      %1830 = vmatpush1.msra.mxu0 0.0
      %1831 = vmatprep.subr.mxu0 0.0
      %1832 = vmatpush1.msra.mxu0 0.0
      %1833 = vmatprep.subr.mxu0 0.0
      %1834 = vmatpush1.msra.mxu0 0.0
      %1835 = vmatprep.subr.mxu0 0.0
      %1836 = vmatpush1.msra.mxu0 0.0
      %1837 = vmatprep.subr.mxu0 0.0
      %1838 = vmatpush1.msra.mxu0 0.0
      %1839 = vmatprep.subr.mxu0 0.0
      %1840 = vmatpush1.msra.mxu0 0.0
      %1841 = vmatprep.subr.mxu0 0.0
      %1842 = vmatpush1.msra.mxu0 0.0
      %1843 = vmatprep.subr.mxu0 0.0
      %1844 = vmatpush1.msra.mxu0 0.0
      %1845 = vmatprep.subr.mxu0 0.0
      %1846 = vmatpush1.msra.mxu0 0.0
      %1847 = vmatprep.subr.mxu0 0.0
      %1848 = vmatpush1.msra.mxu0 0.0
      %1849 = vmatprep.subr.mxu0 0.0
      %1850 = vmatpush1.msra.mxu0 0.0
      %1851 = vmatprep.subr.mxu0 0.0
      %1852 = vmatpush1.msra.mxu0 0.0
      %1853 = vmatprep.subr.mxu0 0.0
      %1854 = vmatpush1.msra.mxu0 0.0
      %1855 = vmatprep.subr.mxu0 0.0
      %1856 = vmatpush1.msra.mxu0 0.0
      %1857 = vmatprep.subr.mxu0 0.0
      %1858 = vmatpush1.msra.mxu0 0.0
      %1859 = vmatprep.subr.mxu0 0.0
      %1860 = vmatpush1.msra.mxu0 0.0
      %1861 = vmatprep.subr.mxu0 0.0
      %1862 = vmatpush1.msra.mxu0 0.0
      %1863 = vmatprep.subr.mxu0 0.0
      %1864 = vmatpush1.msra.mxu0 0.0
      %1865 = vmatprep.subr.mxu0 0.0
      %1866 = vmatpush1.msra.mxu0 0.0
      %1867 = vmatprep.subr.mxu0 0.0
      %1868 = vmatpush1.msra.mxu0 0.0
      %1869 = vmatprep.subr.mxu0 0.0
      %1870 = vmatpush1.msra.mxu0 0.0
      %1871 = vmatprep.subr.mxu0 0.0
      %1872 = vmatpush1.msra.mxu0 0.0
      %1873 = vmatprep.subr.mxu0 0.0
      %1874 = vmatpush1.msra.mxu0 0.0
      %1875 = vmatprep.subr.mxu0 0.0
      %1876 = vmatpush1.msra.mxu0 0.0
      %1877 = vmatprep.mubr.f32.mxu0 0.0
      %1878 = vmatmul.mubr.f32.gmra.mrb[0].mxu0 %v1715
      %v1879 = vpop.f32.mrb[0].mxu0
      %v1880 = vadd.f32 0.0, %v1879
      %v1881 = vpop.f32.mrb[0].mxu0
      %1882 = vmatprep.mubr.f32.mxu0 0.0
      %1883 = vmatmul.mubr.f32.gmra.mrb[0].mxu0 %v1718
      %v1884 = vpop.f32.mrb[0].mxu0
      %v1885 = vadd.f32 0.0, %v1884
      %v1886 = vpop.f32.mrb[0].mxu0
      %1887 = vmatprep.mubr.f32.mxu0 0.0
      %1888 = vmatmul.mubr.f32.gmra.mrb[0].mxu0 %v1721
      %v1889 = vpop.f32.mrb[0].mxu0
      %v1890 = vadd.f32 0.0, %v1889
      %v1891 = vpop.f32.mrb[0].mxu0
      %1892 = vmatprep.mubr.f32.mxu0 0.0
      %1893 = vmatmul.mubr.f32.gmra.mrb[0].mxu0 %v1724
      %v1894 = vpop.f32.mrb[0].mxu0
      %v1895 = vadd.f32 0.0, %v1894
      %v1896 = vpop.f32.mrb[0].mxu0
      %1897 = vmatprep.mubr.f32.mxu0 0.0
      %1898 = vmatmul.mubr.f32.gmra.mrb[0].mxu0 %v1727
      %v1899 = vpop.f32.mrb[0].mxu0
      %v1900 = vadd.f32 0.0, %v1899
      %v1901 = vpop.f32.mrb[0].mxu0
      %1902 = vmatprep.mubr.f32.mxu0 0.0
      %1903 = vmatmul.mubr.f32.gmra.mrb[0].mxu0 %v1730
      %v1904 = vpop.f32.mrb[0].mxu0
      %v1905 = vadd.f32 0.0, %v1904
      %v1906 = vpop.f32.mrb[0].mxu0
      %1907 = vmatprep.mubr.f32.mxu0 0.0
      %1908 = vmatmul.mubr.f32.gmra.mrb[0].mxu0 %v1733
      %v1909 = vpop.f32.mrb[0].mxu0
      %v1910 = vadd.f32 0.0, %v1909
      %v1911 = vpop.f32.mrb[0].mxu0
      %1912 = vmatprep.mubr.f32.mxu0 0.0
      %1913 = vmatmul.mubr.f32.gmra.mrb[0].mxu0 %v1736
      %v1914 = vpop.f32.mrb[0].mxu0
      %v1915 = vadd.f32 0.0, %v1914
      %v1916 = vpop.f32.mrb[0].mxu0
      %1917 = vmatprep.mubr.f32.mxu0 0.0
      %1918 = vmatmul.mubr.f32.gmra.mrb[0].mxu0 %v1739
      %v1919 = vpop.f32.mrb[0].mxu0
      %v1920 = vadd.f32 0.0, %v1919
      %v1921 = vpop.f32.mrb[0].mxu0
      %1922 = vmatprep.mubr.f32.mxu0 0.0
      %1923 = vmatmul.mubr.f32.gmra.mrb[0].mxu0 %v1742
      %v1924 = vpop.f32.mrb[0].mxu0
      %v1925 = vadd.f32 0.0, %v1924
      %v1926 = vpop.f32.mrb[0].mxu0
      %1927 = vmatprep.mubr.f32.mxu0 0.0
      %1928 = vmatmul.mubr.f32.gmra.mrb[0].mxu0 %v1745
      %v1929 = vpop.f32.mrb[0].mxu0
      %v1930 = vadd.f32 0.0, %v1929
      %v1931 = vpop.f32.mrb[0].mxu0
      %1932 = vmatprep.mubr.f32.mxu0 0.0
      %1933 = vmatmul.mubr.f32.gmra.mrb[0].mxu0 %v1748
      %v1934 = vpop.f32.mrb[0].mxu0
      %v1935 = vadd.f32 0.0, %v1934
      %v1936 = vpop.f32.mrb[0].mxu0
      %1937 = vmatprep.mubr.f32.mxu0 0.0
      %1938 = vmatmul.mubr.f32.gmra.mrb[0].mxu0 %v1751
      %v1939 = vpop.f32.mrb[0].mxu0
      %v1940 = vadd.f32 0.0, %v1939
      %v1941 = vpop.f32.mrb[0].mxu0
      %1942 = vmatprep.mubr.f32.mxu0 0.0
      %1943 = vmatmul.mubr.f32.gmra.mrb[0].mxu0 %v1754
      %v1944 = vpop.f32.mrb[0].mxu0
      %v1945 = vadd.f32 0.0, %v1944
      %v1946 = vpop.f32.mrb[0].mxu0
      %1947 = vmatprep.mubr.f32.mxu0 0.0
      %1948 = vmatmul.mubr.f32.gmra.mrb[0].mxu0 %v1757
      %v1949 = vpop.f32.mrb[0].mxu0
      %v1950 = vadd.f32 0.0, %v1949
      %v1951 = vpop.f32.mrb[0].mxu0
      %1952 = vmatprep.mubr.f32.mxu0 0.0
      %1953 = vmatmul.mubr.f32.gmra.mrb[0].mxu0 %v1760
      %v1954 = vpop.f32.mrb[0].mxu0
      %v1955 = vadd.f32 0.0, %v1954
      %v1956 = vpop.f32.mrb[0].mxu0
      %1957 = vmatprep.mubr.f32.mxu0 0.0
      %1958 = vmatmul.mubr.f32.gmra.mrb[0].mxu0 %v1763
      %v1959 = vpop.f32.mrb[0].mxu0
      %v1960 = vadd.f32 0.0, %v1959
      %v1961 = vpop.f32.mrb[0].mxu0
      %1962 = vmatprep.mubr.f32.mxu0 0.0
      %1963 = vmatmul.mubr.f32.gmra.mrb[0].mxu0 %v1766
      %v1964 = vpop.f32.mrb[0].mxu0
      %v1965 = vadd.f32 0.0, %v1964
      %v1966 = vpop.f32.mrb[0].mxu0
      %1967 = vmatprep.mubr.f32.mxu0 0.0
      %1968 = vmatmul.mubr.f32.gmra.mrb[0].mxu0 %v1769
      %v1969 = vpop.f32.mrb[0].mxu0
      %v1970 = vadd.f32 0.0, %v1969
      %v1971 = vpop.f32.mrb[0].mxu0
      %1972 = vmatprep.mubr.f32.mxu0 0.0
      %1973 = vmatmul.mubr.f32.gmra.mrb[0].mxu0 %v1772
      %v1974 = vpop.f32.mrb[0].mxu0
      %v1975 = vadd.f32 0.0, %v1974
      %v1976 = vpop.f32.mrb[0].mxu0
      %1977 = vmatprep.mubr.f32.mxu0 0.0
      %1978 = vmatmul.mubr.f32.gmra.mrb[0].mxu0 %v1775
      %v1979 = vpop.f32.mrb[0].mxu0
      %v1980 = vadd.f32 0.0, %v1979
      %v1981 = vpop.f32.mrb[0].mxu0
      %1982 = vmatprep.mubr.f32.mxu0 0.0
      %1983 = vmatmul.mubr.f32.gmra.mrb[0].mxu0 %v1778
      %v1984 = vpop.f32.mrb[0].mxu0
      %v1985 = vadd.f32 0.0, %v1984
      %v1986 = vpop.f32.mrb[0].mxu0
      %1987 = vmatprep.mubr.f32.mxu0 0.0
      %1988 = vmatmul.mubr.f32.gmra.mrb[0].mxu0 %v1781
      %v1989 = vpop.f32.mrb[0].mxu0
      %v1990 = vadd.f32 0.0, %v1989
      %v1991 = vpop.f32.mrb[0].mxu0
      %1992 = vmatprep.mubr.f32.mxu0 0.0
      %1993 = vmatmul.mubr.f32.gmra.mrb[0].mxu0 %v1784
      %v1994 = vpop.f32.mrb[0].mxu0
      %v1995 = vadd.f32 0.0, %v1994
      %v1996 = vpop.f32.mrb[0].mxu0
      %1997 = vmatprep.mubr.f32.mxu0 0.0
      %1998 = vmatmul.mubr.f32.gmra.mrb[0].mxu0 %v1787
      %v1999 = vpop.f32.mrb[0].mxu0
      %v2000 = vadd.f32 0.0, %v1999
      %v2001 = vpop.f32.mrb[0].mxu0
      %2002 = vmatprep.mubr.f32.mxu0 0.0
      %2003 = vmatmul.mubr.f32.gmra.mrb[0].mxu0 %v1790
      %v2004 = vpop.f32.mrb[0].mxu0
      %v2005 = vadd.f32 0.0, %v2004
      %v2006 = vpop.f32.mrb[0].mxu0
      %2007 = vmatprep.mubr.f32.mxu0 0.0
      %2008 = vmatmul.mubr.f32.gmra.mrb[0].mxu0 %v1793
      %v2009 = vpop.f32.mrb[0].mxu0
      %v2010 = vadd.f32 0.0, %v2009
      %v2011 = vpop.f32.mrb[0].mxu0
      %2012 = vmatprep.mubr.f32.mxu0 0.0
      %2013 = vmatmul.mubr.f32.gmra.mrb[0].mxu0 %v1796
      %v2014 = vpop.f32.mrb[0].mxu0
      %v2015 = vadd.f32 0.0, %v2014
      %v2016 = vpop.f32.mrb[0].mxu0
      %2017 = vmatprep.mubr.f32.mxu0 0.0
      %2018 = vmatmul.mubr.f32.gmra.mrb[0].mxu0 %v1799
      %v2019 = vpop.f32.mrb[0].mxu0
      %v2020 = vadd.f32 0.0, %v2019
      %v2021 = vpop.f32.mrb[0].mxu0
      %2022 = vmatprep.mubr.f32.mxu0 0.0
      %2023 = vmatmul.mubr.f32.gmra.mrb[0].mxu0 %v1802
      %v2024 = vpop.f32.mrb[0].mxu0
      %v2025 = vadd.f32 0.0, %v2024
      %v2026 = vpop.f32.mrb[0].mxu0
      %2027 = vmatprep.mubr.f32.mxu0 0.0
      %2028 = vmatmul.mubr.f32.gmra.mrb[0].mxu0 %v1805
      %v2029 = vpop.f32.mrb[0].mxu0
      %v2030 = vadd.f32 0.0, %v2029
      %v2031 = vpop.f32.mrb[0].mxu0
      %2032 = vmatprep.mubr.f32.mxu0 0.0
      %2033 = vmatmul.mubr.f32.gmra.mrb[0].mxu0 %v1808
      %v2034 = vpop.f32.mrb[0].mxu0
      %v2035 = vadd.f32 0.0, %v2034
      %v2036 = vpop.f32.mrb[0].mxu0
      %2037 = vdwg.mxu0
      %v2038 = vadd.f32 %v1648, %v1880
      %v2039 = vadd.f32 %v1649, %v1885
      %v2040 = vadd.f32 %v1650, %v1890
      %v2041 = vadd.f32 %v1651, %v1895
      %v2042 = vadd.f32 %v1652, %v1900
      %v2043 = vadd.f32 %v1653, %v1905
      %v2044 = vadd.f32 %v1654, %v1910
      %v2045 = vadd.f32 %v1655, %v1915
      %v2046 = vadd.f32 %v1656, %v1920
      %v2047 = vadd.f32 %v1657, %v1925
      %v2048 = vadd.f32 %v1658, %v1930
      %v2049 = vadd.f32 %v1659, %v1935
      %v2050 = vadd.f32 %v1660, %v1940
      %v2051 = vadd.f32 %v1661, %v1945
      %v2052 = vadd.f32 %v1662, %v1950
      %v2053 = vadd.f32 %v1663, %v1955
      %v2054 = vadd.f32 %v1664, %v1960
      %v2055 = vadd.f32 %v1665, %v1965
      %v2056 = vadd.f32 %v1666, %v1970
      %v2057 = vadd.f32 %v1667, %v1975
      %v2058 = vadd.f32 %v1668, %v1980
      %v2059 = vadd.f32 %v1669, %v1985
      %v2060 = vadd.f32 %v1670, %v1990
      %v2061 = vadd.f32 %v1671, %v1995
      %v2062 = vadd.f32 %v1672, %v2000
      %v2063 = vadd.f32 %v1673, %v2005
      %v2064 = vadd.f32 %v1674, %v2010
      %v2065 = vadd.f32 %v1675, %v2015
      %v2066 = vadd.f32 %v1676, %v2020
      %v2067 = vadd.f32 %v1677, %v2025
      %v2068 = vadd.f32 %v1678, %v2030
      %v2069 = vadd.f32 %v1679, %v2035
      %v2070 = vld [vmem:[%s1289 + $0x2] sm:$0xff]
      %v2071 = vld [vmem:[%s1289 + $0xa] sm:$0xff]
      %v2072 = vld [vmem:[%s1289 + $0x1a] sm:$0xff]
      %v2073 = vld [vmem:[%s1289 + $0x22] sm:$0xff]
      %v2074 = vld [vmem:[%s1289 + $0x32] sm:$0xff]
      %v2075 = vld [vmem:[%s1289 + $0x3a] sm:$0xff]
      %v2076 = vld [vmem:[%s1289 + $0x4a] sm:$0xff]
      %v2077 = vld [vmem:[%s1289 + $0x52] sm:$0xff]
      %v2078 = vld [vmem:[%s1289 + $0x62] sm:$0xff]
      %v2079 = vld [vmem:[%s1289 + $0x6a] sm:$0xff]
      %v2080 = vld [vmem:[%s1289 + $0x7a] sm:$0xff]
      %v2081 = vld [vmem:[%s1289 + $0x82] sm:$0xff]
      %v2082 = vld [vmem:[%s1289 + $0x92] sm:$0xff]
      %v2083 = vld [vmem:[%s1289 + $0x9a] sm:$0xff]
      %v2084 = vld [vmem:[%s1289 + $0xaa] sm:$0xff]
      %v2085 = vld [vmem:[%s1289 + $0xb2] sm:$0xff]
      %v2086 = vld [vmem:[%s1289 + $0xc2] sm:$0xff]
      %v2087 = vld [vmem:[%s1289 + $0xca] sm:$0xff]
      %v2088 = vld [vmem:[%s1289 + $0xda] sm:$0xff]
      %v2089 = vld [vmem:[%s1289 + $0xe2] sm:$0xff]
      %v2090 = vld [vmem:[%s1289 + $0xf2] sm:$0xff]
      %v2091 = vld [vmem:[%s1289 + $0xfa] sm:$0xff]
      %v2092 = vld [vmem:[%s1289 + $0x10a] sm:$0xff]
      %v2093 = vld [vmem:[%s1289 + $0x112] sm:$0xff]
      %v2094 = vld [vmem:[%s1289 + $0x122] sm:$0xff]
      %v2095 = vld [vmem:[%s1289 + $0x12a] sm:$0xff]
      %v2096 = vld [vmem:[%s1289 + $0x13a] sm:$0xff]
      %v2097 = vld [vmem:[%s1289 + $0x142] sm:$0xff]
      %v2098 = vld [vmem:[%s1289 + $0x152] sm:$0xff]
      %v2099 = vld [vmem:[%s1289 + $0x15a] sm:$0xff]
      %v2100 = vld [vmem:[%s1289 + $0x16a] sm:$0xff]
      %v2101 = vld [vmem:[%s1289 + $0x172] sm:$0xff]
      %s2102 = scalar_lea.vmem %s1, 20
      %v2103 = vld [vmem:[%s2102] sm:$0xf]
      %v2105 = vsel %vm249, %v2070, 0
      %v2108 = vsel %vm249, %v2071, 0
      %v2111 = vsel %vm249, %v2072, 0
      %v2114 = vsel %vm249, %v2073, 0
      %v2117 = vsel %vm249, %v2074, 0
      %v2120 = vsel %vm249, %v2075, 0
      %v2123 = vsel %vm249, %v2076, 0
      %v2126 = vsel %vm249, %v2077, 0
      %v2129 = vsel %vm249, %v2078, 0
      %v2132 = vsel %vm249, %v2079, 0
      %v2135 = vsel %vm249, %v2080, 0
      %v2138 = vsel %vm249, %v2081, 0
      %v2141 = vsel %vm249, %v2082, 0
      %v2144 = vsel %vm249, %v2083, 0
      %v2147 = vsel %vm249, %v2084, 0
      %v2150 = vsel %vm249, %v2085, 0
      %v2153 = vsel %vm249, %v2086, 0
      %v2156 = vsel %vm249, %v2087, 0
      %v2159 = vsel %vm249, %v2088, 0
      %v2162 = vsel %vm249, %v2089, 0
      %v2165 = vsel %vm249, %v2090, 0
      %v2168 = vsel %vm249, %v2091, 0
      %v2171 = vsel %vm249, %v2092, 0
      %v2174 = vsel %vm249, %v2093, 0
      %v2177 = vsel %vm249, %v2094, 0
      %v2180 = vsel %vm249, %v2095, 0
      %v2183 = vsel %vm249, %v2096, 0
      %v2186 = vsel %vm249, %v2097, 0
      %v2189 = vsel %vm249, %v2098, 0
      %v2192 = vsel %vm249, %v2099, 0
      %v2195 = vsel %vm249, %v2100, 0
      %v2198 = vsel %vm249, %v2101, 0
      %v2201 = vsel %vm346, %v2103, 0
      %2203 = vmatprep.subr.mxu0 0.0
      %2204 = vmatpush1.msra.mxu0 %v2201
      %2205 = vmatprep.subr.mxu0 0.0
      %2206 = vmatpush1.msra.mxu0 0.0
      %2207 = vmatprep.subr.mxu0 0.0
      %2208 = vmatpush1.msra.mxu0 0.0
      %2209 = vmatprep.subr.mxu0 0.0
      %2210 = vmatpush1.msra.mxu0 0.0
      %2211 = vmatprep.subr.mxu0 0.0
      %2212 = vmatpush1.msra.mxu0 0.0
      %2213 = vmatprep.subr.mxu0 0.0
      %2214 = vmatpush1.msra.mxu0 0.0
      %2215 = vmatprep.subr.mxu0 0.0
      %2216 = vmatpush1.msra.mxu0 0.0
      %2217 = vmatprep.subr.mxu0 0.0
      %2218 = vmatpush1.msra.mxu0 0.0
      %2219 = vmatprep.subr.mxu0 0.0
      %2220 = vmatpush1.msra.mxu0 0.0
      %2221 = vmatprep.subr.mxu0 0.0
      %2222 = vmatpush1.msra.mxu0 0.0
      %2223 = vmatprep.subr.mxu0 0.0
      %2224 = vmatpush1.msra.mxu0 0.0
      %2225 = vmatprep.subr.mxu0 0.0
      %2226 = vmatpush1.msra.mxu0 0.0
      %2227 = vmatprep.subr.mxu0 0.0
      %2228 = vmatpush1.msra.mxu0 0.0
      %2229 = vmatprep.subr.mxu0 0.0
      %2230 = vmatpush1.msra.mxu0 0.0
      %2231 = vmatprep.subr.mxu0 0.0
      %2232 = vmatpush1.msra.mxu0 0.0
      %2233 = vmatprep.subr.mxu0 0.0
      %2234 = vmatpush1.msra.mxu0 0.0
      %2235 = vmatprep.subr.mxu0 0.0
      %2236 = vmatpush1.msra.mxu0 0.0
      %2237 = vmatprep.subr.mxu0 0.0
      %2238 = vmatpush1.msra.mxu0 0.0
      %2239 = vmatprep.subr.mxu0 0.0
      %2240 = vmatpush1.msra.mxu0 0.0
      %2241 = vmatprep.subr.mxu0 0.0
      %2242 = vmatpush1.msra.mxu0 0.0
      %2243 = vmatprep.subr.mxu0 0.0
      %2244 = vmatpush1.msra.mxu0 0.0
      %2245 = vmatprep.subr.mxu0 0.0
      %2246 = vmatpush1.msra.mxu0 0.0
      %2247 = vmatprep.subr.mxu0 0.0
      %2248 = vmatpush1.msra.mxu0 0.0
      %2249 = vmatprep.subr.mxu0 0.0
      %2250 = vmatpush1.msra.mxu0 0.0
      %2251 = vmatprep.subr.mxu0 0.0
      %2252 = vmatpush1.msra.mxu0 0.0
      %2253 = vmatprep.subr.mxu0 0.0
      %2254 = vmatpush1.msra.mxu0 0.0
      %2255 = vmatprep.subr.mxu0 0.0
      %2256 = vmatpush1.msra.mxu0 0.0
      %2257 = vmatprep.subr.mxu0 0.0
      %2258 = vmatpush1.msra.mxu0 0.0
      %2259 = vmatprep.subr.mxu0 0.0
      %2260 = vmatpush1.msra.mxu0 0.0
      %2261 = vmatprep.subr.mxu0 0.0
      %2262 = vmatpush1.msra.mxu0 0.0
      %2263 = vmatprep.subr.mxu0 0.0
      %2264 = vmatpush1.msra.mxu0 0.0
      %2265 = vmatprep.subr.mxu0 0.0
      %2266 = vmatpush1.msra.mxu0 0.0
      %2267 = vmatprep.mubr.f32.mxu0 0.0
      %2268 = vmatmul.mubr.f32.gmra.mrb[0].mxu0 %v2105
      %v2269 = vpop.f32.mrb[0].mxu0
      %v2270 = vadd.f32 0.0, %v2269
      %v2271 = vpop.f32.mrb[0].mxu0
      %2272 = vmatprep.mubr.f32.mxu0 0.0
      %2273 = vmatmul.mubr.f32.gmra.mrb[0].mxu0 %v2108
      %v2274 = vpop.f32.mrb[0].mxu0
      %v2275 = vadd.f32 0.0, %v2274
      %v2276 = vpop.f32.mrb[0].mxu0
      %2277 = vmatprep.mubr.f32.mxu0 0.0
      %2278 = vmatmul.mubr.f32.gmra.mrb[0].mxu0 %v2111
      %v2279 = vpop.f32.mrb[0].mxu0
      %v2280 = vadd.f32 0.0, %v2279
      %v2281 = vpop.f32.mrb[0].mxu0
      %2282 = vmatprep.mubr.f32.mxu0 0.0
      %2283 = vmatmul.mubr.f32.gmra.mrb[0].mxu0 %v2114
      %v2284 = vpop.f32.mrb[0].mxu0
      %v2285 = vadd.f32 0.0, %v2284
      %v2286 = vpop.f32.mrb[0].mxu0
      %2287 = vmatprep.mubr.f32.mxu0 0.0
      %2288 = vmatmul.mubr.f32.gmra.mrb[0].mxu0 %v2117
      %v2289 = vpop.f32.mrb[0].mxu0
      %v2290 = vadd.f32 0.0, %v2289
      %v2291 = vpop.f32.mrb[0].mxu0
      %2292 = vmatprep.mubr.f32.mxu0 0.0
      %2293 = vmatmul.mubr.f32.gmra.mrb[0].mxu0 %v2120
      %v2294 = vpop.f32.mrb[0].mxu0
      %v2295 = vadd.f32 0.0, %v2294
      %v2296 = vpop.f32.mrb[0].mxu0
      %2297 = vmatprep.mubr.f32.mxu0 0.0
      %2298 = vmatmul.mubr.f32.gmra.mrb[0].mxu0 %v2123
      %v2299 = vpop.f32.mrb[0].mxu0
      %v2300 = vadd.f32 0.0, %v2299
      %v2301 = vpop.f32.mrb[0].mxu0
      %2302 = vmatprep.mubr.f32.mxu0 0.0
      %2303 = vmatmul.mubr.f32.gmra.mrb[0].mxu0 %v2126
      %v2304 = vpop.f32.mrb[0].mxu0
      %v2305 = vadd.f32 0.0, %v2304
      %v2306 = vpop.f32.mrb[0].mxu0
      %2307 = vmatprep.mubr.f32.mxu0 0.0
      %2308 = vmatmul.mubr.f32.gmra.mrb[0].mxu0 %v2129
      %v2309 = vpop.f32.mrb[0].mxu0
      %v2310 = vadd.f32 0.0, %v2309
      %v2311 = vpop.f32.mrb[0].mxu0
      %2312 = vmatprep.mubr.f32.mxu0 0.0
      %2313 = vmatmul.mubr.f32.gmra.mrb[0].mxu0 %v2132
      %v2314 = vpop.f32.mrb[0].mxu0
      %v2315 = vadd.f32 0.0, %v2314
      %v2316 = vpop.f32.mrb[0].mxu0
      %2317 = vmatprep.mubr.f32.mxu0 0.0
      %2318 = vmatmul.mubr.f32.gmra.mrb[0].mxu0 %v2135
      %v2319 = vpop.f32.mrb[0].mxu0
      %v2320 = vadd.f32 0.0, %v2319
      %v2321 = vpop.f32.mrb[0].mxu0
      %2322 = vmatprep.mubr.f32.mxu0 0.0
      %2323 = vmatmul.mubr.f32.gmra.mrb[0].mxu0 %v2138
      %v2324 = vpop.f32.mrb[0].mxu0
      %v2325 = vadd.f32 0.0, %v2324
      %v2326 = vpop.f32.mrb[0].mxu0
      %2327 = vmatprep.mubr.f32.mxu0 0.0
      %2328 = vmatmul.mubr.f32.gmra.mrb[0].mxu0 %v2141
      %v2329 = vpop.f32.mrb[0].mxu0
      %v2330 = vadd.f32 0.0, %v2329
      %v2331 = vpop.f32.mrb[0].mxu0
      %2332 = vmatprep.mubr.f32.mxu0 0.0
      %2333 = vmatmul.mubr.f32.gmra.mrb[0].mxu0 %v2144
      %v2334 = vpop.f32.mrb[0].mxu0
      %v2335 = vadd.f32 0.0, %v2334
      %v2336 = vpop.f32.mrb[0].mxu0
      %2337 = vmatprep.mubr.f32.mxu0 0.0
      %2338 = vmatmul.mubr.f32.gmra.mrb[0].mxu0 %v2147
      %v2339 = vpop.f32.mrb[0].mxu0
      %v2340 = vadd.f32 0.0, %v2339
      %v2341 = vpop.f32.mrb[0].mxu0
      %2342 = vmatprep.mubr.f32.mxu0 0.0
      %2343 = vmatmul.mubr.f32.gmra.mrb[0].mxu0 %v2150
      %v2344 = vpop.f32.mrb[0].mxu0
      %v2345 = vadd.f32 0.0, %v2344
      %v2346 = vpop.f32.mrb[0].mxu0
      %2347 = vmatprep.mubr.f32.mxu0 0.0
      %2348 = vmatmul.mubr.f32.gmra.mrb[0].mxu0 %v2153
      %v2349 = vpop.f32.mrb[0].mxu0
      %v2350 = vadd.f32 0.0, %v2349
      %v2351 = vpop.f32.mrb[0].mxu0
      %2352 = vmatprep.mubr.f32.mxu0 0.0
      %2353 = vmatmul.mubr.f32.gmra.mrb[0].mxu0 %v2156
      %v2354 = vpop.f32.mrb[0].mxu0
      %v2355 = vadd.f32 0.0, %v2354
      %v2356 = vpop.f32.mrb[0].mxu0
      %2357 = vmatprep.mubr.f32.mxu0 0.0
      %2358 = vmatmul.mubr.f32.gmra.mrb[0].mxu0 %v2159
      %v2359 = vpop.f32.mrb[0].mxu0
      %v2360 = vadd.f32 0.0, %v2359
      %v2361 = vpop.f32.mrb[0].mxu0
      %2362 = vmatprep.mubr.f32.mxu0 0.0
      %2363 = vmatmul.mubr.f32.gmra.mrb[0].mxu0 %v2162
      %v2364 = vpop.f32.mrb[0].mxu0
      %v2365 = vadd.f32 0.0, %v2364
      %v2366 = vpop.f32.mrb[0].mxu0
      %2367 = vmatprep.mubr.f32.mxu0 0.0
      %2368 = vmatmul.mubr.f32.gmra.mrb[0].mxu0 %v2165
      %v2369 = vpop.f32.mrb[0].mxu0
      %v2370 = vadd.f32 0.0, %v2369
      %v2371 = vpop.f32.mrb[0].mxu0
      %2372 = vmatprep.mubr.f32.mxu0 0.0
      %2373 = vmatmul.mubr.f32.gmra.mrb[0].mxu0 %v2168
      %v2374 = vpop.f32.mrb[0].mxu0
      %v2375 = vadd.f32 0.0, %v2374
      %v2376 = vpop.f32.mrb[0].mxu0
      %2377 = vmatprep.mubr.f32.mxu0 0.0
      %2378 = vmatmul.mubr.f32.gmra.mrb[0].mxu0 %v2171
      %v2379 = vpop.f32.mrb[0].mxu0
      %v2380 = vadd.f32 0.0, %v2379
      %v2381 = vpop.f32.mrb[0].mxu0
      %2382 = vmatprep.mubr.f32.mxu0 0.0
      %2383 = vmatmul.mubr.f32.gmra.mrb[0].mxu0 %v2174
      %v2384 = vpop.f32.mrb[0].mxu0
      %v2385 = vadd.f32 0.0, %v2384
      %v2386 = vpop.f32.mrb[0].mxu0
      %2387 = vmatprep.mubr.f32.mxu0 0.0
      %2388 = vmatmul.mubr.f32.gmra.mrb[0].mxu0 %v2177
      %v2389 = vpop.f32.mrb[0].mxu0
      %v2390 = vadd.f32 0.0, %v2389
      %v2391 = vpop.f32.mrb[0].mxu0
      %2392 = vmatprep.mubr.f32.mxu0 0.0
      %2393 = vmatmul.mubr.f32.gmra.mrb[0].mxu0 %v2180
      %v2394 = vpop.f32.mrb[0].mxu0
      %v2395 = vadd.f32 0.0, %v2394
      %v2396 = vpop.f32.mrb[0].mxu0
      %2397 = vmatprep.mubr.f32.mxu0 0.0
      %2398 = vmatmul.mubr.f32.gmra.mrb[0].mxu0 %v2183
      %v2399 = vpop.f32.mrb[0].mxu0
      %v2400 = vadd.f32 0.0, %v2399
      %v2401 = vpop.f32.mrb[0].mxu0
      %2402 = vmatprep.mubr.f32.mxu0 0.0
      %2403 = vmatmul.mubr.f32.gmra.mrb[0].mxu0 %v2186
      %v2404 = vpop.f32.mrb[0].mxu0
      %v2405 = vadd.f32 0.0, %v2404
      %v2406 = vpop.f32.mrb[0].mxu0
      %2407 = vmatprep.mubr.f32.mxu0 0.0
      %2408 = vmatmul.mubr.f32.gmra.mrb[0].mxu0 %v2189
      %v2409 = vpop.f32.mrb[0].mxu0
      %v2410 = vadd.f32 0.0, %v2409
      %v2411 = vpop.f32.mrb[0].mxu0
      %2412 = vmatprep.mubr.f32.mxu0 0.0
      %2413 = vmatmul.mubr.f32.gmra.mrb[0].mxu0 %v2192
      %v2414 = vpop.f32.mrb[0].mxu0
      %v2415 = vadd.f32 0.0, %v2414
      %v2416 = vpop.f32.mrb[0].mxu0
      %2417 = vmatprep.mubr.f32.mxu0 0.0
      %2418 = vmatmul.mubr.f32.gmra.mrb[0].mxu0 %v2195
      %v2419 = vpop.f32.mrb[0].mxu0
      %v2420 = vadd.f32 0.0, %v2419
      %v2421 = vpop.f32.mrb[0].mxu0
      %2422 = vmatprep.mubr.f32.mxu0 0.0
      %2423 = vmatmul.mubr.f32.gmra.mrb[0].mxu0 %v2198
      %v2424 = vpop.f32.mrb[0].mxu0
      %v2425 = vadd.f32 0.0, %v2424
      %v2426 = vpop.f32.mrb[0].mxu0
      %2427 = vdwg.mxu0
      %v2428 = vadd.f32 %v2038, %v2270
      %v2429 = vadd.f32 %v2039, %v2275
      %v2430 = vadd.f32 %v2040, %v2280
      %v2431 = vadd.f32 %v2041, %v2285
      %v2432 = vadd.f32 %v2042, %v2290
      %v2433 = vadd.f32 %v2043, %v2295
      %v2434 = vadd.f32 %v2044, %v2300
      %v2435 = vadd.f32 %v2045, %v2305
      %v2436 = vadd.f32 %v2046, %v2310
      %v2437 = vadd.f32 %v2047, %v2315
      %v2438 = vadd.f32 %v2048, %v2320
      %v2439 = vadd.f32 %v2049, %v2325
      %v2440 = vadd.f32 %v2050, %v2330
      %v2441 = vadd.f32 %v2051, %v2335
      %v2442 = vadd.f32 %v2052, %v2340
      %v2443 = vadd.f32 %v2053, %v2345
      %v2444 = vadd.f32 %v2054, %v2350
      %v2445 = vadd.f32 %v2055, %v2355
      %v2446 = vadd.f32 %v2056, %v2360
      %v2447 = vadd.f32 %v2057, %v2365
      %v2448 = vadd.f32 %v2058, %v2370
      %v2449 = vadd.f32 %v2059, %v2375
      %v2450 = vadd.f32 %v2060, %v2380
      %v2451 = vadd.f32 %v2061, %v2385
      %v2452 = vadd.f32 %v2062, %v2390
      %v2453 = vadd.f32 %v2063, %v2395
      %v2454 = vadd.f32 %v2064, %v2400
      %v2455 = vadd.f32 %v2065, %v2405
      %v2456 = vadd.f32 %v2066, %v2410
      %v2457 = vadd.f32 %v2067, %v2415
      %v2458 = vadd.f32 %v2068, %v2420
      %v2459 = vadd.f32 %v2069, %v2425
      %s2460 = scalar_lea.vmem %s172, 48
      %v2461 = vld [vmem:[%s2460] sm:$0xff]
      %v2462 = vld [vmem:[%s2460 + $0x8] sm:$0xff]
      %v2463 = vld [vmem:[%s2460 + $0x18] sm:$0xff]
      %v2464 = vld [vmem:[%s2460 + $0x20] sm:$0xff]
      %v2465 = vld [vmem:[%s2460 + $0x30] sm:$0xff]
      %v2466 = vld [vmem:[%s2460 + $0x38] sm:$0xff]
      %v2467 = vld [vmem:[%s2460 + $0x48] sm:$0xff]
      %v2468 = vld [vmem:[%s2460 + $0x50] sm:$0xff]
      %v2469 = vld [vmem:[%s2460 + $0x60] sm:$0xff]
      %v2470 = vld [vmem:[%s2460 + $0x68] sm:$0xff]
      %v2471 = vld [vmem:[%s2460 + $0x78] sm:$0xff]
      %v2472 = vld [vmem:[%s2460 + $0x80] sm:$0xff]
      %v2473 = vld [vmem:[%s2460 + $0x90] sm:$0xff]
      %v2474 = vld [vmem:[%s2460 + $0x98] sm:$0xff]
      %v2475 = vld [vmem:[%s2460 + $0xa8] sm:$0xff]
      %v2476 = vld [vmem:[%s2460 + $0xb0] sm:$0xff]
      %v2477 = vld [vmem:[%s2460 + $0xc0] sm:$0xff]
      %v2478 = vld [vmem:[%s2460 + $0xc8] sm:$0xff]
      %v2479 = vld [vmem:[%s2460 + $0xd8] sm:$0xff]
      %v2480 = vld [vmem:[%s2460 + $0xe0] sm:$0xff]
      %v2481 = vld [vmem:[%s2460 + $0xf0] sm:$0xff]
      %v2482 = vld [vmem:[%s2460 + $0xf8] sm:$0xff]
      %v2483 = vld [vmem:[%s2460 + $0x108] sm:$0xff]
      %v2484 = vld [vmem:[%s2460 + $0x110] sm:$0xff]
      %v2485 = vld [vmem:[%s2460 + $0x120] sm:$0xff]
      %v2486 = vld [vmem:[%s2460 + $0x128] sm:$0xff]
      %v2487 = vld [vmem:[%s2460 + $0x138] sm:$0xff]
      %v2488 = vld [vmem:[%s2460 + $0x140] sm:$0xff]
      %v2489 = vld [vmem:[%s2460 + $0x150] sm:$0xff]
      %v2490 = vld [vmem:[%s2460 + $0x158] sm:$0xff]
      %v2491 = vld [vmem:[%s2460 + $0x168] sm:$0xff]
      %v2492 = vld [vmem:[%s2460 + $0x170] sm:$0xff]
      %s2493 = scalar_lea.vmem %s1, 24
      %v2494 = vld [vmem:[%s2493] sm:$0xf]
      %v2496 = vsel %vm249, %v2461, 0
      %v2499 = vsel %vm249, %v2462, 0
      %v2502 = vsel %vm249, %v2463, 0
      %v2505 = vsel %vm249, %v2464, 0
      %v2508 = vsel %vm249, %v2465, 0
      %v2511 = vsel %vm249, %v2466, 0
      %v2514 = vsel %vm249, %v2467, 0
      %v2517 = vsel %vm249, %v2468, 0
      %v2520 = vsel %vm249, %v2469, 0
      %v2523 = vsel %vm249, %v2470, 0
      %v2526 = vsel %vm249, %v2471, 0
      %v2529 = vsel %vm249, %v2472, 0
      %v2532 = vsel %vm249, %v2473, 0
      %v2535 = vsel %vm249, %v2474, 0
      %v2538 = vsel %vm249, %v2475, 0
      %v2541 = vsel %vm249, %v2476, 0
      %v2544 = vsel %vm249, %v2477, 0
      %v2547 = vsel %vm249, %v2478, 0
      %v2550 = vsel %vm249, %v2479, 0
      %v2553 = vsel %vm249, %v2480, 0
      %v2556 = vsel %vm249, %v2481, 0
      %v2559 = vsel %vm249, %v2482, 0
      %v2562 = vsel %vm249, %v2483, 0
      %v2565 = vsel %vm249, %v2484, 0
      %v2568 = vsel %vm249, %v2485, 0
      %v2571 = vsel %vm249, %v2486, 0
      %v2574 = vsel %vm249, %v2487, 0
      %v2577 = vsel %vm249, %v2488, 0
      %v2580 = vsel %vm249, %v2489, 0
      %v2583 = vsel %vm249, %v2490, 0
      %v2586 = vsel %vm249, %v2491, 0
      %v2589 = vsel %vm249, %v2492, 0
      %v2592 = vsel %vm346, %v2494, 0
      %2594 = vmatprep.subr.mxu0 0.0
      %2595 = vmatpush1.msra.mxu0 %v2592
      %2596 = vmatprep.subr.mxu0 0.0
      %2597 = vmatpush1.msra.mxu0 0.0
      %2598 = vmatprep.subr.mxu0 0.0
      %2599 = vmatpush1.msra.mxu0 0.0
      %2600 = vmatprep.subr.mxu0 0.0
      %2601 = vmatpush1.msra.mxu0 0.0
      %2602 = vmatprep.subr.mxu0 0.0
      %2603 = vmatpush1.msra.mxu0 0.0
      %2604 = vmatprep.subr.mxu0 0.0
      %2605 = vmatpush1.msra.mxu0 0.0
      %2606 = vmatprep.subr.mxu0 0.0
      %2607 = vmatpush1.msra.mxu0 0.0
      %2608 = vmatprep.subr.mxu0 0.0
      %2609 = vmatpush1.msra.mxu0 0.0
      %2610 = vmatprep.subr.mxu0 0.0
      %2611 = vmatpush1.msra.mxu0 0.0
      %2612 = vmatprep.subr.mxu0 0.0
      %2613 = vmatpush1.msra.mxu0 0.0
      %2614 = vmatprep.subr.mxu0 0.0
      %2615 = vmatpush1.msra.mxu0 0.0
      %2616 = vmatprep.subr.mxu0 0.0
      %2617 = vmatpush1.msra.mxu0 0.0
      %2618 = vmatprep.subr.mxu0 0.0
      %2619 = vmatpush1.msra.mxu0 0.0
      %2620 = vmatprep.subr.mxu0 0.0
      %2621 = vmatpush1.msra.mxu0 0.0
      %2622 = vmatprep.subr.mxu0 0.0
      %2623 = vmatpush1.msra.mxu0 0.0
      %2624 = vmatprep.subr.mxu0 0.0
      %2625 = vmatpush1.msra.mxu0 0.0
      %2626 = vmatprep.subr.mxu0 0.0
      %2627 = vmatpush1.msra.mxu0 0.0
      %2628 = vmatprep.subr.mxu0 0.0
      %2629 = vmatpush1.msra.mxu0 0.0
      %2630 = vmatprep.subr.mxu0 0.0
      %2631 = vmatpush1.msra.mxu0 0.0
      %2632 = vmatprep.subr.mxu0 0.0
      %2633 = vmatpush1.msra.mxu0 0.0
      %2634 = vmatprep.subr.mxu0 0.0
      %2635 = vmatpush1.msra.mxu0 0.0
      %2636 = vmatprep.subr.mxu0 0.0
      %2637 = vmatpush1.msra.mxu0 0.0
      %2638 = vmatprep.subr.mxu0 0.0
      %2639 = vmatpush1.msra.mxu0 0.0
      %2640 = vmatprep.subr.mxu0 0.0
      %2641 = vmatpush1.msra.mxu0 0.0
      %2642 = vmatprep.subr.mxu0 0.0
      %2643 = vmatpush1.msra.mxu0 0.0
      %2644 = vmatprep.subr.mxu0 0.0
      %2645 = vmatpush1.msra.mxu0 0.0
      %2646 = vmatprep.subr.mxu0 0.0
      %2647 = vmatpush1.msra.mxu0 0.0
      %2648 = vmatprep.subr.mxu0 0.0
      %2649 = vmatpush1.msra.mxu0 0.0
      %2650 = vmatprep.subr.mxu0 0.0
      %2651 = vmatpush1.msra.mxu0 0.0
      %2652 = vmatprep.subr.mxu0 0.0
      %2653 = vmatpush1.msra.mxu0 0.0
      %2654 = vmatprep.subr.mxu0 0.0
      %2655 = vmatpush1.msra.mxu0 0.0
      %2656 = vmatprep.subr.mxu0 0.0
      %2657 = vmatpush1.msra.mxu0 0.0
      %2658 = vmatprep.mubr.f32.mxu0 0.0
      %2659 = vmatmul.mubr.f32.gmra.mrb[0].mxu0 %v2496
      %v2660 = vpop.f32.mrb[0].mxu0
      %v2661 = vadd.f32 0.0, %v2660
      %v2662 = vpop.f32.mrb[0].mxu0
      %2663 = vmatprep.mubr.f32.mxu0 0.0
      %2664 = vmatmul.mubr.f32.gmra.mrb[0].mxu0 %v2499
      %v2665 = vpop.f32.mrb[0].mxu0
      %v2666 = vadd.f32 0.0, %v2665
      %v2667 = vpop.f32.mrb[0].mxu0
      %2668 = vmatprep.mubr.f32.mxu0 0.0
      %2669 = vmatmul.mubr.f32.gmra.mrb[0].mxu0 %v2502
      %v2670 = vpop.f32.mrb[0].mxu0
      %v2671 = vadd.f32 0.0, %v2670
      %v2672 = vpop.f32.mrb[0].mxu0
      %2673 = vmatprep.mubr.f32.mxu0 0.0
      %2674 = vmatmul.mubr.f32.gmra.mrb[0].mxu0 %v2505
      %v2675 = vpop.f32.mrb[0].mxu0
      %v2676 = vadd.f32 0.0, %v2675
      %v2677 = vpop.f32.mrb[0].mxu0
      %2678 = vmatprep.mubr.f32.mxu0 0.0
      %2679 = vmatmul.mubr.f32.gmra.mrb[0].mxu0 %v2508
      %v2680 = vpop.f32.mrb[0].mxu0
      %v2681 = vadd.f32 0.0, %v2680
      %v2682 = vpop.f32.mrb[0].mxu0
      %2683 = vmatprep.mubr.f32.mxu0 0.0
      %2684 = vmatmul.mubr.f32.gmra.mrb[0].mxu0 %v2511
      %v2685 = vpop.f32.mrb[0].mxu0
      %v2686 = vadd.f32 0.0, %v2685
      %v2687 = vpop.f32.mrb[0].mxu0
      %2688 = vmatprep.mubr.f32.mxu0 0.0
      %2689 = vmatmul.mubr.f32.gmra.mrb[0].mxu0 %v2514
      %v2690 = vpop.f32.mrb[0].mxu0
      %v2691 = vadd.f32 0.0, %v2690
      %v2692 = vpop.f32.mrb[0].mxu0
      %2693 = vmatprep.mubr.f32.mxu0 0.0
      %2694 = vmatmul.mubr.f32.gmra.mrb[0].mxu0 %v2517
      %v2695 = vpop.f32.mrb[0].mxu0
      %v2696 = vadd.f32 0.0, %v2695
      %v2697 = vpop.f32.mrb[0].mxu0
      %2698 = vmatprep.mubr.f32.mxu0 0.0
      %2699 = vmatmul.mubr.f32.gmra.mrb[0].mxu0 %v2520
      %v2700 = vpop.f32.mrb[0].mxu0
      %v2701 = vadd.f32 0.0, %v2700
      %v2702 = vpop.f32.mrb[0].mxu0
      %2703 = vmatprep.mubr.f32.mxu0 0.0
      %2704 = vmatmul.mubr.f32.gmra.mrb[0].mxu0 %v2523
      %v2705 = vpop.f32.mrb[0].mxu0
      %v2706 = vadd.f32 0.0, %v2705
      %v2707 = vpop.f32.mrb[0].mxu0
      %2708 = vmatprep.mubr.f32.mxu0 0.0
      %2709 = vmatmul.mubr.f32.gmra.mrb[0].mxu0 %v2526
      %v2710 = vpop.f32.mrb[0].mxu0
      %v2711 = vadd.f32 0.0, %v2710
      %v2712 = vpop.f32.mrb[0].mxu0
      %2713 = vmatprep.mubr.f32.mxu0 0.0
      %2714 = vmatmul.mubr.f32.gmra.mrb[0].mxu0 %v2529
      %v2715 = vpop.f32.mrb[0].mxu0
      %v2716 = vadd.f32 0.0, %v2715
      %v2717 = vpop.f32.mrb[0].mxu0
      %2718 = vmatprep.mubr.f32.mxu0 0.0
      %2719 = vmatmul.mubr.f32.gmra.mrb[0].mxu0 %v2532
      %v2720 = vpop.f32.mrb[0].mxu0
      %v2721 = vadd.f32 0.0, %v2720
      %v2722 = vpop.f32.mrb[0].mxu0
      %2723 = vmatprep.mubr.f32.mxu0 0.0
      %2724 = vmatmul.mubr.f32.gmra.mrb[0].mxu0 %v2535
      %v2725 = vpop.f32.mrb[0].mxu0
      %v2726 = vadd.f32 0.0, %v2725
      %v2727 = vpop.f32.mrb[0].mxu0
      %2728 = vmatprep.mubr.f32.mxu0 0.0
      %2729 = vmatmul.mubr.f32.gmra.mrb[0].mxu0 %v2538
      %v2730 = vpop.f32.mrb[0].mxu0
      %v2731 = vadd.f32 0.0, %v2730
      %v2732 = vpop.f32.mrb[0].mxu0
      %2733 = vmatprep.mubr.f32.mxu0 0.0
      %2734 = vmatmul.mubr.f32.gmra.mrb[0].mxu0 %v2541
      %v2735 = vpop.f32.mrb[0].mxu0
      %v2736 = vadd.f32 0.0, %v2735
      %v2737 = vpop.f32.mrb[0].mxu0
      %2738 = vmatprep.mubr.f32.mxu0 0.0
      %2739 = vmatmul.mubr.f32.gmra.mrb[0].mxu0 %v2544
      %v2740 = vpop.f32.mrb[0].mxu0
      %v2741 = vadd.f32 0.0, %v2740
      %v2742 = vpop.f32.mrb[0].mxu0
      %2743 = vmatprep.mubr.f32.mxu0 0.0
      %2744 = vmatmul.mubr.f32.gmra.mrb[0].mxu0 %v2547
      %v2745 = vpop.f32.mrb[0].mxu0
      %v2746 = vadd.f32 0.0, %v2745
      %v2747 = vpop.f32.mrb[0].mxu0
      %2748 = vmatprep.mubr.f32.mxu0 0.0
      %2749 = vmatmul.mubr.f32.gmra.mrb[0].mxu0 %v2550
      %v2750 = vpop.f32.mrb[0].mxu0
      %v2751 = vadd.f32 0.0, %v2750
      %v2752 = vpop.f32.mrb[0].mxu0
      %2753 = vmatprep.mubr.f32.mxu0 0.0
      %2754 = vmatmul.mubr.f32.gmra.mrb[0].mxu0 %v2553
      %v2755 = vpop.f32.mrb[0].mxu0
      %v2756 = vadd.f32 0.0, %v2755
      %v2757 = vpop.f32.mrb[0].mxu0
      %2758 = vmatprep.mubr.f32.mxu0 0.0
      %2759 = vmatmul.mubr.f32.gmra.mrb[0].mxu0 %v2556
      %v2760 = vpop.f32.mrb[0].mxu0
      %v2761 = vadd.f32 0.0, %v2760
      %v2762 = vpop.f32.mrb[0].mxu0
      %2763 = vmatprep.mubr.f32.mxu0 0.0
      %2764 = vmatmul.mubr.f32.gmra.mrb[0].mxu0 %v2559
      %v2765 = vpop.f32.mrb[0].mxu0
      %v2766 = vadd.f32 0.0, %v2765
      %v2767 = vpop.f32.mrb[0].mxu0
      %2768 = vmatprep.mubr.f32.mxu0 0.0
      %2769 = vmatmul.mubr.f32.gmra.mrb[0].mxu0 %v2562
      %v2770 = vpop.f32.mrb[0].mxu0
      %v2771 = vadd.f32 0.0, %v2770
      %v2772 = vpop.f32.mrb[0].mxu0
      %2773 = vmatprep.mubr.f32.mxu0 0.0
      %2774 = vmatmul.mubr.f32.gmra.mrb[0].mxu0 %v2565
      %v2775 = vpop.f32.mrb[0].mxu0
      %v2776 = vadd.f32 0.0, %v2775
      %v2777 = vpop.f32.mrb[0].mxu0
      %2778 = vmatprep.mubr.f32.mxu0 0.0
      %2779 = vmatmul.mubr.f32.gmra.mrb[0].mxu0 %v2568
      %v2780 = vpop.f32.mrb[0].mxu0
      %v2781 = vadd.f32 0.0, %v2780
      %v2782 = vpop.f32.mrb[0].mxu0
      %2783 = vmatprep.mubr.f32.mxu0 0.0
      %2784 = vmatmul.mubr.f32.gmra.mrb[0].mxu0 %v2571
      %v2785 = vpop.f32.mrb[0].mxu0
      %v2786 = vadd.f32 0.0, %v2785
      %v2787 = vpop.f32.mrb[0].mxu0
      %2788 = vmatprep.mubr.f32.mxu0 0.0
      %2789 = vmatmul.mubr.f32.gmra.mrb[0].mxu0 %v2574
      %v2790 = vpop.f32.mrb[0].mxu0
      %v2791 = vadd.f32 0.0, %v2790
      %v2792 = vpop.f32.mrb[0].mxu0
      %2793 = vmatprep.mubr.f32.mxu0 0.0
      %2794 = vmatmul.mubr.f32.gmra.mrb[0].mxu0 %v2577
      %v2795 = vpop.f32.mrb[0].mxu0
      %v2796 = vadd.f32 0.0, %v2795
      %v2797 = vpop.f32.mrb[0].mxu0
      %2798 = vmatprep.mubr.f32.mxu0 0.0
      %2799 = vmatmul.mubr.f32.gmra.mrb[0].mxu0 %v2580
      %v2800 = vpop.f32.mrb[0].mxu0
      %v2801 = vadd.f32 0.0, %v2800
      %v2802 = vpop.f32.mrb[0].mxu0
      %2803 = vmatprep.mubr.f32.mxu0 0.0
      %2804 = vmatmul.mubr.f32.gmra.mrb[0].mxu0 %v2583
      %v2805 = vpop.f32.mrb[0].mxu0
      %v2806 = vadd.f32 0.0, %v2805
      %v2807 = vpop.f32.mrb[0].mxu0
      %2808 = vmatprep.mubr.f32.mxu0 0.0
      %2809 = vmatmul.mubr.f32.gmra.mrb[0].mxu0 %v2586
      %v2810 = vpop.f32.mrb[0].mxu0
      %v2811 = vadd.f32 0.0, %v2810
      %v2812 = vpop.f32.mrb[0].mxu0
      %2813 = vmatprep.mubr.f32.mxu0 0.0
      %2814 = vmatmul.mubr.f32.gmra.mrb[0].mxu0 %v2589
      %v2815 = vpop.f32.mrb[0].mxu0
      %v2816 = vadd.f32 0.0, %v2815
      %v2817 = vpop.f32.mrb[0].mxu0
      %2818 = vdwg.mxu0
      %v2819 = vadd.f32 %v2428, %v2661
      %v2820 = vadd.f32 %v2429, %v2666
      %v2821 = vadd.f32 %v2430, %v2671
      %v2822 = vadd.f32 %v2431, %v2676
      %v2823 = vadd.f32 %v2432, %v2681
      %v2824 = vadd.f32 %v2433, %v2686
      %v2825 = vadd.f32 %v2434, %v2691
      %v2826 = vadd.f32 %v2435, %v2696
      %v2827 = vadd.f32 %v2436, %v2701
      %v2828 = vadd.f32 %v2437, %v2706
      %v2829 = vadd.f32 %v2438, %v2711
      %v2830 = vadd.f32 %v2439, %v2716
      %v2831 = vadd.f32 %v2440, %v2721
      %v2832 = vadd.f32 %v2441, %v2726
      %v2833 = vadd.f32 %v2442, %v2731
      %v2834 = vadd.f32 %v2443, %v2736
      %v2835 = vadd.f32 %v2444, %v2741
      %v2836 = vadd.f32 %v2445, %v2746
      %v2837 = vadd.f32 %v2446, %v2751
      %v2838 = vadd.f32 %v2447, %v2756
      %v2839 = vadd.f32 %v2448, %v2761
      %v2840 = vadd.f32 %v2449, %v2766
      %v2841 = vadd.f32 %v2450, %v2771
      %v2842 = vadd.f32 %v2451, %v2776
      %v2843 = vadd.f32 %v2452, %v2781
      %v2844 = vadd.f32 %v2453, %v2786
      %v2845 = vadd.f32 %v2454, %v2791
      %v2846 = vadd.f32 %v2455, %v2796
      %v2847 = vadd.f32 %v2456, %v2801
      %v2848 = vadd.f32 %v2457, %v2806
      %v2849 = vadd.f32 %v2458, %v2811
      %v2850 = vadd.f32 %v2459, %v2816
      %v2851 = vld [vmem:[%s2460 + $0x1] sm:$0xff]
      %v2852 = vld [vmem:[%s2460 + $0x9] sm:$0xff]
      %v2853 = vld [vmem:[%s2460 + $0x19] sm:$0xff]
      %v2854 = vld [vmem:[%s2460 + $0x21] sm:$0xff]
      %v2855 = vld [vmem:[%s2460 + $0x31] sm:$0xff]
      %v2856 = vld [vmem:[%s2460 + $0x39] sm:$0xff]
      %v2857 = vld [vmem:[%s2460 + $0x49] sm:$0xff]
      %v2858 = vld [vmem:[%s2460 + $0x51] sm:$0xff]
      %v2859 = vld [vmem:[%s2460 + $0x61] sm:$0xff]
      %v2860 = vld [vmem:[%s2460 + $0x69] sm:$0xff]
      %v2861 = vld [vmem:[%s2460 + $0x79] sm:$0xff]
      %v2862 = vld [vmem:[%s2460 + $0x81] sm:$0xff]
      %v2863 = vld [vmem:[%s2460 + $0x91] sm:$0xff]
      %v2864 = vld [vmem:[%s2460 + $0x99] sm:$0xff]
      %v2865 = vld [vmem:[%s2460 + $0xa9] sm:$0xff]
      %v2866 = vld [vmem:[%s2460 + $0xb1] sm:$0xff]
      %v2867 = vld [vmem:[%s2460 + $0xc1] sm:$0xff]
      %v2868 = vld [vmem:[%s2460 + $0xc9] sm:$0xff]
      %v2869 = vld [vmem:[%s2460 + $0xd9] sm:$0xff]
      %v2870 = vld [vmem:[%s2460 + $0xe1] sm:$0xff]
      %v2871 = vld [vmem:[%s2460 + $0xf1] sm:$0xff]
      %v2872 = vld [vmem:[%s2460 + $0xf9] sm:$0xff]
      %v2873 = vld [vmem:[%s2460 + $0x109] sm:$0xff]
      %v2874 = vld [vmem:[%s2460 + $0x111] sm:$0xff]
      %v2875 = vld [vmem:[%s2460 + $0x121] sm:$0xff]
      %v2876 = vld [vmem:[%s2460 + $0x129] sm:$0xff]
      %v2877 = vld [vmem:[%s2460 + $0x139] sm:$0xff]
      %v2878 = vld [vmem:[%s2460 + $0x141] sm:$0xff]
      %v2879 = vld [vmem:[%s2460 + $0x151] sm:$0xff]
      %v2880 = vld [vmem:[%s2460 + $0x159] sm:$0xff]
      %v2881 = vld [vmem:[%s2460 + $0x169] sm:$0xff]
      %v2882 = vld [vmem:[%s2460 + $0x171] sm:$0xff]
      %s2883 = scalar_lea.vmem %s1, 28
      %v2884 = vld [vmem:[%s2883] sm:$0xf]
      %v2886 = vsel %vm249, %v2851, 0
      %v2889 = vsel %vm249, %v2852, 0
      %v2892 = vsel %vm249, %v2853, 0
      %v2895 = vsel %vm249, %v2854, 0
      %v2898 = vsel %vm249, %v2855, 0
      %v2901 = vsel %vm249, %v2856, 0
      %v2904 = vsel %vm249, %v2857, 0
      %v2907 = vsel %vm249, %v2858, 0
      %v2910 = vsel %vm249, %v2859, 0
      %v2913 = vsel %vm249, %v2860, 0
      %v2916 = vsel %vm249, %v2861, 0
      %v2919 = vsel %vm249, %v2862, 0
      %v2922 = vsel %vm249, %v2863, 0
      %v2925 = vsel %vm249, %v2864, 0
      %v2928 = vsel %vm249, %v2865, 0
      %v2931 = vsel %vm249, %v2866, 0
      %v2934 = vsel %vm249, %v2867, 0
      %v2937 = vsel %vm249, %v2868, 0
      %v2940 = vsel %vm249, %v2869, 0
      %v2943 = vsel %vm249, %v2870, 0
      %v2946 = vsel %vm249, %v2871, 0
      %v2949 = vsel %vm249, %v2872, 0
      %v2952 = vsel %vm249, %v2873, 0
      %v2955 = vsel %vm249, %v2874, 0
      %v2958 = vsel %vm249, %v2875, 0
      %v2961 = vsel %vm249, %v2876, 0
      %v2964 = vsel %vm249, %v2877, 0
      %v2967 = vsel %vm249, %v2878, 0
      %v2970 = vsel %vm249, %v2879, 0
      %v2973 = vsel %vm249, %v2880, 0
      %v2976 = vsel %vm249, %v2881, 0
      %v2979 = vsel %vm249, %v2882, 0
      %v2982 = vsel %vm346, %v2884, 0
      %2984 = vmatprep.subr.mxu0 0.0
      %2985 = vmatpush1.msra.mxu0 %v2982
      %2986 = vmatprep.subr.mxu0 0.0
      %2987 = vmatpush1.msra.mxu0 0.0
      %2988 = vmatprep.subr.mxu0 0.0
      %2989 = vmatpush1.msra.mxu0 0.0
      %2990 = vmatprep.subr.mxu0 0.0
      %2991 = vmatpush1.msra.mxu0 0.0
      %2992 = vmatprep.subr.mxu0 0.0
      %2993 = vmatpush1.msra.mxu0 0.0
      %2994 = vmatprep.subr.mxu0 0.0
      %2995 = vmatpush1.msra.mxu0 0.0
      %2996 = vmatprep.subr.mxu0 0.0
      %2997 = vmatpush1.msra.mxu0 0.0
      %2998 = vmatprep.subr.mxu0 0.0
      %2999 = vmatpush1.msra.mxu0 0.0
      %3000 = vmatprep.subr.mxu0 0.0
      %3001 = vmatpush1.msra.mxu0 0.0
      %3002 = vmatprep.subr.mxu0 0.0
      %3003 = vmatpush1.msra.mxu0 0.0
      %3004 = vmatprep.subr.mxu0 0.0
      %3005 = vmatpush1.msra.mxu0 0.0
      %3006 = vmatprep.subr.mxu0 0.0
      %3007 = vmatpush1.msra.mxu0 0.0
      %3008 = vmatprep.subr.mxu0 0.0
      %3009 = vmatpush1.msra.mxu0 0.0
      %3010 = vmatprep.subr.mxu0 0.0
      %3011 = vmatpush1.msra.mxu0 0.0
      %3012 = vmatprep.subr.mxu0 0.0
      %3013 = vmatpush1.msra.mxu0 0.0
      %3014 = vmatprep.subr.mxu0 0.0
      %3015 = vmatpush1.msra.mxu0 0.0
      %3016 = vmatprep.subr.mxu0 0.0
      %3017 = vmatpush1.msra.mxu0 0.0
      %3018 = vmatprep.subr.mxu0 0.0
      %3019 = vmatpush1.msra.mxu0 0.0
      %3020 = vmatprep.subr.mxu0 0.0
      %3021 = vmatpush1.msra.mxu0 0.0
      %3022 = vmatprep.subr.mxu0 0.0
      %3023 = vmatpush1.msra.mxu0 0.0
      %3024 = vmatprep.subr.mxu0 0.0
      %3025 = vmatpush1.msra.mxu0 0.0
      %3026 = vmatprep.subr.mxu0 0.0
      %3027 = vmatpush1.msra.mxu0 0.0
      %3028 = vmatprep.subr.mxu0 0.0
      %3029 = vmatpush1.msra.mxu0 0.0
      %3030 = vmatprep.subr.mxu0 0.0
      %3031 = vmatpush1.msra.mxu0 0.0
      %3032 = vmatprep.subr.mxu0 0.0
      %3033 = vmatpush1.msra.mxu0 0.0
      %3034 = vmatprep.subr.mxu0 0.0
      %3035 = vmatpush1.msra.mxu0 0.0
      %3036 = vmatprep.subr.mxu0 0.0
      %3037 = vmatpush1.msra.mxu0 0.0
      %3038 = vmatprep.subr.mxu0 0.0
      %3039 = vmatpush1.msra.mxu0 0.0
      %3040 = vmatprep.subr.mxu0 0.0
      %3041 = vmatpush1.msra.mxu0 0.0
      %3042 = vmatprep.subr.mxu0 0.0
      %3043 = vmatpush1.msra.mxu0 0.0
      %3044 = vmatprep.subr.mxu0 0.0
      %3045 = vmatpush1.msra.mxu0 0.0
      %3046 = vmatprep.subr.mxu0 0.0
      %3047 = vmatpush1.msra.mxu0 0.0
      %3048 = vmatprep.mubr.f32.mxu0 0.0
      %3049 = vmatmul.mubr.f32.gmra.mrb[0].mxu0 %v2886
      %v3050 = vpop.f32.mrb[0].mxu0
      %v3051 = vadd.f32 0.0, %v3050
      %v3052 = vpop.f32.mrb[0].mxu0
      %3053 = vmatprep.mubr.f32.mxu0 0.0
      %3054 = vmatmul.mubr.f32.gmra.mrb[0].mxu0 %v2889
      %v3055 = vpop.f32.mrb[0].mxu0
      %v3056 = vadd.f32 0.0, %v3055
      %v3057 = vpop.f32.mrb[0].mxu0
      %3058 = vmatprep.mubr.f32.mxu0 0.0
      %3059 = vmatmul.mubr.f32.gmra.mrb[0].mxu0 %v2892
      %v3060 = vpop.f32.mrb[0].mxu0
      %v3061 = vadd.f32 0.0, %v3060
      %v3062 = vpop.f32.mrb[0].mxu0
      %3063 = vmatprep.mubr.f32.mxu0 0.0
      %3064 = vmatmul.mubr.f32.gmra.mrb[0].mxu0 %v2895
      %v3065 = vpop.f32.mrb[0].mxu0
      %v3066 = vadd.f32 0.0, %v3065
      %v3067 = vpop.f32.mrb[0].mxu0
      %3068 = vmatprep.mubr.f32.mxu0 0.0
      %3069 = vmatmul.mubr.f32.gmra.mrb[0].mxu0 %v2898
      %v3070 = vpop.f32.mrb[0].mxu0
      %v3071 = vadd.f32 0.0, %v3070
      %v3072 = vpop.f32.mrb[0].mxu0
      %3073 = vmatprep.mubr.f32.mxu0 0.0
      %3074 = vmatmul.mubr.f32.gmra.mrb[0].mxu0 %v2901
      %v3075 = vpop.f32.mrb[0].mxu0
      %v3076 = vadd.f32 0.0, %v3075
      %v3077 = vpop.f32.mrb[0].mxu0
      %3078 = vmatprep.mubr.f32.mxu0 0.0
      %3079 = vmatmul.mubr.f32.gmra.mrb[0].mxu0 %v2904
      %v3080 = vpop.f32.mrb[0].mxu0
      %v3081 = vadd.f32 0.0, %v3080
      %v3082 = vpop.f32.mrb[0].mxu0
      %3083 = vmatprep.mubr.f32.mxu0 0.0
      %3084 = vmatmul.mubr.f32.gmra.mrb[0].mxu0 %v2907
      %v3085 = vpop.f32.mrb[0].mxu0
      %v3086 = vadd.f32 0.0, %v3085
      %v3087 = vpop.f32.mrb[0].mxu0
      %3088 = vmatprep.mubr.f32.mxu0 0.0
      %3089 = vmatmul.mubr.f32.gmra.mrb[0].mxu0 %v2910
      %v3090 = vpop.f32.mrb[0].mxu0
      %v3091 = vadd.f32 0.0, %v3090
      %v3092 = vpop.f32.mrb[0].mxu0
      %3093 = vmatprep.mubr.f32.mxu0 0.0
      %3094 = vmatmul.mubr.f32.gmra.mrb[0].mxu0 %v2913
      %v3095 = vpop.f32.mrb[0].mxu0
      %v3096 = vadd.f32 0.0, %v3095
      %v3097 = vpop.f32.mrb[0].mxu0
      %3098 = vmatprep.mubr.f32.mxu0 0.0
      %3099 = vmatmul.mubr.f32.gmra.mrb[0].mxu0 %v2916
      %v3100 = vpop.f32.mrb[0].mxu0
      %v3101 = vadd.f32 0.0, %v3100
      %v3102 = vpop.f32.mrb[0].mxu0
      %3103 = vmatprep.mubr.f32.mxu0 0.0
      %3104 = vmatmul.mubr.f32.gmra.mrb[0].mxu0 %v2919
      %v3105 = vpop.f32.mrb[0].mxu0
      %v3106 = vadd.f32 0.0, %v3105
      %v3107 = vpop.f32.mrb[0].mxu0
      %3108 = vmatprep.mubr.f32.mxu0 0.0
      %3109 = vmatmul.mubr.f32.gmra.mrb[0].mxu0 %v2922
      %v3110 = vpop.f32.mrb[0].mxu0
      %v3111 = vadd.f32 0.0, %v3110
      %v3112 = vpop.f32.mrb[0].mxu0
      %3113 = vmatprep.mubr.f32.mxu0 0.0
      %3114 = vmatmul.mubr.f32.gmra.mrb[0].mxu0 %v2925
      %v3115 = vpop.f32.mrb[0].mxu0
      %v3116 = vadd.f32 0.0, %v3115
      %v3117 = vpop.f32.mrb[0].mxu0
      %3118 = vmatprep.mubr.f32.mxu0 0.0
      %3119 = vmatmul.mubr.f32.gmra.mrb[0].mxu0 %v2928
      %v3120 = vpop.f32.mrb[0].mxu0
      %v3121 = vadd.f32 0.0, %v3120
      %v3122 = vpop.f32.mrb[0].mxu0
      %3123 = vmatprep.mubr.f32.mxu0 0.0
      %3124 = vmatmul.mubr.f32.gmra.mrb[0].mxu0 %v2931
      %v3125 = vpop.f32.mrb[0].mxu0
      %v3126 = vadd.f32 0.0, %v3125
      %v3127 = vpop.f32.mrb[0].mxu0
      %3128 = vmatprep.mubr.f32.mxu0 0.0
      %3129 = vmatmul.mubr.f32.gmra.mrb[0].mxu0 %v2934
      %v3130 = vpop.f32.mrb[0].mxu0
      %v3131 = vadd.f32 0.0, %v3130
      %v3132 = vpop.f32.mrb[0].mxu0
      %3133 = vmatprep.mubr.f32.mxu0 0.0
      %3134 = vmatmul.mubr.f32.gmra.mrb[0].mxu0 %v2937
      %v3135 = vpop.f32.mrb[0].mxu0
      %v3136 = vadd.f32 0.0, %v3135
      %v3137 = vpop.f32.mrb[0].mxu0
      %3138 = vmatprep.mubr.f32.mxu0 0.0
      %3139 = vmatmul.mubr.f32.gmra.mrb[0].mxu0 %v2940
      %v3140 = vpop.f32.mrb[0].mxu0
      %v3141 = vadd.f32 0.0, %v3140
      %v3142 = vpop.f32.mrb[0].mxu0
      %3143 = vmatprep.mubr.f32.mxu0 0.0
      %3144 = vmatmul.mubr.f32.gmra.mrb[0].mxu0 %v2943
      %v3145 = vpop.f32.mrb[0].mxu0
      %v3146 = vadd.f32 0.0, %v3145
      %v3147 = vpop.f32.mrb[0].mxu0
      %3148 = vmatprep.mubr.f32.mxu0 0.0
      %3149 = vmatmul.mubr.f32.gmra.mrb[0].mxu0 %v2946
      %v3150 = vpop.f32.mrb[0].mxu0
      %v3151 = vadd.f32 0.0, %v3150
      %v3152 = vpop.f32.mrb[0].mxu0
      %3153 = vmatprep.mubr.f32.mxu0 0.0
      %3154 = vmatmul.mubr.f32.gmra.mrb[0].mxu0 %v2949
      %v3155 = vpop.f32.mrb[0].mxu0
      %v3156 = vadd.f32 0.0, %v3155
      %v3157 = vpop.f32.mrb[0].mxu0
      %3158 = vmatprep.mubr.f32.mxu0 0.0
      %3159 = vmatmul.mubr.f32.gmra.mrb[0].mxu0 %v2952
      %v3160 = vpop.f32.mrb[0].mxu0
      %v3161 = vadd.f32 0.0, %v3160
      %v3162 = vpop.f32.mrb[0].mxu0
      %3163 = vmatprep.mubr.f32.mxu0 0.0
      %3164 = vmatmul.mubr.f32.gmra.mrb[0].mxu0 %v2955
      %v3165 = vpop.f32.mrb[0].mxu0
      %v3166 = vadd.f32 0.0, %v3165
      %v3167 = vpop.f32.mrb[0].mxu0
      %3168 = vmatprep.mubr.f32.mxu0 0.0
      %3169 = vmatmul.mubr.f32.gmra.mrb[0].mxu0 %v2958
      %v3170 = vpop.f32.mrb[0].mxu0
      %v3171 = vadd.f32 0.0, %v3170
      %v3172 = vpop.f32.mrb[0].mxu0
      %3173 = vmatprep.mubr.f32.mxu0 0.0
      %3174 = vmatmul.mubr.f32.gmra.mrb[0].mxu0 %v2961
      %v3175 = vpop.f32.mrb[0].mxu0
      %v3176 = vadd.f32 0.0, %v3175
      %v3177 = vpop.f32.mrb[0].mxu0
      %3178 = vmatprep.mubr.f32.mxu0 0.0
      %3179 = vmatmul.mubr.f32.gmra.mrb[0].mxu0 %v2964
      %v3180 = vpop.f32.mrb[0].mxu0
      %v3181 = vadd.f32 0.0, %v3180
      %v3182 = vpop.f32.mrb[0].mxu0
      %3183 = vmatprep.mubr.f32.mxu0 0.0
      %3184 = vmatmul.mubr.f32.gmra.mrb[0].mxu0 %v2967
      %v3185 = vpop.f32.mrb[0].mxu0
      %v3186 = vadd.f32 0.0, %v3185
      %v3187 = vpop.f32.mrb[0].mxu0
      %3188 = vmatprep.mubr.f32.mxu0 0.0
      %3189 = vmatmul.mubr.f32.gmra.mrb[0].mxu0 %v2970
      %v3190 = vpop.f32.mrb[0].mxu0
      %v3191 = vadd.f32 0.0, %v3190
      %v3192 = vpop.f32.mrb[0].mxu0
      %3193 = vmatprep.mubr.f32.mxu0 0.0
      %3194 = vmatmul.mubr.f32.gmra.mrb[0].mxu0 %v2973
      %v3195 = vpop.f32.mrb[0].mxu0
      %v3196 = vadd.f32 0.0, %v3195
      %v3197 = vpop.f32.mrb[0].mxu0
      %3198 = vmatprep.mubr.f32.mxu0 0.0
      %3199 = vmatmul.mubr.f32.gmra.mrb[0].mxu0 %v2976
      %v3200 = vpop.f32.mrb[0].mxu0
      %v3201 = vadd.f32 0.0, %v3200
      %v3202 = vpop.f32.mrb[0].mxu0
      %3203 = vmatprep.mubr.f32.mxu0 0.0
      %3204 = vmatmul.mubr.f32.gmra.mrb[0].mxu0 %v2979
      %v3205 = vpop.f32.mrb[0].mxu0
      %v3206 = vadd.f32 0.0, %v3205
      %v3207 = vpop.f32.mrb[0].mxu0
      %3208 = vdwg.mxu0
      %v3209 = vadd.f32 %v2819, %v3051
      %v3210 = vadd.f32 %v2820, %v3056
      %v3211 = vadd.f32 %v2821, %v3061
      %v3212 = vadd.f32 %v2822, %v3066
      %v3213 = vadd.f32 %v2823, %v3071
      %v3214 = vadd.f32 %v2824, %v3076
      %v3215 = vadd.f32 %v2825, %v3081
      %v3216 = vadd.f32 %v2826, %v3086
      %v3217 = vadd.f32 %v2827, %v3091
      %v3218 = vadd.f32 %v2828, %v3096
      %v3219 = vadd.f32 %v2829, %v3101
      %v3220 = vadd.f32 %v2830, %v3106
      %v3221 = vadd.f32 %v2831, %v3111
      %v3222 = vadd.f32 %v2832, %v3116
      %v3223 = vadd.f32 %v2833, %v3121
      %v3224 = vadd.f32 %v2834, %v3126
      %v3225 = vadd.f32 %v2835, %v3131
      %v3226 = vadd.f32 %v2836, %v3136
      %v3227 = vadd.f32 %v2837, %v3141
      %v3228 = vadd.f32 %v2838, %v3146
      %v3229 = vadd.f32 %v2839, %v3151
      %v3230 = vadd.f32 %v2840, %v3156
      %v3231 = vadd.f32 %v2841, %v3161
      %v3232 = vadd.f32 %v2842, %v3166
      %v3233 = vadd.f32 %v2843, %v3171
      %v3234 = vadd.f32 %v2844, %v3176
      %v3235 = vadd.f32 %v2845, %v3181
      %v3236 = vadd.f32 %v2846, %v3186
      %v3237 = vadd.f32 %v2847, %v3191
      %v3238 = vadd.f32 %v2848, %v3196
      %v3239 = vadd.f32 %v2849, %v3201
      %v3240 = vadd.f32 %v2850, %v3206
      %v3241 = vld [vmem:[%s2460 + $0x2] sm:$0xff]
      %v3242 = vld [vmem:[%s2460 + $0xa] sm:$0xff]
      %v3243 = vld [vmem:[%s2460 + $0x1a] sm:$0xff]
      %v3244 = vld [vmem:[%s2460 + $0x22] sm:$0xff]
      %v3245 = vld [vmem:[%s2460 + $0x32] sm:$0xff]
      %v3246 = vld [vmem:[%s2460 + $0x3a] sm:$0xff]
      %v3247 = vld [vmem:[%s2460 + $0x4a] sm:$0xff]
      %v3248 = vld [vmem:[%s2460 + $0x52] sm:$0xff]
      %v3249 = vld [vmem:[%s2460 + $0x62] sm:$0xff]
      %v3250 = vld [vmem:[%s2460 + $0x6a] sm:$0xff]
      %v3251 = vld [vmem:[%s2460 + $0x7a] sm:$0xff]
      %v3252 = vld [vmem:[%s2460 + $0x82] sm:$0xff]
      %v3253 = vld [vmem:[%s2460 + $0x92] sm:$0xff]
      %v3254 = vld [vmem:[%s2460 + $0x9a] sm:$0xff]
      %v3255 = vld [vmem:[%s2460 + $0xaa] sm:$0xff]
      %v3256 = vld [vmem:[%s2460 + $0xb2] sm:$0xff]
      %v3257 = vld [vmem:[%s2460 + $0xc2] sm:$0xff]
      %v3258 = vld [vmem:[%s2460 + $0xca] sm:$0xff]
      %v3259 = vld [vmem:[%s2460 + $0xda] sm:$0xff]
      %v3260 = vld [vmem:[%s2460 + $0xe2] sm:$0xff]
      %v3261 = vld [vmem:[%s2460 + $0xf2] sm:$0xff]
      %v3262 = vld [vmem:[%s2460 + $0xfa] sm:$0xff]
      %v3263 = vld [vmem:[%s2460 + $0x10a] sm:$0xff]
      %v3264 = vld [vmem:[%s2460 + $0x112] sm:$0xff]
      %v3265 = vld [vmem:[%s2460 + $0x122] sm:$0xff]
      %v3266 = vld [vmem:[%s2460 + $0x12a] sm:$0xff]
      %v3267 = vld [vmem:[%s2460 + $0x13a] sm:$0xff]
      %v3268 = vld [vmem:[%s2460 + $0x142] sm:$0xff]
      %v3269 = vld [vmem:[%s2460 + $0x152] sm:$0xff]
      %v3270 = vld [vmem:[%s2460 + $0x15a] sm:$0xff]
      %v3271 = vld [vmem:[%s2460 + $0x16a] sm:$0xff]
      %v3272 = vld [vmem:[%s2460 + $0x172] sm:$0xff]
      %s3273 = scalar_lea.vmem %s1, 32
      %v3274 = vld [vmem:[%s3273] sm:$0xf]
      %v3276 = vsel %vm249, %v3241, 0
      %v3279 = vsel %vm249, %v3242, 0
      %v3282 = vsel %vm249, %v3243, 0
      %v3285 = vsel %vm249, %v3244, 0
      %v3288 = vsel %vm249, %v3245, 0
      %v3291 = vsel %vm249, %v3246, 0
      %v3294 = vsel %vm249, %v3247, 0
      %v3297 = vsel %vm249, %v3248, 0
      %v3300 = vsel %vm249, %v3249, 0
      %v3303 = vsel %vm249, %v3250, 0
      %v3306 = vsel %vm249, %v3251, 0
      %v3309 = vsel %vm249, %v3252, 0
      %v3312 = vsel %vm249, %v3253, 0
      %v3315 = vsel %vm249, %v3254, 0
      %v3318 = vsel %vm249, %v3255, 0
      %v3321 = vsel %vm249, %v3256, 0
      %v3324 = vsel %vm249, %v3257, 0
      %v3327 = vsel %vm249, %v3258, 0
      %v3330 = vsel %vm249, %v3259, 0
      %v3333 = vsel %vm249, %v3260, 0
      %v3336 = vsel %vm249, %v3261, 0
      %v3339 = vsel %vm249, %v3262, 0
      %v3342 = vsel %vm249, %v3263, 0
      %v3345 = vsel %vm249, %v3264, 0
      %v3348 = vsel %vm249, %v3265, 0
      %v3351 = vsel %vm249, %v3266, 0
      %v3354 = vsel %vm249, %v3267, 0
      %v3357 = vsel %vm249, %v3268, 0
      %v3360 = vsel %vm249, %v3269, 0
      %v3363 = vsel %vm249, %v3270, 0
      %v3366 = vsel %vm249, %v3271, 0
      %v3369 = vsel %vm249, %v3272, 0
      %v3372 = vsel %vm346, %v3274, 0
      %3374 = vmatprep.subr.mxu0 0.0
      %3375 = vmatpush1.msra.mxu0 %v3372
      %3376 = vmatprep.subr.mxu0 0.0
      %3377 = vmatpush1.msra.mxu0 0.0
      %3378 = vmatprep.subr.mxu0 0.0
      %3379 = vmatpush1.msra.mxu0 0.0
      %3380 = vmatprep.subr.mxu0 0.0
      %3381 = vmatpush1.msra.mxu0 0.0
      %3382 = vmatprep.subr.mxu0 0.0
      %3383 = vmatpush1.msra.mxu0 0.0
      %3384 = vmatprep.subr.mxu0 0.0
      %3385 = vmatpush1.msra.mxu0 0.0
      %3386 = vmatprep.subr.mxu0 0.0
      %3387 = vmatpush1.msra.mxu0 0.0
      %3388 = vmatprep.subr.mxu0 0.0
      %3389 = vmatpush1.msra.mxu0 0.0
      %3390 = vmatprep.subr.mxu0 0.0
      %3391 = vmatpush1.msra.mxu0 0.0
      %3392 = vmatprep.subr.mxu0 0.0
      %3393 = vmatpush1.msra.mxu0 0.0
      %3394 = vmatprep.subr.mxu0 0.0
      %3395 = vmatpush1.msra.mxu0 0.0
      %3396 = vmatprep.subr.mxu0 0.0
      %3397 = vmatpush1.msra.mxu0 0.0
      %3398 = vmatprep.subr.mxu0 0.0
      %3399 = vmatpush1.msra.mxu0 0.0
      %3400 = vmatprep.subr.mxu0 0.0
      %3401 = vmatpush1.msra.mxu0 0.0
      %3402 = vmatprep.subr.mxu0 0.0
      %3403 = vmatpush1.msra.mxu0 0.0
      %3404 = vmatprep.subr.mxu0 0.0
      %3405 = vmatpush1.msra.mxu0 0.0
      %3406 = vmatprep.subr.mxu0 0.0
      %3407 = vmatpush1.msra.mxu0 0.0
      %3408 = vmatprep.subr.mxu0 0.0
      %3409 = vmatpush1.msra.mxu0 0.0
      %3410 = vmatprep.subr.mxu0 0.0
      %3411 = vmatpush1.msra.mxu0 0.0
      %3412 = vmatprep.subr.mxu0 0.0
      %3413 = vmatpush1.msra.mxu0 0.0
      %3414 = vmatprep.subr.mxu0 0.0
      %3415 = vmatpush1.msra.mxu0 0.0
      %3416 = vmatprep.subr.mxu0 0.0
      %3417 = vmatpush1.msra.mxu0 0.0
      %3418 = vmatprep.subr.mxu0 0.0
      %3419 = vmatpush1.msra.mxu0 0.0
      %3420 = vmatprep.subr.mxu0 0.0
      %3421 = vmatpush1.msra.mxu0 0.0
      %3422 = vmatprep.subr.mxu0 0.0
      %3423 = vmatpush1.msra.mxu0 0.0
      %3424 = vmatprep.subr.mxu0 0.0
      %3425 = vmatpush1.msra.mxu0 0.0
      %3426 = vmatprep.subr.mxu0 0.0
      %3427 = vmatpush1.msra.mxu0 0.0
      %3428 = vmatprep.subr.mxu0 0.0
      %3429 = vmatpush1.msra.mxu0 0.0
      %3430 = vmatprep.subr.mxu0 0.0
      %3431 = vmatpush1.msra.mxu0 0.0
      %3432 = vmatprep.subr.mxu0 0.0
      %3433 = vmatpush1.msra.mxu0 0.0
      %3434 = vmatprep.subr.mxu0 0.0
      %3435 = vmatpush1.msra.mxu0 0.0
      %3436 = vmatprep.subr.mxu0 0.0
      %3437 = vmatpush1.msra.mxu0 0.0
      %3438 = vmatprep.mubr.f32.mxu0 0.0
      %3439 = vmatmul.mubr.f32.gmra.mrb[0].mxu0 %v3276
      %v3440 = vpop.f32.mrb[0].mxu0
      %v3441 = vadd.f32 0.0, %v3440
      %v3442 = vpop.f32.mrb[0].mxu0
      %3443 = vmatprep.mubr.f32.mxu0 0.0
      %3444 = vmatmul.mubr.f32.gmra.mrb[0].mxu0 %v3279
      %v3445 = vpop.f32.mrb[0].mxu0
      %v3446 = vadd.f32 0.0, %v3445
      %v3447 = vpop.f32.mrb[0].mxu0
      %3448 = vmatprep.mubr.f32.mxu0 0.0
      %3449 = vmatmul.mubr.f32.gmra.mrb[0].mxu0 %v3282
      %v3450 = vpop.f32.mrb[0].mxu0
      %v3451 = vadd.f32 0.0, %v3450
      %v3452 = vpop.f32.mrb[0].mxu0
      %3453 = vmatprep.mubr.f32.mxu0 0.0
      %3454 = vmatmul.mubr.f32.gmra.mrb[0].mxu0 %v3285
      %v3455 = vpop.f32.mrb[0].mxu0
      %v3456 = vadd.f32 0.0, %v3455
      %v3457 = vpop.f32.mrb[0].mxu0
      %3458 = vmatprep.mubr.f32.mxu0 0.0
      %3459 = vmatmul.mubr.f32.gmra.mrb[0].mxu0 %v3288
      %v3460 = vpop.f32.mrb[0].mxu0
      %v3461 = vadd.f32 0.0, %v3460
      %v3462 = vpop.f32.mrb[0].mxu0
      %3463 = vmatprep.mubr.f32.mxu0 0.0
      %3464 = vmatmul.mubr.f32.gmra.mrb[0].mxu0 %v3291
      %v3465 = vpop.f32.mrb[0].mxu0
      %v3466 = vadd.f32 0.0, %v3465
      %v3467 = vpop.f32.mrb[0].mxu0
      %3468 = vmatprep.mubr.f32.mxu0 0.0
      %3469 = vmatmul.mubr.f32.gmra.mrb[0].mxu0 %v3294
      %v3470 = vpop.f32.mrb[0].mxu0
      %v3471 = vadd.f32 0.0, %v3470
      %v3472 = vpop.f32.mrb[0].mxu0
      %3473 = vmatprep.mubr.f32.mxu0 0.0
      %3474 = vmatmul.mubr.f32.gmra.mrb[0].mxu0 %v3297
      %v3475 = vpop.f32.mrb[0].mxu0
      %v3476 = vadd.f32 0.0, %v3475
      %v3477 = vpop.f32.mrb[0].mxu0
      %3478 = vmatprep.mubr.f32.mxu0 0.0
      %3479 = vmatmul.mubr.f32.gmra.mrb[0].mxu0 %v3300
      %v3480 = vpop.f32.mrb[0].mxu0
      %v3481 = vadd.f32 0.0, %v3480
      %v3482 = vpop.f32.mrb[0].mxu0
      %3483 = vmatprep.mubr.f32.mxu0 0.0
      %3484 = vmatmul.mubr.f32.gmra.mrb[0].mxu0 %v3303
      %v3485 = vpop.f32.mrb[0].mxu0
      %v3486 = vadd.f32 0.0, %v3485
      %v3487 = vpop.f32.mrb[0].mxu0
      %3488 = vmatprep.mubr.f32.mxu0 0.0
      %3489 = vmatmul.mubr.f32.gmra.mrb[0].mxu0 %v3306
      %v3490 = vpop.f32.mrb[0].mxu0
      %v3491 = vadd.f32 0.0, %v3490
      %v3492 = vpop.f32.mrb[0].mxu0
      %3493 = vmatprep.mubr.f32.mxu0 0.0
      %3494 = vmatmul.mubr.f32.gmra.mrb[0].mxu0 %v3309
      %v3495 = vpop.f32.mrb[0].mxu0
      %v3496 = vadd.f32 0.0, %v3495
      %v3497 = vpop.f32.mrb[0].mxu0
      %3498 = vmatprep.mubr.f32.mxu0 0.0
      %3499 = vmatmul.mubr.f32.gmra.mrb[0].mxu0 %v3312
      %v3500 = vpop.f32.mrb[0].mxu0
      %v3501 = vadd.f32 0.0, %v3500
      %v3502 = vpop.f32.mrb[0].mxu0
      %3503 = vmatprep.mubr.f32.mxu0 0.0
      %3504 = vmatmul.mubr.f32.gmra.mrb[0].mxu0 %v3315
      %v3505 = vpop.f32.mrb[0].mxu0
      %v3506 = vadd.f32 0.0, %v3505
      %v3507 = vpop.f32.mrb[0].mxu0
      %3508 = vmatprep.mubr.f32.mxu0 0.0
      %3509 = vmatmul.mubr.f32.gmra.mrb[0].mxu0 %v3318
      %v3510 = vpop.f32.mrb[0].mxu0
      %v3511 = vadd.f32 0.0, %v3510
      %v3512 = vpop.f32.mrb[0].mxu0
      %3513 = vmatprep.mubr.f32.mxu0 0.0
      %3514 = vmatmul.mubr.f32.gmra.mrb[0].mxu0 %v3321
      %v3515 = vpop.f32.mrb[0].mxu0
      %v3516 = vadd.f32 0.0, %v3515
      %v3517 = vpop.f32.mrb[0].mxu0
      %3518 = vmatprep.mubr.f32.mxu0 0.0
      %3519 = vmatmul.mubr.f32.gmra.mrb[0].mxu0 %v3324
      %v3520 = vpop.f32.mrb[0].mxu0
      %v3521 = vadd.f32 0.0, %v3520
      %v3522 = vpop.f32.mrb[0].mxu0
      %3523 = vmatprep.mubr.f32.mxu0 0.0
      %3524 = vmatmul.mubr.f32.gmra.mrb[0].mxu0 %v3327
      %v3525 = vpop.f32.mrb[0].mxu0
      %v3526 = vadd.f32 0.0, %v3525
      %v3527 = vpop.f32.mrb[0].mxu0
      %3528 = vmatprep.mubr.f32.mxu0 0.0
      %3529 = vmatmul.mubr.f32.gmra.mrb[0].mxu0 %v3330
      %v3530 = vpop.f32.mrb[0].mxu0
      %v3531 = vadd.f32 0.0, %v3530
      %v3532 = vpop.f32.mrb[0].mxu0
      %3533 = vmatprep.mubr.f32.mxu0 0.0
      %3534 = vmatmul.mubr.f32.gmra.mrb[0].mxu0 %v3333
      %v3535 = vpop.f32.mrb[0].mxu0
      %v3536 = vadd.f32 0.0, %v3535
      %v3537 = vpop.f32.mrb[0].mxu0
      %3538 = vmatprep.mubr.f32.mxu0 0.0
      %3539 = vmatmul.mubr.f32.gmra.mrb[0].mxu0 %v3336
      %v3540 = vpop.f32.mrb[0].mxu0
      %v3541 = vadd.f32 0.0, %v3540
      %v3542 = vpop.f32.mrb[0].mxu0
      %3543 = vmatprep.mubr.f32.mxu0 0.0
      %3544 = vmatmul.mubr.f32.gmra.mrb[0].mxu0 %v3339
      %v3545 = vpop.f32.mrb[0].mxu0
      %v3546 = vadd.f32 0.0, %v3545
      %v3547 = vpop.f32.mrb[0].mxu0
      %3548 = vmatprep.mubr.f32.mxu0 0.0
      %3549 = vmatmul.mubr.f32.gmra.mrb[0].mxu0 %v3342
      %v3550 = vpop.f32.mrb[0].mxu0
      %v3551 = vadd.f32 0.0, %v3550
      %v3552 = vpop.f32.mrb[0].mxu0
      %3553 = vmatprep.mubr.f32.mxu0 0.0
      %3554 = vmatmul.mubr.f32.gmra.mrb[0].mxu0 %v3345
      %v3555 = vpop.f32.mrb[0].mxu0
      %v3556 = vadd.f32 0.0, %v3555
      %v3557 = vpop.f32.mrb[0].mxu0
      %3558 = vmatprep.mubr.f32.mxu0 0.0
      %3559 = vmatmul.mubr.f32.gmra.mrb[0].mxu0 %v3348
      %v3560 = vpop.f32.mrb[0].mxu0
      %v3561 = vadd.f32 0.0, %v3560
      %v3562 = vpop.f32.mrb[0].mxu0
      %3563 = vmatprep.mubr.f32.mxu0 0.0
      %3564 = vmatmul.mubr.f32.gmra.mrb[0].mxu0 %v3351
      %v3565 = vpop.f32.mrb[0].mxu0
      %v3566 = vadd.f32 0.0, %v3565
      %v3567 = vpop.f32.mrb[0].mxu0
      %3568 = vmatprep.mubr.f32.mxu0 0.0
      %3569 = vmatmul.mubr.f32.gmra.mrb[0].mxu0 %v3354
      %v3570 = vpop.f32.mrb[0].mxu0
      %v3571 = vadd.f32 0.0, %v3570
      %v3572 = vpop.f32.mrb[0].mxu0
      %3573 = vmatprep.mubr.f32.mxu0 0.0
      %3574 = vmatmul.mubr.f32.gmra.mrb[0].mxu0 %v3357
      %v3575 = vpop.f32.mrb[0].mxu0
      %v3576 = vadd.f32 0.0, %v3575
      %v3577 = vpop.f32.mrb[0].mxu0
      %3578 = vmatprep.mubr.f32.mxu0 0.0
      %3579 = vmatmul.mubr.f32.gmra.mrb[0].mxu0 %v3360
      %v3580 = vpop.f32.mrb[0].mxu0
      %v3581 = vadd.f32 0.0, %v3580
      %v3582 = vpop.f32.mrb[0].mxu0
      %3583 = vmatprep.mubr.f32.mxu0 0.0
      %3584 = vmatmul.mubr.f32.gmra.mrb[0].mxu0 %v3363
      %v3585 = vpop.f32.mrb[0].mxu0
      %v3586 = vadd.f32 0.0, %v3585
      %v3587 = vpop.f32.mrb[0].mxu0
      %3588 = vmatprep.mubr.f32.mxu0 0.0
      %3589 = vmatmul.mubr.f32.gmra.mrb[0].mxu0 %v3366
      %v3590 = vpop.f32.mrb[0].mxu0
      %v3591 = vadd.f32 0.0, %v3590
      %v3592 = vpop.f32.mrb[0].mxu0
      %3593 = vmatprep.mubr.f32.mxu0 0.0
      %3594 = vmatmul.mubr.f32.gmra.mrb[0].mxu0 %v3369
      %v3595 = vpop.f32.mrb[0].mxu0
      %v3596 = vadd.f32 0.0, %v3595
      %v3597 = vpop.f32.mrb[0].mxu0
      %3598 = vdwg.mxu0
      %v3599 = vadd.f32 %v3209, %v3441
      %v3600 = vadd.f32 %v3210, %v3446
      %v3601 = vadd.f32 %v3211, %v3451
      %v3602 = vadd.f32 %v3212, %v3456
      %v3603 = vadd.f32 %v3213, %v3461
      %v3604 = vadd.f32 %v3214, %v3466
      %v3605 = vadd.f32 %v3215, %v3471
      %v3606 = vadd.f32 %v3216, %v3476
      %v3607 = vadd.f32 %v3217, %v3481
      %v3608 = vadd.f32 %v3218, %v3486
      %v3609 = vadd.f32 %v3219, %v3491
      %v3610 = vadd.f32 %v3220, %v3496
      %v3611 = vadd.f32 %v3221, %v3501
      %v3612 = vadd.f32 %v3222, %v3506
      %v3613 = vadd.f32 %v3223, %v3511
      %v3614 = vadd.f32 %v3224, %v3516
      %v3615 = vadd.f32 %v3225, %v3521
      %v3616 = vadd.f32 %v3226, %v3526
      %v3617 = vadd.f32 %v3227, %v3531
      %v3618 = vadd.f32 %v3228, %v3536
      %v3619 = vadd.f32 %v3229, %v3541
      %v3620 = vadd.f32 %v3230, %v3546
      %v3621 = vadd.f32 %v3231, %v3551
      %v3622 = vadd.f32 %v3232, %v3556
      %v3623 = vadd.f32 %v3233, %v3561
      %v3624 = vadd.f32 %v3234, %v3566
      %v3625 = vadd.f32 %v3235, %v3571
      %v3626 = vadd.f32 %v3236, %v3576
      %v3627 = vadd.f32 %v3237, %v3581
      %v3628 = vadd.f32 %v3238, %v3586
      %v3629 = vadd.f32 %v3239, %v3591
      %v3630 = vadd.f32 %v3240, %v3596
      %3631 = vst [vmem:[%s177] sm:$0xff] %v3599
      %3632 = vst [vmem:[%s177 + $0x8] sm:$0xff] %v3600
      %3633 = vst [vmem:[%s177 + $0x10] sm:$0xff] %v3601
      %3634 = vst [vmem:[%s177 + $0x18] sm:$0xff] %v3602
      %3635 = vst [vmem:[%s177 + $0x20] sm:$0xff] %v3603
      %3636 = vst [vmem:[%s177 + $0x28] sm:$0xff] %v3604
      %3637 = vst [vmem:[%s177 + $0x30] sm:$0xff] %v3605
      %3638 = vst [vmem:[%s177 + $0x38] sm:$0xff] %v3606
      %3639 = vst [vmem:[%s177 + $0x40] sm:$0xff] %v3607
      %3640 = vst [vmem:[%s177 + $0x48] sm:$0xff] %v3608
      %3641 = vst [vmem:[%s177 + $0x50] sm:$0xff] %v3609
      %3642 = vst [vmem:[%s177 + $0x58] sm:$0xff] %v3610
      %3643 = vst [vmem:[%s177 + $0x60] sm:$0xff] %v3611
      %3644 = vst [vmem:[%s177 + $0x68] sm:$0xff] %v3612
      %3645 = vst [vmem:[%s177 + $0x70] sm:$0xff] %v3613
      %3646 = vst [vmem:[%s177 + $0x78] sm:$0xff] %v3614
      %3647 = vst [vmem:[%s177 + $0x80] sm:$0xff] %v3615
      %3648 = vst [vmem:[%s177 + $0x88] sm:$0xff] %v3616
      %3649 = vst [vmem:[%s177 + $0x90] sm:$0xff] %v3617
      %3650 = vst [vmem:[%s177 + $0x98] sm:$0xff] %v3618
      %3651 = vst [vmem:[%s177 + $0xa0] sm:$0xff] %v3619
      %3652 = vst [vmem:[%s177 + $0xa8] sm:$0xff] %v3620
      %3653 = vst [vmem:[%s177 + $0xb0] sm:$0xff] %v3621
      %3654 = vst [vmem:[%s177 + $0xb8] sm:$0xff] %v3622
      %3655 = vst [vmem:[%s177 + $0xc0] sm:$0xff] %v3623
      %3656 = vst [vmem:[%s177 + $0xc8] sm:$0xff] %v3624
      %3657 = vst [vmem:[%s177 + $0xd0] sm:$0xff] %v3625
      %3658 = vst [vmem:[%s177 + $0xd8] sm:$0xff] %v3626
      %3659 = vst [vmem:[%s177 + $0xe0] sm:$0xff] %v3627
      %3660 = vst [vmem:[%s177 + $0xe8] sm:$0xff] %v3628
      %3661 = vst [vmem:[%s177 + $0xf0] sm:$0xff] %v3629
      %3662 = vst [vmem:[%s177 + $0xf8] sm:$0xff] %v3630
      %v3663 = vadd.f32 %v3599, %v3600
      %v3664 = vadd.f32 %v3663, %v3601
      %v3665 = vadd.f32 %v3664, %v3602
      %v3666 = vadd.f32 %v3665, %v3603
      %v3667 = vadd.f32 %v3666, %v3604
      %v3668 = vadd.f32 %v3667, %v3605
      %v3669 = vadd.f32 %v3668, %v3606
      %v3670 = vadd.f32 %v3669, %v3607
      %v3671 = vadd.f32 %v3670, %v3608
      %v3672 = vadd.f32 %v3671, %v3609
      %v3673 = vadd.f32 %v3672, %v3610
      %v3674 = vadd.f32 %v3673, %v3611
      %v3675 = vadd.f32 %v3674, %v3612
      %v3676 = vadd.f32 %v3675, %v3613
      %v3677 = vadd.f32 %v3676, %v3614
      %v3678 = vadd.f32 %v3677, %v3615
      %v3679 = vadd.f32 %v3678, %v3616
      %v3680 = vadd.f32 %v3679, %v3617
      %v3681 = vadd.f32 %v3680, %v3618
      %v3682 = vadd.f32 %v3681, %v3619
      %v3683 = vadd.f32 %v3682, %v3620
      %v3684 = vadd.f32 %v3683, %v3621
      %v3685 = vadd.f32 %v3684, %v3622
      %v3686 = vadd.f32 %v3685, %v3623
      %v3687 = vadd.f32 %v3686, %v3624
      %v3688 = vadd.f32 %v3687, %v3625
      %v3689 = vadd.f32 %v3688, %v3626
      %v3690 = vadd.f32 %v3689, %v3627
      %v3691 = vadd.f32 %v3690, %v3628
      %v3692 = vadd.f32 %v3691, %v3629
      %v3693 = vadd.f32 %v3692, %v3630
      %v3694 = vrot.slane %v3693, 4
      %v3695 = vadd.f32 %v3693, %v3694
      %v3696 = vrot.slane %v3695, 2
      %v3697 = vadd.f32 %v3695, %v3696
      %v3698 = vrot.slane %v3697, 1
      %v3699 = vadd.f32 %v3697, %v3698
      %v3700 = vmul.f32 %v3599, %v3599
      %v3701 = vmul.f32 %v3600, %v3600
      %v3702 = vmul.f32 %v3601, %v3601
      %v3703 = vmul.f32 %v3602, %v3602
      %v3704 = vmul.f32 %v3603, %v3603
      %v3705 = vmul.f32 %v3604, %v3604
      %v3706 = vmul.f32 %v3605, %v3605
      %v3707 = vmul.f32 %v3606, %v3606
      %v3708 = vmul.f32 %v3607, %v3607
      %v3709 = vmul.f32 %v3608, %v3608
      %v3710 = vmul.f32 %v3609, %v3609
      %v3711 = vmul.f32 %v3610, %v3610
      %v3712 = vmul.f32 %v3611, %v3611
      %v3713 = vmul.f32 %v3612, %v3612
      %v3714 = vmul.f32 %v3613, %v3613
      %v3715 = vmul.f32 %v3614, %v3614
      %v3716 = vmul.f32 %v3615, %v3615
      %v3717 = vmul.f32 %v3616, %v3616
      %v3718 = vmul.f32 %v3617, %v3617
      %v3719 = vmul.f32 %v3618, %v3618
      %v3720 = vmul.f32 %v3619, %v3619
      %v3721 = vmul.f32 %v3620, %v3620
      %v3722 = vmul.f32 %v3621, %v3621
      %v3723 = vmul.f32 %v3622, %v3622
      %v3724 = vmul.f32 %v3623, %v3623
      %v3725 = vmul.f32 %v3624, %v3624
      %v3726 = vmul.f32 %v3625, %v3625
      %v3727 = vmul.f32 %v3626, %v3626
      %v3728 = vmul.f32 %v3627, %v3627
      %v3729 = vmul.f32 %v3628, %v3628
      %v3730 = vmul.f32 %v3629, %v3629
      %v3731 = vmul.f32 %v3630, %v3630
      %v3732 = vadd.f32 %v3700, %v3701
      %v3733 = vadd.f32 %v3732, %v3702
      %v3734 = vadd.f32 %v3733, %v3703
      %v3735 = vadd.f32 %v3734, %v3704
      %v3736 = vadd.f32 %v3735, %v3705
      %v3737 = vadd.f32 %v3736, %v3706
      %v3738 = vadd.f32 %v3737, %v3707
      %v3739 = vadd.f32 %v3738, %v3708
      %v3740 = vadd.f32 %v3739, %v3709
      %v3741 = vadd.f32 %v3740, %v3710
      %v3742 = vadd.f32 %v3741, %v3711
      %v3743 = vadd.f32 %v3742, %v3712
      %v3744 = vadd.f32 %v3743, %v3713
      %v3745 = vadd.f32 %v3744, %v3714
      %v3746 = vadd.f32 %v3745, %v3715
      %v3747 = vadd.f32 %v3746, %v3716
      %v3748 = vadd.f32 %v3747, %v3717
      %v3749 = vadd.f32 %v3748, %v3718
      %v3750 = vadd.f32 %v3749, %v3719
      %v3751 = vadd.f32 %v3750, %v3720
      %v3752 = vadd.f32 %v3751, %v3721
      %v3753 = vadd.f32 %v3752, %v3722
      %v3754 = vadd.f32 %v3753, %v3723
      %v3755 = vadd.f32 %v3754, %v3724
      %v3756 = vadd.f32 %v3755, %v3725
      %v3757 = vadd.f32 %v3756, %v3726
      %v3758 = vadd.f32 %v3757, %v3727
      %v3759 = vadd.f32 %v3758, %v3728
      %v3760 = vadd.f32 %v3759, %v3729
      %v3761 = vadd.f32 %v3760, %v3730
      %v3762 = vadd.f32 %v3761, %v3731
      %v3763 = vrot.slane %v3762, 4
      %v3764 = vadd.f32 %v3762, %v3763
      %v3765 = vrot.slane %v3764, 2
      %v3766 = vadd.f32 %v3764, %v3765
      %v3767 = vrot.slane %v3766, 1
      %v3768 = vadd.f32 %v3766, %v3767
      %vm3769 = vcmask 1040384
      %v3770 = vsel %vm3769, %v3699, %v3768
      %3771 = vst [vmem:[%s181] sm:$0x3] %v3770
      %p3772 = scmp.lt.s32.totalorder %s15, 1
      %s3773 = scalar_select %p3772, %s15, 1
      %s3774 = smul.addr %s3773, 32
      %s3775 = smul.addr %s3774, 8
      %s3776 = scalar_lea.vmem %s2, %s3775
      %p3777 = scmp.lt.s32.totalorder %s15, 1
      %s3778 = scalar_select %p3777, %s15, 1
      %s3779 = smul.addr %s3778, 2
      %s3780 = scalar_lea.vmem %s3, %s3779
      // Predicated region
      $region29: #{double_conv.4} parent=27 // pred_check
        %p3781 = pneg %p80
      $region30: #{double_conv.4} parent=27 // pred_check_branch
        %3783 = sbr.rel (%p3781) target = $region32
      $region31: #{double_conv.4} parent=27 // pred_region
        _
      $region32: #{double_conv.4} parent=27 // pred_fallthru
        _
      // Predicated region
      $region33: #{double_conv.4} parent=27 // pred_check
        %p3784 = pneg %p106
      $region34: #{double_conv.4} parent=27 // pred_check_branch
        %3786 = sbr.rel (%p3784) target = $region36
      $region35: #{double_conv.4} parent=27 // pred_region
        _
      $region36: #{double_conv.4} parent=27 // pred_fallthru
        _
    $region28: #{double_conv.4} parent=5 // pred_fallthru
      _
    %p3787 = scmp.le.s32.totalorder 2, %s10
    // Predicated region
    $region37: #{double_conv.4} parent=5 // pred_check
      %p3788 = pneg %p3787
    $region38: #{double_conv.4} parent=5 // pred_check_branch
      %3790 = sbr.rel (%p3788) target = $region40
    $region39: #{double_conv.4} parent=5 // pred_region
      %s3791 = ssub.s32 %s10, 2
      // Predicated region
      $region41: #{double_conv.4} parent=39 // pred_check
        %p3792 = pneg %p86
      $region42: #{double_conv.4} parent=39 // pred_check_branch
        %3794 = sbr.rel (%p3792) target = $region44
      $region43: #{double_conv.4} parent=39 // pred_region
        %p3795 = scmp.lt.s32.totalorder %s16, 1
        %s3796 = scalar_select %p3795, %s16, 1
        %s3797 = smul.addr %s3796, 32
        %s3798 = smul.addr %s3797, 8
        %s3799 = scalar_lea.vmem %s2, %s3798
      $region44: #{double_conv.4} parent=39 // pred_fallthru
        _
      // Predicated region
      $region45: #{double_conv.4} parent=39 // pred_check
        %p3800 = pneg %p112
      $region46: #{double_conv.4} parent=39 // pred_check_branch
        %3802 = sbr.rel (%p3800) target = $region48
      $region47: #{double_conv.4} parent=39 // pred_region
        %p3803 = scmp.lt.s32.totalorder %s16, 1
        %s3804 = scalar_select %p3803, %s16, 1
        %s3805 = smul.addr %s3804, 2
        %s3806 = scalar_lea.vmem %s3, %s3805
      $region48: #{double_conv.4} parent=39 // pred_fallthru
        _
    $region40: #{double_conv.4} parent=5 // pred_fallthru
      _
  $region6: #{double_conv.4} parent=0 // loop_footer
    %s14 = sadd.s32 1, %s10
  $region7: #{double_conv.4} parent=0 // loop_footer_branch
    %9 = sbr.rel target = $region3
  $region8: #{double_conv.4} parent=0 // loop_exit
    _

// kernel: double_conv.6
$region0: #{double_conv.6}
  #allocation0 [shape = 'u32[]', space=smem, size = 0x4, offset = 0x4, fixed_abs, tag = 'smem constant byte address 0x4 - core index']
  #allocation1 [shape = 'u32[144,128]{1,0:T(1,128)}', space=vmem, size = 0x12000, scoped, tag = 'internal scratch']
  %s0 = inlined_call_operand.vmem [shape: f32[2,18,18,128], index: 0, kind: input, shape index: {}]
  %s1 = inlined_call_operand.vmem [shape: f32[3,3,128,128], index: 1, kind: input, shape index: {}]
  %s2 = inlined_call_operand.vmem [shape: f32[2,256,128], index: 2, kind: output, shape index: {0}]
  %s3 = inlined_call_operand.vmem [shape: f32[2,2,128], index: 3, kind: output, shape index: {1}]
  %4 = xla_tuple %s2, %s3
  %s5 = sld [smem:[#allocation0]]
  $region49: #{double_conv.6} parent=0
    _
  %s7 = ssub.s32 1, %s5
  %s8 = scalar_select 0, %s7, %s5
  loop: start=0, step=1, limit=4
  $region2: #{double_conv.6} parent=0 // loop_pre_header
    _
  $region3: #{double_conv.6} parent=0 // loop_header
    %s10 = sphi 0, %s14
    %p11 = scmp.ge.s32.totalorder %s10, 4
    %s20 = sphi 0, %s22
    %s23 = sphi 0, %s20
    %s24 = sphi 0, %s23
    %s40 = sphi 0, %s24
    %s44 = sphi 0, %s44
    %s46 = sphi 0, %s44
    %s47 = sphi 0, %s46
    %s61 = sphi 0, %s47
    %s67 = sphi 0, %s69
    %s70 = sphi 0, %s67
    %s71 = sphi 0, %s70
    %s87 = sphi 0, %s71
    %s93 = sphi 0, %s95
    %s96 = sphi 0, %s93
    %s97 = sphi 0, %s96
    %s113 = sphi 0, %s97
  $region4: #{double_conv.6} parent=0 // loop_header_branch
    %13 = sbr.rel (%p11) target = $region8
  $region5: #{double_conv.6} parent=0 // loop_body
    %s15 = ssub.s32 %s10, 1
    %s16 = ssub.s32 %s10, 2
    %s17 = sadd.s32 %s10, 1
    %s18 = ssub.s32 %s10, %s17
    %p19 = scmp.eq.s32.totalorder %s18, 0
    %s21 = sadd.s32 %s20, 1
    %s22 = scalar_select %p19, %s20, %s21
    %p25 = pneg %p19
    %p26 = scmp.eq.s32.totalorder %s10, 1
    %p27 = por %p25, %p26
    %p28 = scmp.ne.s32.totalorder %s20, %s23
    %p29 = scmp.eq.s32.totalorder %s10, 0
    %p30 = por %p28, %p29
    %p31 = scmp.ne.s32.totalorder %s20, %s23
    %p32 = scmp.eq.s32.totalorder %s15, 1
    %p33 = por %p31, %p32
    %p34 = scmp.ne.s32.totalorder %s23, %s24
    %p35 = scmp.eq.s32.totalorder %s15, 0
    %p36 = por %p34, %p35
    %p37 = scmp.ne.s32.totalorder %s23, %s24
    %p38 = scmp.eq.s32.totalorder %s16, 1
    %p39 = por %p37, %p38
    %p41 = scmp.ne.s32.totalorder %s24, %s40
    %p42 = scmp.eq.s32.totalorder %s16, 0
    %p43 = por %p41, %p42
    %s45 = sadd.s32 %s44, 1
    %p48 = scmp.eq.s32.totalorder %s10, 1
    %p49 = scmp.ne.s32.totalorder %s44, %s46
    %p50 = scmp.eq.s32.totalorder %s10, 0
    %p51 = por %p49, %p50
    %p52 = scmp.ne.s32.totalorder %s44, %s46
    %p53 = scmp.eq.s32.totalorder %s15, 1
    %p54 = por %p52, %p53
    %p55 = scmp.ne.s32.totalorder %s46, %s47
    %p56 = scmp.eq.s32.totalorder %s15, 0
    %p57 = por %p55, %p56
    %p58 = scmp.ne.s32.totalorder %s46, %s47
    %p59 = scmp.eq.s32.totalorder %s16, 1
    %p60 = por %p58, %p59
    %p62 = scmp.ne.s32.totalorder %s47, %s61
    %p63 = scmp.eq.s32.totalorder %s16, 0
    %p64 = por %p62, %p63
    %s65 = ssub.s32 %s10, %s17
    %p66 = scmp.eq.s32.totalorder %s65, 0
    %s68 = sadd.s32 %s67, 1
    %s69 = scalar_select %p66, %s67, %s68
    %p72 = pneg %p66
    %p73 = scmp.eq.s32.totalorder %s10, 1
    %p74 = por %p72, %p73
    %p75 = scmp.ne.s32.totalorder %s67, %s70
    %p76 = scmp.eq.s32.totalorder %s10, 0
    %p77 = por %p75, %p76
    %p78 = scmp.ne.s32.totalorder %s67, %s70
    %p79 = scmp.eq.s32.totalorder %s15, 1
    %p80 = por %p78, %p79
    %p81 = scmp.ne.s32.totalorder %s70, %s71
    %p82 = scmp.eq.s32.totalorder %s15, 0
    %p83 = por %p81, %p82
    %p84 = scmp.ne.s32.totalorder %s70, %s71
    %p85 = scmp.eq.s32.totalorder %s16, 1
    %p86 = por %p84, %p85
    %p88 = scmp.ne.s32.totalorder %s71, %s87
    %p89 = scmp.eq.s32.totalorder %s16, 0
    %p90 = por %p88, %p89
    %s91 = ssub.s32 %s10, %s17
    %p92 = scmp.eq.s32.totalorder %s91, 0
    %s94 = sadd.s32 %s93, 1
    %s95 = scalar_select %p92, %s93, %s94
    %p98 = pneg %p92
    %p99 = scmp.eq.s32.totalorder %s10, 1
    %p100 = por %p98, %p99
    %p101 = scmp.ne.s32.totalorder %s93, %s96
    %p102 = scmp.eq.s32.totalorder %s10, 0
    %p103 = por %p101, %p102
    %p104 = scmp.ne.s32.totalorder %s93, %s96
    %p105 = scmp.eq.s32.totalorder %s15, 1
    %p106 = por %p104, %p105
    %p107 = scmp.ne.s32.totalorder %s96, %s97
    %p108 = scmp.eq.s32.totalorder %s15, 0
    %p109 = por %p107, %p108
    %p110 = scmp.ne.s32.totalorder %s96, %s97
    %p111 = scmp.eq.s32.totalorder %s16, 1
    %p112 = por %p110, %p111
    %p114 = scmp.ne.s32.totalorder %s97, %s113
    %p115 = scmp.eq.s32.totalorder %s16, 0
    %p116 = por %p114, %p115
    %p117 = scmp.le.s32.totalorder 1, %s10
    %p118 = scmp.lt.s32.totalorder %s10, 3
    %p119 = pnand %p117, %p118
    %p120 = pneg %p119
    // Predicated region
    $region9: #{double_conv.6} parent=5 // pred_check
      _
    $region10: #{double_conv.6} parent=5 // pred_check_branch
      %122 = sbr.rel (%p119) target = $region12
    $region11: #{double_conv.6} parent=5 // pred_region
      %s123 = ssub.s32 %s10, 1
      // Predicated region
      $region13: #{double_conv.6} parent=11 // pred_check
        %p124 = pneg %p57
      $region14: #{double_conv.6} parent=11 // pred_check_branch
        %126 = sbr.rel (%p124) target = $region16
      $region15: #{double_conv.6} parent=11 // pred_region
        _
      $region16: #{double_conv.6} parent=11 // pred_fallthru
        _
    $region12: #{double_conv.6} parent=5 // pred_fallthru
      _
    %p127 = scmp.lt.s32.totalorder %s10, 2
    // Predicated region
    $region17: #{double_conv.6} parent=5 // pred_check
      %p128 = pneg %p127
    $region18: #{double_conv.6} parent=5 // pred_check_branch
      %130 = sbr.rel (%p128) target = $region20
    $region19: #{double_conv.6} parent=5 // pred_region
      // Predicated region
      $region21: #{double_conv.6} parent=19 // pred_check
        %p131 = pneg %p30
      $region22: #{double_conv.6} parent=19 // pred_check_branch
        %133 = sbr.rel (%p131) target = $region24
      $region23: #{double_conv.6} parent=19 // pred_region
        %p134 = scmp.lt.s32.totalorder %s10, 1
        %s135 = scalar_select %p134, %s10, 1
        %s136 = smul.addr %s135, 54
        %s137 = smul.addr %s136, 8
        %s138 = scalar_lea.vmem %s0, %s137
      $region24: #{double_conv.6} parent=19 // pred_fallthru
        _
    $region20: #{double_conv.6} parent=5 // pred_fallthru
      _
    %p139 = scmp.le.s32.totalorder 1, %s10
    %p140 = scmp.lt.s32.totalorder %s10, 3
    %p141 = pnand %p139, %p140
    %p142 = pneg %p141
    // Predicated region
    $region25: #{double_conv.6} parent=5 // pred_check
      _
    $region26: #{double_conv.6} parent=5 // pred_check_branch
      %144 = sbr.rel (%p141) target = $region28
    $region27: #{double_conv.6} parent=5 // pred_region
      %s145 = ssub.s32 %s10, 1
      %p146 = scmp.lt.s32.totalorder %s15, 1
      %s147 = scalar_select %p146, %s15, 1
      %s148 = smul.addr %s147, 54
      %s149 = smul.addr %s148, 8
      %s150 = scalar_lea.vmem %s0, %s149
      %p151 = pneg %p36
      %p152 = pneg %p33
      %p153 = pneg %p57
      %p154 = pneg %p54
      %p155 = pneg %p83
      %p156 = pneg %p80
      %p157 = scmp.lt.s32.totalorder %s15, 1
      %s158 = scalar_select %p157, %s15, 1
      %s159 = smul.addr %s158, 32
      %s160 = smul.addr %s159, 8
      %s161 = scalar_lea.vmem %s2, %s160
      %p162 = pneg %p109
      %p163 = pneg %p106
      %p164 = scmp.lt.s32.totalorder %s15, 1
      %s165 = scalar_select %p164, %s15, 1
      %s166 = smul.addr %s165, 2
      %s167 = scalar_lea.vmem %s3, %s166
      %p168 = scmp.lt.s32.totalorder %s15, 1
      %s169 = scalar_select %p168, %s15, 1
      %s170 = smul.addr %s169, 54
      %s171 = smul.addr %s170, 8
      %s172 = scalar_lea.vmem %s0, %s171
      %p173 = scmp.lt.s32.totalorder %s15, 1
      %s174 = scalar_select %p173, %s15, 1
      %s175 = smul.addr %s174, 32
      %s176 = smul.addr %s175, 8
      %s177 = scalar_lea.vmem %s2, %s176
      %p178 = scmp.lt.s32.totalorder %s15, 1
      %s179 = scalar_select %p178, %s15, 1
      %s180 = smul.addr %s179, 2
      %s181 = scalar_lea.vmem %s3, %s180
      %v182 = vld [vmem:[%s172] sm:$0xff]
      %v183 = vld [vmem:[%s172 + $0x8] sm:$0xff]
      %v184 = vld [vmem:[%s172 + $0x18] sm:$0xff]
      %v185 = vld [vmem:[%s172 + $0x20] sm:$0xff]
      %v186 = vld [vmem:[%s172 + $0x30] sm:$0xff]
      %v187 = vld [vmem:[%s172 + $0x38] sm:$0xff]
      %v188 = vld [vmem:[%s172 + $0x48] sm:$0xff]
      %v189 = vld [vmem:[%s172 + $0x50] sm:$0xff]
      %v190 = vld [vmem:[%s172 + $0x60] sm:$0xff]
      %v191 = vld [vmem:[%s172 + $0x68] sm:$0xff]
      %v192 = vld [vmem:[%s172 + $0x78] sm:$0xff]
      %v193 = vld [vmem:[%s172 + $0x80] sm:$0xff]
      %v194 = vld [vmem:[%s172 + $0x90] sm:$0xff]
      %v195 = vld [vmem:[%s172 + $0x98] sm:$0xff]
      %v196 = vld [vmem:[%s172 + $0xa8] sm:$0xff]
      %v197 = vld [vmem:[%s172 + $0xb0] sm:$0xff]
      %v198 = vld [vmem:[%s172 + $0xc0] sm:$0xff]
      %v199 = vld [vmem:[%s172 + $0xc8] sm:$0xff]
      %v200 = vld [vmem:[%s172 + $0xd8] sm:$0xff]
      %v201 = vld [vmem:[%s172 + $0xe0] sm:$0xff]
      %v202 = vld [vmem:[%s172 + $0xf0] sm:$0xff]
      %v203 = vld [vmem:[%s172 + $0xf8] sm:$0xff]
      %v204 = vld [vmem:[%s172 + $0x108] sm:$0xff]
      %v205 = vld [vmem:[%s172 + $0x110] sm:$0xff]
      %v206 = vld [vmem:[%s172 + $0x120] sm:$0xff]
      %v207 = vld [vmem:[%s172 + $0x128] sm:$0xff]
      %v208 = vld [vmem:[%s172 + $0x138] sm:$0xff]
      %v209 = vld [vmem:[%s172 + $0x140] sm:$0xff]
      %v210 = vld [vmem:[%s172 + $0x150] sm:$0xff]
      %v211 = vld [vmem:[%s172 + $0x158] sm:$0xff]
      %v212 = vld [vmem:[%s172 + $0x168] sm:$0xff]
      %v213 = vld [vmem:[%s172 + $0x170] sm:$0xff]
      %v214 = vld [vmem:[%s1] sm:$0xff]
      %v215 = vld [vmem:[%s1 + $0x8] sm:$0xff]
      %v216 = vld [vmem:[%s1 + $0x10] sm:$0xff]
      %v217 = vld [vmem:[%s1 + $0x18] sm:$0xff]
      %v218 = vld [vmem:[%s1 + $0x20] sm:$0xff]
      %v219 = vld [vmem:[%s1 + $0x28] sm:$0xff]
      %v220 = vld [vmem:[%s1 + $0x30] sm:$0xff]
      %v221 = vld [vmem:[%s1 + $0x38] sm:$0xff]
      %v222 = vld [vmem:[%s1 + $0x40] sm:$0xff]
      %v223 = vld [vmem:[%s1 + $0x48] sm:$0xff]
      %v224 = vld [vmem:[%s1 + $0x50] sm:$0xff]
      %v225 = vld [vmem:[%s1 + $0x58] sm:$0xff]
      %v226 = vld [vmem:[%s1 + $0x60] sm:$0xff]
      %v227 = vld [vmem:[%s1 + $0x68] sm:$0xff]
      %v228 = vld [vmem:[%s1 + $0x70] sm:$0xff]
      %v229 = vld [vmem:[%s1 + $0x78] sm:$0xff]
      %v230 = vld [vmem:[%s172 + $0x1] sm:$0xff]
      %v231 = vld [vmem:[%s172 + $0x9] sm:$0xff]
      %v232 = vld [vmem:[%s172 + $0x19] sm:$0xff]
      %v233 = vld [vmem:[%s172 + $0x21] sm:$0xff]
      %v234 = vld [vmem:[%s172 + $0x31] sm:$0xff]
      %v235 = vld [vmem:[%s172 + $0x39] sm:$0xff]
      %v236 = vld [vmem:[%s172 + $0x49] sm:$0xff]
      %v237 = vld [vmem:[%s172 + $0x51] sm:$0xff]
      %v238 = vld [vmem:[%s172 + $0x61] sm:$0xff]
      %v239 = vld [vmem:[%s172 + $0x69] sm:$0xff]
      %v240 = vld [vmem:[%s172 + $0x79] sm:$0xff]
      %v241 = vld [vmem:[%s172 + $0x81] sm:$0xff]
      %v242 = vld [vmem:[%s172 + $0x91] sm:$0xff]
      %v243 = vld [vmem:[%s172 + $0x99] sm:$0xff]
      %v244 = vld [vmem:[%s172 + $0xa9] sm:$0xff]
      %v245 = vld [vmem:[%s172 + $0xb1] sm:$0xff]
      %v246 = vld [vmem:[%s172 + $0xc1] sm:$0xff]
      %v247 = vld [vmem:[%s172 + $0xc9] sm:$0xff]
      %v248 = vld [vmem:[%s172 + $0xd9] sm:$0xff]
      %v249 = vld [vmem:[%s172 + $0xe1] sm:$0xff]
      %v250 = vld [vmem:[%s172 + $0xf1] sm:$0xff]
      %v251 = vld [vmem:[%s172 + $0xf9] sm:$0xff]
      %v252 = vld [vmem:[%s172 + $0x109] sm:$0xff]
      %v253 = vld [vmem:[%s172 + $0x111] sm:$0xff]
      %v254 = vld [vmem:[%s172 + $0x121] sm:$0xff]
      %v255 = vld [vmem:[%s172 + $0x129] sm:$0xff]
      %v256 = vld [vmem:[%s172 + $0x139] sm:$0xff]
      %v257 = vld [vmem:[%s172 + $0x141] sm:$0xff]
      %v258 = vld [vmem:[%s172 + $0x151] sm:$0xff]
      %v259 = vld [vmem:[%s172 + $0x159] sm:$0xff]
      %v260 = vld [vmem:[%s172 + $0x169] sm:$0xff]
      %v261 = vld [vmem:[%s172 + $0x171] sm:$0xff]
      %s262 = scalar_lea.vmem %s1, 128
      %v263 = vld [vmem:[%s262] sm:$0xff]
      %v264 = vld [vmem:[%s262 + $0x8] sm:$0xff]
      %v265 = vld [vmem:[%s262 + $0x10] sm:$0xff]
      %v266 = vld [vmem:[%s262 + $0x18] sm:$0xff]
      %v267 = vld [vmem:[%s262 + $0x20] sm:$0xff]
      %v268 = vld [vmem:[%s262 + $0x28] sm:$0xff]
      %v269 = vld [vmem:[%s262 + $0x30] sm:$0xff]
      %v270 = vld [vmem:[%s262 + $0x38] sm:$0xff]
      %v271 = vld [vmem:[%s262 + $0x40] sm:$0xff]
      %v272 = vld [vmem:[%s262 + $0x48] sm:$0xff]
      %v273 = vld [vmem:[%s262 + $0x50] sm:$0xff]
      %v274 = vld [vmem:[%s262 + $0x58] sm:$0xff]
      %v275 = vld [vmem:[%s262 + $0x60] sm:$0xff]
      %v276 = vld [vmem:[%s262 + $0x68] sm:$0xff]
      %v277 = vld [vmem:[%s262 + $0x70] sm:$0xff]
      %v278 = vld [vmem:[%s262 + $0x78] sm:$0xff]
      %279 = vmatprep.subr.mxu0 0.0
      %280 = vmatpush1.msra.mxu0 %v263
      %281 = vmatprep.subr.mxu0 0.0
      %282 = vmatpush1.msra.mxu0 %v264
      %283 = vmatprep.subr.mxu0 0.0
      %284 = vmatpush1.msra.mxu0 %v265
      %285 = vmatprep.subr.mxu0 0.0
      %286 = vmatpush1.msra.mxu0 %v266
      %287 = vmatprep.subr.mxu0 0.0
      %288 = vmatpush1.msra.mxu0 %v267
      %289 = vmatprep.subr.mxu0 0.0
      %290 = vmatpush1.msra.mxu0 %v268
      %291 = vmatprep.subr.mxu0 0.0
      %292 = vmatpush1.msra.mxu0 %v269
      %293 = vmatprep.subr.mxu0 0.0
      %294 = vmatpush1.msra.mxu0 %v270
      %295 = vmatprep.subr.mxu0 0.0
      %296 = vmatpush1.msra.mxu0 %v271
      %297 = vmatprep.subr.mxu0 0.0
      %298 = vmatpush1.msra.mxu0 %v272
      %299 = vmatprep.subr.mxu0 0.0
      %300 = vmatpush1.msra.mxu0 %v273
      %301 = vmatprep.subr.mxu0 0.0
      %302 = vmatpush1.msra.mxu0 %v274
      %303 = vmatprep.subr.mxu0 0.0
      %304 = vmatpush1.msra.mxu0 %v275
      %305 = vmatprep.subr.mxu0 0.0
      %306 = vmatpush1.msra.mxu0 %v276
      %307 = vmatprep.subr.mxu0 0.0
      %308 = vmatpush1.msra.mxu0 %v277
      %309 = vmatprep.subr.mxu0 0.0
      %310 = vmatpush1.msra.mxu0 %v278
      %311 = vmatprep.subr.mxu0 0.0
      %312 = vmatpush1.msra.mxu0 0.0
      %313 = vmatprep.subr.mxu0 0.0
      %314 = vmatpush1.msra.mxu0 0.0
      %315 = vmatprep.subr.mxu0 0.0
      %316 = vmatpush1.msra.mxu0 0.0
      %317 = vmatprep.subr.mxu0 0.0
      %318 = vmatpush1.msra.mxu0 0.0
      %319 = vmatprep.subr.mxu0 0.0
      %320 = vmatpush1.msra.mxu0 0.0
      %321 = vmatprep.subr.mxu0 0.0
      %322 = vmatpush1.msra.mxu0 0.0
      %323 = vmatprep.subr.mxu0 0.0
      %324 = vmatpush1.msra.mxu0 0.0
      %325 = vmatprep.subr.mxu0 0.0
      %326 = vmatpush1.msra.mxu0 0.0
      %327 = vmatprep.subr.mxu0 0.0
      %328 = vmatpush1.msra.mxu0 0.0
      %329 = vmatprep.subr.mxu0 0.0
      %330 = vmatpush1.msra.mxu0 0.0
      %331 = vmatprep.subr.mxu0 0.0
      %332 = vmatpush1.msra.mxu0 0.0
      %333 = vmatprep.subr.mxu0 0.0
      %334 = vmatpush1.msra.mxu0 0.0
      %335 = vmatprep.subr.mxu0 0.0
      %336 = vmatpush1.msra.mxu0 0.0
      %337 = vmatprep.subr.mxu0 0.0
      %338 = vmatpush1.msra.mxu0 0.0
      %339 = vmatprep.subr.mxu0 0.0
      %340 = vmatpush1.msra.mxu0 0.0
      %341 = vmatprep.subr.mxu0 0.0
      %342 = vmatpush1.msra.mxu0 0.0
      %343 = vmatprep.mubr.f32.mxu0 0.0
      %344 = vmatmul.mubr.f32.gmra.mrb[0].mxu0 %v230
      %v345 = vpop.f32.mrb[0].mxu0
      %v346 = vadd.f32 0.0, %v345
      %v347 = vpop.f32.mrb[0].mxu0
      %348 = vmatprep.mubr.f32.mxu0 0.0
      %349 = vmatmul.mubr.f32.gmra.mrb[0].mxu0 %v231
      %v350 = vpop.f32.mrb[0].mxu0
      %v351 = vadd.f32 0.0, %v350
      %v352 = vpop.f32.mrb[0].mxu0
      %353 = vmatprep.mubr.f32.mxu0 0.0
      %354 = vmatmul.mubr.f32.gmra.mrb[0].mxu0 %v232
      %v355 = vpop.f32.mrb[0].mxu0
      %v356 = vadd.f32 0.0, %v355
      %v357 = vpop.f32.mrb[0].mxu0
      %358 = vmatprep.mubr.f32.mxu0 0.0
      %359 = vmatmul.mubr.f32.gmra.mrb[0].mxu0 %v233
      %v360 = vpop.f32.mrb[0].mxu0
      %v361 = vadd.f32 0.0, %v360
      %v362 = vpop.f32.mrb[0].mxu0
      %363 = vmatprep.mubr.f32.mxu0 0.0
      %364 = vmatmul.mubr.f32.gmra.mrb[0].mxu0 %v234
      %v365 = vpop.f32.mrb[0].mxu0
      %v366 = vadd.f32 0.0, %v365
      %v367 = vpop.f32.mrb[0].mxu0
      %368 = vmatprep.mubr.f32.mxu0 0.0
      %369 = vmatmul.mubr.f32.gmra.mrb[0].mxu0 %v235
      %v370 = vpop.f32.mrb[0].mxu0
      %v371 = vadd.f32 0.0, %v370
      %v372 = vpop.f32.mrb[0].mxu0
      %373 = vmatprep.mubr.f32.mxu0 0.0
      %374 = vmatmul.mubr.f32.gmra.mrb[0].mxu0 %v236
      %v375 = vpop.f32.mrb[0].mxu0
      %v376 = vadd.f32 0.0, %v375
      %v377 = vpop.f32.mrb[0].mxu0
      %378 = vmatprep.mubr.f32.mxu0 0.0
      %379 = vmatmul.mubr.f32.gmra.mrb[0].mxu0 %v237
      %v380 = vpop.f32.mrb[0].mxu0
      %v381 = vadd.f32 0.0, %v380
      %v382 = vpop.f32.mrb[0].mxu0
      %383 = vmatprep.mubr.f32.mxu0 0.0
      %384 = vmatmul.mubr.f32.gmra.mrb[0].mxu0 %v238
      %v385 = vpop.f32.mrb[0].mxu0
      %v386 = vadd.f32 0.0, %v385
      %v387 = vpop.f32.mrb[0].mxu0
      %388 = vmatprep.mubr.f32.mxu0 0.0
      %389 = vmatmul.mubr.f32.gmra.mrb[0].mxu0 %v239
      %v390 = vpop.f32.mrb[0].mxu0
      %v391 = vadd.f32 0.0, %v390
      %v392 = vpop.f32.mrb[0].mxu0
      %393 = vmatprep.mubr.f32.mxu0 0.0
      %394 = vmatmul.mubr.f32.gmra.mrb[0].mxu0 %v240
      %v395 = vpop.f32.mrb[0].mxu0
      %v396 = vadd.f32 0.0, %v395
      %v397 = vpop.f32.mrb[0].mxu0
      %398 = vmatprep.mubr.f32.mxu0 0.0
      %399 = vmatmul.mubr.f32.gmra.mrb[0].mxu0 %v241
      %v400 = vpop.f32.mrb[0].mxu0
      %v401 = vadd.f32 0.0, %v400
      %v402 = vpop.f32.mrb[0].mxu0
      %403 = vmatprep.mubr.f32.mxu0 0.0
      %404 = vmatmul.mubr.f32.gmra.mrb[0].mxu0 %v242
      %v405 = vpop.f32.mrb[0].mxu0
      %v406 = vadd.f32 0.0, %v405
      %v407 = vpop.f32.mrb[0].mxu0
      %408 = vmatprep.mubr.f32.mxu0 0.0
      %409 = vmatmul.mubr.f32.gmra.mrb[0].mxu0 %v243
      %v410 = vpop.f32.mrb[0].mxu0
      %v411 = vadd.f32 0.0, %v410
      %v412 = vpop.f32.mrb[0].mxu0
      %413 = vmatprep.mubr.f32.mxu0 0.0
      %414 = vmatmul.mubr.f32.gmra.mrb[0].mxu0 %v244
      %v415 = vpop.f32.mrb[0].mxu0
      %v416 = vadd.f32 0.0, %v415
      %v417 = vpop.f32.mrb[0].mxu0
      %418 = vmatprep.mubr.f32.mxu0 0.0
      %419 = vmatmul.mubr.f32.gmra.mrb[0].mxu0 %v245
      %v420 = vpop.f32.mrb[0].mxu0
      %v421 = vadd.f32 0.0, %v420
      %v422 = vpop.f32.mrb[0].mxu0
      %423 = vmatprep.mubr.f32.mxu0 0.0
      %424 = vmatmul.mubr.f32.gmra.mrb[0].mxu0 %v246
      %v425 = vpop.f32.mrb[0].mxu0
      %v426 = vadd.f32 0.0, %v425
      %v427 = vpop.f32.mrb[0].mxu0
      %428 = vmatprep.mubr.f32.mxu0 0.0
      %429 = vmatmul.mubr.f32.gmra.mrb[0].mxu0 %v247
      %v430 = vpop.f32.mrb[0].mxu0
      %v431 = vadd.f32 0.0, %v430
      %v432 = vpop.f32.mrb[0].mxu0
      %433 = vmatprep.mubr.f32.mxu0 0.0
      %434 = vmatmul.mubr.f32.gmra.mrb[0].mxu0 %v248
      %v435 = vpop.f32.mrb[0].mxu0
      %v436 = vadd.f32 0.0, %v435
      %v437 = vpop.f32.mrb[0].mxu0
      %438 = vmatprep.mubr.f32.mxu0 0.0
      %439 = vmatmul.mubr.f32.gmra.mrb[0].mxu0 %v249
      %v440 = vpop.f32.mrb[0].mxu0
      %v441 = vadd.f32 0.0, %v440
      %v442 = vpop.f32.mrb[0].mxu0
      %443 = vmatprep.mubr.f32.mxu0 0.0
      %444 = vmatmul.mubr.f32.gmra.mrb[0].mxu0 %v250
      %v445 = vpop.f32.mrb[0].mxu0
      %v446 = vadd.f32 0.0, %v445
      %v447 = vpop.f32.mrb[0].mxu0
      %448 = vmatprep.mubr.f32.mxu0 0.0
      %449 = vmatmul.mubr.f32.gmra.mrb[0].mxu0 %v251
      %v450 = vpop.f32.mrb[0].mxu0
      %v451 = vadd.f32 0.0, %v450
      %v452 = vpop.f32.mrb[0].mxu0
      %453 = vmatprep.mubr.f32.mxu0 0.0
      %454 = vmatmul.mubr.f32.gmra.mrb[0].mxu0 %v252
      %v455 = vpop.f32.mrb[0].mxu0
      %v456 = vadd.f32 0.0, %v455
      %v457 = vpop.f32.mrb[0].mxu0
      %458 = vmatprep.mubr.f32.mxu0 0.0
      %459 = vmatmul.mubr.f32.gmra.mrb[0].mxu0 %v253
      %v460 = vpop.f32.mrb[0].mxu0
      %v461 = vadd.f32 0.0, %v460
      %v462 = vpop.f32.mrb[0].mxu0
      %463 = vmatprep.mubr.f32.mxu0 0.0
      %464 = vmatmul.mubr.f32.gmra.mrb[0].mxu0 %v254
      %v465 = vpop.f32.mrb[0].mxu0
      %v466 = vadd.f32 0.0, %v465
      %v467 = vpop.f32.mrb[0].mxu0
      %468 = vmatprep.mubr.f32.mxu0 0.0
      %469 = vmatmul.mubr.f32.gmra.mrb[0].mxu0 %v255
      %v470 = vpop.f32.mrb[0].mxu0
      %v471 = vadd.f32 0.0, %v470
      %v472 = vpop.f32.mrb[0].mxu0
      %473 = vmatprep.mubr.f32.mxu0 0.0
      %474 = vmatmul.mubr.f32.gmra.mrb[0].mxu0 %v256
      %v475 = vpop.f32.mrb[0].mxu0
      %v476 = vadd.f32 0.0, %v475
      %v477 = vpop.f32.mrb[0].mxu0
      %478 = vmatprep.mubr.f32.mxu0 0.0
      %479 = vmatmul.mubr.f32.gmra.mrb[0].mxu0 %v257
      %v480 = vpop.f32.mrb[0].mxu0
      %v481 = vadd.f32 0.0, %v480
      %v482 = vpop.f32.mrb[0].mxu0
      %483 = vmatprep.mubr.f32.mxu0 0.0
      %484 = vmatmul.mubr.f32.gmra.mrb[0].mxu0 %v258
      %v485 = vpop.f32.mrb[0].mxu0
      %v486 = vadd.f32 0.0, %v485
      %v487 = vpop.f32.mrb[0].mxu0
      %488 = vmatprep.mubr.f32.mxu0 0.0
      %489 = vmatmul.mubr.f32.gmra.mrb[0].mxu0 %v259
      %v490 = vpop.f32.mrb[0].mxu0
      %v491 = vadd.f32 0.0, %v490
      %v492 = vpop.f32.mrb[0].mxu0
      %493 = vmatprep.mubr.f32.mxu0 0.0
      %494 = vmatmul.mubr.f32.gmra.mrb[0].mxu0 %v260
      %v495 = vpop.f32.mrb[0].mxu0
      %v496 = vadd.f32 0.0, %v495
      %v497 = vpop.f32.mrb[0].mxu0
      %498 = vmatprep.mubr.f32.mxu0 0.0
      %499 = vmatmul.mubr.f32.gmra.mrb[0].mxu0 %v261
      %v500 = vpop.f32.mrb[0].mxu0
      %v501 = vadd.f32 0.0, %v500
      %v502 = vpop.f32.mrb[0].mxu0
      %503 = vdwg.mxu0
      %504 = vmatprep.subr.mxu0 0.0
      %505 = vmatpush1.msra.mxu0 %v214
      %506 = vmatprep.subr.mxu0 0.0
      %507 = vmatpush1.msra.mxu0 %v215
      %508 = vmatprep.subr.mxu0 0.0
      %509 = vmatpush1.msra.mxu0 %v216
      %510 = vmatprep.subr.mxu0 0.0
      %511 = vmatpush1.msra.mxu0 %v217
      %512 = vmatprep.subr.mxu0 0.0
      %513 = vmatpush1.msra.mxu0 %v218
      %514 = vmatprep.subr.mxu0 0.0
      %515 = vmatpush1.msra.mxu0 %v219
      %516 = vmatprep.subr.mxu0 0.0
      %517 = vmatpush1.msra.mxu0 %v220
      %518 = vmatprep.subr.mxu0 0.0
      %519 = vmatpush1.msra.mxu0 %v221
      %520 = vmatprep.subr.mxu0 0.0
      %521 = vmatpush1.msra.mxu0 %v222
      %522 = vmatprep.subr.mxu0 0.0
      %523 = vmatpush1.msra.mxu0 %v223
      %524 = vmatprep.subr.mxu0 0.0
      %525 = vmatpush1.msra.mxu0 %v224
      %526 = vmatprep.subr.mxu0 0.0
      %527 = vmatpush1.msra.mxu0 %v225
      %528 = vmatprep.subr.mxu0 0.0
      %529 = vmatpush1.msra.mxu0 %v226
      %530 = vmatprep.subr.mxu0 0.0
      %531 = vmatpush1.msra.mxu0 %v227
      %532 = vmatprep.subr.mxu0 0.0
      %533 = vmatpush1.msra.mxu0 %v228
      %534 = vmatprep.subr.mxu0 0.0
      %535 = vmatpush1.msra.mxu0 %v229
      %536 = vmatprep.subr.mxu0 0.0
      %537 = vmatpush1.msra.mxu0 0.0
      %538 = vmatprep.subr.mxu0 0.0
      %539 = vmatpush1.msra.mxu0 0.0
      %540 = vmatprep.subr.mxu0 0.0
      %541 = vmatpush1.msra.mxu0 0.0
      %542 = vmatprep.subr.mxu0 0.0
      %543 = vmatpush1.msra.mxu0 0.0
      %544 = vmatprep.subr.mxu0 0.0
      %545 = vmatpush1.msra.mxu0 0.0
      %546 = vmatprep.subr.mxu0 0.0
      %547 = vmatpush1.msra.mxu0 0.0
      %548 = vmatprep.subr.mxu0 0.0
      %549 = vmatpush1.msra.mxu0 0.0
      %550 = vmatprep.subr.mxu0 0.0
      %551 = vmatpush1.msra.mxu0 0.0
      %552 = vmatprep.subr.mxu0 0.0
      %553 = vmatpush1.msra.mxu0 0.0
      %554 = vmatprep.subr.mxu0 0.0
      %555 = vmatpush1.msra.mxu0 0.0
      %556 = vmatprep.subr.mxu0 0.0
      %557 = vmatpush1.msra.mxu0 0.0
      %558 = vmatprep.subr.mxu0 0.0
      %559 = vmatpush1.msra.mxu0 0.0
      %560 = vmatprep.subr.mxu0 0.0
      %561 = vmatpush1.msra.mxu0 0.0
      %562 = vmatprep.subr.mxu0 0.0
      %563 = vmatpush1.msra.mxu0 0.0
      %564 = vmatprep.subr.mxu0 0.0
      %565 = vmatpush1.msra.mxu0 0.0
      %566 = vmatprep.subr.mxu0 0.0
      %567 = vmatpush1.msra.mxu0 0.0
      %568 = vmatprep.mubr.f32.mxu0 0.0
      %569 = vmatmul.mubr.f32.gmra.mrb[0].mxu0 %v182
      %v570 = vpop.f32.mrb[0].mxu0
      %v571 = vadd.f32 %v346, %v570
      %v572 = vpop.f32.mrb[0].mxu0
      %573 = vmatprep.mubr.f32.mxu0 0.0
      %574 = vmatmul.mubr.f32.gmra.mrb[0].mxu0 %v183
      %v575 = vpop.f32.mrb[0].mxu0
      %v576 = vadd.f32 %v351, %v575
      %v577 = vpop.f32.mrb[0].mxu0
      %578 = vmatprep.mubr.f32.mxu0 0.0
      %579 = vmatmul.mubr.f32.gmra.mrb[0].mxu0 %v184
      %v580 = vpop.f32.mrb[0].mxu0
      %v581 = vadd.f32 %v356, %v580
      %v582 = vpop.f32.mrb[0].mxu0
      %583 = vmatprep.mubr.f32.mxu0 0.0
      %584 = vmatmul.mubr.f32.gmra.mrb[0].mxu0 %v185
      %v585 = vpop.f32.mrb[0].mxu0
      %v586 = vadd.f32 %v361, %v585
      %v587 = vpop.f32.mrb[0].mxu0
      %588 = vmatprep.mubr.f32.mxu0 0.0
      %589 = vmatmul.mubr.f32.gmra.mrb[0].mxu0 %v186
      %v590 = vpop.f32.mrb[0].mxu0
      %v591 = vadd.f32 %v366, %v590
      %v592 = vpop.f32.mrb[0].mxu0
      %593 = vmatprep.mubr.f32.mxu0 0.0
      %594 = vmatmul.mubr.f32.gmra.mrb[0].mxu0 %v187
      %v595 = vpop.f32.mrb[0].mxu0
      %v596 = vadd.f32 %v371, %v595
      %v597 = vpop.f32.mrb[0].mxu0
      %598 = vmatprep.mubr.f32.mxu0 0.0
      %599 = vmatmul.mubr.f32.gmra.mrb[0].mxu0 %v188
      %v600 = vpop.f32.mrb[0].mxu0
      %v601 = vadd.f32 %v376, %v600
      %v602 = vpop.f32.mrb[0].mxu0
      %603 = vmatprep.mubr.f32.mxu0 0.0
      %604 = vmatmul.mubr.f32.gmra.mrb[0].mxu0 %v189
      %v605 = vpop.f32.mrb[0].mxu0
      %v606 = vadd.f32 %v381, %v605
      %v607 = vpop.f32.mrb[0].mxu0
      %608 = vmatprep.mubr.f32.mxu0 0.0
      %609 = vmatmul.mubr.f32.gmra.mrb[0].mxu0 %v190
      %v610 = vpop.f32.mrb[0].mxu0
      %v611 = vadd.f32 %v386, %v610
      %v612 = vpop.f32.mrb[0].mxu0
      %613 = vmatprep.mubr.f32.mxu0 0.0
      %614 = vmatmul.mubr.f32.gmra.mrb[0].mxu0 %v191
      %v615 = vpop.f32.mrb[0].mxu0
      %v616 = vadd.f32 %v391, %v615
      %v617 = vpop.f32.mrb[0].mxu0
      %618 = vmatprep.mubr.f32.mxu0 0.0
      %619 = vmatmul.mubr.f32.gmra.mrb[0].mxu0 %v192
      %v620 = vpop.f32.mrb[0].mxu0
      %v621 = vadd.f32 %v396, %v620
      %v622 = vpop.f32.mrb[0].mxu0
      %623 = vmatprep.mubr.f32.mxu0 0.0
      %624 = vmatmul.mubr.f32.gmra.mrb[0].mxu0 %v193
      %v625 = vpop.f32.mrb[0].mxu0
      %v626 = vadd.f32 %v401, %v625
      %v627 = vpop.f32.mrb[0].mxu0
      %628 = vmatprep.mubr.f32.mxu0 0.0
      %629 = vmatmul.mubr.f32.gmra.mrb[0].mxu0 %v194
      %v630 = vpop.f32.mrb[0].mxu0
      %v631 = vadd.f32 %v406, %v630
      %v632 = vpop.f32.mrb[0].mxu0
      %633 = vmatprep.mubr.f32.mxu0 0.0
      %634 = vmatmul.mubr.f32.gmra.mrb[0].mxu0 %v195
      %v635 = vpop.f32.mrb[0].mxu0
      %v636 = vadd.f32 %v411, %v635
      %v637 = vpop.f32.mrb[0].mxu0
      %638 = vmatprep.mubr.f32.mxu0 0.0
      %639 = vmatmul.mubr.f32.gmra.mrb[0].mxu0 %v196
      %v640 = vpop.f32.mrb[0].mxu0
      %v641 = vadd.f32 %v416, %v640
      %v642 = vpop.f32.mrb[0].mxu0
      %643 = vmatprep.mubr.f32.mxu0 0.0
      %644 = vmatmul.mubr.f32.gmra.mrb[0].mxu0 %v197
      %v645 = vpop.f32.mrb[0].mxu0
      %v646 = vadd.f32 %v421, %v645
      %v647 = vpop.f32.mrb[0].mxu0
      %648 = vmatprep.mubr.f32.mxu0 0.0
      %649 = vmatmul.mubr.f32.gmra.mrb[0].mxu0 %v198
      %v650 = vpop.f32.mrb[0].mxu0
      %v651 = vadd.f32 %v426, %v650
      %v652 = vpop.f32.mrb[0].mxu0
      %653 = vmatprep.mubr.f32.mxu0 0.0
      %654 = vmatmul.mubr.f32.gmra.mrb[0].mxu0 %v199
      %v655 = vpop.f32.mrb[0].mxu0
      %v656 = vadd.f32 %v431, %v655
      %v657 = vpop.f32.mrb[0].mxu0
      %658 = vmatprep.mubr.f32.mxu0 0.0
      %659 = vmatmul.mubr.f32.gmra.mrb[0].mxu0 %v200
      %v660 = vpop.f32.mrb[0].mxu0
      %v661 = vadd.f32 %v436, %v660
      %v662 = vpop.f32.mrb[0].mxu0
      %663 = vmatprep.mubr.f32.mxu0 0.0
      %664 = vmatmul.mubr.f32.gmra.mrb[0].mxu0 %v201
      %v665 = vpop.f32.mrb[0].mxu0
      %v666 = vadd.f32 %v441, %v665
      %v667 = vpop.f32.mrb[0].mxu0
      %668 = vmatprep.mubr.f32.mxu0 0.0
      %669 = vmatmul.mubr.f32.gmra.mrb[0].mxu0 %v202
      %v670 = vpop.f32.mrb[0].mxu0
      %v671 = vadd.f32 %v446, %v670
      %v672 = vpop.f32.mrb[0].mxu0
      %673 = vmatprep.mubr.f32.mxu0 0.0
      %674 = vmatmul.mubr.f32.gmra.mrb[0].mxu0 %v203
      %v675 = vpop.f32.mrb[0].mxu0
      %v676 = vadd.f32 %v451, %v675
      %v677 = vpop.f32.mrb[0].mxu0
      %678 = vmatprep.mubr.f32.mxu0 0.0
      %679 = vmatmul.mubr.f32.gmra.mrb[0].mxu0 %v204
      %v680 = vpop.f32.mrb[0].mxu0
      %v681 = vadd.f32 %v456, %v680
      %v682 = vpop.f32.mrb[0].mxu0
      %683 = vmatprep.mubr.f32.mxu0 0.0
      %684 = vmatmul.mubr.f32.gmra.mrb[0].mxu0 %v205
      %v685 = vpop.f32.mrb[0].mxu0
      %v686 = vadd.f32 %v461, %v685
      %v687 = vpop.f32.mrb[0].mxu0
      %688 = vmatprep.mubr.f32.mxu0 0.0
      %689 = vmatmul.mubr.f32.gmra.mrb[0].mxu0 %v206
      %v690 = vpop.f32.mrb[0].mxu0
      %v691 = vadd.f32 %v466, %v690
      %v692 = vpop.f32.mrb[0].mxu0
      %693 = vmatprep.mubr.f32.mxu0 0.0
      %694 = vmatmul.mubr.f32.gmra.mrb[0].mxu0 %v207
      %v695 = vpop.f32.mrb[0].mxu0
      %v696 = vadd.f32 %v471, %v695
      %v697 = vpop.f32.mrb[0].mxu0
      %698 = vmatprep.mubr.f32.mxu0 0.0
      %699 = vmatmul.mubr.f32.gmra.mrb[0].mxu0 %v208
      %v700 = vpop.f32.mrb[0].mxu0
      %v701 = vadd.f32 %v476, %v700
      %v702 = vpop.f32.mrb[0].mxu0
      %703 = vmatprep.mubr.f32.mxu0 0.0
      %704 = vmatmul.mubr.f32.gmra.mrb[0].mxu0 %v209
      %v705 = vpop.f32.mrb[0].mxu0
      %v706 = vadd.f32 %v481, %v705
      %v707 = vpop.f32.mrb[0].mxu0
      %708 = vmatprep.mubr.f32.mxu0 0.0
      %709 = vmatmul.mubr.f32.gmra.mrb[0].mxu0 %v210
      %v710 = vpop.f32.mrb[0].mxu0
      %v711 = vadd.f32 %v486, %v710
      %v712 = vpop.f32.mrb[0].mxu0
      %713 = vmatprep.mubr.f32.mxu0 0.0
      %714 = vmatmul.mubr.f32.gmra.mrb[0].mxu0 %v211
      %v715 = vpop.f32.mrb[0].mxu0
      %v716 = vadd.f32 %v491, %v715
      %v717 = vpop.f32.mrb[0].mxu0
      %718 = vmatprep.mubr.f32.mxu0 0.0
      %719 = vmatmul.mubr.f32.gmra.mrb[0].mxu0 %v212
      %v720 = vpop.f32.mrb[0].mxu0
      %v721 = vadd.f32 %v496, %v720
      %v722 = vpop.f32.mrb[0].mxu0
      %723 = vmatprep.mubr.f32.mxu0 0.0
      %724 = vmatmul.mubr.f32.gmra.mrb[0].mxu0 %v213
      %v725 = vpop.f32.mrb[0].mxu0
      %v726 = vadd.f32 %v501, %v725
      %v727 = vpop.f32.mrb[0].mxu0
      %728 = vdwg.mxu0
      %v729 = vld [vmem:[%s172 + $0x2] sm:$0xff]
      %v730 = vld [vmem:[%s172 + $0xa] sm:$0xff]
      %v731 = vld [vmem:[%s172 + $0x1a] sm:$0xff]
      %v732 = vld [vmem:[%s172 + $0x22] sm:$0xff]
      %v733 = vld [vmem:[%s172 + $0x32] sm:$0xff]
      %v734 = vld [vmem:[%s172 + $0x3a] sm:$0xff]
      %v735 = vld [vmem:[%s172 + $0x4a] sm:$0xff]
      %v736 = vld [vmem:[%s172 + $0x52] sm:$0xff]
      %v737 = vld [vmem:[%s172 + $0x62] sm:$0xff]
      %v738 = vld [vmem:[%s172 + $0x6a] sm:$0xff]
      %v739 = vld [vmem:[%s172 + $0x7a] sm:$0xff]
      %v740 = vld [vmem:[%s172 + $0x82] sm:$0xff]
      %v741 = vld [vmem:[%s172 + $0x92] sm:$0xff]
      %v742 = vld [vmem:[%s172 + $0x9a] sm:$0xff]
      %v743 = vld [vmem:[%s172 + $0xaa] sm:$0xff]
      %v744 = vld [vmem:[%s172 + $0xb2] sm:$0xff]
      %v745 = vld [vmem:[%s172 + $0xc2] sm:$0xff]
      %v746 = vld [vmem:[%s172 + $0xca] sm:$0xff]
      %v747 = vld [vmem:[%s172 + $0xda] sm:$0xff]
      %v748 = vld [vmem:[%s172 + $0xe2] sm:$0xff]
      %v749 = vld [vmem:[%s172 + $0xf2] sm:$0xff]
      %v750 = vld [vmem:[%s172 + $0xfa] sm:$0xff]
      %v751 = vld [vmem:[%s172 + $0x10a] sm:$0xff]
      %v752 = vld [vmem:[%s172 + $0x112] sm:$0xff]
      %v753 = vld [vmem:[%s172 + $0x122] sm:$0xff]
      %v754 = vld [vmem:[%s172 + $0x12a] sm:$0xff]
      %v755 = vld [vmem:[%s172 + $0x13a] sm:$0xff]
      %v756 = vld [vmem:[%s172 + $0x142] sm:$0xff]
      %v757 = vld [vmem:[%s172 + $0x152] sm:$0xff]
      %v758 = vld [vmem:[%s172 + $0x15a] sm:$0xff]
      %v759 = vld [vmem:[%s172 + $0x16a] sm:$0xff]
      %v760 = vld [vmem:[%s172 + $0x172] sm:$0xff]
      %s761 = scalar_lea.vmem %s1, 256
      %v762 = vld [vmem:[%s761] sm:$0xff]
      %v763 = vld [vmem:[%s761 + $0x8] sm:$0xff]
      %v764 = vld [vmem:[%s761 + $0x10] sm:$0xff]
      %v765 = vld [vmem:[%s761 + $0x18] sm:$0xff]
      %v766 = vld [vmem:[%s761 + $0x20] sm:$0xff]
      %v767 = vld [vmem:[%s761 + $0x28] sm:$0xff]
      %v768 = vld [vmem:[%s761 + $0x30] sm:$0xff]
      %v769 = vld [vmem:[%s761 + $0x38] sm:$0xff]
      %v770 = vld [vmem:[%s761 + $0x40] sm:$0xff]
      %v771 = vld [vmem:[%s761 + $0x48] sm:$0xff]
      %v772 = vld [vmem:[%s761 + $0x50] sm:$0xff]
      %v773 = vld [vmem:[%s761 + $0x58] sm:$0xff]
      %v774 = vld [vmem:[%s761 + $0x60] sm:$0xff]
      %v775 = vld [vmem:[%s761 + $0x68] sm:$0xff]
      %v776 = vld [vmem:[%s761 + $0x70] sm:$0xff]
      %v777 = vld [vmem:[%s761 + $0x78] sm:$0xff]
      %778 = vmatprep.subr.mxu0 0.0
      %779 = vmatpush1.msra.mxu0 %v762
      %780 = vmatprep.subr.mxu0 0.0
      %781 = vmatpush1.msra.mxu0 %v763
      %782 = vmatprep.subr.mxu0 0.0
      %783 = vmatpush1.msra.mxu0 %v764
      %784 = vmatprep.subr.mxu0 0.0
      %785 = vmatpush1.msra.mxu0 %v765
      %786 = vmatprep.subr.mxu0 0.0
      %787 = vmatpush1.msra.mxu0 %v766
      %788 = vmatprep.subr.mxu0 0.0
      %789 = vmatpush1.msra.mxu0 %v767
      %790 = vmatprep.subr.mxu0 0.0
      %791 = vmatpush1.msra.mxu0 %v768
      %792 = vmatprep.subr.mxu0 0.0
      %793 = vmatpush1.msra.mxu0 %v769
      %794 = vmatprep.subr.mxu0 0.0
      %795 = vmatpush1.msra.mxu0 %v770
      %796 = vmatprep.subr.mxu0 0.0
      %797 = vmatpush1.msra.mxu0 %v771
      %798 = vmatprep.subr.mxu0 0.0
      %799 = vmatpush1.msra.mxu0 %v772
      %800 = vmatprep.subr.mxu0 0.0
      %801 = vmatpush1.msra.mxu0 %v773
      %802 = vmatprep.subr.mxu0 0.0
      %803 = vmatpush1.msra.mxu0 %v774
      %804 = vmatprep.subr.mxu0 0.0
      %805 = vmatpush1.msra.mxu0 %v775
      %806 = vmatprep.subr.mxu0 0.0
      %807 = vmatpush1.msra.mxu0 %v776
      %808 = vmatprep.subr.mxu0 0.0
      %809 = vmatpush1.msra.mxu0 %v777
      %810 = vmatprep.subr.mxu0 0.0
      %811 = vmatpush1.msra.mxu0 0.0
      %812 = vmatprep.subr.mxu0 0.0
      %813 = vmatpush1.msra.mxu0 0.0
      %814 = vmatprep.subr.mxu0 0.0
      %815 = vmatpush1.msra.mxu0 0.0
      %816 = vmatprep.subr.mxu0 0.0
      %817 = vmatpush1.msra.mxu0 0.0
      %818 = vmatprep.subr.mxu0 0.0
      %819 = vmatpush1.msra.mxu0 0.0
      %820 = vmatprep.subr.mxu0 0.0
      %821 = vmatpush1.msra.mxu0 0.0
      %822 = vmatprep.subr.mxu0 0.0
      %823 = vmatpush1.msra.mxu0 0.0
      %824 = vmatprep.subr.mxu0 0.0
      %825 = vmatpush1.msra.mxu0 0.0
      %826 = vmatprep.subr.mxu0 0.0
      %827 = vmatpush1.msra.mxu0 0.0
      %828 = vmatprep.subr.mxu0 0.0
      %829 = vmatpush1.msra.mxu0 0.0
      %830 = vmatprep.subr.mxu0 0.0
      %831 = vmatpush1.msra.mxu0 0.0
      %832 = vmatprep.subr.mxu0 0.0
      %833 = vmatpush1.msra.mxu0 0.0
      %834 = vmatprep.subr.mxu0 0.0
      %835 = vmatpush1.msra.mxu0 0.0
      %836 = vmatprep.subr.mxu0 0.0
      %837 = vmatpush1.msra.mxu0 0.0
      %838 = vmatprep.subr.mxu0 0.0
      %839 = vmatpush1.msra.mxu0 0.0
      %840 = vmatprep.subr.mxu0 0.0
      %841 = vmatpush1.msra.mxu0 0.0
      %842 = vmatprep.mubr.f32.mxu0 0.0
      %843 = vmatmul.mubr.f32.gmra.mrb[0].mxu0 %v729
      %v844 = vpop.f32.mrb[0].mxu0
      %v845 = vadd.f32 0.0, %v844
      %v846 = vpop.f32.mrb[0].mxu0
      %847 = vmatprep.mubr.f32.mxu0 0.0
      %848 = vmatmul.mubr.f32.gmra.mrb[0].mxu0 %v730
      %v849 = vpop.f32.mrb[0].mxu0
      %v850 = vadd.f32 0.0, %v849
      %v851 = vpop.f32.mrb[0].mxu0
      %852 = vmatprep.mubr.f32.mxu0 0.0
      %853 = vmatmul.mubr.f32.gmra.mrb[0].mxu0 %v731
      %v854 = vpop.f32.mrb[0].mxu0
      %v855 = vadd.f32 0.0, %v854
      %v856 = vpop.f32.mrb[0].mxu0
      %857 = vmatprep.mubr.f32.mxu0 0.0
      %858 = vmatmul.mubr.f32.gmra.mrb[0].mxu0 %v732
      %v859 = vpop.f32.mrb[0].mxu0
      %v860 = vadd.f32 0.0, %v859
      %v861 = vpop.f32.mrb[0].mxu0
      %862 = vmatprep.mubr.f32.mxu0 0.0
      %863 = vmatmul.mubr.f32.gmra.mrb[0].mxu0 %v733
      %v864 = vpop.f32.mrb[0].mxu0
      %v865 = vadd.f32 0.0, %v864
      %v866 = vpop.f32.mrb[0].mxu0
      %867 = vmatprep.mubr.f32.mxu0 0.0
      %868 = vmatmul.mubr.f32.gmra.mrb[0].mxu0 %v734
      %v869 = vpop.f32.mrb[0].mxu0
      %v870 = vadd.f32 0.0, %v869
      %v871 = vpop.f32.mrb[0].mxu0
      %872 = vmatprep.mubr.f32.mxu0 0.0
      %873 = vmatmul.mubr.f32.gmra.mrb[0].mxu0 %v735
      %v874 = vpop.f32.mrb[0].mxu0
      %v875 = vadd.f32 0.0, %v874
      %v876 = vpop.f32.mrb[0].mxu0
      %877 = vmatprep.mubr.f32.mxu0 0.0
      %878 = vmatmul.mubr.f32.gmra.mrb[0].mxu0 %v736
      %v879 = vpop.f32.mrb[0].mxu0
      %v880 = vadd.f32 0.0, %v879
      %v881 = vpop.f32.mrb[0].mxu0
      %882 = vmatprep.mubr.f32.mxu0 0.0
      %883 = vmatmul.mubr.f32.gmra.mrb[0].mxu0 %v737
      %v884 = vpop.f32.mrb[0].mxu0
      %v885 = vadd.f32 0.0, %v884
      %v886 = vpop.f32.mrb[0].mxu0
      %887 = vmatprep.mubr.f32.mxu0 0.0
      %888 = vmatmul.mubr.f32.gmra.mrb[0].mxu0 %v738
      %v889 = vpop.f32.mrb[0].mxu0
      %v890 = vadd.f32 0.0, %v889
      %v891 = vpop.f32.mrb[0].mxu0
      %892 = vmatprep.mubr.f32.mxu0 0.0
      %893 = vmatmul.mubr.f32.gmra.mrb[0].mxu0 %v739
      %v894 = vpop.f32.mrb[0].mxu0
      %v895 = vadd.f32 0.0, %v894
      %v896 = vpop.f32.mrb[0].mxu0
      %897 = vmatprep.mubr.f32.mxu0 0.0
      %898 = vmatmul.mubr.f32.gmra.mrb[0].mxu0 %v740
      %v899 = vpop.f32.mrb[0].mxu0
      %v900 = vadd.f32 0.0, %v899
      %v901 = vpop.f32.mrb[0].mxu0
      %902 = vmatprep.mubr.f32.mxu0 0.0
      %903 = vmatmul.mubr.f32.gmra.mrb[0].mxu0 %v741
      %v904 = vpop.f32.mrb[0].mxu0
      %v905 = vadd.f32 0.0, %v904
      %v906 = vpop.f32.mrb[0].mxu0
      %907 = vmatprep.mubr.f32.mxu0 0.0
      %908 = vmatmul.mubr.f32.gmra.mrb[0].mxu0 %v742
      %v909 = vpop.f32.mrb[0].mxu0
      %v910 = vadd.f32 0.0, %v909
      %v911 = vpop.f32.mrb[0].mxu0
      %912 = vmatprep.mubr.f32.mxu0 0.0
      %913 = vmatmul.mubr.f32.gmra.mrb[0].mxu0 %v743
      %v914 = vpop.f32.mrb[0].mxu0
      %v915 = vadd.f32 0.0, %v914
      %v916 = vpop.f32.mrb[0].mxu0
      %917 = vmatprep.mubr.f32.mxu0 0.0
      %918 = vmatmul.mubr.f32.gmra.mrb[0].mxu0 %v744
      %v919 = vpop.f32.mrb[0].mxu0
      %v920 = vadd.f32 0.0, %v919
      %v921 = vpop.f32.mrb[0].mxu0
      %922 = vmatprep.mubr.f32.mxu0 0.0
      %923 = vmatmul.mubr.f32.gmra.mrb[0].mxu0 %v745
      %v924 = vpop.f32.mrb[0].mxu0
      %v925 = vadd.f32 0.0, %v924
      %v926 = vpop.f32.mrb[0].mxu0
      %927 = vmatprep.mubr.f32.mxu0 0.0
      %928 = vmatmul.mubr.f32.gmra.mrb[0].mxu0 %v746
      %v929 = vpop.f32.mrb[0].mxu0
      %v930 = vadd.f32 0.0, %v929
      %v931 = vpop.f32.mrb[0].mxu0
      %932 = vmatprep.mubr.f32.mxu0 0.0
      %933 = vmatmul.mubr.f32.gmra.mrb[0].mxu0 %v747
      %v934 = vpop.f32.mrb[0].mxu0
      %v935 = vadd.f32 0.0, %v934
      %v936 = vpop.f32.mrb[0].mxu0
      %937 = vmatprep.mubr.f32.mxu0 0.0
      %938 = vmatmul.mubr.f32.gmra.mrb[0].mxu0 %v748
      %v939 = vpop.f32.mrb[0].mxu0
      %v940 = vadd.f32 0.0, %v939
      %v941 = vpop.f32.mrb[0].mxu0
      %942 = vmatprep.mubr.f32.mxu0 0.0
      %943 = vmatmul.mubr.f32.gmra.mrb[0].mxu0 %v749
      %v944 = vpop.f32.mrb[0].mxu0
      %v945 = vadd.f32 0.0, %v944
      %v946 = vpop.f32.mrb[0].mxu0
      %947 = vmatprep.mubr.f32.mxu0 0.0
      %948 = vmatmul.mubr.f32.gmra.mrb[0].mxu0 %v750
      %v949 = vpop.f32.mrb[0].mxu0
      %v950 = vadd.f32 0.0, %v949
      %v951 = vpop.f32.mrb[0].mxu0
      %952 = vmatprep.mubr.f32.mxu0 0.0
      %953 = vmatmul.mubr.f32.gmra.mrb[0].mxu0 %v751
      %v954 = vpop.f32.mrb[0].mxu0
      %v955 = vadd.f32 0.0, %v954
      %v956 = vpop.f32.mrb[0].mxu0
      %957 = vmatprep.mubr.f32.mxu0 0.0
      %958 = vmatmul.mubr.f32.gmra.mrb[0].mxu0 %v752
      %v959 = vpop.f32.mrb[0].mxu0
      %v960 = vadd.f32 0.0, %v959
      %v961 = vpop.f32.mrb[0].mxu0
      %962 = vmatprep.mubr.f32.mxu0 0.0
      %963 = vmatmul.mubr.f32.gmra.mrb[0].mxu0 %v753
      %v964 = vpop.f32.mrb[0].mxu0
      %v965 = vadd.f32 0.0, %v964
      %v966 = vpop.f32.mrb[0].mxu0
      %967 = vmatprep.mubr.f32.mxu0 0.0
      %968 = vmatmul.mubr.f32.gmra.mrb[0].mxu0 %v754
      %v969 = vpop.f32.mrb[0].mxu0
      %v970 = vadd.f32 0.0, %v969
      %v971 = vpop.f32.mrb[0].mxu0
      %972 = vmatprep.mubr.f32.mxu0 0.0
      %973 = vmatmul.mubr.f32.gmra.mrb[0].mxu0 %v755
      %v974 = vpop.f32.mrb[0].mxu0
      %v975 = vadd.f32 0.0, %v974
      %v976 = vpop.f32.mrb[0].mxu0
      %977 = vmatprep.mubr.f32.mxu0 0.0
      %978 = vmatmul.mubr.f32.gmra.mrb[0].mxu0 %v756
      %v979 = vpop.f32.mrb[0].mxu0
      %v980 = vadd.f32 0.0, %v979
      %v981 = vpop.f32.mrb[0].mxu0
      %982 = vmatprep.mubr.f32.mxu0 0.0
      %983 = vmatmul.mubr.f32.gmra.mrb[0].mxu0 %v757
      %v984 = vpop.f32.mrb[0].mxu0
      %v985 = vadd.f32 0.0, %v984
      %v986 = vpop.f32.mrb[0].mxu0
      %987 = vmatprep.mubr.f32.mxu0 0.0
      %988 = vmatmul.mubr.f32.gmra.mrb[0].mxu0 %v758
      %v989 = vpop.f32.mrb[0].mxu0
      %v990 = vadd.f32 0.0, %v989
      %v991 = vpop.f32.mrb[0].mxu0
      %992 = vmatprep.mubr.f32.mxu0 0.0
      %993 = vmatmul.mubr.f32.gmra.mrb[0].mxu0 %v759
      %v994 = vpop.f32.mrb[0].mxu0
      %v995 = vadd.f32 0.0, %v994
      %v996 = vpop.f32.mrb[0].mxu0
      %997 = vmatprep.mubr.f32.mxu0 0.0
      %998 = vmatmul.mubr.f32.gmra.mrb[0].mxu0 %v760
      %v999 = vpop.f32.mrb[0].mxu0
      %v1000 = vadd.f32 0.0, %v999
      %v1001 = vpop.f32.mrb[0].mxu0
      %1002 = vdwg.mxu0
      %v1003 = vadd.f32 %v571, %v845
      %v1004 = vadd.f32 %v576, %v850
      %v1005 = vadd.f32 %v581, %v855
      %v1006 = vadd.f32 %v586, %v860
      %v1007 = vadd.f32 %v591, %v865
      %v1008 = vadd.f32 %v596, %v870
      %v1009 = vadd.f32 %v601, %v875
      %v1010 = vadd.f32 %v606, %v880
      %v1011 = vadd.f32 %v611, %v885
      %v1012 = vadd.f32 %v616, %v890
      %v1013 = vadd.f32 %v621, %v895
      %v1014 = vadd.f32 %v626, %v900
      %v1015 = vadd.f32 %v631, %v905
      %v1016 = vadd.f32 %v636, %v910
      %v1017 = vadd.f32 %v641, %v915
      %v1018 = vadd.f32 %v646, %v920
      %v1019 = vadd.f32 %v651, %v925
      %v1020 = vadd.f32 %v656, %v930
      %v1021 = vadd.f32 %v661, %v935
      %v1022 = vadd.f32 %v666, %v940
      %v1023 = vadd.f32 %v671, %v945
      %v1024 = vadd.f32 %v676, %v950
      %v1025 = vadd.f32 %v681, %v955
      %v1026 = vadd.f32 %v686, %v960
      %v1027 = vadd.f32 %v691, %v965
      %v1028 = vadd.f32 %v696, %v970
      %v1029 = vadd.f32 %v701, %v975
      %v1030 = vadd.f32 %v706, %v980
      %v1031 = vadd.f32 %v711, %v985
      %v1032 = vadd.f32 %v716, %v990
      %v1033 = vadd.f32 %v721, %v995
      %v1034 = vadd.f32 %v726, %v1000
      %s1035 = scalar_lea.vmem %s172, 24
      %v1036 = vld [vmem:[%s1035] sm:$0xff]
      %v1037 = vld [vmem:[%s1035 + $0x8] sm:$0xff]
      %v1038 = vld [vmem:[%s1035 + $0x18] sm:$0xff]
      %v1039 = vld [vmem:[%s1035 + $0x20] sm:$0xff]
      %v1040 = vld [vmem:[%s1035 + $0x30] sm:$0xff]
      %v1041 = vld [vmem:[%s1035 + $0x38] sm:$0xff]
      %v1042 = vld [vmem:[%s1035 + $0x48] sm:$0xff]
      %v1043 = vld [vmem:[%s1035 + $0x50] sm:$0xff]
      %v1044 = vld [vmem:[%s1035 + $0x60] sm:$0xff]
      %v1045 = vld [vmem:[%s1035 + $0x68] sm:$0xff]
      %v1046 = vld [vmem:[%s1035 + $0x78] sm:$0xff]
      %v1047 = vld [vmem:[%s1035 + $0x80] sm:$0xff]
      %v1048 = vld [vmem:[%s1035 + $0x90] sm:$0xff]
      %v1049 = vld [vmem:[%s1035 + $0x98] sm:$0xff]
      %v1050 = vld [vmem:[%s1035 + $0xa8] sm:$0xff]
      %v1051 = vld [vmem:[%s1035 + $0xb0] sm:$0xff]
      %v1052 = vld [vmem:[%s1035 + $0xc0] sm:$0xff]
      %v1053 = vld [vmem:[%s1035 + $0xc8] sm:$0xff]
      %v1054 = vld [vmem:[%s1035 + $0xd8] sm:$0xff]
      %v1055 = vld [vmem:[%s1035 + $0xe0] sm:$0xff]
      %v1056 = vld [vmem:[%s1035 + $0xf0] sm:$0xff]
      %v1057 = vld [vmem:[%s1035 + $0xf8] sm:$0xff]
      %v1058 = vld [vmem:[%s1035 + $0x108] sm:$0xff]
      %v1059 = vld [vmem:[%s1035 + $0x110] sm:$0xff]
      %v1060 = vld [vmem:[%s1035 + $0x120] sm:$0xff]
      %v1061 = vld [vmem:[%s1035 + $0x128] sm:$0xff]
      %v1062 = vld [vmem:[%s1035 + $0x138] sm:$0xff]
      %v1063 = vld [vmem:[%s1035 + $0x140] sm:$0xff]
      %v1064 = vld [vmem:[%s1035 + $0x150] sm:$0xff]
      %v1065 = vld [vmem:[%s1035 + $0x158] sm:$0xff]
      %v1066 = vld [vmem:[%s1035 + $0x168] sm:$0xff]
      %v1067 = vld [vmem:[%s1035 + $0x170] sm:$0xff]
      %s1068 = scalar_lea.vmem %s1, 384
      %v1069 = vld [vmem:[%s1068] sm:$0xff]
      %v1070 = vld [vmem:[%s1068 + $0x8] sm:$0xff]
      %v1071 = vld [vmem:[%s1068 + $0x10] sm:$0xff]
      %v1072 = vld [vmem:[%s1068 + $0x18] sm:$0xff]
      %v1073 = vld [vmem:[%s1068 + $0x20] sm:$0xff]
      %v1074 = vld [vmem:[%s1068 + $0x28] sm:$0xff]
      %v1075 = vld [vmem:[%s1068 + $0x30] sm:$0xff]
      %v1076 = vld [vmem:[%s1068 + $0x38] sm:$0xff]
      %v1077 = vld [vmem:[%s1068 + $0x40] sm:$0xff]
      %v1078 = vld [vmem:[%s1068 + $0x48] sm:$0xff]
      %v1079 = vld [vmem:[%s1068 + $0x50] sm:$0xff]
      %v1080 = vld [vmem:[%s1068 + $0x58] sm:$0xff]
      %v1081 = vld [vmem:[%s1068 + $0x60] sm:$0xff]
      %v1082 = vld [vmem:[%s1068 + $0x68] sm:$0xff]
      %v1083 = vld [vmem:[%s1068 + $0x70] sm:$0xff]
      %v1084 = vld [vmem:[%s1068 + $0x78] sm:$0xff]
      %1085 = vmatprep.subr.mxu0 0.0
      %1086 = vmatpush1.msra.mxu0 %v1069
      %1087 = vmatprep.subr.mxu0 0.0
      %1088 = vmatpush1.msra.mxu0 %v1070
      %1089 = vmatprep.subr.mxu0 0.0
      %1090 = vmatpush1.msra.mxu0 %v1071
      %1091 = vmatprep.subr.mxu0 0.0
      %1092 = vmatpush1.msra.mxu0 %v1072
      %1093 = vmatprep.subr.mxu0 0.0
      %1094 = vmatpush1.msra.mxu0 %v1073
      %1095 = vmatprep.subr.mxu0 0.0
      %1096 = vmatpush1.msra.mxu0 %v1074
      %1097 = vmatprep.subr.mxu0 0.0
      %1098 = vmatpush1.msra.mxu0 %v1075
      %1099 = vmatprep.subr.mxu0 0.0
      %1100 = vmatpush1.msra.mxu0 %v1076
      %1101 = vmatprep.subr.mxu0 0.0
      %1102 = vmatpush1.msra.mxu0 %v1077
      %1103 = vmatprep.subr.mxu0 0.0
      %1104 = vmatpush1.msra.mxu0 %v1078
      %1105 = vmatprep.subr.mxu0 0.0
      %1106 = vmatpush1.msra.mxu0 %v1079
      %1107 = vmatprep.subr.mxu0 0.0
      %1108 = vmatpush1.msra.mxu0 %v1080
      %1109 = vmatprep.subr.mxu0 0.0
      %1110 = vmatpush1.msra.mxu0 %v1081
      %1111 = vmatprep.subr.mxu0 0.0
      %1112 = vmatpush1.msra.mxu0 %v1082
      %1113 = vmatprep.subr.mxu0 0.0
      %1114 = vmatpush1.msra.mxu0 %v1083
      %1115 = vmatprep.subr.mxu0 0.0
      %1116 = vmatpush1.msra.mxu0 %v1084
      %1117 = vmatprep.subr.mxu0 0.0
      %1118 = vmatpush1.msra.mxu0 0.0
      %1119 = vmatprep.subr.mxu0 0.0
      %1120 = vmatpush1.msra.mxu0 0.0
      %1121 = vmatprep.subr.mxu0 0.0
      %1122 = vmatpush1.msra.mxu0 0.0
      %1123 = vmatprep.subr.mxu0 0.0
      %1124 = vmatpush1.msra.mxu0 0.0
      %1125 = vmatprep.subr.mxu0 0.0
      %1126 = vmatpush1.msra.mxu0 0.0
      %1127 = vmatprep.subr.mxu0 0.0
      %1128 = vmatpush1.msra.mxu0 0.0
      %1129 = vmatprep.subr.mxu0 0.0
      %1130 = vmatpush1.msra.mxu0 0.0
      %1131 = vmatprep.subr.mxu0 0.0
      %1132 = vmatpush1.msra.mxu0 0.0
      %1133 = vmatprep.subr.mxu0 0.0
      %1134 = vmatpush1.msra.mxu0 0.0
      %1135 = vmatprep.subr.mxu0 0.0
      %1136 = vmatpush1.msra.mxu0 0.0
      %1137 = vmatprep.subr.mxu0 0.0
      %1138 = vmatpush1.msra.mxu0 0.0
      %1139 = vmatprep.subr.mxu0 0.0
      %1140 = vmatpush1.msra.mxu0 0.0
      %1141 = vmatprep.subr.mxu0 0.0
      %1142 = vmatpush1.msra.mxu0 0.0
      %1143 = vmatprep.subr.mxu0 0.0
      %1144 = vmatpush1.msra.mxu0 0.0
      %1145 = vmatprep.subr.mxu0 0.0
      %1146 = vmatpush1.msra.mxu0 0.0
      %1147 = vmatprep.subr.mxu0 0.0
      %1148 = vmatpush1.msra.mxu0 0.0
      %1149 = vmatprep.mubr.f32.mxu0 0.0
      %1150 = vmatmul.mubr.f32.gmra.mrb[0].mxu0 %v1036
      %v1151 = vpop.f32.mrb[0].mxu0
      %v1152 = vadd.f32 0.0, %v1151
      %v1153 = vpop.f32.mrb[0].mxu0
      %1154 = vmatprep.mubr.f32.mxu0 0.0
      %1155 = vmatmul.mubr.f32.gmra.mrb[0].mxu0 %v1037
      %v1156 = vpop.f32.mrb[0].mxu0
      %v1157 = vadd.f32 0.0, %v1156
      %v1158 = vpop.f32.mrb[0].mxu0
      %1159 = vmatprep.mubr.f32.mxu0 0.0
      %1160 = vmatmul.mubr.f32.gmra.mrb[0].mxu0 %v1038
      %v1161 = vpop.f32.mrb[0].mxu0
      %v1162 = vadd.f32 0.0, %v1161
      %v1163 = vpop.f32.mrb[0].mxu0
      %1164 = vmatprep.mubr.f32.mxu0 0.0
      %1165 = vmatmul.mubr.f32.gmra.mrb[0].mxu0 %v1039
      %v1166 = vpop.f32.mrb[0].mxu0
      %v1167 = vadd.f32 0.0, %v1166
      %v1168 = vpop.f32.mrb[0].mxu0
      %1169 = vmatprep.mubr.f32.mxu0 0.0
      %1170 = vmatmul.mubr.f32.gmra.mrb[0].mxu0 %v1040
      %v1171 = vpop.f32.mrb[0].mxu0
      %v1172 = vadd.f32 0.0, %v1171
      %v1173 = vpop.f32.mrb[0].mxu0
      %1174 = vmatprep.mubr.f32.mxu0 0.0
      %1175 = vmatmul.mubr.f32.gmra.mrb[0].mxu0 %v1041
      %v1176 = vpop.f32.mrb[0].mxu0
      %v1177 = vadd.f32 0.0, %v1176
      %v1178 = vpop.f32.mrb[0].mxu0
      %1179 = vmatprep.mubr.f32.mxu0 0.0
      %1180 = vmatmul.mubr.f32.gmra.mrb[0].mxu0 %v1042
      %v1181 = vpop.f32.mrb[0].mxu0
      %v1182 = vadd.f32 0.0, %v1181
      %v1183 = vpop.f32.mrb[0].mxu0
      %1184 = vmatprep.mubr.f32.mxu0 0.0
      %1185 = vmatmul.mubr.f32.gmra.mrb[0].mxu0 %v1043
      %v1186 = vpop.f32.mrb[0].mxu0
      %v1187 = vadd.f32 0.0, %v1186
      %v1188 = vpop.f32.mrb[0].mxu0
      %1189 = vmatprep.mubr.f32.mxu0 0.0
      %1190 = vmatmul.mubr.f32.gmra.mrb[0].mxu0 %v1044
      %v1191 = vpop.f32.mrb[0].mxu0
      %v1192 = vadd.f32 0.0, %v1191
      %v1193 = vpop.f32.mrb[0].mxu0
      %1194 = vmatprep.mubr.f32.mxu0 0.0
      %1195 = vmatmul.mubr.f32.gmra.mrb[0].mxu0 %v1045
      %v1196 = vpop.f32.mrb[0].mxu0
      %v1197 = vadd.f32 0.0, %v1196
      %v1198 = vpop.f32.mrb[0].mxu0
      %1199 = vmatprep.mubr.f32.mxu0 0.0
      %1200 = vmatmul.mubr.f32.gmra.mrb[0].mxu0 %v1046
      %v1201 = vpop.f32.mrb[0].mxu0
      %v1202 = vadd.f32 0.0, %v1201
      %v1203 = vpop.f32.mrb[0].mxu0
      %1204 = vmatprep.mubr.f32.mxu0 0.0
      %1205 = vmatmul.mubr.f32.gmra.mrb[0].mxu0 %v1047
      %v1206 = vpop.f32.mrb[0].mxu0
      %v1207 = vadd.f32 0.0, %v1206
      %v1208 = vpop.f32.mrb[0].mxu0
      %1209 = vmatprep.mubr.f32.mxu0 0.0
      %1210 = vmatmul.mubr.f32.gmra.mrb[0].mxu0 %v1048
      %v1211 = vpop.f32.mrb[0].mxu0
      %v1212 = vadd.f32 0.0, %v1211
      %v1213 = vpop.f32.mrb[0].mxu0
      %1214 = vmatprep.mubr.f32.mxu0 0.0
      %1215 = vmatmul.mubr.f32.gmra.mrb[0].mxu0 %v1049
      %v1216 = vpop.f32.mrb[0].mxu0
      %v1217 = vadd.f32 0.0, %v1216
      %v1218 = vpop.f32.mrb[0].mxu0
      %1219 = vmatprep.mubr.f32.mxu0 0.0
      %1220 = vmatmul.mubr.f32.gmra.mrb[0].mxu0 %v1050
      %v1221 = vpop.f32.mrb[0].mxu0
      %v1222 = vadd.f32 0.0, %v1221
      %v1223 = vpop.f32.mrb[0].mxu0
      %1224 = vmatprep.mubr.f32.mxu0 0.0
      %1225 = vmatmul.mubr.f32.gmra.mrb[0].mxu0 %v1051
      %v1226 = vpop.f32.mrb[0].mxu0
      %v1227 = vadd.f32 0.0, %v1226
      %v1228 = vpop.f32.mrb[0].mxu0
      %1229 = vmatprep.mubr.f32.mxu0 0.0
      %1230 = vmatmul.mubr.f32.gmra.mrb[0].mxu0 %v1052
      %v1231 = vpop.f32.mrb[0].mxu0
      %v1232 = vadd.f32 0.0, %v1231
      %v1233 = vpop.f32.mrb[0].mxu0
      %1234 = vmatprep.mubr.f32.mxu0 0.0
      %1235 = vmatmul.mubr.f32.gmra.mrb[0].mxu0 %v1053
      %v1236 = vpop.f32.mrb[0].mxu0
      %v1237 = vadd.f32 0.0, %v1236
      %v1238 = vpop.f32.mrb[0].mxu0
      %1239 = vmatprep.mubr.f32.mxu0 0.0
      %1240 = vmatmul.mubr.f32.gmra.mrb[0].mxu0 %v1054
      %v1241 = vpop.f32.mrb[0].mxu0
      %v1242 = vadd.f32 0.0, %v1241
      %v1243 = vpop.f32.mrb[0].mxu0
      %1244 = vmatprep.mubr.f32.mxu0 0.0
      %1245 = vmatmul.mubr.f32.gmra.mrb[0].mxu0 %v1055
      %v1246 = vpop.f32.mrb[0].mxu0
      %v1247 = vadd.f32 0.0, %v1246
      %v1248 = vpop.f32.mrb[0].mxu0
      %1249 = vmatprep.mubr.f32.mxu0 0.0
      %1250 = vmatmul.mubr.f32.gmra.mrb[0].mxu0 %v1056
      %v1251 = vpop.f32.mrb[0].mxu0
      %v1252 = vadd.f32 0.0, %v1251
      %v1253 = vpop.f32.mrb[0].mxu0
      %1254 = vmatprep.mubr.f32.mxu0 0.0
      %1255 = vmatmul.mubr.f32.gmra.mrb[0].mxu0 %v1057
      %v1256 = vpop.f32.mrb[0].mxu0
      %v1257 = vadd.f32 0.0, %v1256
      %v1258 = vpop.f32.mrb[0].mxu0
      %1259 = vmatprep.mubr.f32.mxu0 0.0
      %1260 = vmatmul.mubr.f32.gmra.mrb[0].mxu0 %v1058
      %v1261 = vpop.f32.mrb[0].mxu0
      %v1262 = vadd.f32 0.0, %v1261
      %v1263 = vpop.f32.mrb[0].mxu0
      %1264 = vmatprep.mubr.f32.mxu0 0.0
      %1265 = vmatmul.mubr.f32.gmra.mrb[0].mxu0 %v1059
      %v1266 = vpop.f32.mrb[0].mxu0
      %v1267 = vadd.f32 0.0, %v1266
      %v1268 = vpop.f32.mrb[0].mxu0
      %1269 = vmatprep.mubr.f32.mxu0 0.0
      %1270 = vmatmul.mubr.f32.gmra.mrb[0].mxu0 %v1060
      %v1271 = vpop.f32.mrb[0].mxu0
      %v1272 = vadd.f32 0.0, %v1271
      %v1273 = vpop.f32.mrb[0].mxu0
      %1274 = vmatprep.mubr.f32.mxu0 0.0
      %1275 = vmatmul.mubr.f32.gmra.mrb[0].mxu0 %v1061
      %v1276 = vpop.f32.mrb[0].mxu0
      %v1277 = vadd.f32 0.0, %v1276
      %v1278 = vpop.f32.mrb[0].mxu0
      %1279 = vmatprep.mubr.f32.mxu0 0.0
      %1280 = vmatmul.mubr.f32.gmra.mrb[0].mxu0 %v1062
      %v1281 = vpop.f32.mrb[0].mxu0
      %v1282 = vadd.f32 0.0, %v1281
      %v1283 = vpop.f32.mrb[0].mxu0
      %1284 = vmatprep.mubr.f32.mxu0 0.0
      %1285 = vmatmul.mubr.f32.gmra.mrb[0].mxu0 %v1063
      %v1286 = vpop.f32.mrb[0].mxu0
      %v1287 = vadd.f32 0.0, %v1286
      %v1288 = vpop.f32.mrb[0].mxu0
      %1289 = vmatprep.mubr.f32.mxu0 0.0
      %1290 = vmatmul.mubr.f32.gmra.mrb[0].mxu0 %v1064
      %v1291 = vpop.f32.mrb[0].mxu0
      %v1292 = vadd.f32 0.0, %v1291
      %v1293 = vpop.f32.mrb[0].mxu0
      %1294 = vmatprep.mubr.f32.mxu0 0.0
      %1295 = vmatmul.mubr.f32.gmra.mrb[0].mxu0 %v1065
      %v1296 = vpop.f32.mrb[0].mxu0
      %v1297 = vadd.f32 0.0, %v1296
      %v1298 = vpop.f32.mrb[0].mxu0
      %1299 = vmatprep.mubr.f32.mxu0 0.0
      %1300 = vmatmul.mubr.f32.gmra.mrb[0].mxu0 %v1066
      %v1301 = vpop.f32.mrb[0].mxu0
      %v1302 = vadd.f32 0.0, %v1301
      %v1303 = vpop.f32.mrb[0].mxu0
      %1304 = vmatprep.mubr.f32.mxu0 0.0
      %1305 = vmatmul.mubr.f32.gmra.mrb[0].mxu0 %v1067
      %v1306 = vpop.f32.mrb[0].mxu0
      %v1307 = vadd.f32 0.0, %v1306
      %v1308 = vpop.f32.mrb[0].mxu0
      %1309 = vdwg.mxu0
      %v1310 = vadd.f32 %v1003, %v1152
      %v1311 = vadd.f32 %v1004, %v1157
      %v1312 = vadd.f32 %v1005, %v1162
      %v1313 = vadd.f32 %v1006, %v1167
      %v1314 = vadd.f32 %v1007, %v1172
      %v1315 = vadd.f32 %v1008, %v1177
      %v1316 = vadd.f32 %v1009, %v1182
      %v1317 = vadd.f32 %v1010, %v1187
      %v1318 = vadd.f32 %v1011, %v1192
      %v1319 = vadd.f32 %v1012, %v1197
      %v1320 = vadd.f32 %v1013, %v1202
      %v1321 = vadd.f32 %v1014, %v1207
      %v1322 = vadd.f32 %v1015, %v1212
      %v1323 = vadd.f32 %v1016, %v1217
      %v1324 = vadd.f32 %v1017, %v1222
      %v1325 = vadd.f32 %v1018, %v1227
      %v1326 = vadd.f32 %v1019, %v1232
      %v1327 = vadd.f32 %v1020, %v1237
      %v1328 = vadd.f32 %v1021, %v1242
      %v1329 = vadd.f32 %v1022, %v1247
      %v1330 = vadd.f32 %v1023, %v1252
      %v1331 = vadd.f32 %v1024, %v1257
      %v1332 = vadd.f32 %v1025, %v1262
      %v1333 = vadd.f32 %v1026, %v1267
      %v1334 = vadd.f32 %v1027, %v1272
      %v1335 = vadd.f32 %v1028, %v1277
      %v1336 = vadd.f32 %v1029, %v1282
      %v1337 = vadd.f32 %v1030, %v1287
      %v1338 = vadd.f32 %v1031, %v1292
      %v1339 = vadd.f32 %v1032, %v1297
      %v1340 = vadd.f32 %v1033, %v1302
      %v1341 = vadd.f32 %v1034, %v1307
      %v1342 = vld [vmem:[%s1035 + $0x1] sm:$0xff]
      %v1343 = vld [vmem:[%s1035 + $0x9] sm:$0xff]
      %v1344 = vld [vmem:[%s1035 + $0x19] sm:$0xff]
      %v1345 = vld [vmem:[%s1035 + $0x21] sm:$0xff]
      %v1346 = vld [vmem:[%s1035 + $0x31] sm:$0xff]
      %v1347 = vld [vmem:[%s1035 + $0x39] sm:$0xff]
      %v1348 = vld [vmem:[%s1035 + $0x49] sm:$0xff]
      %v1349 = vld [vmem:[%s1035 + $0x51] sm:$0xff]
      %v1350 = vld [vmem:[%s1035 + $0x61] sm:$0xff]
      %v1351 = vld [vmem:[%s1035 + $0x69] sm:$0xff]
      %v1352 = vld [vmem:[%s1035 + $0x79] sm:$0xff]
      %v1353 = vld [vmem:[%s1035 + $0x81] sm:$0xff]
      %v1354 = vld [vmem:[%s1035 + $0x91] sm:$0xff]
      %v1355 = vld [vmem:[%s1035 + $0x99] sm:$0xff]
      %v1356 = vld [vmem:[%s1035 + $0xa9] sm:$0xff]
      %v1357 = vld [vmem:[%s1035 + $0xb1] sm:$0xff]
      %v1358 = vld [vmem:[%s1035 + $0xc1] sm:$0xff]
      %v1359 = vld [vmem:[%s1035 + $0xc9] sm:$0xff]
      %v1360 = vld [vmem:[%s1035 + $0xd9] sm:$0xff]
      %v1361 = vld [vmem:[%s1035 + $0xe1] sm:$0xff]
      %v1362 = vld [vmem:[%s1035 + $0xf1] sm:$0xff]
      %v1363 = vld [vmem:[%s1035 + $0xf9] sm:$0xff]
      %v1364 = vld [vmem:[%s1035 + $0x109] sm:$0xff]
      %v1365 = vld [vmem:[%s1035 + $0x111] sm:$0xff]
      %v1366 = vld [vmem:[%s1035 + $0x121] sm:$0xff]
      %v1367 = vld [vmem:[%s1035 + $0x129] sm:$0xff]
      %v1368 = vld [vmem:[%s1035 + $0x139] sm:$0xff]
      %v1369 = vld [vmem:[%s1035 + $0x141] sm:$0xff]
      %v1370 = vld [vmem:[%s1035 + $0x151] sm:$0xff]
      %v1371 = vld [vmem:[%s1035 + $0x159] sm:$0xff]
      %v1372 = vld [vmem:[%s1035 + $0x169] sm:$0xff]
      %v1373 = vld [vmem:[%s1035 + $0x171] sm:$0xff]
      %s1374 = scalar_lea.vmem %s1, 512
      %v1375 = vld [vmem:[%s1374] sm:$0xff]
      %v1376 = vld [vmem:[%s1374 + $0x8] sm:$0xff]
      %v1377 = vld [vmem:[%s1374 + $0x10] sm:$0xff]
      %v1378 = vld [vmem:[%s1374 + $0x18] sm:$0xff]
      %v1379 = vld [vmem:[%s1374 + $0x20] sm:$0xff]
      %v1380 = vld [vmem:[%s1374 + $0x28] sm:$0xff]
      %v1381 = vld [vmem:[%s1374 + $0x30] sm:$0xff]
      %v1382 = vld [vmem:[%s1374 + $0x38] sm:$0xff]
      %v1383 = vld [vmem:[%s1374 + $0x40] sm:$0xff]
      %v1384 = vld [vmem:[%s1374 + $0x48] sm:$0xff]
      %v1385 = vld [vmem:[%s1374 + $0x50] sm:$0xff]
      %v1386 = vld [vmem:[%s1374 + $0x58] sm:$0xff]
      %v1387 = vld [vmem:[%s1374 + $0x60] sm:$0xff]
      %v1388 = vld [vmem:[%s1374 + $0x68] sm:$0xff]
      %v1389 = vld [vmem:[%s1374 + $0x70] sm:$0xff]
      %v1390 = vld [vmem:[%s1374 + $0x78] sm:$0xff]
      %1391 = vmatprep.subr.mxu0 0.0
      %1392 = vmatpush1.msra.mxu0 %v1375
      %1393 = vmatprep.subr.mxu0 0.0
      %1394 = vmatpush1.msra.mxu0 %v1376
      %1395 = vmatprep.subr.mxu0 0.0
      %1396 = vmatpush1.msra.mxu0 %v1377
      %1397 = vmatprep.subr.mxu0 0.0
      %1398 = vmatpush1.msra.mxu0 %v1378
      %1399 = vmatprep.subr.mxu0 0.0
      %1400 = vmatpush1.msra.mxu0 %v1379
      %1401 = vmatprep.subr.mxu0 0.0
      %1402 = vmatpush1.msra.mxu0 %v1380
      %1403 = vmatprep.subr.mxu0 0.0
      %1404 = vmatpush1.msra.mxu0 %v1381
      %1405 = vmatprep.subr.mxu0 0.0
      %1406 = vmatpush1.msra.mxu0 %v1382
      %1407 = vmatprep.subr.mxu0 0.0
      %1408 = vmatpush1.msra.mxu0 %v1383
      %1409 = vmatprep.subr.mxu0 0.0
      %1410 = vmatpush1.msra.mxu0 %v1384
      %1411 = vmatprep.subr.mxu0 0.0
      %1412 = vmatpush1.msra.mxu0 %v1385
      %1413 = vmatprep.subr.mxu0 0.0
      %1414 = vmatpush1.msra.mxu0 %v1386
      %1415 = vmatprep.subr.mxu0 0.0
      %1416 = vmatpush1.msra.mxu0 %v1387
      %1417 = vmatprep.subr.mxu0 0.0
      %1418 = vmatpush1.msra.mxu0 %v1388
      %1419 = vmatprep.subr.mxu0 0.0
      %1420 = vmatpush1.msra.mxu0 %v1389
      %1421 = vmatprep.subr.mxu0 0.0
      %1422 = vmatpush1.msra.mxu0 %v1390
      %1423 = vmatprep.subr.mxu0 0.0
      %1424 = vmatpush1.msra.mxu0 0.0
      %1425 = vmatprep.subr.mxu0 0.0
      %1426 = vmatpush1.msra.mxu0 0.0
      %1427 = vmatprep.subr.mxu0 0.0
      %1428 = vmatpush1.msra.mxu0 0.0
      %1429 = vmatprep.subr.mxu0 0.0
      %1430 = vmatpush1.msra.mxu0 0.0
      %1431 = vmatprep.subr.mxu0 0.0
      %1432 = vmatpush1.msra.mxu0 0.0
      %1433 = vmatprep.subr.mxu0 0.0
      %1434 = vmatpush1.msra.mxu0 0.0
      %1435 = vmatprep.subr.mxu0 0.0
      %1436 = vmatpush1.msra.mxu0 0.0
      %1437 = vmatprep.subr.mxu0 0.0
      %1438 = vmatpush1.msra.mxu0 0.0
      %1439 = vmatprep.subr.mxu0 0.0
      %1440 = vmatpush1.msra.mxu0 0.0
      %1441 = vmatprep.subr.mxu0 0.0
      %1442 = vmatpush1.msra.mxu0 0.0
      %1443 = vmatprep.subr.mxu0 0.0
      %1444 = vmatpush1.msra.mxu0 0.0
      %1445 = vmatprep.subr.mxu0 0.0
      %1446 = vmatpush1.msra.mxu0 0.0
      %1447 = vmatprep.subr.mxu0 0.0
      %1448 = vmatpush1.msra.mxu0 0.0
      %1449 = vmatprep.subr.mxu0 0.0
      %1450 = vmatpush1.msra.mxu0 0.0
      %1451 = vmatprep.subr.mxu0 0.0
      %1452 = vmatpush1.msra.mxu0 0.0
      %1453 = vmatprep.subr.mxu0 0.0
      %1454 = vmatpush1.msra.mxu0 0.0
      %1455 = vmatprep.mubr.f32.mxu0 0.0
      %1456 = vmatmul.mubr.f32.gmra.mrb[0].mxu0 %v1342
      %v1457 = vpop.f32.mrb[0].mxu0
      %v1458 = vadd.f32 0.0, %v1457
      %v1459 = vpop.f32.mrb[0].mxu0
      %1460 = vmatprep.mubr.f32.mxu0 0.0
      %1461 = vmatmul.mubr.f32.gmra.mrb[0].mxu0 %v1343
      %v1462 = vpop.f32.mrb[0].mxu0
      %v1463 = vadd.f32 0.0, %v1462
      %v1464 = vpop.f32.mrb[0].mxu0
      %1465 = vmatprep.mubr.f32.mxu0 0.0
      %1466 = vmatmul.mubr.f32.gmra.mrb[0].mxu0 %v1344
      %v1467 = vpop.f32.mrb[0].mxu0
      %v1468 = vadd.f32 0.0, %v1467
      %v1469 = vpop.f32.mrb[0].mxu0
      %1470 = vmatprep.mubr.f32.mxu0 0.0
      %1471 = vmatmul.mubr.f32.gmra.mrb[0].mxu0 %v1345
      %v1472 = vpop.f32.mrb[0].mxu0
      %v1473 = vadd.f32 0.0, %v1472
      %v1474 = vpop.f32.mrb[0].mxu0
      %1475 = vmatprep.mubr.f32.mxu0 0.0
      %1476 = vmatmul.mubr.f32.gmra.mrb[0].mxu0 %v1346
      %v1477 = vpop.f32.mrb[0].mxu0
      %v1478 = vadd.f32 0.0, %v1477
      %v1479 = vpop.f32.mrb[0].mxu0
      %1480 = vmatprep.mubr.f32.mxu0 0.0
      %1481 = vmatmul.mubr.f32.gmra.mrb[0].mxu0 %v1347
      %v1482 = vpop.f32.mrb[0].mxu0
      %v1483 = vadd.f32 0.0, %v1482
      %v1484 = vpop.f32.mrb[0].mxu0
      %1485 = vmatprep.mubr.f32.mxu0 0.0
      %1486 = vmatmul.mubr.f32.gmra.mrb[0].mxu0 %v1348
      %v1487 = vpop.f32.mrb[0].mxu0
      %v1488 = vadd.f32 0.0, %v1487
      %v1489 = vpop.f32.mrb[0].mxu0
      %1490 = vmatprep.mubr.f32.mxu0 0.0
      %1491 = vmatmul.mubr.f32.gmra.mrb[0].mxu0 %v1349
      %v1492 = vpop.f32.mrb[0].mxu0
      %v1493 = vadd.f32 0.0, %v1492
      %v1494 = vpop.f32.mrb[0].mxu0
      %1495 = vmatprep.mubr.f32.mxu0 0.0
      %1496 = vmatmul.mubr.f32.gmra.mrb[0].mxu0 %v1350
      %v1497 = vpop.f32.mrb[0].mxu0
      %v1498 = vadd.f32 0.0, %v1497
      %v1499 = vpop.f32.mrb[0].mxu0
      %1500 = vmatprep.mubr.f32.mxu0 0.0
      %1501 = vmatmul.mubr.f32.gmra.mrb[0].mxu0 %v1351
      %v1502 = vpop.f32.mrb[0].mxu0
      %v1503 = vadd.f32 0.0, %v1502
      %v1504 = vpop.f32.mrb[0].mxu0
      %1505 = vmatprep.mubr.f32.mxu0 0.0
      %1506 = vmatmul.mubr.f32.gmra.mrb[0].mxu0 %v1352
      %v1507 = vpop.f32.mrb[0].mxu0
      %v1508 = vadd.f32 0.0, %v1507
      %v1509 = vpop.f32.mrb[0].mxu0
      %1510 = vmatprep.mubr.f32.mxu0 0.0
      %1511 = vmatmul.mubr.f32.gmra.mrb[0].mxu0 %v1353
      %v1512 = vpop.f32.mrb[0].mxu0
      %v1513 = vadd.f32 0.0, %v1512
      %v1514 = vpop.f32.mrb[0].mxu0
      %1515 = vmatprep.mubr.f32.mxu0 0.0
      %1516 = vmatmul.mubr.f32.gmra.mrb[0].mxu0 %v1354
      %v1517 = vpop.f32.mrb[0].mxu0
      %v1518 = vadd.f32 0.0, %v1517
      %v1519 = vpop.f32.mrb[0].mxu0
      %1520 = vmatprep.mubr.f32.mxu0 0.0
      %1521 = vmatmul.mubr.f32.gmra.mrb[0].mxu0 %v1355
      %v1522 = vpop.f32.mrb[0].mxu0
      %v1523 = vadd.f32 0.0, %v1522
      %v1524 = vpop.f32.mrb[0].mxu0
      %1525 = vmatprep.mubr.f32.mxu0 0.0
      %1526 = vmatmul.mubr.f32.gmra.mrb[0].mxu0 %v1356
      %v1527 = vpop.f32.mrb[0].mxu0
      %v1528 = vadd.f32 0.0, %v1527
      %v1529 = vpop.f32.mrb[0].mxu0
      %1530 = vmatprep.mubr.f32.mxu0 0.0
      %1531 = vmatmul.mubr.f32.gmra.mrb[0].mxu0 %v1357
      %v1532 = vpop.f32.mrb[0].mxu0
      %v1533 = vadd.f32 0.0, %v1532
      %v1534 = vpop.f32.mrb[0].mxu0
      %1535 = vmatprep.mubr.f32.mxu0 0.0
      %1536 = vmatmul.mubr.f32.gmra.mrb[0].mxu0 %v1358
      %v1537 = vpop.f32.mrb[0].mxu0
      %v1538 = vadd.f32 0.0, %v1537
      %v1539 = vpop.f32.mrb[0].mxu0
      %1540 = vmatprep.mubr.f32.mxu0 0.0
      %1541 = vmatmul.mubr.f32.gmra.mrb[0].mxu0 %v1359
      %v1542 = vpop.f32.mrb[0].mxu0
      %v1543 = vadd.f32 0.0, %v1542
      %v1544 = vpop.f32.mrb[0].mxu0
      %1545 = vmatprep.mubr.f32.mxu0 0.0
      %1546 = vmatmul.mubr.f32.gmra.mrb[0].mxu0 %v1360
      %v1547 = vpop.f32.mrb[0].mxu0
      %v1548 = vadd.f32 0.0, %v1547
      %v1549 = vpop.f32.mrb[0].mxu0
      %1550 = vmatprep.mubr.f32.mxu0 0.0
      %1551 = vmatmul.mubr.f32.gmra.mrb[0].mxu0 %v1361
      %v1552 = vpop.f32.mrb[0].mxu0
      %v1553 = vadd.f32 0.0, %v1552
      %v1554 = vpop.f32.mrb[0].mxu0
      %1555 = vmatprep.mubr.f32.mxu0 0.0
      %1556 = vmatmul.mubr.f32.gmra.mrb[0].mxu0 %v1362
      %v1557 = vpop.f32.mrb[0].mxu0
      %v1558 = vadd.f32 0.0, %v1557
      %v1559 = vpop.f32.mrb[0].mxu0
      %1560 = vmatprep.mubr.f32.mxu0 0.0
      %1561 = vmatmul.mubr.f32.gmra.mrb[0].mxu0 %v1363
      %v1562 = vpop.f32.mrb[0].mxu0
      %v1563 = vadd.f32 0.0, %v1562
      %v1564 = vpop.f32.mrb[0].mxu0
      %1565 = vmatprep.mubr.f32.mxu0 0.0
      %1566 = vmatmul.mubr.f32.gmra.mrb[0].mxu0 %v1364
      %v1567 = vpop.f32.mrb[0].mxu0
      %v1568 = vadd.f32 0.0, %v1567
      %v1569 = vpop.f32.mrb[0].mxu0
      %1570 = vmatprep.mubr.f32.mxu0 0.0
      %1571 = vmatmul.mubr.f32.gmra.mrb[0].mxu0 %v1365
      %v1572 = vpop.f32.mrb[0].mxu0
      %v1573 = vadd.f32 0.0, %v1572
      %v1574 = vpop.f32.mrb[0].mxu0
      %1575 = vmatprep.mubr.f32.mxu0 0.0
      %1576 = vmatmul.mubr.f32.gmra.mrb[0].mxu0 %v1366
      %v1577 = vpop.f32.mrb[0].mxu0
      %v1578 = vadd.f32 0.0, %v1577
      %v1579 = vpop.f32.mrb[0].mxu0
      %1580 = vmatprep.mubr.f32.mxu0 0.0
      %1581 = vmatmul.mubr.f32.gmra.mrb[0].mxu0 %v1367
      %v1582 = vpop.f32.mrb[0].mxu0
      %v1583 = vadd.f32 0.0, %v1582
      %v1584 = vpop.f32.mrb[0].mxu0
      %1585 = vmatprep.mubr.f32.mxu0 0.0
      %1586 = vmatmul.mubr.f32.gmra.mrb[0].mxu0 %v1368
      %v1587 = vpop.f32.mrb[0].mxu0
      %v1588 = vadd.f32 0.0, %v1587
      %v1589 = vpop.f32.mrb[0].mxu0
      %1590 = vmatprep.mubr.f32.mxu0 0.0
      %1591 = vmatmul.mubr.f32.gmra.mrb[0].mxu0 %v1369
      %v1592 = vpop.f32.mrb[0].mxu0
      %v1593 = vadd.f32 0.0, %v1592
      %v1594 = vpop.f32.mrb[0].mxu0
      %1595 = vmatprep.mubr.f32.mxu0 0.0
      %1596 = vmatmul.mubr.f32.gmra.mrb[0].mxu0 %v1370
      %v1597 = vpop.f32.mrb[0].mxu0
      %v1598 = vadd.f32 0.0, %v1597
      %v1599 = vpop.f32.mrb[0].mxu0
      %1600 = vmatprep.mubr.f32.mxu0 0.0
      %1601 = vmatmul.mubr.f32.gmra.mrb[0].mxu0 %v1371
      %v1602 = vpop.f32.mrb[0].mxu0
      %v1603 = vadd.f32 0.0, %v1602
      %v1604 = vpop.f32.mrb[0].mxu0
      %1605 = vmatprep.mubr.f32.mxu0 0.0
      %1606 = vmatmul.mubr.f32.gmra.mrb[0].mxu0 %v1372
      %v1607 = vpop.f32.mrb[0].mxu0
      %v1608 = vadd.f32 0.0, %v1607
      %v1609 = vpop.f32.mrb[0].mxu0
      %1610 = vmatprep.mubr.f32.mxu0 0.0
      %1611 = vmatmul.mubr.f32.gmra.mrb[0].mxu0 %v1373
      %v1612 = vpop.f32.mrb[0].mxu0
      %v1613 = vadd.f32 0.0, %v1612
      %v1614 = vpop.f32.mrb[0].mxu0
      %1615 = vdwg.mxu0
      %v1616 = vadd.f32 %v1310, %v1458
      %v1617 = vadd.f32 %v1311, %v1463
      %v1618 = vadd.f32 %v1312, %v1468
      %v1619 = vadd.f32 %v1313, %v1473
      %v1620 = vadd.f32 %v1314, %v1478
      %v1621 = vadd.f32 %v1315, %v1483
      %v1622 = vadd.f32 %v1316, %v1488
      %v1623 = vadd.f32 %v1317, %v1493
      %v1624 = vadd.f32 %v1318, %v1498
      %v1625 = vadd.f32 %v1319, %v1503
      %v1626 = vadd.f32 %v1320, %v1508
      %v1627 = vadd.f32 %v1321, %v1513
      %v1628 = vadd.f32 %v1322, %v1518
      %v1629 = vadd.f32 %v1323, %v1523
      %v1630 = vadd.f32 %v1324, %v1528
      %v1631 = vadd.f32 %v1325, %v1533
      %v1632 = vadd.f32 %v1326, %v1538
      %v1633 = vadd.f32 %v1327, %v1543
      %v1634 = vadd.f32 %v1328, %v1548
      %v1635 = vadd.f32 %v1329, %v1553
      %v1636 = vadd.f32 %v1330, %v1558
      %v1637 = vadd.f32 %v1331, %v1563
      %v1638 = vadd.f32 %v1332, %v1568
      %v1639 = vadd.f32 %v1333, %v1573
      %v1640 = vadd.f32 %v1334, %v1578
      %v1641 = vadd.f32 %v1335, %v1583
      %v1642 = vadd.f32 %v1336, %v1588
      %v1643 = vadd.f32 %v1337, %v1593
      %v1644 = vadd.f32 %v1338, %v1598
      %v1645 = vadd.f32 %v1339, %v1603
      %v1646 = vadd.f32 %v1340, %v1608
      %v1647 = vadd.f32 %v1341, %v1613
      %v1648 = vld [vmem:[%s1035 + $0x2] sm:$0xff]
      %v1649 = vld [vmem:[%s1035 + $0xa] sm:$0xff]
      %v1650 = vld [vmem:[%s1035 + $0x1a] sm:$0xff]
      %v1651 = vld [vmem:[%s1035 + $0x22] sm:$0xff]
      %v1652 = vld [vmem:[%s1035 + $0x32] sm:$0xff]
      %v1653 = vld [vmem:[%s1035 + $0x3a] sm:$0xff]
      %v1654 = vld [vmem:[%s1035 + $0x4a] sm:$0xff]
      %v1655 = vld [vmem:[%s1035 + $0x52] sm:$0xff]
      %v1656 = vld [vmem:[%s1035 + $0x62] sm:$0xff]
      %v1657 = vld [vmem:[%s1035 + $0x6a] sm:$0xff]
      %v1658 = vld [vmem:[%s1035 + $0x7a] sm:$0xff]
      %v1659 = vld [vmem:[%s1035 + $0x82] sm:$0xff]
      %v1660 = vld [vmem:[%s1035 + $0x92] sm:$0xff]
      %v1661 = vld [vmem:[%s1035 + $0x9a] sm:$0xff]
      %v1662 = vld [vmem:[%s1035 + $0xaa] sm:$0xff]
      %v1663 = vld [vmem:[%s1035 + $0xb2] sm:$0xff]
      %v1664 = vld [vmem:[%s1035 + $0xc2] sm:$0xff]
      %v1665 = vld [vmem:[%s1035 + $0xca] sm:$0xff]
      %v1666 = vld [vmem:[%s1035 + $0xda] sm:$0xff]
      %v1667 = vld [vmem:[%s1035 + $0xe2] sm:$0xff]
      %v1668 = vld [vmem:[%s1035 + $0xf2] sm:$0xff]
      %v1669 = vld [vmem:[%s1035 + $0xfa] sm:$0xff]
      %v1670 = vld [vmem:[%s1035 + $0x10a] sm:$0xff]
      %v1671 = vld [vmem:[%s1035 + $0x112] sm:$0xff]
      %v1672 = vld [vmem:[%s1035 + $0x122] sm:$0xff]
      %v1673 = vld [vmem:[%s1035 + $0x12a] sm:$0xff]
      %v1674 = vld [vmem:[%s1035 + $0x13a] sm:$0xff]
      %v1675 = vld [vmem:[%s1035 + $0x142] sm:$0xff]
      %v1676 = vld [vmem:[%s1035 + $0x152] sm:$0xff]
      %v1677 = vld [vmem:[%s1035 + $0x15a] sm:$0xff]
      %v1678 = vld [vmem:[%s1035 + $0x16a] sm:$0xff]
      %v1679 = vld [vmem:[%s1035 + $0x172] sm:$0xff]
      %s1680 = scalar_lea.vmem %s1, 640
      %v1681 = vld [vmem:[%s1680] sm:$0xff]
      %v1682 = vld [vmem:[%s1680 + $0x8] sm:$0xff]
      %v1683 = vld [vmem:[%s1680 + $0x10] sm:$0xff]
      %v1684 = vld [vmem:[%s1680 + $0x18] sm:$0xff]
      %v1685 = vld [vmem:[%s1680 + $0x20] sm:$0xff]
      %v1686 = vld [vmem:[%s1680 + $0x28] sm:$0xff]
      %v1687 = vld [vmem:[%s1680 + $0x30] sm:$0xff]
      %v1688 = vld [vmem:[%s1680 + $0x38] sm:$0xff]
      %v1689 = vld [vmem:[%s1680 + $0x40] sm:$0xff]
      %v1690 = vld [vmem:[%s1680 + $0x48] sm:$0xff]
      %v1691 = vld [vmem:[%s1680 + $0x50] sm:$0xff]
      %v1692 = vld [vmem:[%s1680 + $0x58] sm:$0xff]
      %v1693 = vld [vmem:[%s1680 + $0x60] sm:$0xff]
      %v1694 = vld [vmem:[%s1680 + $0x68] sm:$0xff]
      %v1695 = vld [vmem:[%s1680 + $0x70] sm:$0xff]
      %v1696 = vld [vmem:[%s1680 + $0x78] sm:$0xff]
      %1697 = vmatprep.subr.mxu0 0.0
      %1698 = vmatpush1.msra.mxu0 %v1681
      %1699 = vmatprep.subr.mxu0 0.0
      %1700 = vmatpush1.msra.mxu0 %v1682
      %1701 = vmatprep.subr.mxu0 0.0
      %1702 = vmatpush1.msra.mxu0 %v1683
      %1703 = vmatprep.subr.mxu0 0.0
      %1704 = vmatpush1.msra.mxu0 %v1684
      %1705 = vmatprep.subr.mxu0 0.0
      %1706 = vmatpush1.msra.mxu0 %v1685
      %1707 = vmatprep.subr.mxu0 0.0
      %1708 = vmatpush1.msra.mxu0 %v1686
      %1709 = vmatprep.subr.mxu0 0.0
      %1710 = vmatpush1.msra.mxu0 %v1687
      %1711 = vmatprep.subr.mxu0 0.0
      %1712 = vmatpush1.msra.mxu0 %v1688
      %1713 = vmatprep.subr.mxu0 0.0
      %1714 = vmatpush1.msra.mxu0 %v1689
      %1715 = vmatprep.subr.mxu0 0.0
      %1716 = vmatpush1.msra.mxu0 %v1690
      %1717 = vmatprep.subr.mxu0 0.0
      %1718 = vmatpush1.msra.mxu0 %v1691
      %1719 = vmatprep.subr.mxu0 0.0
      %1720 = vmatpush1.msra.mxu0 %v1692
      %1721 = vmatprep.subr.mxu0 0.0
      %1722 = vmatpush1.msra.mxu0 %v1693
      %1723 = vmatprep.subr.mxu0 0.0
      %1724 = vmatpush1.msra.mxu0 %v1694
      %1725 = vmatprep.subr.mxu0 0.0
      %1726 = vmatpush1.msra.mxu0 %v1695
      %1727 = vmatprep.subr.mxu0 0.0
      %1728 = vmatpush1.msra.mxu0 %v1696
      %1729 = vmatprep.subr.mxu0 0.0
      %1730 = vmatpush1.msra.mxu0 0.0
      %1731 = vmatprep.subr.mxu0 0.0
      %1732 = vmatpush1.msra.mxu0 0.0
      %1733 = vmatprep.subr.mxu0 0.0
      %1734 = vmatpush1.msra.mxu0 0.0
      %1735 = vmatprep.subr.mxu0 0.0
      %1736 = vmatpush1.msra.mxu0 0.0
      %1737 = vmatprep.subr.mxu0 0.0
      %1738 = vmatpush1.msra.mxu0 0.0
      %1739 = vmatprep.subr.mxu0 0.0
      %1740 = vmatpush1.msra.mxu0 0.0
      %1741 = vmatprep.subr.mxu0 0.0
      %1742 = vmatpush1.msra.mxu0 0.0
      %1743 = vmatprep.subr.mxu0 0.0
      %1744 = vmatpush1.msra.mxu0 0.0
      %1745 = vmatprep.subr.mxu0 0.0
      %1746 = vmatpush1.msra.mxu0 0.0
      %1747 = vmatprep.subr.mxu0 0.0
      %1748 = vmatpush1.msra.mxu0 0.0
      %1749 = vmatprep.subr.mxu0 0.0
      %1750 = vmatpush1.msra.mxu0 0.0
      %1751 = vmatprep.subr.mxu0 0.0
      %1752 = vmatpush1.msra.mxu0 0.0
      %1753 = vmatprep.subr.mxu0 0.0
      %1754 = vmatpush1.msra.mxu0 0.0
      %1755 = vmatprep.subr.mxu0 0.0
      %1756 = vmatpush1.msra.mxu0 0.0
      %1757 = vmatprep.subr.mxu0 0.0
      %1758 = vmatpush1.msra.mxu0 0.0
      %1759 = vmatprep.subr.mxu0 0.0
      %1760 = vmatpush1.msra.mxu0 0.0
      %1761 = vmatprep.mubr.f32.mxu0 0.0
      %1762 = vmatmul.mubr.f32.gmra.mrb[0].mxu0 %v1648
      %v1763 = vpop.f32.mrb[0].mxu0
      %v1764 = vadd.f32 0.0, %v1763
      %v1765 = vpop.f32.mrb[0].mxu0
      %1766 = vmatprep.mubr.f32.mxu0 0.0
      %1767 = vmatmul.mubr.f32.gmra.mrb[0].mxu0 %v1649
      %v1768 = vpop.f32.mrb[0].mxu0
      %v1769 = vadd.f32 0.0, %v1768
      %v1770 = vpop.f32.mrb[0].mxu0
      %1771 = vmatprep.mubr.f32.mxu0 0.0
      %1772 = vmatmul.mubr.f32.gmra.mrb[0].mxu0 %v1650
      %v1773 = vpop.f32.mrb[0].mxu0
      %v1774 = vadd.f32 0.0, %v1773
      %v1775 = vpop.f32.mrb[0].mxu0
      %1776 = vmatprep.mubr.f32.mxu0 0.0
      %1777 = vmatmul.mubr.f32.gmra.mrb[0].mxu0 %v1651
      %v1778 = vpop.f32.mrb[0].mxu0
      %v1779 = vadd.f32 0.0, %v1778
      %v1780 = vpop.f32.mrb[0].mxu0
      %1781 = vmatprep.mubr.f32.mxu0 0.0
      %1782 = vmatmul.mubr.f32.gmra.mrb[0].mxu0 %v1652
      %v1783 = vpop.f32.mrb[0].mxu0
      %v1784 = vadd.f32 0.0, %v1783
      %v1785 = vpop.f32.mrb[0].mxu0
      %1786 = vmatprep.mubr.f32.mxu0 0.0
      %1787 = vmatmul.mubr.f32.gmra.mrb[0].mxu0 %v1653
      %v1788 = vpop.f32.mrb[0].mxu0
      %v1789 = vadd.f32 0.0, %v1788
      %v1790 = vpop.f32.mrb[0].mxu0
      %1791 = vmatprep.mubr.f32.mxu0 0.0
      %1792 = vmatmul.mubr.f32.gmra.mrb[0].mxu0 %v1654
      %v1793 = vpop.f32.mrb[0].mxu0
      %v1794 = vadd.f32 0.0, %v1793
      %v1795 = vpop.f32.mrb[0].mxu0
      %1796 = vmatprep.mubr.f32.mxu0 0.0
      %1797 = vmatmul.mubr.f32.gmra.mrb[0].mxu0 %v1655
      %v1798 = vpop.f32.mrb[0].mxu0
      %v1799 = vadd.f32 0.0, %v1798
      %v1800 = vpop.f32.mrb[0].mxu0
      %1801 = vmatprep.mubr.f32.mxu0 0.0
      %1802 = vmatmul.mubr.f32.gmra.mrb[0].mxu0 %v1656
      %v1803 = vpop.f32.mrb[0].mxu0
      %v1804 = vadd.f32 0.0, %v1803
      %v1805 = vpop.f32.mrb[0].mxu0
      %1806 = vmatprep.mubr.f32.mxu0 0.0
      %1807 = vmatmul.mubr.f32.gmra.mrb[0].mxu0 %v1657
      %v1808 = vpop.f32.mrb[0].mxu0
      %v1809 = vadd.f32 0.0, %v1808
      %v1810 = vpop.f32.mrb[0].mxu0
      %1811 = vmatprep.mubr.f32.mxu0 0.0
      %1812 = vmatmul.mubr.f32.gmra.mrb[0].mxu0 %v1658
      %v1813 = vpop.f32.mrb[0].mxu0
      %v1814 = vadd.f32 0.0, %v1813
      %v1815 = vpop.f32.mrb[0].mxu0
      %1816 = vmatprep.mubr.f32.mxu0 0.0
      %1817 = vmatmul.mubr.f32.gmra.mrb[0].mxu0 %v1659
      %v1818 = vpop.f32.mrb[0].mxu0
      %v1819 = vadd.f32 0.0, %v1818
      %v1820 = vpop.f32.mrb[0].mxu0
      %1821 = vmatprep.mubr.f32.mxu0 0.0
      %1822 = vmatmul.mubr.f32.gmra.mrb[0].mxu0 %v1660
      %v1823 = vpop.f32.mrb[0].mxu0
      %v1824 = vadd.f32 0.0, %v1823
      %v1825 = vpop.f32.mrb[0].mxu0
      %1826 = vmatprep.mubr.f32.mxu0 0.0
      %1827 = vmatmul.mubr.f32.gmra.mrb[0].mxu0 %v1661
      %v1828 = vpop.f32.mrb[0].mxu0
      %v1829 = vadd.f32 0.0, %v1828
      %v1830 = vpop.f32.mrb[0].mxu0
      %1831 = vmatprep.mubr.f32.mxu0 0.0
      %1832 = vmatmul.mubr.f32.gmra.mrb[0].mxu0 %v1662
      %v1833 = vpop.f32.mrb[0].mxu0
      %v1834 = vadd.f32 0.0, %v1833
      %v1835 = vpop.f32.mrb[0].mxu0
      %1836 = vmatprep.mubr.f32.mxu0 0.0
      %1837 = vmatmul.mubr.f32.gmra.mrb[0].mxu0 %v1663
      %v1838 = vpop.f32.mrb[0].mxu0
      %v1839 = vadd.f32 0.0, %v1838
      %v1840 = vpop.f32.mrb[0].mxu0
      %1841 = vmatprep.mubr.f32.mxu0 0.0
      %1842 = vmatmul.mubr.f32.gmra.mrb[0].mxu0 %v1664
      %v1843 = vpop.f32.mrb[0].mxu0
      %v1844 = vadd.f32 0.0, %v1843
      %v1845 = vpop.f32.mrb[0].mxu0
      %1846 = vmatprep.mubr.f32.mxu0 0.0
      %1847 = vmatmul.mubr.f32.gmra.mrb[0].mxu0 %v1665
      %v1848 = vpop.f32.mrb[0].mxu0
      %v1849 = vadd.f32 0.0, %v1848
      %v1850 = vpop.f32.mrb[0].mxu0
      %1851 = vmatprep.mubr.f32.mxu0 0.0
      %1852 = vmatmul.mubr.f32.gmra.mrb[0].mxu0 %v1666
      %v1853 = vpop.f32.mrb[0].mxu0
      %v1854 = vadd.f32 0.0, %v1853
      %v1855 = vpop.f32.mrb[0].mxu0
      %1856 = vmatprep.mubr.f32.mxu0 0.0
      %1857 = vmatmul.mubr.f32.gmra.mrb[0].mxu0 %v1667
      %v1858 = vpop.f32.mrb[0].mxu0
      %v1859 = vadd.f32 0.0, %v1858
      %v1860 = vpop.f32.mrb[0].mxu0
      %1861 = vmatprep.mubr.f32.mxu0 0.0
      %1862 = vmatmul.mubr.f32.gmra.mrb[0].mxu0 %v1668
      %v1863 = vpop.f32.mrb[0].mxu0
      %v1864 = vadd.f32 0.0, %v1863
      %v1865 = vpop.f32.mrb[0].mxu0
      %1866 = vmatprep.mubr.f32.mxu0 0.0
      %1867 = vmatmul.mubr.f32.gmra.mrb[0].mxu0 %v1669
      %v1868 = vpop.f32.mrb[0].mxu0
      %v1869 = vadd.f32 0.0, %v1868
      %v1870 = vpop.f32.mrb[0].mxu0
      %1871 = vmatprep.mubr.f32.mxu0 0.0
      %1872 = vmatmul.mubr.f32.gmra.mrb[0].mxu0 %v1670
      %v1873 = vpop.f32.mrb[0].mxu0
      %v1874 = vadd.f32 0.0, %v1873
      %v1875 = vpop.f32.mrb[0].mxu0
      %1876 = vmatprep.mubr.f32.mxu0 0.0
      %1877 = vmatmul.mubr.f32.gmra.mrb[0].mxu0 %v1671
      %v1878 = vpop.f32.mrb[0].mxu0
      %v1879 = vadd.f32 0.0, %v1878
      %v1880 = vpop.f32.mrb[0].mxu0
      %1881 = vmatprep.mubr.f32.mxu0 0.0
      %1882 = vmatmul.mubr.f32.gmra.mrb[0].mxu0 %v1672
      %v1883 = vpop.f32.mrb[0].mxu0
      %v1884 = vadd.f32 0.0, %v1883
      %v1885 = vpop.f32.mrb[0].mxu0
      %1886 = vmatprep.mubr.f32.mxu0 0.0
      %1887 = vmatmul.mubr.f32.gmra.mrb[0].mxu0 %v1673
      %v1888 = vpop.f32.mrb[0].mxu0
      %v1889 = vadd.f32 0.0, %v1888
      %v1890 = vpop.f32.mrb[0].mxu0
      %1891 = vmatprep.mubr.f32.mxu0 0.0
      %1892 = vmatmul.mubr.f32.gmra.mrb[0].mxu0 %v1674
      %v1893 = vpop.f32.mrb[0].mxu0
      %v1894 = vadd.f32 0.0, %v1893
      %v1895 = vpop.f32.mrb[0].mxu0
      %1896 = vmatprep.mubr.f32.mxu0 0.0
      %1897 = vmatmul.mubr.f32.gmra.mrb[0].mxu0 %v1675
      %v1898 = vpop.f32.mrb[0].mxu0
      %v1899 = vadd.f32 0.0, %v1898
      %v1900 = vpop.f32.mrb[0].mxu0
      %1901 = vmatprep.mubr.f32.mxu0 0.0
      %1902 = vmatmul.mubr.f32.gmra.mrb[0].mxu0 %v1676
      %v1903 = vpop.f32.mrb[0].mxu0
      %v1904 = vadd.f32 0.0, %v1903
      %v1905 = vpop.f32.mrb[0].mxu0
      %1906 = vmatprep.mubr.f32.mxu0 0.0
      %1907 = vmatmul.mubr.f32.gmra.mrb[0].mxu0 %v1677
      %v1908 = vpop.f32.mrb[0].mxu0
      %v1909 = vadd.f32 0.0, %v1908
      %v1910 = vpop.f32.mrb[0].mxu0
      %1911 = vmatprep.mubr.f32.mxu0 0.0
      %1912 = vmatmul.mubr.f32.gmra.mrb[0].mxu0 %v1678
      %v1913 = vpop.f32.mrb[0].mxu0
      %v1914 = vadd.f32 0.0, %v1913
      %v1915 = vpop.f32.mrb[0].mxu0
      %1916 = vmatprep.mubr.f32.mxu0 0.0
      %1917 = vmatmul.mubr.f32.gmra.mrb[0].mxu0 %v1679
      %v1918 = vpop.f32.mrb[0].mxu0
      %v1919 = vadd.f32 0.0, %v1918
      %v1920 = vpop.f32.mrb[0].mxu0
      %1921 = vdwg.mxu0
      %v1922 = vadd.f32 %v1616, %v1764
      %v1923 = vadd.f32 %v1617, %v1769
      %v1924 = vadd.f32 %v1618, %v1774
      %v1925 = vadd.f32 %v1619, %v1779
      %v1926 = vadd.f32 %v1620, %v1784
      %v1927 = vadd.f32 %v1621, %v1789
      %v1928 = vadd.f32 %v1622, %v1794
      %v1929 = vadd.f32 %v1623, %v1799
      %v1930 = vadd.f32 %v1624, %v1804
      %v1931 = vadd.f32 %v1625, %v1809
      %v1932 = vadd.f32 %v1626, %v1814
      %v1933 = vadd.f32 %v1627, %v1819
      %v1934 = vadd.f32 %v1628, %v1824
      %v1935 = vadd.f32 %v1629, %v1829
      %v1936 = vadd.f32 %v1630, %v1834
      %v1937 = vadd.f32 %v1631, %v1839
      %v1938 = vadd.f32 %v1632, %v1844
      %v1939 = vadd.f32 %v1633, %v1849
      %v1940 = vadd.f32 %v1634, %v1854
      %v1941 = vadd.f32 %v1635, %v1859
      %v1942 = vadd.f32 %v1636, %v1864
      %v1943 = vadd.f32 %v1637, %v1869
      %v1944 = vadd.f32 %v1638, %v1874
      %v1945 = vadd.f32 %v1639, %v1879
      %v1946 = vadd.f32 %v1640, %v1884
      %v1947 = vadd.f32 %v1641, %v1889
      %v1948 = vadd.f32 %v1642, %v1894
      %v1949 = vadd.f32 %v1643, %v1899
      %v1950 = vadd.f32 %v1644, %v1904
      %v1951 = vadd.f32 %v1645, %v1909
      %v1952 = vadd.f32 %v1646, %v1914
      %v1953 = vadd.f32 %v1647, %v1919
      %s1954 = scalar_lea.vmem %s172, 48
      %v1955 = vld [vmem:[%s1954] sm:$0xff]
      %v1956 = vld [vmem:[%s1954 + $0x8] sm:$0xff]
      %v1957 = vld [vmem:[%s1954 + $0x18] sm:$0xff]
      %v1958 = vld [vmem:[%s1954 + $0x20] sm:$0xff]
      %v1959 = vld [vmem:[%s1954 + $0x30] sm:$0xff]
      %v1960 = vld [vmem:[%s1954 + $0x38] sm:$0xff]
      %v1961 = vld [vmem:[%s1954 + $0x48] sm:$0xff]
      %v1962 = vld [vmem:[%s1954 + $0x50] sm:$0xff]
      %v1963 = vld [vmem:[%s1954 + $0x60] sm:$0xff]
      %v1964 = vld [vmem:[%s1954 + $0x68] sm:$0xff]
      %v1965 = vld [vmem:[%s1954 + $0x78] sm:$0xff]
      %v1966 = vld [vmem:[%s1954 + $0x80] sm:$0xff]
      %v1967 = vld [vmem:[%s1954 + $0x90] sm:$0xff]
      %v1968 = vld [vmem:[%s1954 + $0x98] sm:$0xff]
      %v1969 = vld [vmem:[%s1954 + $0xa8] sm:$0xff]
      %v1970 = vld [vmem:[%s1954 + $0xb0] sm:$0xff]
      %v1971 = vld [vmem:[%s1954 + $0xc0] sm:$0xff]
      %v1972 = vld [vmem:[%s1954 + $0xc8] sm:$0xff]
      %v1973 = vld [vmem:[%s1954 + $0xd8] sm:$0xff]
      %v1974 = vld [vmem:[%s1954 + $0xe0] sm:$0xff]
      %v1975 = vld [vmem:[%s1954 + $0xf0] sm:$0xff]
      %v1976 = vld [vmem:[%s1954 + $0xf8] sm:$0xff]
      %v1977 = vld [vmem:[%s1954 + $0x108] sm:$0xff]
      %v1978 = vld [vmem:[%s1954 + $0x110] sm:$0xff]
      %v1979 = vld [vmem:[%s1954 + $0x120] sm:$0xff]
      %v1980 = vld [vmem:[%s1954 + $0x128] sm:$0xff]
      %v1981 = vld [vmem:[%s1954 + $0x138] sm:$0xff]
      %v1982 = vld [vmem:[%s1954 + $0x140] sm:$0xff]
      %v1983 = vld [vmem:[%s1954 + $0x150] sm:$0xff]
      %v1984 = vld [vmem:[%s1954 + $0x158] sm:$0xff]
      %v1985 = vld [vmem:[%s1954 + $0x168] sm:$0xff]
      %v1986 = vld [vmem:[%s1954 + $0x170] sm:$0xff]
      %s1987 = scalar_lea.vmem %s1, 768
      %v1988 = vld [vmem:[%s1987] sm:$0xff]
      %v1989 = vld [vmem:[%s1987 + $0x8] sm:$0xff]
      %v1990 = vld [vmem:[%s1987 + $0x10] sm:$0xff]
      %v1991 = vld [vmem:[%s1987 + $0x18] sm:$0xff]
      %v1992 = vld [vmem:[%s1987 + $0x20] sm:$0xff]
      %v1993 = vld [vmem:[%s1987 + $0x28] sm:$0xff]
      %v1994 = vld [vmem:[%s1987 + $0x30] sm:$0xff]
      %v1995 = vld [vmem:[%s1987 + $0x38] sm:$0xff]
      %v1996 = vld [vmem:[%s1987 + $0x40] sm:$0xff]
      %v1997 = vld [vmem:[%s1987 + $0x48] sm:$0xff]
      %v1998 = vld [vmem:[%s1987 + $0x50] sm:$0xff]
      %v1999 = vld [vmem:[%s1987 + $0x58] sm:$0xff]
      %v2000 = vld [vmem:[%s1987 + $0x60] sm:$0xff]
      %v2001 = vld [vmem:[%s1987 + $0x68] sm:$0xff]
      %v2002 = vld [vmem:[%s1987 + $0x70] sm:$0xff]
      %v2003 = vld [vmem:[%s1987 + $0x78] sm:$0xff]
      %2004 = vmatprep.subr.mxu0 0.0
      %2005 = vmatpush1.msra.mxu0 %v1988
      %2006 = vmatprep.subr.mxu0 0.0
      %2007 = vmatpush1.msra.mxu0 %v1989
      %2008 = vmatprep.subr.mxu0 0.0
      %2009 = vmatpush1.msra.mxu0 %v1990
      %2010 = vmatprep.subr.mxu0 0.0
      %2011 = vmatpush1.msra.mxu0 %v1991
      %2012 = vmatprep.subr.mxu0 0.0
      %2013 = vmatpush1.msra.mxu0 %v1992
      %2014 = vmatprep.subr.mxu0 0.0
      %2015 = vmatpush1.msra.mxu0 %v1993
      %2016 = vmatprep.subr.mxu0 0.0
      %2017 = vmatpush1.msra.mxu0 %v1994
      %2018 = vmatprep.subr.mxu0 0.0
      %2019 = vmatpush1.msra.mxu0 %v1995
      %2020 = vmatprep.subr.mxu0 0.0
      %2021 = vmatpush1.msra.mxu0 %v1996
      %2022 = vmatprep.subr.mxu0 0.0
      %2023 = vmatpush1.msra.mxu0 %v1997
      %2024 = vmatprep.subr.mxu0 0.0
      %2025 = vmatpush1.msra.mxu0 %v1998
      %2026 = vmatprep.subr.mxu0 0.0
      %2027 = vmatpush1.msra.mxu0 %v1999
      %2028 = vmatprep.subr.mxu0 0.0
      %2029 = vmatpush1.msra.mxu0 %v2000
      %2030 = vmatprep.subr.mxu0 0.0
      %2031 = vmatpush1.msra.mxu0 %v2001
      %2032 = vmatprep.subr.mxu0 0.0
      %2033 = vmatpush1.msra.mxu0 %v2002
      %2034 = vmatprep.subr.mxu0 0.0
      %2035 = vmatpush1.msra.mxu0 %v2003
      %2036 = vmatprep.subr.mxu0 0.0
      %2037 = vmatpush1.msra.mxu0 0.0
      %2038 = vmatprep.subr.mxu0 0.0
      %2039 = vmatpush1.msra.mxu0 0.0
      %2040 = vmatprep.subr.mxu0 0.0
      %2041 = vmatpush1.msra.mxu0 0.0
      %2042 = vmatprep.subr.mxu0 0.0
      %2043 = vmatpush1.msra.mxu0 0.0
      %2044 = vmatprep.subr.mxu0 0.0
      %2045 = vmatpush1.msra.mxu0 0.0
      %2046 = vmatprep.subr.mxu0 0.0
      %2047 = vmatpush1.msra.mxu0 0.0
      %2048 = vmatprep.subr.mxu0 0.0
      %2049 = vmatpush1.msra.mxu0 0.0
      %2050 = vmatprep.subr.mxu0 0.0
      %2051 = vmatpush1.msra.mxu0 0.0
      %2052 = vmatprep.subr.mxu0 0.0
      %2053 = vmatpush1.msra.mxu0 0.0
      %2054 = vmatprep.subr.mxu0 0.0
      %2055 = vmatpush1.msra.mxu0 0.0
      %2056 = vmatprep.subr.mxu0 0.0
      %2057 = vmatpush1.msra.mxu0 0.0
      %2058 = vmatprep.subr.mxu0 0.0
      %2059 = vmatpush1.msra.mxu0 0.0
      %2060 = vmatprep.subr.mxu0 0.0
      %2061 = vmatpush1.msra.mxu0 0.0
      %2062 = vmatprep.subr.mxu0 0.0
      %2063 = vmatpush1.msra.mxu0 0.0
      %2064 = vmatprep.subr.mxu0 0.0
      %2065 = vmatpush1.msra.mxu0 0.0
      %2066 = vmatprep.subr.mxu0 0.0
      %2067 = vmatpush1.msra.mxu0 0.0
      %2068 = vmatprep.mubr.f32.mxu0 0.0
      %2069 = vmatmul.mubr.f32.gmra.mrb[0].mxu0 %v1955
      %v2070 = vpop.f32.mrb[0].mxu0
      %v2071 = vadd.f32 0.0, %v2070
      %v2072 = vpop.f32.mrb[0].mxu0
      %2073 = vmatprep.mubr.f32.mxu0 0.0
      %2074 = vmatmul.mubr.f32.gmra.mrb[0].mxu0 %v1956
      %v2075 = vpop.f32.mrb[0].mxu0
      %v2076 = vadd.f32 0.0, %v2075
      %v2077 = vpop.f32.mrb[0].mxu0
      %2078 = vmatprep.mubr.f32.mxu0 0.0
      %2079 = vmatmul.mubr.f32.gmra.mrb[0].mxu0 %v1957
      %v2080 = vpop.f32.mrb[0].mxu0
      %v2081 = vadd.f32 0.0, %v2080
      %v2082 = vpop.f32.mrb[0].mxu0
      %2083 = vmatprep.mubr.f32.mxu0 0.0
      %2084 = vmatmul.mubr.f32.gmra.mrb[0].mxu0 %v1958
      %v2085 = vpop.f32.mrb[0].mxu0
      %v2086 = vadd.f32 0.0, %v2085
      %v2087 = vpop.f32.mrb[0].mxu0
      %2088 = vmatprep.mubr.f32.mxu0 0.0
      %2089 = vmatmul.mubr.f32.gmra.mrb[0].mxu0 %v1959
      %v2090 = vpop.f32.mrb[0].mxu0
      %v2091 = vadd.f32 0.0, %v2090
      %v2092 = vpop.f32.mrb[0].mxu0
      %2093 = vmatprep.mubr.f32.mxu0 0.0
      %2094 = vmatmul.mubr.f32.gmra.mrb[0].mxu0 %v1960
      %v2095 = vpop.f32.mrb[0].mxu0
      %v2096 = vadd.f32 0.0, %v2095
      %v2097 = vpop.f32.mrb[0].mxu0
      %2098 = vmatprep.mubr.f32.mxu0 0.0
      %2099 = vmatmul.mubr.f32.gmra.mrb[0].mxu0 %v1961
      %v2100 = vpop.f32.mrb[0].mxu0
      %v2101 = vadd.f32 0.0, %v2100
      %v2102 = vpop.f32.mrb[0].mxu0
      %2103 = vmatprep.mubr.f32.mxu0 0.0
      %2104 = vmatmul.mubr.f32.gmra.mrb[0].mxu0 %v1962
      %v2105 = vpop.f32.mrb[0].mxu0
      %v2106 = vadd.f32 0.0, %v2105
      %v2107 = vpop.f32.mrb[0].mxu0
      %2108 = vmatprep.mubr.f32.mxu0 0.0
      %2109 = vmatmul.mubr.f32.gmra.mrb[0].mxu0 %v1963
      %v2110 = vpop.f32.mrb[0].mxu0
      %v2111 = vadd.f32 0.0, %v2110
      %v2112 = vpop.f32.mrb[0].mxu0
      %2113 = vmatprep.mubr.f32.mxu0 0.0
      %2114 = vmatmul.mubr.f32.gmra.mrb[0].mxu0 %v1964
      %v2115 = vpop.f32.mrb[0].mxu0
      %v2116 = vadd.f32 0.0, %v2115
      %v2117 = vpop.f32.mrb[0].mxu0
      %2118 = vmatprep.mubr.f32.mxu0 0.0
      %2119 = vmatmul.mubr.f32.gmra.mrb[0].mxu0 %v1965
      %v2120 = vpop.f32.mrb[0].mxu0
      %v2121 = vadd.f32 0.0, %v2120
      %v2122 = vpop.f32.mrb[0].mxu0
      %2123 = vmatprep.mubr.f32.mxu0 0.0
      %2124 = vmatmul.mubr.f32.gmra.mrb[0].mxu0 %v1966
      %v2125 = vpop.f32.mrb[0].mxu0
      %v2126 = vadd.f32 0.0, %v2125
      %v2127 = vpop.f32.mrb[0].mxu0
      %2128 = vmatprep.mubr.f32.mxu0 0.0
      %2129 = vmatmul.mubr.f32.gmra.mrb[0].mxu0 %v1967
      %v2130 = vpop.f32.mrb[0].mxu0
      %v2131 = vadd.f32 0.0, %v2130
      %v2132 = vpop.f32.mrb[0].mxu0
      %2133 = vmatprep.mubr.f32.mxu0 0.0
      %2134 = vmatmul.mubr.f32.gmra.mrb[0].mxu0 %v1968
      %v2135 = vpop.f32.mrb[0].mxu0
      %v2136 = vadd.f32 0.0, %v2135
      %v2137 = vpop.f32.mrb[0].mxu0
      %2138 = vmatprep.mubr.f32.mxu0 0.0
      %2139 = vmatmul.mubr.f32.gmra.mrb[0].mxu0 %v1969
      %v2140 = vpop.f32.mrb[0].mxu0
      %v2141 = vadd.f32 0.0, %v2140
      %v2142 = vpop.f32.mrb[0].mxu0
      %2143 = vmatprep.mubr.f32.mxu0 0.0
      %2144 = vmatmul.mubr.f32.gmra.mrb[0].mxu0 %v1970
      %v2145 = vpop.f32.mrb[0].mxu0
      %v2146 = vadd.f32 0.0, %v2145
      %v2147 = vpop.f32.mrb[0].mxu0
      %2148 = vmatprep.mubr.f32.mxu0 0.0
      %2149 = vmatmul.mubr.f32.gmra.mrb[0].mxu0 %v1971
      %v2150 = vpop.f32.mrb[0].mxu0
      %v2151 = vadd.f32 0.0, %v2150
      %v2152 = vpop.f32.mrb[0].mxu0
      %2153 = vmatprep.mubr.f32.mxu0 0.0
      %2154 = vmatmul.mubr.f32.gmra.mrb[0].mxu0 %v1972
      %v2155 = vpop.f32.mrb[0].mxu0
      %v2156 = vadd.f32 0.0, %v2155
      %v2157 = vpop.f32.mrb[0].mxu0
      %2158 = vmatprep.mubr.f32.mxu0 0.0
      %2159 = vmatmul.mubr.f32.gmra.mrb[0].mxu0 %v1973
      %v2160 = vpop.f32.mrb[0].mxu0
      %v2161 = vadd.f32 0.0, %v2160
      %v2162 = vpop.f32.mrb[0].mxu0
      %2163 = vmatprep.mubr.f32.mxu0 0.0
      %2164 = vmatmul.mubr.f32.gmra.mrb[0].mxu0 %v1974
      %v2165 = vpop.f32.mrb[0].mxu0
      %v2166 = vadd.f32 0.0, %v2165
      %v2167 = vpop.f32.mrb[0].mxu0
      %2168 = vmatprep.mubr.f32.mxu0 0.0
      %2169 = vmatmul.mubr.f32.gmra.mrb[0].mxu0 %v1975
      %v2170 = vpop.f32.mrb[0].mxu0
      %v2171 = vadd.f32 0.0, %v2170
      %v2172 = vpop.f32.mrb[0].mxu0
      %2173 = vmatprep.mubr.f32.mxu0 0.0
      %2174 = vmatmul.mubr.f32.gmra.mrb[0].mxu0 %v1976
      %v2175 = vpop.f32.mrb[0].mxu0
      %v2176 = vadd.f32 0.0, %v2175
      %v2177 = vpop.f32.mrb[0].mxu0
      %2178 = vmatprep.mubr.f32.mxu0 0.0
      %2179 = vmatmul.mubr.f32.gmra.mrb[0].mxu0 %v1977
      %v2180 = vpop.f32.mrb[0].mxu0
      %v2181 = vadd.f32 0.0, %v2180
      %v2182 = vpop.f32.mrb[0].mxu0
      %2183 = vmatprep.mubr.f32.mxu0 0.0
      %2184 = vmatmul.mubr.f32.gmra.mrb[0].mxu0 %v1978
      %v2185 = vpop.f32.mrb[0].mxu0
      %v2186 = vadd.f32 0.0, %v2185
      %v2187 = vpop.f32.mrb[0].mxu0
      %2188 = vmatprep.mubr.f32.mxu0 0.0
      %2189 = vmatmul.mubr.f32.gmra.mrb[0].mxu0 %v1979
      %v2190 = vpop.f32.mrb[0].mxu0
      %v2191 = vadd.f32 0.0, %v2190
      %v2192 = vpop.f32.mrb[0].mxu0
      %2193 = vmatprep.mubr.f32.mxu0 0.0
      %2194 = vmatmul.mubr.f32.gmra.mrb[0].mxu0 %v1980
      %v2195 = vpop.f32.mrb[0].mxu0
      %v2196 = vadd.f32 0.0, %v2195
      %v2197 = vpop.f32.mrb[0].mxu0
      %2198 = vmatprep.mubr.f32.mxu0 0.0
      %2199 = vmatmul.mubr.f32.gmra.mrb[0].mxu0 %v1981
      %v2200 = vpop.f32.mrb[0].mxu0
      %v2201 = vadd.f32 0.0, %v2200
      %v2202 = vpop.f32.mrb[0].mxu0
      %2203 = vmatprep.mubr.f32.mxu0 0.0
      %2204 = vmatmul.mubr.f32.gmra.mrb[0].mxu0 %v1982
      %v2205 = vpop.f32.mrb[0].mxu0
      %v2206 = vadd.f32 0.0, %v2205
      %v2207 = vpop.f32.mrb[0].mxu0
      %2208 = vmatprep.mubr.f32.mxu0 0.0
      %2209 = vmatmul.mubr.f32.gmra.mrb[0].mxu0 %v1983
      %v2210 = vpop.f32.mrb[0].mxu0
      %v2211 = vadd.f32 0.0, %v2210
      %v2212 = vpop.f32.mrb[0].mxu0
      %2213 = vmatprep.mubr.f32.mxu0 0.0
      %2214 = vmatmul.mubr.f32.gmra.mrb[0].mxu0 %v1984
      %v2215 = vpop.f32.mrb[0].mxu0
      %v2216 = vadd.f32 0.0, %v2215
      %v2217 = vpop.f32.mrb[0].mxu0
      %2218 = vmatprep.mubr.f32.mxu0 0.0
      %2219 = vmatmul.mubr.f32.gmra.mrb[0].mxu0 %v1985
      %v2220 = vpop.f32.mrb[0].mxu0
      %v2221 = vadd.f32 0.0, %v2220
      %v2222 = vpop.f32.mrb[0].mxu0
      %2223 = vmatprep.mubr.f32.mxu0 0.0
      %2224 = vmatmul.mubr.f32.gmra.mrb[0].mxu0 %v1986
      %v2225 = vpop.f32.mrb[0].mxu0
      %v2226 = vadd.f32 0.0, %v2225
      %v2227 = vpop.f32.mrb[0].mxu0
      %2228 = vdwg.mxu0
      %v2229 = vadd.f32 %v1922, %v2071
      %v2230 = vadd.f32 %v1923, %v2076
      %v2231 = vadd.f32 %v1924, %v2081
      %v2232 = vadd.f32 %v1925, %v2086
      %v2233 = vadd.f32 %v1926, %v2091
      %v2234 = vadd.f32 %v1927, %v2096
      %v2235 = vadd.f32 %v1928, %v2101
      %v2236 = vadd.f32 %v1929, %v2106
      %v2237 = vadd.f32 %v1930, %v2111
      %v2238 = vadd.f32 %v1931, %v2116
      %v2239 = vadd.f32 %v1932, %v2121
      %v2240 = vadd.f32 %v1933, %v2126
      %v2241 = vadd.f32 %v1934, %v2131
      %v2242 = vadd.f32 %v1935, %v2136
      %v2243 = vadd.f32 %v1936, %v2141
      %v2244 = vadd.f32 %v1937, %v2146
      %v2245 = vadd.f32 %v1938, %v2151
      %v2246 = vadd.f32 %v1939, %v2156
      %v2247 = vadd.f32 %v1940, %v2161
      %v2248 = vadd.f32 %v1941, %v2166
      %v2249 = vadd.f32 %v1942, %v2171
      %v2250 = vadd.f32 %v1943, %v2176
      %v2251 = vadd.f32 %v1944, %v2181
      %v2252 = vadd.f32 %v1945, %v2186
      %v2253 = vadd.f32 %v1946, %v2191
      %v2254 = vadd.f32 %v1947, %v2196
      %v2255 = vadd.f32 %v1948, %v2201
      %v2256 = vadd.f32 %v1949, %v2206
      %v2257 = vadd.f32 %v1950, %v2211
      %v2258 = vadd.f32 %v1951, %v2216
      %v2259 = vadd.f32 %v1952, %v2221
      %v2260 = vadd.f32 %v1953, %v2226
      %v2261 = vld [vmem:[%s1954 + $0x1] sm:$0xff]
      %v2262 = vld [vmem:[%s1954 + $0x9] sm:$0xff]
      %v2263 = vld [vmem:[%s1954 + $0x19] sm:$0xff]
      %v2264 = vld [vmem:[%s1954 + $0x21] sm:$0xff]
      %v2265 = vld [vmem:[%s1954 + $0x31] sm:$0xff]
      %v2266 = vld [vmem:[%s1954 + $0x39] sm:$0xff]
      %v2267 = vld [vmem:[%s1954 + $0x49] sm:$0xff]
      %v2268 = vld [vmem:[%s1954 + $0x51] sm:$0xff]
      %v2269 = vld [vmem:[%s1954 + $0x61] sm:$0xff]
      %v2270 = vld [vmem:[%s1954 + $0x69] sm:$0xff]
      %v2271 = vld [vmem:[%s1954 + $0x79] sm:$0xff]
      %v2272 = vld [vmem:[%s1954 + $0x81] sm:$0xff]
      %v2273 = vld [vmem:[%s1954 + $0x91] sm:$0xff]
      %v2274 = vld [vmem:[%s1954 + $0x99] sm:$0xff]
      %v2275 = vld [vmem:[%s1954 + $0xa9] sm:$0xff]
      %v2276 = vld [vmem:[%s1954 + $0xb1] sm:$0xff]
      %v2277 = vld [vmem:[%s1954 + $0xc1] sm:$0xff]
      %v2278 = vld [vmem:[%s1954 + $0xc9] sm:$0xff]
      %v2279 = vld [vmem:[%s1954 + $0xd9] sm:$0xff]
      %v2280 = vld [vmem:[%s1954 + $0xe1] sm:$0xff]
      %v2281 = vld [vmem:[%s1954 + $0xf1] sm:$0xff]
      %v2282 = vld [vmem:[%s1954 + $0xf9] sm:$0xff]
      %v2283 = vld [vmem:[%s1954 + $0x109] sm:$0xff]
      %v2284 = vld [vmem:[%s1954 + $0x111] sm:$0xff]
      %v2285 = vld [vmem:[%s1954 + $0x121] sm:$0xff]
      %v2286 = vld [vmem:[%s1954 + $0x129] sm:$0xff]
      %v2287 = vld [vmem:[%s1954 + $0x139] sm:$0xff]
      %v2288 = vld [vmem:[%s1954 + $0x141] sm:$0xff]
      %v2289 = vld [vmem:[%s1954 + $0x151] sm:$0xff]
      %v2290 = vld [vmem:[%s1954 + $0x159] sm:$0xff]
      %v2291 = vld [vmem:[%s1954 + $0x169] sm:$0xff]
      %v2292 = vld [vmem:[%s1954 + $0x171] sm:$0xff]
      %s2293 = scalar_lea.vmem %s1, 896
      %v2294 = vld [vmem:[%s2293] sm:$0xff]
      %v2295 = vld [vmem:[%s2293 + $0x8] sm:$0xff]
      %v2296 = vld [vmem:[%s2293 + $0x10] sm:$0xff]
      %v2297 = vld [vmem:[%s2293 + $0x18] sm:$0xff]
      %v2298 = vld [vmem:[%s2293 + $0x20] sm:$0xff]
      %v2299 = vld [vmem:[%s2293 + $0x28] sm:$0xff]
      %v2300 = vld [vmem:[%s2293 + $0x30] sm:$0xff]
      %v2301 = vld [vmem:[%s2293 + $0x38] sm:$0xff]
      %v2302 = vld [vmem:[%s2293 + $0x40] sm:$0xff]
      %v2303 = vld [vmem:[%s2293 + $0x48] sm:$0xff]
      %v2304 = vld [vmem:[%s2293 + $0x50] sm:$0xff]
      %v2305 = vld [vmem:[%s2293 + $0x58] sm:$0xff]
      %v2306 = vld [vmem:[%s2293 + $0x60] sm:$0xff]
      %v2307 = vld [vmem:[%s2293 + $0x68] sm:$0xff]
      %v2308 = vld [vmem:[%s2293 + $0x70] sm:$0xff]
      %v2309 = vld [vmem:[%s2293 + $0x78] sm:$0xff]
      %2310 = vmatprep.subr.mxu0 0.0
      %2311 = vmatpush1.msra.mxu0 %v2294
      %2312 = vmatprep.subr.mxu0 0.0
      %2313 = vmatpush1.msra.mxu0 %v2295
      %2314 = vmatprep.subr.mxu0 0.0
      %2315 = vmatpush1.msra.mxu0 %v2296
      %2316 = vmatprep.subr.mxu0 0.0
      %2317 = vmatpush1.msra.mxu0 %v2297
      %2318 = vmatprep.subr.mxu0 0.0
      %2319 = vmatpush1.msra.mxu0 %v2298
      %2320 = vmatprep.subr.mxu0 0.0
      %2321 = vmatpush1.msra.mxu0 %v2299
      %2322 = vmatprep.subr.mxu0 0.0
      %2323 = vmatpush1.msra.mxu0 %v2300
      %2324 = vmatprep.subr.mxu0 0.0
      %2325 = vmatpush1.msra.mxu0 %v2301
      %2326 = vmatprep.subr.mxu0 0.0
      %2327 = vmatpush1.msra.mxu0 %v2302
      %2328 = vmatprep.subr.mxu0 0.0
      %2329 = vmatpush1.msra.mxu0 %v2303
      %2330 = vmatprep.subr.mxu0 0.0
      %2331 = vmatpush1.msra.mxu0 %v2304
      %2332 = vmatprep.subr.mxu0 0.0
      %2333 = vmatpush1.msra.mxu0 %v2305
      %2334 = vmatprep.subr.mxu0 0.0
      %2335 = vmatpush1.msra.mxu0 %v2306
      %2336 = vmatprep.subr.mxu0 0.0
      %2337 = vmatpush1.msra.mxu0 %v2307
      %2338 = vmatprep.subr.mxu0 0.0
      %2339 = vmatpush1.msra.mxu0 %v2308
      %2340 = vmatprep.subr.mxu0 0.0
      %2341 = vmatpush1.msra.mxu0 %v2309
      %2342 = vmatprep.subr.mxu0 0.0
      %2343 = vmatpush1.msra.mxu0 0.0
      %2344 = vmatprep.subr.mxu0 0.0
      %2345 = vmatpush1.msra.mxu0 0.0
      %2346 = vmatprep.subr.mxu0 0.0
      %2347 = vmatpush1.msra.mxu0 0.0
      %2348 = vmatprep.subr.mxu0 0.0
      %2349 = vmatpush1.msra.mxu0 0.0
      %2350 = vmatprep.subr.mxu0 0.0
      %2351 = vmatpush1.msra.mxu0 0.0
      %2352 = vmatprep.subr.mxu0 0.0
      %2353 = vmatpush1.msra.mxu0 0.0
      %2354 = vmatprep.subr.mxu0 0.0
      %2355 = vmatpush1.msra.mxu0 0.0
      %2356 = vmatprep.subr.mxu0 0.0
      %2357 = vmatpush1.msra.mxu0 0.0
      %2358 = vmatprep.subr.mxu0 0.0
      %2359 = vmatpush1.msra.mxu0 0.0
      %2360 = vmatprep.subr.mxu0 0.0
      %2361 = vmatpush1.msra.mxu0 0.0
      %2362 = vmatprep.subr.mxu0 0.0
      %2363 = vmatpush1.msra.mxu0 0.0
      %2364 = vmatprep.subr.mxu0 0.0
      %2365 = vmatpush1.msra.mxu0 0.0
      %2366 = vmatprep.subr.mxu0 0.0
      %2367 = vmatpush1.msra.mxu0 0.0
      %2368 = vmatprep.subr.mxu0 0.0
      %2369 = vmatpush1.msra.mxu0 0.0
      %2370 = vmatprep.subr.mxu0 0.0
      %2371 = vmatpush1.msra.mxu0 0.0
      %2372 = vmatprep.subr.mxu0 0.0
      %2373 = vmatpush1.msra.mxu0 0.0
      %2374 = vmatprep.mubr.f32.mxu0 0.0
      %2375 = vmatmul.mubr.f32.gmra.mrb[0].mxu0 %v2261
      %v2376 = vpop.f32.mrb[0].mxu0
      %v2377 = vadd.f32 0.0, %v2376
      %v2378 = vpop.f32.mrb[0].mxu0
      %2379 = vmatprep.mubr.f32.mxu0 0.0
      %2380 = vmatmul.mubr.f32.gmra.mrb[0].mxu0 %v2262
      %v2381 = vpop.f32.mrb[0].mxu0
      %v2382 = vadd.f32 0.0, %v2381
      %v2383 = vpop.f32.mrb[0].mxu0
      %2384 = vmatprep.mubr.f32.mxu0 0.0
      %2385 = vmatmul.mubr.f32.gmra.mrb[0].mxu0 %v2263
      %v2386 = vpop.f32.mrb[0].mxu0
      %v2387 = vadd.f32 0.0, %v2386
      %v2388 = vpop.f32.mrb[0].mxu0
      %2389 = vmatprep.mubr.f32.mxu0 0.0
      %2390 = vmatmul.mubr.f32.gmra.mrb[0].mxu0 %v2264
      %v2391 = vpop.f32.mrb[0].mxu0
      %v2392 = vadd.f32 0.0, %v2391
      %v2393 = vpop.f32.mrb[0].mxu0
      %2394 = vmatprep.mubr.f32.mxu0 0.0
      %2395 = vmatmul.mubr.f32.gmra.mrb[0].mxu0 %v2265
      %v2396 = vpop.f32.mrb[0].mxu0
      %v2397 = vadd.f32 0.0, %v2396
      %v2398 = vpop.f32.mrb[0].mxu0
      %2399 = vmatprep.mubr.f32.mxu0 0.0
      %2400 = vmatmul.mubr.f32.gmra.mrb[0].mxu0 %v2266
      %v2401 = vpop.f32.mrb[0].mxu0
      %v2402 = vadd.f32 0.0, %v2401
      %v2403 = vpop.f32.mrb[0].mxu0
      %2404 = vmatprep.mubr.f32.mxu0 0.0
      %2405 = vmatmul.mubr.f32.gmra.mrb[0].mxu0 %v2267
      %v2406 = vpop.f32.mrb[0].mxu0
      %v2407 = vadd.f32 0.0, %v2406
      %v2408 = vpop.f32.mrb[0].mxu0
      %2409 = vmatprep.mubr.f32.mxu0 0.0
      %2410 = vmatmul.mubr.f32.gmra.mrb[0].mxu0 %v2268
      %v2411 = vpop.f32.mrb[0].mxu0
      %v2412 = vadd.f32 0.0, %v2411
      %v2413 = vpop.f32.mrb[0].mxu0
      %2414 = vmatprep.mubr.f32.mxu0 0.0
      %2415 = vmatmul.mubr.f32.gmra.mrb[0].mxu0 %v2269
      %v2416 = vpop.f32.mrb[0].mxu0
      %v2417 = vadd.f32 0.0, %v2416
      %v2418 = vpop.f32.mrb[0].mxu0
      %2419 = vmatprep.mubr.f32.mxu0 0.0
      %2420 = vmatmul.mubr.f32.gmra.mrb[0].mxu0 %v2270
      %v2421 = vpop.f32.mrb[0].mxu0
      %v2422 = vadd.f32 0.0, %v2421
      %v2423 = vpop.f32.mrb[0].mxu0
      %2424 = vmatprep.mubr.f32.mxu0 0.0
      %2425 = vmatmul.mubr.f32.gmra.mrb[0].mxu0 %v2271
      %v2426 = vpop.f32.mrb[0].mxu0
      %v2427 = vadd.f32 0.0, %v2426
      %v2428 = vpop.f32.mrb[0].mxu0
      %2429 = vmatprep.mubr.f32.mxu0 0.0
      %2430 = vmatmul.mubr.f32.gmra.mrb[0].mxu0 %v2272
      %v2431 = vpop.f32.mrb[0].mxu0
      %v2432 = vadd.f32 0.0, %v2431
      %v2433 = vpop.f32.mrb[0].mxu0
      %2434 = vmatprep.mubr.f32.mxu0 0.0
      %2435 = vmatmul.mubr.f32.gmra.mrb[0].mxu0 %v2273
      %v2436 = vpop.f32.mrb[0].mxu0
      %v2437 = vadd.f32 0.0, %v2436
      %v2438 = vpop.f32.mrb[0].mxu0
      %2439 = vmatprep.mubr.f32.mxu0 0.0
      %2440 = vmatmul.mubr.f32.gmra.mrb[0].mxu0 %v2274
      %v2441 = vpop.f32.mrb[0].mxu0
      %v2442 = vadd.f32 0.0, %v2441
      %v2443 = vpop.f32.mrb[0].mxu0
      %2444 = vmatprep.mubr.f32.mxu0 0.0
      %2445 = vmatmul.mubr.f32.gmra.mrb[0].mxu0 %v2275
      %v2446 = vpop.f32.mrb[0].mxu0
      %v2447 = vadd.f32 0.0, %v2446
      %v2448 = vpop.f32.mrb[0].mxu0
      %2449 = vmatprep.mubr.f32.mxu0 0.0
      %2450 = vmatmul.mubr.f32.gmra.mrb[0].mxu0 %v2276
      %v2451 = vpop.f32.mrb[0].mxu0
      %v2452 = vadd.f32 0.0, %v2451
      %v2453 = vpop.f32.mrb[0].mxu0
      %2454 = vmatprep.mubr.f32.mxu0 0.0
      %2455 = vmatmul.mubr.f32.gmra.mrb[0].mxu0 %v2277
      %v2456 = vpop.f32.mrb[0].mxu0
      %v2457 = vadd.f32 0.0, %v2456
      %v2458 = vpop.f32.mrb[0].mxu0
      %2459 = vmatprep.mubr.f32.mxu0 0.0
      %2460 = vmatmul.mubr.f32.gmra.mrb[0].mxu0 %v2278
      %v2461 = vpop.f32.mrb[0].mxu0
      %v2462 = vadd.f32 0.0, %v2461
      %v2463 = vpop.f32.mrb[0].mxu0
      %2464 = vmatprep.mubr.f32.mxu0 0.0
      %2465 = vmatmul.mubr.f32.gmra.mrb[0].mxu0 %v2279
      %v2466 = vpop.f32.mrb[0].mxu0
      %v2467 = vadd.f32 0.0, %v2466
      %v2468 = vpop.f32.mrb[0].mxu0
      %2469 = vmatprep.mubr.f32.mxu0 0.0
      %2470 = vmatmul.mubr.f32.gmra.mrb[0].mxu0 %v2280
      %v2471 = vpop.f32.mrb[0].mxu0
      %v2472 = vadd.f32 0.0, %v2471
      %v2473 = vpop.f32.mrb[0].mxu0
      %2474 = vmatprep.mubr.f32.mxu0 0.0
      %2475 = vmatmul.mubr.f32.gmra.mrb[0].mxu0 %v2281
      %v2476 = vpop.f32.mrb[0].mxu0
      %v2477 = vadd.f32 0.0, %v2476
      %v2478 = vpop.f32.mrb[0].mxu0
      %2479 = vmatprep.mubr.f32.mxu0 0.0
      %2480 = vmatmul.mubr.f32.gmra.mrb[0].mxu0 %v2282
      %v2481 = vpop.f32.mrb[0].mxu0
      %v2482 = vadd.f32 0.0, %v2481
      %v2483 = vpop.f32.mrb[0].mxu0
      %2484 = vmatprep.mubr.f32.mxu0 0.0
      %2485 = vmatmul.mubr.f32.gmra.mrb[0].mxu0 %v2283
      %v2486 = vpop.f32.mrb[0].mxu0
      %v2487 = vadd.f32 0.0, %v2486
      %v2488 = vpop.f32.mrb[0].mxu0
      %2489 = vmatprep.mubr.f32.mxu0 0.0
      %2490 = vmatmul.mubr.f32.gmra.mrb[0].mxu0 %v2284
      %v2491 = vpop.f32.mrb[0].mxu0
      %v2492 = vadd.f32 0.0, %v2491
      %v2493 = vpop.f32.mrb[0].mxu0
      %2494 = vmatprep.mubr.f32.mxu0 0.0
      %2495 = vmatmul.mubr.f32.gmra.mrb[0].mxu0 %v2285
      %v2496 = vpop.f32.mrb[0].mxu0
      %v2497 = vadd.f32 0.0, %v2496
      %v2498 = vpop.f32.mrb[0].mxu0
      %2499 = vmatprep.mubr.f32.mxu0 0.0
      %2500 = vmatmul.mubr.f32.gmra.mrb[0].mxu0 %v2286
      %v2501 = vpop.f32.mrb[0].mxu0
      %v2502 = vadd.f32 0.0, %v2501
      %v2503 = vpop.f32.mrb[0].mxu0
      %2504 = vmatprep.mubr.f32.mxu0 0.0
      %2505 = vmatmul.mubr.f32.gmra.mrb[0].mxu0 %v2287
      %v2506 = vpop.f32.mrb[0].mxu0
      %v2507 = vadd.f32 0.0, %v2506
      %v2508 = vpop.f32.mrb[0].mxu0
      %2509 = vmatprep.mubr.f32.mxu0 0.0
      %2510 = vmatmul.mubr.f32.gmra.mrb[0].mxu0 %v2288
      %v2511 = vpop.f32.mrb[0].mxu0
      %v2512 = vadd.f32 0.0, %v2511
      %v2513 = vpop.f32.mrb[0].mxu0
      %2514 = vmatprep.mubr.f32.mxu0 0.0
      %2515 = vmatmul.mubr.f32.gmra.mrb[0].mxu0 %v2289
      %v2516 = vpop.f32.mrb[0].mxu0
      %v2517 = vadd.f32 0.0, %v2516
      %v2518 = vpop.f32.mrb[0].mxu0
      %2519 = vmatprep.mubr.f32.mxu0 0.0
      %2520 = vmatmul.mubr.f32.gmra.mrb[0].mxu0 %v2290
      %v2521 = vpop.f32.mrb[0].mxu0
      %v2522 = vadd.f32 0.0, %v2521
      %v2523 = vpop.f32.mrb[0].mxu0
      %2524 = vmatprep.mubr.f32.mxu0 0.0
      %2525 = vmatmul.mubr.f32.gmra.mrb[0].mxu0 %v2291
      %v2526 = vpop.f32.mrb[0].mxu0
      %v2527 = vadd.f32 0.0, %v2526
      %v2528 = vpop.f32.mrb[0].mxu0
      %2529 = vmatprep.mubr.f32.mxu0 0.0
      %2530 = vmatmul.mubr.f32.gmra.mrb[0].mxu0 %v2292
      %v2531 = vpop.f32.mrb[0].mxu0
      %v2532 = vadd.f32 0.0, %v2531
      %v2533 = vpop.f32.mrb[0].mxu0
      %2534 = vdwg.mxu0
      %v2535 = vadd.f32 %v2229, %v2377
      %v2536 = vadd.f32 %v2230, %v2382
      %v2537 = vadd.f32 %v2231, %v2387
      %v2538 = vadd.f32 %v2232, %v2392
      %v2539 = vadd.f32 %v2233, %v2397
      %v2540 = vadd.f32 %v2234, %v2402
      %v2541 = vadd.f32 %v2235, %v2407
      %v2542 = vadd.f32 %v2236, %v2412
      %v2543 = vadd.f32 %v2237, %v2417
      %v2544 = vadd.f32 %v2238, %v2422
      %v2545 = vadd.f32 %v2239, %v2427
      %v2546 = vadd.f32 %v2240, %v2432
      %v2547 = vadd.f32 %v2241, %v2437
      %v2548 = vadd.f32 %v2242, %v2442
      %v2549 = vadd.f32 %v2243, %v2447
      %v2550 = vadd.f32 %v2244, %v2452
      %v2551 = vadd.f32 %v2245, %v2457
      %v2552 = vadd.f32 %v2246, %v2462
      %v2553 = vadd.f32 %v2247, %v2467
      %v2554 = vadd.f32 %v2248, %v2472
      %v2555 = vadd.f32 %v2249, %v2477
      %v2556 = vadd.f32 %v2250, %v2482
      %v2557 = vadd.f32 %v2251, %v2487
      %v2558 = vadd.f32 %v2252, %v2492
      %v2559 = vadd.f32 %v2253, %v2497
      %v2560 = vadd.f32 %v2254, %v2502
      %v2561 = vadd.f32 %v2255, %v2507
      %v2562 = vadd.f32 %v2256, %v2512
      %v2563 = vadd.f32 %v2257, %v2517
      %v2564 = vadd.f32 %v2258, %v2522
      %v2565 = vadd.f32 %v2259, %v2527
      %v2566 = vadd.f32 %v2260, %v2532
      %v2567 = vld [vmem:[%s1954 + $0x2] sm:$0xff]
      %v2568 = vld [vmem:[%s1954 + $0xa] sm:$0xff]
      %v2569 = vld [vmem:[%s1954 + $0x1a] sm:$0xff]
      %v2570 = vld [vmem:[%s1954 + $0x22] sm:$0xff]
      %v2571 = vld [vmem:[%s1954 + $0x32] sm:$0xff]
      %v2572 = vld [vmem:[%s1954 + $0x3a] sm:$0xff]
      %v2573 = vld [vmem:[%s1954 + $0x4a] sm:$0xff]
      %v2574 = vld [vmem:[%s1954 + $0x52] sm:$0xff]
      %v2575 = vld [vmem:[%s1954 + $0x62] sm:$0xff]
      %v2576 = vld [vmem:[%s1954 + $0x6a] sm:$0xff]
      %v2577 = vld [vmem:[%s1954 + $0x7a] sm:$0xff]
      %v2578 = vld [vmem:[%s1954 + $0x82] sm:$0xff]
      %v2579 = vld [vmem:[%s1954 + $0x92] sm:$0xff]
      %v2580 = vld [vmem:[%s1954 + $0x9a] sm:$0xff]
      %v2581 = vld [vmem:[%s1954 + $0xaa] sm:$0xff]
      %v2582 = vld [vmem:[%s1954 + $0xb2] sm:$0xff]
      %v2583 = vld [vmem:[%s1954 + $0xc2] sm:$0xff]
      %v2584 = vld [vmem:[%s1954 + $0xca] sm:$0xff]
      %v2585 = vld [vmem:[%s1954 + $0xda] sm:$0xff]
      %v2586 = vld [vmem:[%s1954 + $0xe2] sm:$0xff]
      %v2587 = vld [vmem:[%s1954 + $0xf2] sm:$0xff]
      %v2588 = vld [vmem:[%s1954 + $0xfa] sm:$0xff]
      %v2589 = vld [vmem:[%s1954 + $0x10a] sm:$0xff]
      %v2590 = vld [vmem:[%s1954 + $0x112] sm:$0xff]
      %v2591 = vld [vmem:[%s1954 + $0x122] sm:$0xff]
      %v2592 = vld [vmem:[%s1954 + $0x12a] sm:$0xff]
      %v2593 = vld [vmem:[%s1954 + $0x13a] sm:$0xff]
      %v2594 = vld [vmem:[%s1954 + $0x142] sm:$0xff]
      %v2595 = vld [vmem:[%s1954 + $0x152] sm:$0xff]
      %v2596 = vld [vmem:[%s1954 + $0x15a] sm:$0xff]
      %v2597 = vld [vmem:[%s1954 + $0x16a] sm:$0xff]
      %v2598 = vld [vmem:[%s1954 + $0x172] sm:$0xff]
      %s2599 = scalar_lea.vmem %s1, 1024
      %v2600 = vld [vmem:[%s2599] sm:$0xff]
      %v2601 = vld [vmem:[%s2599 + $0x8] sm:$0xff]
      %v2602 = vld [vmem:[%s2599 + $0x10] sm:$0xff]
      %v2603 = vld [vmem:[%s2599 + $0x18] sm:$0xff]
      %v2604 = vld [vmem:[%s2599 + $0x20] sm:$0xff]
      %v2605 = vld [vmem:[%s2599 + $0x28] sm:$0xff]
      %v2606 = vld [vmem:[%s2599 + $0x30] sm:$0xff]
      %v2607 = vld [vmem:[%s2599 + $0x38] sm:$0xff]
      %v2608 = vld [vmem:[%s2599 + $0x40] sm:$0xff]
      %v2609 = vld [vmem:[%s2599 + $0x48] sm:$0xff]
      %v2610 = vld [vmem:[%s2599 + $0x50] sm:$0xff]
      %v2611 = vld [vmem:[%s2599 + $0x58] sm:$0xff]
      %v2612 = vld [vmem:[%s2599 + $0x60] sm:$0xff]
      %v2613 = vld [vmem:[%s2599 + $0x68] sm:$0xff]
      %v2614 = vld [vmem:[%s2599 + $0x70] sm:$0xff]
      %v2615 = vld [vmem:[%s2599 + $0x78] sm:$0xff]
      %2616 = vmatprep.subr.mxu0 0.0
      %2617 = vmatpush1.msra.mxu0 %v2600
      %2618 = vmatprep.subr.mxu0 0.0
      %2619 = vmatpush1.msra.mxu0 %v2601
      %2620 = vmatprep.subr.mxu0 0.0
      %2621 = vmatpush1.msra.mxu0 %v2602
      %2622 = vmatprep.subr.mxu0 0.0
      %2623 = vmatpush1.msra.mxu0 %v2603
      %2624 = vmatprep.subr.mxu0 0.0
      %2625 = vmatpush1.msra.mxu0 %v2604
      %2626 = vmatprep.subr.mxu0 0.0
      %2627 = vmatpush1.msra.mxu0 %v2605
      %2628 = vmatprep.subr.mxu0 0.0
      %2629 = vmatpush1.msra.mxu0 %v2606
      %2630 = vmatprep.subr.mxu0 0.0
      %2631 = vmatpush1.msra.mxu0 %v2607
      %2632 = vmatprep.subr.mxu0 0.0
      %2633 = vmatpush1.msra.mxu0 %v2608
      %2634 = vmatprep.subr.mxu0 0.0
      %2635 = vmatpush1.msra.mxu0 %v2609
      %2636 = vmatprep.subr.mxu0 0.0
      %2637 = vmatpush1.msra.mxu0 %v2610
      %2638 = vmatprep.subr.mxu0 0.0
      %2639 = vmatpush1.msra.mxu0 %v2611
      %2640 = vmatprep.subr.mxu0 0.0
      %2641 = vmatpush1.msra.mxu0 %v2612
      %2642 = vmatprep.subr.mxu0 0.0
      %2643 = vmatpush1.msra.mxu0 %v2613
      %2644 = vmatprep.subr.mxu0 0.0
      %2645 = vmatpush1.msra.mxu0 %v2614
      %2646 = vmatprep.subr.mxu0 0.0
      %2647 = vmatpush1.msra.mxu0 %v2615
      %2648 = vmatprep.subr.mxu0 0.0
      %2649 = vmatpush1.msra.mxu0 0.0
      %2650 = vmatprep.subr.mxu0 0.0
      %2651 = vmatpush1.msra.mxu0 0.0
      %2652 = vmatprep.subr.mxu0 0.0
      %2653 = vmatpush1.msra.mxu0 0.0
      %2654 = vmatprep.subr.mxu0 0.0
      %2655 = vmatpush1.msra.mxu0 0.0
      %2656 = vmatprep.subr.mxu0 0.0
      %2657 = vmatpush1.msra.mxu0 0.0
      %2658 = vmatprep.subr.mxu0 0.0
      %2659 = vmatpush1.msra.mxu0 0.0
      %2660 = vmatprep.subr.mxu0 0.0
      %2661 = vmatpush1.msra.mxu0 0.0
      %2662 = vmatprep.subr.mxu0 0.0
      %2663 = vmatpush1.msra.mxu0 0.0
      %2664 = vmatprep.subr.mxu0 0.0
      %2665 = vmatpush1.msra.mxu0 0.0
      %2666 = vmatprep.subr.mxu0 0.0
      %2667 = vmatpush1.msra.mxu0 0.0
      %2668 = vmatprep.subr.mxu0 0.0
      %2669 = vmatpush1.msra.mxu0 0.0
      %2670 = vmatprep.subr.mxu0 0.0
      %2671 = vmatpush1.msra.mxu0 0.0
      %2672 = vmatprep.subr.mxu0 0.0
      %2673 = vmatpush1.msra.mxu0 0.0
      %2674 = vmatprep.subr.mxu0 0.0
      %2675 = vmatpush1.msra.mxu0 0.0
      %2676 = vmatprep.subr.mxu0 0.0
      %2677 = vmatpush1.msra.mxu0 0.0
      %2678 = vmatprep.subr.mxu0 0.0
      %2679 = vmatpush1.msra.mxu0 0.0
      %2680 = vmatprep.mubr.f32.mxu0 0.0
      %2681 = vmatmul.mubr.f32.gmra.mrb[0].mxu0 %v2567
      %v2682 = vpop.f32.mrb[0].mxu0
      %v2683 = vadd.f32 0.0, %v2682
      %v2684 = vpop.f32.mrb[0].mxu0
      %2685 = vmatprep.mubr.f32.mxu0 0.0
      %2686 = vmatmul.mubr.f32.gmra.mrb[0].mxu0 %v2568
      %v2687 = vpop.f32.mrb[0].mxu0
      %v2688 = vadd.f32 0.0, %v2687
      %v2689 = vpop.f32.mrb[0].mxu0
      %2690 = vmatprep.mubr.f32.mxu0 0.0
      %2691 = vmatmul.mubr.f32.gmra.mrb[0].mxu0 %v2569
      %v2692 = vpop.f32.mrb[0].mxu0
      %v2693 = vadd.f32 0.0, %v2692
      %v2694 = vpop.f32.mrb[0].mxu0
      %2695 = vmatprep.mubr.f32.mxu0 0.0
      %2696 = vmatmul.mubr.f32.gmra.mrb[0].mxu0 %v2570
      %v2697 = vpop.f32.mrb[0].mxu0
      %v2698 = vadd.f32 0.0, %v2697
      %v2699 = vpop.f32.mrb[0].mxu0
      %2700 = vmatprep.mubr.f32.mxu0 0.0
      %2701 = vmatmul.mubr.f32.gmra.mrb[0].mxu0 %v2571
      %v2702 = vpop.f32.mrb[0].mxu0
      %v2703 = vadd.f32 0.0, %v2702
      %v2704 = vpop.f32.mrb[0].mxu0
      %2705 = vmatprep.mubr.f32.mxu0 0.0
      %2706 = vmatmul.mubr.f32.gmra.mrb[0].mxu0 %v2572
      %v2707 = vpop.f32.mrb[0].mxu0
      %v2708 = vadd.f32 0.0, %v2707
      %v2709 = vpop.f32.mrb[0].mxu0
      %2710 = vmatprep.mubr.f32.mxu0 0.0
      %2711 = vmatmul.mubr.f32.gmra.mrb[0].mxu0 %v2573
      %v2712 = vpop.f32.mrb[0].mxu0
      %v2713 = vadd.f32 0.0, %v2712
      %v2714 = vpop.f32.mrb[0].mxu0
      %2715 = vmatprep.mubr.f32.mxu0 0.0
      %2716 = vmatmul.mubr.f32.gmra.mrb[0].mxu0 %v2574
      %v2717 = vpop.f32.mrb[0].mxu0
      %v2718 = vadd.f32 0.0, %v2717
      %v2719 = vpop.f32.mrb[0].mxu0
      %2720 = vmatprep.mubr.f32.mxu0 0.0
      %2721 = vmatmul.mubr.f32.gmra.mrb[0].mxu0 %v2575
      %v2722 = vpop.f32.mrb[0].mxu0
      %v2723 = vadd.f32 0.0, %v2722
      %v2724 = vpop.f32.mrb[0].mxu0
      %2725 = vmatprep.mubr.f32.mxu0 0.0
      %2726 = vmatmul.mubr.f32.gmra.mrb[0].mxu0 %v2576
      %v2727 = vpop.f32.mrb[0].mxu0
      %v2728 = vadd.f32 0.0, %v2727
      %v2729 = vpop.f32.mrb[0].mxu0
      %2730 = vmatprep.mubr.f32.mxu0 0.0
      %2731 = vmatmul.mubr.f32.gmra.mrb[0].mxu0 %v2577
      %v2732 = vpop.f32.mrb[0].mxu0
      %v2733 = vadd.f32 0.0, %v2732
      %v2734 = vpop.f32.mrb[0].mxu0
      %2735 = vmatprep.mubr.f32.mxu0 0.0
      %2736 = vmatmul.mubr.f32.gmra.mrb[0].mxu0 %v2578
      %v2737 = vpop.f32.mrb[0].mxu0
      %v2738 = vadd.f32 0.0, %v2737
      %v2739 = vpop.f32.mrb[0].mxu0
      %2740 = vmatprep.mubr.f32.mxu0 0.0
      %2741 = vmatmul.mubr.f32.gmra.mrb[0].mxu0 %v2579
      %v2742 = vpop.f32.mrb[0].mxu0
      %v2743 = vadd.f32 0.0, %v2742
      %v2744 = vpop.f32.mrb[0].mxu0
      %2745 = vmatprep.mubr.f32.mxu0 0.0
      %2746 = vmatmul.mubr.f32.gmra.mrb[0].mxu0 %v2580
      %v2747 = vpop.f32.mrb[0].mxu0
      %v2748 = vadd.f32 0.0, %v2747
      %v2749 = vpop.f32.mrb[0].mxu0
      %2750 = vmatprep.mubr.f32.mxu0 0.0
      %2751 = vmatmul.mubr.f32.gmra.mrb[0].mxu0 %v2581
      %v2752 = vpop.f32.mrb[0].mxu0
      %v2753 = vadd.f32 0.0, %v2752
      %v2754 = vpop.f32.mrb[0].mxu0
      %2755 = vmatprep.mubr.f32.mxu0 0.0
      %2756 = vmatmul.mubr.f32.gmra.mrb[0].mxu0 %v2582
      %v2757 = vpop.f32.mrb[0].mxu0
      %v2758 = vadd.f32 0.0, %v2757
      %v2759 = vpop.f32.mrb[0].mxu0
      %2760 = vmatprep.mubr.f32.mxu0 0.0
      %2761 = vmatmul.mubr.f32.gmra.mrb[0].mxu0 %v2583
      %v2762 = vpop.f32.mrb[0].mxu0
      %v2763 = vadd.f32 0.0, %v2762
      %v2764 = vpop.f32.mrb[0].mxu0
      %2765 = vmatprep.mubr.f32.mxu0 0.0
      %2766 = vmatmul.mubr.f32.gmra.mrb[0].mxu0 %v2584
      %v2767 = vpop.f32.mrb[0].mxu0
      %v2768 = vadd.f32 0.0, %v2767
      %v2769 = vpop.f32.mrb[0].mxu0
      %2770 = vmatprep.mubr.f32.mxu0 0.0
      %2771 = vmatmul.mubr.f32.gmra.mrb[0].mxu0 %v2585
      %v2772 = vpop.f32.mrb[0].mxu0
      %v2773 = vadd.f32 0.0, %v2772
      %v2774 = vpop.f32.mrb[0].mxu0
      %2775 = vmatprep.mubr.f32.mxu0 0.0
      %2776 = vmatmul.mubr.f32.gmra.mrb[0].mxu0 %v2586
      %v2777 = vpop.f32.mrb[0].mxu0
      %v2778 = vadd.f32 0.0, %v2777
      %v2779 = vpop.f32.mrb[0].mxu0
      %2780 = vmatprep.mubr.f32.mxu0 0.0
      %2781 = vmatmul.mubr.f32.gmra.mrb[0].mxu0 %v2587
      %v2782 = vpop.f32.mrb[0].mxu0
      %v2783 = vadd.f32 0.0, %v2782
      %v2784 = vpop.f32.mrb[0].mxu0
      %2785 = vmatprep.mubr.f32.mxu0 0.0
      %2786 = vmatmul.mubr.f32.gmra.mrb[0].mxu0 %v2588
      %v2787 = vpop.f32.mrb[0].mxu0
      %v2788 = vadd.f32 0.0, %v2787
      %v2789 = vpop.f32.mrb[0].mxu0
      %2790 = vmatprep.mubr.f32.mxu0 0.0
      %2791 = vmatmul.mubr.f32.gmra.mrb[0].mxu0 %v2589
      %v2792 = vpop.f32.mrb[0].mxu0
      %v2793 = vadd.f32 0.0, %v2792
      %v2794 = vpop.f32.mrb[0].mxu0
      %2795 = vmatprep.mubr.f32.mxu0 0.0
      %2796 = vmatmul.mubr.f32.gmra.mrb[0].mxu0 %v2590
      %v2797 = vpop.f32.mrb[0].mxu0
      %v2798 = vadd.f32 0.0, %v2797
      %v2799 = vpop.f32.mrb[0].mxu0
      %2800 = vmatprep.mubr.f32.mxu0 0.0
      %2801 = vmatmul.mubr.f32.gmra.mrb[0].mxu0 %v2591
      %v2802 = vpop.f32.mrb[0].mxu0
      %v2803 = vadd.f32 0.0, %v2802
      %v2804 = vpop.f32.mrb[0].mxu0
      %2805 = vmatprep.mubr.f32.mxu0 0.0
      %2806 = vmatmul.mubr.f32.gmra.mrb[0].mxu0 %v2592
      %v2807 = vpop.f32.mrb[0].mxu0
      %v2808 = vadd.f32 0.0, %v2807
      %v2809 = vpop.f32.mrb[0].mxu0
      %2810 = vmatprep.mubr.f32.mxu0 0.0
      %2811 = vmatmul.mubr.f32.gmra.mrb[0].mxu0 %v2593
      %v2812 = vpop.f32.mrb[0].mxu0
      %v2813 = vadd.f32 0.0, %v2812
      %v2814 = vpop.f32.mrb[0].mxu0
      %2815 = vmatprep.mubr.f32.mxu0 0.0
      %2816 = vmatmul.mubr.f32.gmra.mrb[0].mxu0 %v2594
      %v2817 = vpop.f32.mrb[0].mxu0
      %v2818 = vadd.f32 0.0, %v2817
      %v2819 = vpop.f32.mrb[0].mxu0
      %2820 = vmatprep.mubr.f32.mxu0 0.0
      %2821 = vmatmul.mubr.f32.gmra.mrb[0].mxu0 %v2595
      %v2822 = vpop.f32.mrb[0].mxu0
      %v2823 = vadd.f32 0.0, %v2822
      %v2824 = vpop.f32.mrb[0].mxu0
      %2825 = vmatprep.mubr.f32.mxu0 0.0
      %2826 = vmatmul.mubr.f32.gmra.mrb[0].mxu0 %v2596
      %v2827 = vpop.f32.mrb[0].mxu0
      %v2828 = vadd.f32 0.0, %v2827
      %v2829 = vpop.f32.mrb[0].mxu0
      %2830 = vmatprep.mubr.f32.mxu0 0.0
      %2831 = vmatmul.mubr.f32.gmra.mrb[0].mxu0 %v2597
      %v2832 = vpop.f32.mrb[0].mxu0
      %v2833 = vadd.f32 0.0, %v2832
      %v2834 = vpop.f32.mrb[0].mxu0
      %2835 = vmatprep.mubr.f32.mxu0 0.0
      %2836 = vmatmul.mubr.f32.gmra.mrb[0].mxu0 %v2598
      %v2837 = vpop.f32.mrb[0].mxu0
      %v2838 = vadd.f32 0.0, %v2837
      %v2839 = vpop.f32.mrb[0].mxu0
      %2840 = vdwg.mxu0
      %v2841 = vadd.f32 %v2535, %v2683
      %v2842 = vadd.f32 %v2536, %v2688
      %v2843 = vadd.f32 %v2537, %v2693
      %v2844 = vadd.f32 %v2538, %v2698
      %v2845 = vadd.f32 %v2539, %v2703
      %v2846 = vadd.f32 %v2540, %v2708
      %v2847 = vadd.f32 %v2541, %v2713
      %v2848 = vadd.f32 %v2542, %v2718
      %v2849 = vadd.f32 %v2543, %v2723
      %v2850 = vadd.f32 %v2544, %v2728
      %v2851 = vadd.f32 %v2545, %v2733
      %v2852 = vadd.f32 %v2546, %v2738
      %v2853 = vadd.f32 %v2547, %v2743
      %v2854 = vadd.f32 %v2548, %v2748
      %v2855 = vadd.f32 %v2549, %v2753
      %v2856 = vadd.f32 %v2550, %v2758
      %v2857 = vadd.f32 %v2551, %v2763
      %v2858 = vadd.f32 %v2552, %v2768
      %v2859 = vadd.f32 %v2553, %v2773
      %v2860 = vadd.f32 %v2554, %v2778
      %v2861 = vadd.f32 %v2555, %v2783
      %v2862 = vadd.f32 %v2556, %v2788
      %v2863 = vadd.f32 %v2557, %v2793
      %v2864 = vadd.f32 %v2558, %v2798
      %v2865 = vadd.f32 %v2559, %v2803
      %v2866 = vadd.f32 %v2560, %v2808
      %v2867 = vadd.f32 %v2561, %v2813
      %v2868 = vadd.f32 %v2562, %v2818
      %v2869 = vadd.f32 %v2563, %v2823
      %v2870 = vadd.f32 %v2564, %v2828
      %v2871 = vadd.f32 %v2565, %v2833
      %v2872 = vadd.f32 %v2566, %v2838
      %2873 = vst [vmem:[%s177] sm:$0xff] %v2841
      %2874 = vst [vmem:[%s177 + $0x8] sm:$0xff] %v2842
      %2875 = vst [vmem:[%s177 + $0x10] sm:$0xff] %v2843
      %2876 = vst [vmem:[%s177 + $0x18] sm:$0xff] %v2844
      %2877 = vst [vmem:[%s177 + $0x20] sm:$0xff] %v2845
      %2878 = vst [vmem:[%s177 + $0x28] sm:$0xff] %v2846
      %2879 = vst [vmem:[%s177 + $0x30] sm:$0xff] %v2847
      %2880 = vst [vmem:[%s177 + $0x38] sm:$0xff] %v2848
      %2881 = vst [vmem:[%s177 + $0x40] sm:$0xff] %v2849
      %2882 = vst [vmem:[%s177 + $0x48] sm:$0xff] %v2850
      %2883 = vst [vmem:[%s177 + $0x50] sm:$0xff] %v2851
      %2884 = vst [vmem:[%s177 + $0x58] sm:$0xff] %v2852
      %2885 = vst [vmem:[%s177 + $0x60] sm:$0xff] %v2853
      %2886 = vst [vmem:[%s177 + $0x68] sm:$0xff] %v2854
      %2887 = vst [vmem:[%s177 + $0x70] sm:$0xff] %v2855
      %2888 = vst [vmem:[%s177 + $0x78] sm:$0xff] %v2856
      %2889 = vst [vmem:[%s177 + $0x80] sm:$0xff] %v2857
      %2890 = vst [vmem:[%s177 + $0x88] sm:$0xff] %v2858
      %2891 = vst [vmem:[%s177 + $0x90] sm:$0xff] %v2859
      %2892 = vst [vmem:[%s177 + $0x98] sm:$0xff] %v2860
      %2893 = vst [vmem:[%s177 + $0xa0] sm:$0xff] %v2861
      %2894 = vst [vmem:[%s177 + $0xa8] sm:$0xff] %v2862
      %2895 = vst [vmem:[%s177 + $0xb0] sm:$0xff] %v2863
      %2896 = vst [vmem:[%s177 + $0xb8] sm:$0xff] %v2864
      %2897 = vst [vmem:[%s177 + $0xc0] sm:$0xff] %v2865
      %2898 = vst [vmem:[%s177 + $0xc8] sm:$0xff] %v2866
      %2899 = vst [vmem:[%s177 + $0xd0] sm:$0xff] %v2867
      %2900 = vst [vmem:[%s177 + $0xd8] sm:$0xff] %v2868
      %2901 = vst [vmem:[%s177 + $0xe0] sm:$0xff] %v2869
      %2902 = vst [vmem:[%s177 + $0xe8] sm:$0xff] %v2870
      %2903 = vst [vmem:[%s177 + $0xf0] sm:$0xff] %v2871
      %2904 = vst [vmem:[%s177 + $0xf8] sm:$0xff] %v2872
      %v2905 = vadd.f32 %v2841, %v2842
      %v2906 = vadd.f32 %v2905, %v2843
      %v2907 = vadd.f32 %v2906, %v2844
      %v2908 = vadd.f32 %v2907, %v2845
      %v2909 = vadd.f32 %v2908, %v2846
      %v2910 = vadd.f32 %v2909, %v2847
      %v2911 = vadd.f32 %v2910, %v2848
      %v2912 = vadd.f32 %v2911, %v2849
      %v2913 = vadd.f32 %v2912, %v2850
      %v2914 = vadd.f32 %v2913, %v2851
      %v2915 = vadd.f32 %v2914, %v2852
      %v2916 = vadd.f32 %v2915, %v2853
      %v2917 = vadd.f32 %v2916, %v2854
      %v2918 = vadd.f32 %v2917, %v2855
      %v2919 = vadd.f32 %v2918, %v2856
      %v2920 = vadd.f32 %v2919, %v2857
      %v2921 = vadd.f32 %v2920, %v2858
      %v2922 = vadd.f32 %v2921, %v2859
      %v2923 = vadd.f32 %v2922, %v2860
      %v2924 = vadd.f32 %v2923, %v2861
      %v2925 = vadd.f32 %v2924, %v2862
      %v2926 = vadd.f32 %v2925, %v2863
      %v2927 = vadd.f32 %v2926, %v2864
      %v2928 = vadd.f32 %v2927, %v2865
      %v2929 = vadd.f32 %v2928, %v2866
      %v2930 = vadd.f32 %v2929, %v2867
      %v2931 = vadd.f32 %v2930, %v2868
      %v2932 = vadd.f32 %v2931, %v2869
      %v2933 = vadd.f32 %v2932, %v2870
      %v2934 = vadd.f32 %v2933, %v2871
      %v2935 = vadd.f32 %v2934, %v2872
      %v2936 = vrot.slane %v2935, 4
      %v2937 = vadd.f32 %v2935, %v2936
      %v2938 = vrot.slane %v2937, 2
      %v2939 = vadd.f32 %v2937, %v2938
      %v2940 = vrot.slane %v2939, 1
      %v2941 = vadd.f32 %v2939, %v2940
      %v2942 = vmul.f32 %v2841, %v2841
      %v2943 = vmul.f32 %v2842, %v2842
      %v2944 = vmul.f32 %v2843, %v2843
      %v2945 = vmul.f32 %v2844, %v2844
      %v2946 = vmul.f32 %v2845, %v2845
      %v2947 = vmul.f32 %v2846, %v2846
      %v2948 = vmul.f32 %v2847, %v2847
      %v2949 = vmul.f32 %v2848, %v2848
      %v2950 = vmul.f32 %v2849, %v2849
      %v2951 = vmul.f32 %v2850, %v2850
      %v2952 = vmul.f32 %v2851, %v2851
      %v2953 = vmul.f32 %v2852, %v2852
      %v2954 = vmul.f32 %v2853, %v2853
      %v2955 = vmul.f32 %v2854, %v2854
      %v2956 = vmul.f32 %v2855, %v2855
      %v2957 = vmul.f32 %v2856, %v2856
      %v2958 = vmul.f32 %v2857, %v2857
      %v2959 = vmul.f32 %v2858, %v2858
      %v2960 = vmul.f32 %v2859, %v2859
      %v2961 = vmul.f32 %v2860, %v2860
      %v2962 = vmul.f32 %v2861, %v2861
      %v2963 = vmul.f32 %v2862, %v2862
      %v2964 = vmul.f32 %v2863, %v2863
      %v2965 = vmul.f32 %v2864, %v2864
      %v2966 = vmul.f32 %v2865, %v2865
      %v2967 = vmul.f32 %v2866, %v2866
      %v2968 = vmul.f32 %v2867, %v2867
      %v2969 = vmul.f32 %v2868, %v2868
      %v2970 = vmul.f32 %v2869, %v2869
      %v2971 = vmul.f32 %v2870, %v2870
      %v2972 = vmul.f32 %v2871, %v2871
      %v2973 = vmul.f32 %v2872, %v2872
      %v2974 = vadd.f32 %v2942, %v2943
      %v2975 = vadd.f32 %v2974, %v2944
      %v2976 = vadd.f32 %v2975, %v2945
      %v2977 = vadd.f32 %v2976, %v2946
      %v2978 = vadd.f32 %v2977, %v2947
      %v2979 = vadd.f32 %v2978, %v2948
      %v2980 = vadd.f32 %v2979, %v2949
      %v2981 = vadd.f32 %v2980, %v2950
      %v2982 = vadd.f32 %v2981, %v2951
      %v2983 = vadd.f32 %v2982, %v2952
      %v2984 = vadd.f32 %v2983, %v2953
      %v2985 = vadd.f32 %v2984, %v2954
      %v2986 = vadd.f32 %v2985, %v2955
      %v2987 = vadd.f32 %v2986, %v2956
      %v2988 = vadd.f32 %v2987, %v2957
      %v2989 = vadd.f32 %v2988, %v2958
      %v2990 = vadd.f32 %v2989, %v2959
      %v2991 = vadd.f32 %v2990, %v2960
      %v2992 = vadd.f32 %v2991, %v2961
      %v2993 = vadd.f32 %v2992, %v2962
      %v2994 = vadd.f32 %v2993, %v2963
      %v2995 = vadd.f32 %v2994, %v2964
      %v2996 = vadd.f32 %v2995, %v2965
      %v2997 = vadd.f32 %v2996, %v2966
      %v2998 = vadd.f32 %v2997, %v2967
      %v2999 = vadd.f32 %v2998, %v2968
      %v3000 = vadd.f32 %v2999, %v2969
      %v3001 = vadd.f32 %v3000, %v2970
      %v3002 = vadd.f32 %v3001, %v2971
      %v3003 = vadd.f32 %v3002, %v2972
      %v3004 = vadd.f32 %v3003, %v2973
      %v3005 = vrot.slane %v3004, 4
      %v3006 = vadd.f32 %v3004, %v3005
      %v3007 = vrot.slane %v3006, 2
      %v3008 = vadd.f32 %v3006, %v3007
      %v3009 = vrot.slane %v3008, 1
      %v3010 = vadd.f32 %v3008, %v3009
      %vm3011 = vcmask 1040384
      %v3012 = vsel %vm3011, %v2941, %v3010
      %3013 = vst [vmem:[%s181] sm:$0x3] %v3012
      %p3014 = scmp.lt.s32.totalorder %s15, 1
      %s3015 = scalar_select %p3014, %s15, 1
      %s3016 = smul.addr %s3015, 32
      %s3017 = smul.addr %s3016, 8
      %s3018 = scalar_lea.vmem %s2, %s3017
      %p3019 = scmp.lt.s32.totalorder %s15, 1
      %s3020 = scalar_select %p3019, %s15, 1
      %s3021 = smul.addr %s3020, 2
      %s3022 = scalar_lea.vmem %s3, %s3021
      // Predicated region
      $region29: #{double_conv.6} parent=27 // pred_check
        %p3023 = pneg %p80
      $region30: #{double_conv.6} parent=27 // pred_check_branch
        %3025 = sbr.rel (%p3023) target = $region32
      $region31: #{double_conv.6} parent=27 // pred_region
        _
      $region32: #{double_conv.6} parent=27 // pred_fallthru
        _
      // Predicated region
      $region33: #{double_conv.6} parent=27 // pred_check
        %p3026 = pneg %p106
      $region34: #{double_conv.6} parent=27 // pred_check_branch
        %3028 = sbr.rel (%p3026) target = $region36
      $region35: #{double_conv.6} parent=27 // pred_region
        _
      $region36: #{double_conv.6} parent=27 // pred_fallthru
        _
    $region28: #{double_conv.6} parent=5 // pred_fallthru
      _
    %p3029 = scmp.le.s32.totalorder 2, %s10
    // Predicated region
    $region37: #{double_conv.6} parent=5 // pred_check
      %p3030 = pneg %p3029
    $region38: #{double_conv.6} parent=5 // pred_check_branch
      %3032 = sbr.rel (%p3030) target = $region40
    $region39: #{double_conv.6} parent=5 // pred_region
      %s3033 = ssub.s32 %s10, 2
      // Predicated region
      $region41: #{double_conv.6} parent=39 // pred_check
        %p3034 = pneg %p86
      $region42: #{double_conv.6} parent=39 // pred_check_branch
        %3036 = sbr.rel (%p3034) target = $region44
      $region43: #{double_conv.6} parent=39 // pred_region
        %p3037 = scmp.lt.s32.totalorder %s16, 1
        %s3038 = scalar_select %p3037, %s16, 1
        %s3039 = smul.addr %s3038, 32
        %s3040 = smul.addr %s3039, 8
        %s3041 = scalar_lea.vmem %s2, %s3040
      $region44: #{double_conv.6} parent=39 // pred_fallthru
        _
      // Predicated region
      $region45: #{double_conv.6} parent=39 // pred_check
        %p3042 = pneg %p112
      $region46: #{double_conv.6} parent=39 // pred_check_branch
        %3044 = sbr.rel (%p3042) target = $region48
      $region47: #{double_conv.6} parent=39 // pred_region
        %p3045 = scmp.lt.s32.totalorder %s16, 1
        %s3046 = scalar_select %p3045, %s16, 1
        %s3047 = smul.addr %s3046, 2
        %s3048 = scalar_lea.vmem %s3, %s3047
      $region48: #{double_conv.6} parent=39 // pred_fallthru
        _
    $region40: #{double_conv.6} parent=5 // pred_fallthru
      _
  $region6: #{double_conv.6} parent=0 // loop_footer
    %s14 = sadd.s32 1, %s10
  $region7: #{double_conv.6} parent=0 // loop_footer_branch
    %9 = sbr.rel target = $region3
  $region8: #{double_conv.6} parent=0 // loop_exit
    _

</llo_original>
